<compile_context>
chip_gen: v6e
topology: v6e:2x2x1
jax: 0.10.0
libtpu: 0.0.40
codegen_flags: <defaults>
</compile_context>

<pallas_src>
import math
from functools import partial

import jax
import jax.numpy as jnp
from jax.experimental import pallas as pl
from jax.experimental.pallas import tpu as pltpu


# ----------------------------------------------------------------------------
# In-kernel helpers (operate on VMEM-resident values / refs)
# ----------------------------------------------------------------------------
def _layernorm(y, gamma, beta, eps=1e-5):
    mean = jnp.mean(y, axis=-1, keepdims=True)
    d = y - mean
    var = jnp.mean(d * d, axis=-1, keepdims=True)
    return d * jax.lax.rsqrt(var + eps) * gamma + beta


def _mha(num_heads, q_bf, k_bf, v_bf,
         wq_ref, bq_ref, wk_ref, bk_ref, wv_ref, bv_ref,
         wo_ref, bo_ref, pv_ref):
    """Multi-head attention for one row tile of one batch element.

    q_bf (Na, C) bf16, k_bf / v_bf (Nb, C) bf16.
    Combined weights: wq/wk/wv (C, d_int) bf16 (1/sqrt(dh) pre-folded into
    wq & bq), wo (d_int, C) bf16, biases f32.  pv_ref is an (Na, d_int) f32
    VMEM scratch so the out-projection runs as a single matmul.
    Returns (Na, C) f32 with the output projection (incl. bias) applied.
    """
    d_int = wq_ref.shape[1]
    dh = d_int // num_heads
    dn = (((1,), (1,)), ((), ()))  # contract last dims, no batch dims

    # Combined projections: one wide (N, C) @ (C, d_int) matmul per q/k/v.
    qp = (jnp.dot(q_bf, wq_ref[...], preferred_element_type=jnp.float32)
          + bq_ref[...]).astype(jnp.bfloat16)
    kp = (jnp.dot(k_bf, wk_ref[...], preferred_element_type=jnp.float32)
          + bk_ref[...]).astype(jnp.bfloat16)
    vp = (jnp.dot(v_bf, wv_ref[...], preferred_element_type=jnp.float32)
          + bv_ref[...]).astype(jnp.bfloat16)

    for h in range(num_heads):          # static unroll; per-head lane views only
        sl = slice(h * dh, (h + 1) * dh)
        s = jax.lax.dot_general(qp[:, sl], kp[:, sl], dn,
                                preferred_element_type=jnp.float32)
        s = s - jnp.max(s, axis=-1, keepdims=True)
        p = jnp.exp(s)
        p = p * pl.reciprocal(jnp.sum(p, axis=-1, keepdims=True), approx=True)
        pv_ref[:, sl] = jnp.dot(p.astype(jnp.bfloat16), vp[:, sl],
                                preferred_element_type=jnp.float32)

    # Single fused output projection over the full d_int contraction.
    return (jnp.dot(pv_ref[...].astype(jnp.bfloat16), wo_ref[...],
                    preferred_element_type=jnp.float32) + bo_ref[...])


# ----------------------------------------------------------------------------
# Pallas kernels
# ----------------------------------------------------------------------------
def _cross_attn_ln_kernel(num_heads,
                          a_ref, ape_ref, b_ref, bpe_ref,
                          wq_ref, bq_ref, wk_ref, bk_ref, wv_ref, bv_ref,
                          wo_ref, bo_ref, g_ref, beta_ref, o_ref, pv_ref):
    """out = LayerNorm(a + Attn(q=a+a_pe, k=b+b_pe, v=b)) for one row tile of a."""
    a = a_ref[0]                                    # (ta, C) residual / query src
    b = b_ref[0]                                    # (Nb, C) key / value src
    q_bf = (a + ape_ref[0]).astype(jnp.bfloat16)
    k_bf = (b + bpe_ref[0]).astype(jnp.bfloat16)
    attn = _mha(num_heads, q_bf, k_bf, b.astype(jnp.bfloat16),
                wq_ref, bq_ref, wk_ref, bk_ref, wv_ref, bv_ref,
                wo_ref, bo_ref, pv_ref)
    o_ref[0] = _layernorm(a + attn, g_ref[...], beta_ref[...])


def _self_attn_ln_kernel(num_heads,
                         x_ref, pe_ref,
                         wq_ref, bq_ref, wk_ref, bk_ref, wv_ref, bv_ref,
                         wo_ref, bo_ref, g_ref, beta_ref, o_ref, pv_ref):
    """out = LayerNorm(x + Attn(q=k=x+pe, v=x))  (step 1, non-skip path)."""
    x = x_ref[0]
    qk_bf = (x + pe_ref[0]).astype(jnp.bfloat16)
    attn = _mha(num_heads, qk_bf, qk_bf, x.astype(jnp.bfloat16),
                wq_ref, bq_ref, wk_ref, bk_ref, wv_ref, bv_ref,
                wo_ref, bo_ref, pv_ref)
    o_ref[0] = _layernorm(x + attn, g_ref[...], beta_ref[...])


def _self_attn_ln_nores_kernel(num_heads,
                               x_ref,
                               wq_ref, bq_ref, wk_ref, bk_ref, wv_ref, bv_ref,
                               wo_ref, bo_ref, g_ref, beta_ref, o_ref, pv_ref):
    """out = LayerNorm(Attn(x, x, x))  (skip_first_layer_pe path, no residual)."""
    x_bf = x_ref[0].astype(jnp.bfloat16)
    attn = _mha(num_heads, x_bf, x_bf, x_bf,
                wq_ref, bq_ref, wk_ref, bk_ref, wv_ref, bv_ref,
                wo_ref, bo_ref, pv_ref)
    o_ref[0] = _layernorm(attn, g_ref[...], beta_ref[...])


def _mlp_ln_kernel(x_ref, w1_ref, b1_ref, w2_ref, b2_ref, g_ref, beta_ref, o_ref):
    """out = LayerNorm(x + Linear(ReLU(Linear(x)))) for one row tile of x."""
    x = x_ref[0]
    h = jnp.dot(x.astype(jnp.bfloat16), w1_ref[...],
                preferred_element_type=jnp.float32) + b1_ref[...]
    h = jnp.maximum(h, 0.0)
    y = jnp.dot(h.astype(jnp.bfloat16), w2_ref[...],
                preferred_element_type=jnp.float32) + b2_ref[...]
    o_ref[0] = _layernorm(x + y, g_ref[...], beta_ref[...])


# ----------------------------------------------------------------------------
# Wrappers around pallas_call
# ----------------------------------------------------------------------------
def _wspec(arr):
    """Full-array BlockSpec with a constant index map (weights / norm params)."""
    shape = arr.shape
    nd = len(shape)
    return pl.BlockSpec(shape, lambda *_: (0,) * nd)


def _row_tile(n, target=512):
    """Largest multiple-of-8 divisor of n that is <= target (n itself if small)."""
    if n <= target:
        return n
    for t in range(target, 7, -8):
        if n % t == 0:
            return t
    return n


def cross_attention_ln(a, a_pe, b, b_pe, p, gamma, beta, num_heads, row_tile=512):
    """Fused: LayerNorm(a + Attention(q=a+a_pe, k=b+b_pe, v=b)), rows of a tiled."""
    B, Na, C = a.shape
    Nb = b.shape[1]
    d_int = p["wq"].shape[1]
    ta = _row_tile(Na, row_tile)
    a_spec = pl.BlockSpec((1, ta, C), lambda i, j: (i, j, 0))
    b_spec = pl.BlockSpec((1, Nb, C), lambda i, j: (i, 0, 0))
    return pl.pallas_call(
        partial(_cross_attn_ln_kernel, num_heads),
        out_shape=jax.ShapeDtypeStruct((B, Na, C), a.dtype),
        grid=(B, Na // ta),
        in_specs=[a_spec, a_spec, b_spec, b_spec,
                  _wspec(p["wq"]), _wspec(p["bq"]),
                  _wspec(p["wk"]), _wspec(p["bk"]),
                  _wspec(p["wv"]), _wspec(p["bv"]),
                  _wspec(p["wo"]), _wspec(p["bo"]),
                  _wspec(gamma), _wspec(beta)],
        out_specs=a_spec,
        scratch_shapes=[pltpu.VMEM((ta, d_int), jnp.float32)],
        compiler_params=pltpu.CompilerParams(
            dimension_semantics=("parallel", "parallel")),
    )(a, a_pe, b, b_pe,
      p["wq"], p["bq"], p["wk"], p["bk"], p["wv"], p["bv"],
      p["wo"], p["bo"], gamma, beta)


def self_attention_ln(x, pe, p, gamma, beta, num_heads):
    """Fused: LayerNorm(x + Attention(q=k=x+pe, v=x))."""
    B, N, C = x.shape
    d_int = p["wq"].shape[1]
    tok = pl.BlockSpec((1, N, C), lambda i: (i, 0, 0))
    return pl.pallas_call(
        partial(_self_attn_ln_kernel, num_heads),
        out_shape=jax.ShapeDtypeStruct((B, N, C), x.dtype),
        grid=(B,),
        in_specs=[tok, tok,
                  _wspec(p["wq"]), _wspec(p["bq"]),
                  _wspec(p["wk"]), _wspec(p["bk"]),
                  _wspec(p["wv"]), _wspec(p["bv"]),
                  _wspec(p["wo"]), _wspec(p["bo"]),
                  _wspec(gamma), _wspec(beta)],
        out_specs=tok,
        scratch_shapes=[pltpu.VMEM((N, d_int), jnp.float32)],
        compiler_params=pltpu.CompilerParams(dimension_semantics=("parallel",)),
    )(x, pe, p["wq"], p["bq"], p["wk"], p["bk"], p["wv"], p["bv"],
      p["wo"], p["bo"], gamma, beta)


def self_attention_ln_noresidual(x, p, gamma, beta, num_heads):
    """Fused: LayerNorm(Attention(x, x, x)) for the skip_first_layer_pe path."""
    B, N, C = x.shape
    d_int = p["wq"].shape[1]
    tok = pl.BlockSpec((1, N, C), lambda i: (i, 0, 0))
    return pl.pallas_call(
        partial(_self_attn_ln_nores_kernel, num_heads),
        out_shape=jax.ShapeDtypeStruct((B, N, C), x.dtype),
        grid=(B,),
        in_specs=[tok,
                  _wspec(p["wq"]), _wspec(p["bq"]),
                  _wspec(p["wk"]), _wspec(p["bk"]),
                  _wspec(p["wv"]), _wspec(p["bv"]),
                  _wspec(p["wo"]), _wspec(p["bo"]),
                  _wspec(gamma), _wspec(beta)],
        out_specs=tok,
        scratch_shapes=[pltpu.VMEM((N, d_int), jnp.float32)],
        compiler_params=pltpu.CompilerParams(dimension_semantics=("parallel",)),
    )(x, p["wq"], p["bq"], p["wk"], p["bk"], p["wv"], p["bv"],
      p["wo"], p["bo"], gamma, beta)


def mlp_ln(x, p, gamma, beta, row_tile=512):
    """Fused: LayerNorm(x + Linear(ReLU(Linear(x)))), rows tiled."""
    B, N, C = x.shape
    tn = _row_tile(N, row_tile)
    tok = pl.BlockSpec((1, tn, C), lambda i, j: (i, j, 0))
    return pl.pallas_call(
        _mlp_ln_kernel,
        out_shape=jax.ShapeDtypeStruct((B, N, C), x.dtype),
        grid=(B, N // tn),
        in_specs=[tok,
                  _wspec(p["w1"]), _wspec(p["b1"]),
                  _wspec(p["w2"]), _wspec(p["b2"]),
                  _wspec(gamma), _wspec(beta)],
        out_specs=tok,
        compiler_params=pltpu.CompilerParams(
            dimension_semantics=("parallel", "parallel")),
    )(x, p["w1"], p["b1"], p["w2"], p["b2"], gamma, beta)


# ----------------------------------------------------------------------------
# One-time weight packing (hoisted OUT of the forward path)
# ----------------------------------------------------------------------------
def _prep_attn_params(p, num_heads):
    """Cast weights to bf16 once and fold 1/sqrt(dh) into the q projection."""
    d_int = p["wq"].shape[1]
    assert d_int % num_heads == 0, "num_heads must divide internal_dim"
    scale = 1.0 / math.sqrt(d_int // num_heads)
    return {
        "wq": (p["wq"] * scale).astype(jnp.bfloat16),
        "bq": (p["bq"] * scale).astype(jnp.float32),
        "wk": p["wk"].astype(jnp.bfloat16),
        "bk": p["bk"].astype(jnp.float32),
        "wv": p["wv"].astype(jnp.bfloat16),
        "bv": p["bv"].astype(jnp.float32),
        "wo": p["wo"].astype(jnp.bfloat16),
        "bo": p["bo"].astype(jnp.float32),
    }


def prepare_params(params, num_heads):
    prepped = {
        "self_attn": _prep_attn_params(params["self_attn"], num_heads),
        "cross_t2i": _prep_attn_params(params["cross_t2i"], num_heads),
        "cross_i2t": _prep_attn_params(params["cross_i2t"], num_heads),
        "mlp": {
            "w1": params["mlp"]["w1"].astype(jnp.bfloat16),
            "b1": params["mlp"]["b1"],
            "w2": params["mlp"]["w2"].astype(jnp.bfloat16),
            "b2": params["mlp"]["b2"],
        },
    }
    for i in range(1, 5):
        prepped[f"norm{i}_g"] = params[f"norm{i}_g"]
        prepped[f"norm{i}_b"] = params[f"norm{i}_b"]
    return prepped


# ----------------------------------------------------------------------------
# TwoWayAttentionBlock forward (4 fused Pallas kernels per block)
# ----------------------------------------------------------------------------
def two_way_attention_block(prepared, queries, keys, query_pe, key_pe,
                            num_heads, skip_first_layer_pe=False):
    # (1) self attention on sparse tokens  (+ residual + norm1 fused)
    if skip_first_layer_pe:
        queries = self_attention_ln_noresidual(
            queries, prepared["self_attn"],
            prepared["norm1_g"], prepared["norm1_b"], num_heads)
    else:
        queries = self_attention_ln(
            queries, query_pe, prepared["self_attn"],
            prepared["norm1_g"], prepared["norm1_b"], num_heads)

    # (2) cross attention: tokens -> image  (+ residual + norm2 fused)
    queries = cross_attention_ln(
        queries, query_pe, keys, key_pe, prepared["cross_t2i"],
        prepared["norm2_g"], prepared["norm2_b"], num_heads)

    # (3) MLP on sparse tokens  (+ residual + norm3 fused)
    queries = mlp_ln(queries, prepared["mlp"],
                     prepared["norm3_g"], prepared["norm3_b"])

    # (4) cross attention: image -> tokens  (+ residual + norm4 fused)
    keys = cross_attention_ln(
        keys, key_pe, queries, query_pe, prepared["cross_i2t"],
        prepared["norm4_g"], prepared["norm4_b"], num_heads)

    return queries, keys


# ----------------------------------------------------------------------------
# Deterministic parameter init (PyTorch-Linear layout: W as (in, out))
# ----------------------------------------------------------------------------
def init_attn_params(key, embedding_dim, internal_dim, scale=0.05):
    ks = jax.random.split(key, 8)
    f32 = jnp.float32
    return {
        "wq": scale * jax.random.normal(ks[0], (embedding_dim, internal_dim), f32),
        "bq": scale * jax.random.normal(ks[1], (1, internal_dim), f32),
        "wk": scale * jax.random.normal(ks[2], (embedding_dim, internal_dim), f32),
        "bk": scale * jax.random.normal(ks[3], (1, internal_dim), f32),
        "wv": scale * jax.random.normal(ks[4], (embedding_dim, internal_dim), f32),
        "bv": scale * jax.random.normal(ks[5], (1, internal_dim), f32),
        "wo": scale * jax.random.normal(ks[6], (internal_dim, embedding_dim), f32),
        "bo": scale * jax.random.normal(ks[7], (1, embedding_dim), f32),
    }


def init_params(key, embedding_dim, num_heads, mlp_dim, attention_downsample_rate):
    ks = jax.random.split(key, 8)
    f32 = jnp.float32
    d_ds = embedding_dim // attention_downsample_rate
    params = {
        "self_attn": init_attn_params(ks[0], embedding_dim, embedding_dim),
        "cross_t2i": init_attn_params(ks[1], embedding_dim, d_ds),
        "cross_i2t": init_attn_params(ks[2], embedding_dim, d_ds),
        "mlp": {
            "w1": 0.05 * jax.random.normal(ks[3], (embedding_dim, mlp_dim), f32),
            "b1": 0.05 * jax.random.normal(ks[4], (1, mlp_dim), f32),
            "w2": 0.05 * jax.random.normal(ks[5], (mlp_dim, embedding_dim), f32),
            "b2": 0.05 * jax.random.normal(ks[6], (1, embedding_dim), f32),
        },
    }
    for i in range(1, 5):
        params[f"norm{i}_g"] = jnp.ones((1, embedding_dim), f32)
        params[f"norm{i}_b"] = jnp.zeros((1, embedding_dim), f32)
    return params


# ----------------------------------------------------------------------------
# Pure-JAX f32 reference (correctness check, uses the RAW params)
# ----------------------------------------------------------------------------
def _ref_attention(q, k, v, p, num_heads):
    B, Nq, _ = q.shape
    qp = q @ p["wq"] + p["bq"][0]
    kp = k @ p["wk"] + p["bk"][0]
    vp = v @ p["wv"] + p["bv"][0]
    d_int = p["wq"].shape[1]
    dh = d_int // num_heads

    def sep(x):
        b, n, _ = x.shape
        return jnp.transpose(x.reshape(b, n, num_heads, dh), (0, 2, 1, 3))

    qh, kh, vh = sep(qp), sep(kp), sep(vp)
    attn = jnp.einsum("bhqd,bhkd->bhqk", qh, kh) / math.sqrt(dh)
    attn = jax.nn.softmax(attn, axis=-1)
    out = jnp.einsum("bhqk,bhkd->bhqd", attn, vh)
    out = jnp.transpose(out, (0, 2, 1, 3)).reshape(B, Nq, d_int)
    return out @ p["wo"] + p["bo"][0]


def _ref_ln(x, g, b):
    m = jnp.mean(x, axis=-1, keepdims=True)
    v = jnp.mean((x - m) ** 2, axis=-1, keepdims=True)
    return (x - m) * jax.lax.rsqrt(v + 1e-5) * g[0] + b[0]


def _ref_block(params, queries, keys, query_pe, key_pe, num_heads,
               skip_first_layer_pe=False):
    if skip_first_layer_pe:
        queries = _ref_attention(queries, queries, queries, params["self_attn"], num_heads)
        queries = _ref_ln(queries, params["norm1_g"], params["norm1_b"])
    else:
        q = queries + query_pe
        queries = _ref_ln(
            queries + _ref_attention(q, q, queries, params["self_attn"], num_heads),
            params["norm1_g"], params["norm1_b"])
    q = queries + query_pe
    k = keys + key_pe
    queries = _ref_ln(
        queries + _ref_attention(q, k, keys, params["cross_t2i"], num_heads),
        params["norm2_g"], params["norm2_b"])
    mlp = params["mlp"]
    h = jnp.maximum(queries @ mlp["w1"] + mlp["b1"][0], 0.0)
    queries = _ref_ln(queries + (h @ mlp["w2"] + mlp["b2"][0]),
                      params["norm3_g"], params["norm3_b"])
    q = queries + query_pe
    k = keys + key_pe
    keys = _ref_ln(
        keys + _ref_attention(k, q, queries, params["cross_i2t"], num_heads),
        params["norm4_g"], params["norm4_b"])
    return queries, keys


# ----------------------------------------------------------------------------
# Main
# ----------------------------------------------------------------------------
if __name__ == "__main__":
    B = 2            # batch
    Nq = 8           # sparse (prompt) tokens
    Nk = 64          # dense (image) tokens, e.g. 8x8 flattened
    C = 32           # embedding_dim
    H = 4            # num_heads
    MLP = 64         # mlp_dim
    DS = 2           # attention_downsample_rate

    root = jax.random.PRNGKey(0)
    k_param, k_q, k_k, k_qpe, k_kpe = jax.random.split(root, 5)

    params = init_params(k_param, C, H, MLP, DS)
    queries = jax.random.normal(k_q, (B, Nq, C), jnp.float32)
    keys = jax.random.normal(k_k, (B, Nk, C), jnp.float32)
    query_pe = jax.random.normal(k_qpe, (B, Nq, C), jnp.float32)
    key_pe = jax.random.normal(k_kpe, (B, Nk, C), jnp.float32)

    # Pack / cast weights ONCE (not per forward).
    prepared = prepare_params(params, H)

    fwd = jax.jit(two_way_attention_block,
                  static_argnames=("num_heads", "skip_first_layer_pe"))

    # Tolerance loosened vs. the f32 reference because matmuls run in bf16
    # (f32 accumulation) and the softmax divide uses the approx reciprocal.
    TOL = 5e-2
    for skip in (False, True):
        out_q, out_k = fwd(prepared, queries, keys, query_pe, key_pe,
                           num_heads=H, skip_first_layer_pe=skip)
        out_q = jax.block_until_ready(out_q)
        out_k = jax.block_until_ready(out_k)

        ref_q, ref_k = _ref_block(params, queries, keys, query_pe, key_pe, H,
                                  skip_first_layer_pe=skip)
        assert jnp.allclose(out_q, ref_q, atol=TOL, rtol=TOL), \
            f"queries mismatch (skip={skip}): {jnp.max(jnp.abs(out_q - ref_q))}"
        assert jnp.allclose(out_k, ref_k, atol=TOL, rtol=TOL), \
            f"keys mismatch (skip={skip}): {jnp.max(jnp.abs(out_k - ref_k))}"

    print("KERNEL_OK")
</pallas_src>

<mosaic_0001>
module attributes {stable_mosaic.version = 11 : i64} {
  func.func @_self_attn_ln_kernel(%arg0: i32, %arg1: memref<1x8x32xf32, #tpu.memory_space<vmem>>, %arg2: memref<1x8x32xf32, #tpu.memory_space<vmem>>, %arg3: memref<32x32xbf16, #tpu.memory_space<vmem>>, %arg4: memref<1x32xf32, #tpu.memory_space<vmem>>, %arg5: memref<32x32xbf16, #tpu.memory_space<vmem>>, %arg6: memref<1x32xf32, #tpu.memory_space<vmem>>, %arg7: memref<32x32xbf16, #tpu.memory_space<vmem>>, %arg8: memref<1x32xf32, #tpu.memory_space<vmem>>, %arg9: memref<32x32xbf16, #tpu.memory_space<vmem>>, %arg10: memref<1x32xf32, #tpu.memory_space<vmem>>, %arg11: memref<1x32xf32, #tpu.memory_space<vmem>>, %arg12: memref<1x32xf32, #tpu.memory_space<vmem>>, %arg13: memref<1x8x32xf32, #tpu.memory_space<vmem>>, %arg14: memref<8x32xf32, #tpu.memory_space<vmem>>) attributes {dimension_semantics = [#tpu.dimension_semantics<parallel>], iteration_bounds = array<i64: 2>, scalar_prefetch = 0 : i64, scratch_operands = 1 : i64, tpu.core_type = #tpu.core_type<tc>, window_params = [{transform_indices = @transform_0, window_bounds = array<i64: 1, 8, 32>}, {transform_indices = @transform_1, window_bounds = array<i64: 1, 8, 32>}, {pipeline_mode = #tpu.pipeline_mode<synchronous>, transform_indices = @transform_2, window_bounds = array<i64: 32, 32>}, {pipeline_mode = #tpu.pipeline_mode<synchronous>, transform_indices = @transform_3, window_bounds = array<i64: 1, 32>}, {pipeline_mode = #tpu.pipeline_mode<synchronous>, transform_indices = @transform_4, window_bounds = array<i64: 32, 32>}, {pipeline_mode = #tpu.pipeline_mode<synchronous>, transform_indices = @transform_5, window_bounds = array<i64: 1, 32>}, {pipeline_mode = #tpu.pipeline_mode<synchronous>, transform_indices = @transform_6, window_bounds = array<i64: 32, 32>}, {pipeline_mode = #tpu.pipeline_mode<synchronous>, transform_indices = @transform_7, window_bounds = array<i64: 1, 32>}, {pipeline_mode = #tpu.pipeline_mode<synchronous>, transform_indices = @transform_8, window_bounds = array<i64: 32, 32>}, {pipeline_mode = #tpu.pipeline_mode<synchronous>, transform_indices = @transform_9, window_bounds = array<i64: 1, 32>}, {pipeline_mode = #tpu.pipeline_mode<synchronous>, transform_indices = @transform_10, window_bounds = array<i64: 1, 32>}, {pipeline_mode = #tpu.pipeline_mode<synchronous>, transform_indices = @transform_11, window_bounds = array<i64: 1, 32>}, {transform_indices = @transform_12, window_bounds = array<i64: 1, 8, 32>}]} {
    %c0 = arith.constant 0 : index
    %c0_0 = arith.constant 0 : index
    %c0_1 = arith.constant 0 : index
    %0 = vector.load %arg1[%c0, %c0_0, %c0_1] : memref<1x8x32xf32, #tpu.memory_space<vmem>>, vector<1x8x32xf32>
    %1 = vector.shape_cast %0 : vector<1x8x32xf32> to vector<8x32xf32>
    %c0_2 = arith.constant 0 : index
    %c0_3 = arith.constant 0 : index
    %c0_4 = arith.constant 0 : index
    %2 = vector.load %arg2[%c0_2, %c0_3, %c0_4] : memref<1x8x32xf32, #tpu.memory_space<vmem>>, vector<1x8x32xf32>
    %3 = vector.shape_cast %2 : vector<1x8x32xf32> to vector<8x32xf32>
    %4 = arith.addf %1, %3 : vector<8x32xf32>
    %5 = arith.truncf %4 : vector<8x32xf32> to vector<8x32xbf16>
    %6 = arith.truncf %1 : vector<8x32xf32> to vector<8x32xbf16>
    %c0_5 = arith.constant 0 : index
    %c0_6 = arith.constant 0 : index
    %7 = vector.load %arg3[%c0_5, %c0_6] : memref<32x32xbf16, #tpu.memory_space<vmem>>, vector<32x32xbf16>
    %cst = arith.constant dense<0.000000e+00> : vector<8x32xf32>
    %8 = tpu.matmul %5, %7, %cst {dimension_numbers = #tpu.dot_dimension_numbers<[1], [0], [0], [1], [0, 0, 1, 1], [], []>} : vector<8x32xbf16>, vector<32x32xbf16>, vector<8x32xf32> -> vector<8x32xf32>
    %c0_7 = arith.constant 0 : index
    %c0_8 = arith.constant 0 : index
    %9 = vector.load %arg4[%c0_7, %c0_8] : memref<1x32xf32, #tpu.memory_space<vmem>>, vector<1x32xf32>
    %10 = vector.broadcast %9 : vector<1x32xf32> to vector<8x32xf32>
    %11 = arith.addf %8, %10 : vector<8x32xf32>
    %12 = arith.truncf %11 : vector<8x32xf32> to vector<8x32xbf16>
    %c0_9 = arith.constant 0 : index
    %c0_10 = arith.constant 0 : index
    %13 = vector.load %arg5[%c0_9, %c0_10] : memref<32x32xbf16, #tpu.memory_space<vmem>>, vector<32x32xbf16>
    %cst_11 = arith.constant dense<0.000000e+00> : vector<8x32xf32>
    %14 = tpu.matmul %5, %13, %cst_11 {dimension_numbers = #tpu.dot_dimension_numbers<[1], [0], [0], [1], [0, 0, 1, 1], [], []>} : vector<8x32xbf16>, vector<32x32xbf16>, vector<8x32xf32> -> vector<8x32xf32>
    %c0_12 = arith.constant 0 : index
    %c0_13 = arith.constant 0 : index
    %15 = vector.load %arg6[%c0_12, %c0_13] : memref<1x32xf32, #tpu.memory_space<vmem>>, vector<1x32xf32>
    %16 = vector.broadcast %15 : vector<1x32xf32> to vector<8x32xf32>
    %17 = arith.addf %14, %16 : vector<8x32xf32>
    %18 = arith.truncf %17 : vector<8x32xf32> to vector<8x32xbf16>
    %c0_14 = arith.constant 0 : index
    %c0_15 = arith.constant 0 : index
    %19 = vector.load %arg7[%c0_14, %c0_15] : memref<32x32xbf16, #tpu.memory_space<vmem>>, vector<32x32xbf16>
    %cst_16 = arith.constant dense<0.000000e+00> : vector<8x32xf32>
    %20 = tpu.matmul %6, %19, %cst_16 {dimension_numbers = #tpu.dot_dimension_numbers<[1], [0], [0], [1], [0, 0, 1, 1], [], []>} : vector<8x32xbf16>, vector<32x32xbf16>, vector<8x32xf32> -> vector<8x32xf32>
    %c0_17 = arith.constant 0 : index
    %c0_18 = arith.constant 0 : index
    %21 = vector.load %arg8[%c0_17, %c0_18] : memref<1x32xf32, #tpu.memory_space<vmem>>, vector<1x32xf32>
    %22 = vector.broadcast %21 : vector<1x32xf32> to vector<8x32xf32>
    %23 = arith.addf %20, %22 : vector<8x32xf32>
    %24 = arith.truncf %23 : vector<8x32xf32> to vector<8x32xbf16>
    %25 = vector.extract_strided_slice %12 {offsets = [0, 0], sizes = [8, 8], strides = [1, 1]} : vector<8x32xbf16> to vector<8x8xbf16>
    %26 = vector.extract_strided_slice %18 {offsets = [0, 0], sizes = [8, 8], strides = [1, 1]} : vector<8x32xbf16> to vector<8x8xbf16>
    %cst_19 = arith.constant dense<0.000000e+00> : vector<8x8xf32>
    %27 = tpu.matmul %25, %26, %cst_19 {dimension_numbers = #tpu.dot_dimension_numbers<[1], [1], [0], [0], [0, 0, 1, 0], [], []>} : vector<8x8xbf16>, vector<8x8xbf16>, vector<8x8xf32> -> vector<8x8xf32>
    %cst_20 = arith.constant dense<0xFF800000> : vector<8xf32>
    %28 = vector.multi_reduction <maximumf>, %27, %cst_20 [1] : vector<8x8xf32> to vector<8xf32>
    %29 = vector.shape_cast %28 : vector<8xf32> to vector<8x1xf32>
    %30 = vector.broadcast %29 : vector<8x1xf32> to vector<8x8xf32>
    %31 = arith.subf %27, %30 : vector<8x8xf32>
    %32 = math.exp %31 : vector<8x8xf32>
    %cst_21 = arith.constant dense<0.000000e+00> : vector<8xf32>
    %33 = vector.multi_reduction <add>, %32, %cst_21 [1] : vector<8x8xf32> to vector<8xf32>
    %34 = vector.shape_cast %33 : vector<8xf32> to vector<8x1xf32>
    %35 = tpu.reciprocal %34 {approx = true} : vector<8x1xf32> -> vector<8x1xf32>
    %36 = vector.broadcast %35 : vector<8x1xf32> to vector<8x8xf32>
    %37 = arith.mulf %32, %36 : vector<8x8xf32>
    %38 = arith.truncf %37 : vector<8x8xf32> to vector<8x8xbf16>
    %39 = vector.extract_strided_slice %24 {offsets = [0, 0], sizes = [8, 8], strides = [1, 1]} : vector<8x32xbf16> to vector<8x8xbf16>
    %cst_22 = arith.constant dense<0.000000e+00> : vector<8x8xf32>
    %40 = tpu.matmul %38, %39, %cst_22 {dimension_numbers = #tpu.dot_dimension_numbers<[1], [0], [0], [1], [0, 0, 1, 1], [], []>} : vector<8x8xbf16>, vector<8x8xbf16>, vector<8x8xf32> -> vector<8x8xf32>
    %c0_23 = arith.constant 0 : index
    %c0_24 = arith.constant 0 : index
    %41 = vector.load %arg14[%c0_23, %c0_24] : memref<8x32xf32, #tpu.memory_space<vmem>>, vector<8x8xf32>
    tpu.vector_store %arg14[%c0_23, %c0_24], %40 {strides = array<i32>} : memref<8x32xf32, #tpu.memory_space<vmem>>, vector<8x8xf32>,
    %42 = vector.extract_strided_slice %12 {offsets = [0, 8], sizes = [8, 8], strides = [1, 1]} : vector<8x32xbf16> to vector<8x8xbf16>
    %43 = vector.extract_strided_slice %18 {offsets = [0, 8], sizes = [8, 8], strides = [1, 1]} : vector<8x32xbf16> to vector<8x8xbf16>
    %cst_25 = arith.constant dense<0.000000e+00> : vector<8x8xf32>
    %44 = tpu.matmul %42, %43, %cst_25 {dimension_numbers = #tpu.dot_dimension_numbers<[1], [1], [0], [0], [0, 0, 1, 0], [], []>} : vector<8x8xbf16>, vector<8x8xbf16>, vector<8x8xf32> -> vector<8x8xf32>
    %cst_26 = arith.constant dense<0xFF800000> : vector<8xf32>
    %45 = vector.multi_reduction <maximumf>, %44, %cst_26 [1] : vector<8x8xf32> to vector<8xf32>
    %46 = vector.shape_cast %45 : vector<8xf32> to vector<8x1xf32>
    %47 = vector.broadcast %46 : vector<8x1xf32> to vector<8x8xf32>
    %48 = arith.subf %44, %47 : vector<8x8xf32>
    %49 = math.exp %48 : vector<8x8xf32>
    %cst_27 = arith.constant dense<0.000000e+00> : vector<8xf32>
    %50 = vector.multi_reduction <add>, %49, %cst_27 [1] : vector<8x8xf32> to vector<8xf32>
    %51 = vector.shape_cast %50 : vector<8xf32> to vector<8x1xf32>
    %52 = tpu.reciprocal %51 {approx = true} : vector<8x1xf32> -> vector<8x1xf32>
    %53 = vector.broadcast %52 : vector<8x1xf32> to vector<8x8xf32>
    %54 = arith.mulf %49, %53 : vector<8x8xf32>
    %55 = arith.truncf %54 : vector<8x8xf32> to vector<8x8xbf16>
    %56 = vector.extract_strided_slice %24 {offsets = [0, 8], sizes = [8, 8], strides = [1, 1]} : vector<8x32xbf16> to vector<8x8xbf16>
    %cst_28 = arith.constant dense<0.000000e+00> : vector<8x8xf32>
    %57 = tpu.matmul %55, %56, %cst_28 {dimension_numbers = #tpu.dot_dimension_numbers<[1], [0], [0], [1], [0, 0, 1, 1], [], []>} : vector<8x8xbf16>, vector<8x8xbf16>, vector<8x8xf32> -> vector<8x8xf32>
    %c0_29 = arith.constant 0 : index
    %c8 = arith.constant 8 : index
    %58 = vector.load %arg14[%c0_29, %c8] : memref<8x32xf32, #tpu.memory_space<vmem>>, vector<8x8xf32>
    tpu.vector_store %arg14[%c0_29, %c8], %57 {strides = array<i32>} : memref<8x32xf32, #tpu.memory_space<vmem>>, vector<8x8xf32>,
    %59 = vector.extract_strided_slice %12 {offsets = [0, 16], sizes = [8, 8], strides = [1, 1]} : vector<8x32xbf16> to vector<8x8xbf16>
    %60 = vector.extract_strided_slice %18 {offsets = [0, 16], sizes = [8, 8], strides = [1, 1]} : vector<8x32xbf16> to vector<8x8xbf16>
    %cst_30 = arith.constant dense<0.000000e+00> : vector<8x8xf32>
    %61 = tpu.matmul %59, %60, %cst_30 {dimension_numbers = #tpu.dot_dimension_numbers<[1], [1], [0], [0], [0, 0, 1, 0], [], []>} : vector<8x8xbf16>, vector<8x8xbf16>, vector<8x8xf32> -> vector<8x8xf32>
    %cst_31 = arith.constant dense<0xFF800000> : vector<8xf32>
    %62 = vector.multi_reduction <maximumf>, %61, %cst_31 [1] : vector<8x8xf32> to vector<8xf32>
    %63 = vector.shape_cast %62 : vector<8xf32> to vector<8x1xf32>
    %64 = vector.broadcast %63 : vector<8x1xf32> to vector<8x8xf32>
    %65 = arith.subf %61, %64 : vector<8x8xf32>
    %66 = math.exp %65 : vector<8x8xf32>
    %cst_32 = arith.constant dense<0.000000e+00> : vector<8xf32>
    %67 = vector.multi_reduction <add>, %66, %cst_32 [1] : vector<8x8xf32> to vector<8xf32>
    %68 = vector.shape_cast %67 : vector<8xf32> to vector<8x1xf32>
    %69 = tpu.reciprocal %68 {approx = true} : vector<8x1xf32> -> vector<8x1xf32>
    %70 = vector.broadcast %69 : vector<8x1xf32> to vector<8x8xf32>
    %71 = arith.mulf %66, %70 : vector<8x8xf32>
    %72 = arith.truncf %71 : vector<8x8xf32> to vector<8x8xbf16>
    %73 = vector.extract_strided_slice %24 {offsets = [0, 16], sizes = [8, 8], strides = [1, 1]} : vector<8x32xbf16> to vector<8x8xbf16>
    %cst_33 = arith.constant dense<0.000000e+00> : vector<8x8xf32>
    %74 = tpu.matmul %72, %73, %cst_33 {dimension_numbers = #tpu.dot_dimension_numbers<[1], [0], [0], [1], [0, 0, 1, 1], [], []>} : vector<8x8xbf16>, vector<8x8xbf16>, vector<8x8xf32> -> vector<8x8xf32>
    %c0_34 = arith.constant 0 : index
    %c16 = arith.constant 16 : index
    %75 = vector.load %arg14[%c0_34, %c16] : memref<8x32xf32, #tpu.memory_space<vmem>>, vector<8x8xf32>
    tpu.vector_store %arg14[%c0_34, %c16], %74 {strides = array<i32>} : memref<8x32xf32, #tpu.memory_space<vmem>>, vector<8x8xf32>,
    %76 = vector.extract_strided_slice %12 {offsets = [0, 24], sizes = [8, 8], strides = [1, 1]} : vector<8x32xbf16> to vector<8x8xbf16>
    %77 = vector.extract_strided_slice %18 {offsets = [0, 24], sizes = [8, 8], strides = [1, 1]} : vector<8x32xbf16> to vector<8x8xbf16>
    %cst_35 = arith.constant dense<0.000000e+00> : vector<8x8xf32>
    %78 = tpu.matmul %76, %77, %cst_35 {dimension_numbers = #tpu.dot_dimension_numbers<[1], [1], [0], [0], [0, 0, 1, 0], [], []>} : vector<8x8xbf16>, vector<8x8xbf16>, vector<8x8xf32> -> vector<8x8xf32>
    %cst_36 = arith.constant dense<0xFF800000> : vector<8xf32>
    %79 = vector.multi_reduction <maximumf>, %78, %cst_36 [1] : vector<8x8xf32> to vector<8xf32>
    %80 = vector.shape_cast %79 : vector<8xf32> to vector<8x1xf32>
    %81 = vector.broadcast %80 : vector<8x1xf32> to vector<8x8xf32>
    %82 = arith.subf %78, %81 : vector<8x8xf32>
    %83 = math.exp %82 : vector<8x8xf32>
    %cst_37 = arith.constant dense<0.000000e+00> : vector<8xf32>
    %84 = vector.multi_reduction <add>, %83, %cst_37 [1] : vector<8x8xf32> to vector<8xf32>
    %85 = vector.shape_cast %84 : vector<8xf32> to vector<8x1xf32>
    %86 = tpu.reciprocal %85 {approx = true} : vector<8x1xf32> -> vector<8x1xf32>
    %87 = vector.broadcast %86 : vector<8x1xf32> to vector<8x8xf32>
    %88 = arith.mulf %83, %87 : vector<8x8xf32>
    %89 = arith.truncf %88 : vector<8x8xf32> to vector<8x8xbf16>
    %90 = vector.extract_strided_slice %24 {offsets = [0, 24], sizes = [8, 8], strides = [1, 1]} : vector<8x32xbf16> to vector<8x8xbf16>
    %cst_38 = arith.constant dense<0.000000e+00> : vector<8x8xf32>
    %91 = tpu.matmul %89, %90, %cst_38 {dimension_numbers = #tpu.dot_dimension_numbers<[1], [0], [0], [1], [0, 0, 1, 1], [], []>} : vector<8x8xbf16>, vector<8x8xbf16>, vector<8x8xf32> -> vector<8x8xf32>
    %c0_39 = arith.constant 0 : index
    %c24 = arith.constant 24 : index
    %92 = vector.load %arg14[%c0_39, %c24] : memref<8x32xf32, #tpu.memory_space<vmem>>, vector<8x8xf32>
    tpu.vector_store %arg14[%c0_39, %c24], %91 {strides = array<i32>} : memref<8x32xf32, #tpu.memory_space<vmem>>, vector<8x8xf32>,
    %c0_40 = arith.constant 0 : index
    %c0_41 = arith.constant 0 : index
    %93 = vector.load %arg14[%c0_40, %c0_41] : memref<8x32xf32, #tpu.memory_space<vmem>>, vector<8x32xf32>
    %94 = arith.truncf %93 : vector<8x32xf32> to vector<8x32xbf16>
    %c0_42 = arith.constant 0 : index
    %c0_43 = arith.constant 0 : index
    %95 = vector.load %arg9[%c0_42, %c0_43] : memref<32x32xbf16, #tpu.memory_space<vmem>>, vector<32x32xbf16>
    %cst_44 = arith.constant dense<0.000000e+00> : vector<8x32xf32>
    %96 = tpu.matmul %94, %95, %cst_44 {dimension_numbers = #tpu.dot_dimension_numbers<[1], [0], [0], [1], [0, 0, 1, 1], [], []>} : vector<8x32xbf16>, vector<32x32xbf16>, vector<8x32xf32> -> vector<8x32xf32>
    %c0_45 = arith.constant 0 : index
    %c0_46 = arith.constant 0 : index
    %97 = vector.load %arg10[%c0_45, %c0_46] : memref<1x32xf32, #tpu.memory_space<vmem>>, vector<1x32xf32>
    %98 = vector.broadcast %97 : vector<1x32xf32> to vector<8x32xf32>
    %99 = arith.addf %96, %98 : vector<8x32xf32>
    %100 = arith.addf %1, %99 : vector<8x32xf32>
    %c0_47 = arith.constant 0 : index
    %c0_48 = arith.constant 0 : index
    %101 = vector.load %arg11[%c0_47, %c0_48] : memref<1x32xf32, #tpu.memory_space<vmem>>, vector<1x32xf32>
    %c0_49 = arith.constant 0 : index
    %c0_50 = arith.constant 0 : index
    %102 = vector.load %arg12[%c0_49, %c0_50] : memref<1x32xf32, #tpu.memory_space<vmem>>, vector<1x32xf32>
    %cst_51 = arith.constant dense<0.000000e+00> : vector<8xf32>
    %103 = vector.multi_reduction <add>, %100, %cst_51 [1] : vector<8x32xf32> to vector<8xf32>
    %104 = vector.shape_cast %103 : vector<8xf32> to vector<8x1xf32>
    %cst_52 = arith.constant 3.200000e+01 : f32
    %105 = vector.broadcast %cst_52 : f32 to vector<8x1xf32>
    %106 = arith.divf %104, %105 : vector<8x1xf32>
    %107 = vector.broadcast %106 : vector<8x1xf32> to vector<8x32xf32>
    %108 = arith.subf %100, %107 : vector<8x32xf32>
    %109 = arith.mulf %108, %108 : vector<8x32xf32>
    %cst_53 = arith.constant dense<0.000000e+00> : vector<8xf32>
    %110 = vector.multi_reduction <add>, %109, %cst_53 [1] : vector<8x32xf32> to vector<8xf32>
    %111 = vector.shape_cast %110 : vector<8xf32> to vector<8x1xf32>
    %cst_54 = arith.constant 3.200000e+01 : f32
    %112 = vector.broadcast %cst_54 : f32 to vector<8x1xf32>
    %113 = arith.divf %111, %112 : vector<8x1xf32>
    %cst_55 = arith.constant 9.99999974E-6 : f32
    %114 = vector.broadcast %cst_55 : f32 to vector<8x1xf32>
    %115 = arith.addf %113, %114 : vector<8x1xf32>
    %116 = math.rsqrt %115 : vector<8x1xf32>
    %117 = vector.broadcast %116 : vector<8x1xf32> to vector<8x32xf32>
    %118 = arith.mulf %108, %117 : vector<8x32xf32>
    %119 = vector.broadcast %101 : vector<1x32xf32> to vector<8x32xf32>
    %120 = arith.mulf %118, %119 : vector<8x32xf32>
    %121 = vector.broadcast %102 : vector<1x32xf32> to vector<8x32xf32>
    %122 = arith.addf %120, %121 : vector<8x32xf32>
    %c0_56 = arith.constant 0 : index
    %c0_57 = arith.constant 0 : index
    %c0_58 = arith.constant 0 : index
    %123 = vector.load %arg13[%c0_56, %c0_57, %c0_58] : memref<1x8x32xf32, #tpu.memory_space<vmem>>, vector<1x8x32xf32>
    %124 = vector.shape_cast %123 : vector<1x8x32xf32> to vector<8x32xf32>
    %125 = vector.shape_cast %122 : vector<8x32xf32> to vector<1x8x32xf32>
    tpu.vector_store %arg13[%c0_56, %c0_57, %c0_58], %125 {strides = array<i32>} : memref<1x8x32xf32, #tpu.memory_space<vmem>>, vector<1x8x32xf32>,
    return
  }
  func.func @transform_0(%arg0: i32) -> (i32, i32, i32) {
    %c0_i32 = arith.constant 0 : i32
    %c0_i32_0 = arith.constant 0 : i32
    %c0_i32_1 = arith.constant 0 : i32
    return %arg0, %c0_i32, %c0_i32_0 : i32, i32, i32
  }
  func.func @transform_1(%arg0: i32) -> (i32, i32, i32) {
    %c0_i32 = arith.constant 0 : i32
    %c0_i32_0 = arith.constant 0 : i32
    %c0_i32_1 = arith.constant 0 : i32
    return %arg0, %c0_i32, %c0_i32_0 : i32, i32, i32
  }
  func.func @transform_2(%arg0: i32) -> (i32, i32) {
    %c0_i32 = arith.constant 0 : i32
    %c0_i32_0 = arith.constant 0 : i32
    %c0_i32_1 = arith.constant 0 : i32
    return %c0_i32, %c0_i32_0 : i32, i32
  }
  func.func @transform_3(%arg0: i32) -> (i32, i32) {
    %c0_i32 = arith.constant 0 : i32
    %c0_i32_0 = arith.constant 0 : i32
    %c0_i32_1 = arith.constant 0 : i32
    return %c0_i32, %c0_i32_0 : i32, i32
  }
  func.func @transform_4(%arg0: i32) -> (i32, i32) {
    %c0_i32 = arith.constant 0 : i32
    %c0_i32_0 = arith.constant 0 : i32
    %c0_i32_1 = arith.constant 0 : i32
    return %c0_i32, %c0_i32_0 : i32, i32
  }
  func.func @transform_5(%arg0: i32) -> (i32, i32) {
    %c0_i32 = arith.constant 0 : i32
    %c0_i32_0 = arith.constant 0 : i32
    %c0_i32_1 = arith.constant 0 : i32
    return %c0_i32, %c0_i32_0 : i32, i32
  }
  func.func @transform_6(%arg0: i32) -> (i32, i32) {
    %c0_i32 = arith.constant 0 : i32
    %c0_i32_0 = arith.constant 0 : i32
    %c0_i32_1 = arith.constant 0 : i32
    return %c0_i32, %c0_i32_0 : i32, i32
  }
  func.func @transform_7(%arg0: i32) -> (i32, i32) {
    %c0_i32 = arith.constant 0 : i32
    %c0_i32_0 = arith.constant 0 : i32
    %c0_i32_1 = arith.constant 0 : i32
    return %c0_i32, %c0_i32_0 : i32, i32
  }
  func.func @transform_8(%arg0: i32) -> (i32, i32) {
    %c0_i32 = arith.constant 0 : i32
    %c0_i32_0 = arith.constant 0 : i32
    %c0_i32_1 = arith.constant 0 : i32
    return %c0_i32, %c0_i32_0 : i32, i32
  }
  func.func @transform_9(%arg0: i32) -> (i32, i32) {
    %c0_i32 = arith.constant 0 : i32
    %c0_i32_0 = arith.constant 0 : i32
    %c0_i32_1 = arith.constant 0 : i32
    return %c0_i32, %c0_i32_0 : i32, i32
  }
  func.func @transform_10(%arg0: i32) -> (i32, i32) {
    %c0_i32 = arith.constant 0 : i32
    %c0_i32_0 = arith.constant 0 : i32
    %c0_i32_1 = arith.constant 0 : i32
    return %c0_i32, %c0_i32_0 : i32, i32
  }
  func.func @transform_11(%arg0: i32) -> (i32, i32) {
    %c0_i32 = arith.constant 0 : i32
    %c0_i32_0 = arith.constant 0 : i32
    %c0_i32_1 = arith.constant 0 : i32
    return %c0_i32, %c0_i32_0 : i32, i32
  }
  func.func @transform_12(%arg0: i32) -> (i32, i32, i32) {
    %c0_i32 = arith.constant 0 : i32
    %c0_i32_0 = arith.constant 0 : i32
    %c0_i32_1 = arith.constant 0 : i32
    return %arg0, %c0_i32, %c0_i32_0 : i32, i32, i32
  }
}

module attributes {stable_mosaic.version = 11 : i64} {
  func.func @_mlp_ln_kernel(%arg0: i32, %arg1: i32, %arg2: memref<1x8x32xf32, #tpu.memory_space<vmem>>, %arg3: memref<32x64xbf16, #tpu.memory_space<vmem>>, %arg4: memref<1x64xf32, #tpu.memory_space<vmem>>, %arg5: memref<64x32xbf16, #tpu.memory_space<vmem>>, %arg6: memref<1x32xf32, #tpu.memory_space<vmem>>, %arg7: memref<1x32xf32, #tpu.memory_space<vmem>>, %arg8: memref<1x32xf32, #tpu.memory_space<vmem>>, %arg9: memref<1x8x32xf32, #tpu.memory_space<vmem>>) attributes {dimension_semantics = [#tpu.dimension_semantics<parallel>, #tpu.dimension_semantics<parallel>], iteration_bounds = array<i64: 2, 1>, scalar_prefetch = 0 : i64, scratch_operands = 0 : i64, tpu.core_type = #tpu.core_type<tc>, window_params = [{transform_indices = @transform_0, window_bounds = array<i64: 1, 8, 32>}, {pipeline_mode = #tpu.pipeline_mode<synchronous>, transform_indices = @transform_1, window_bounds = array<i64: 32, 64>}, {pipeline_mode = #tpu.pipeline_mode<synchronous>, transform_indices = @transform_2, window_bounds = array<i64: 1, 64>}, {pipeline_mode = #tpu.pipeline_mode<synchronous>, transform_indices = @transform_3, window_bounds = array<i64: 64, 32>}, {pipeline_mode = #tpu.pipeline_mode<synchronous>, transform_indices = @transform_4, window_bounds = array<i64: 1, 32>}, {pipeline_mode = #tpu.pipeline_mode<synchronous>, transform_indices = @transform_5, window_bounds = array<i64: 1, 32>}, {pipeline_mode = #tpu.pipeline_mode<synchronous>, transform_indices = @transform_6, window_bounds = array<i64: 1, 32>}, {transform_indices = @transform_7, window_bounds = array<i64: 1, 8, 32>}]} {
    %c0 = arith.constant 0 : index
    %c0_0 = arith.constant 0 : index
    %c0_1 = arith.constant 0 : index
    %0 = vector.load %arg2[%c0, %c0_0, %c0_1] : memref<1x8x32xf32, #tpu.memory_space<vmem>>, vector<1x8x32xf32>
    %1 = vector.shape_cast %0 : vector<1x8x32xf32> to vector<8x32xf32>
    %2 = arith.truncf %1 : vector<8x32xf32> to vector<8x32xbf16>
    %c0_2 = arith.constant 0 : index
    %c0_3 = arith.constant 0 : index
    %3 = vector.load %arg3[%c0_2, %c0_3] : memref<32x64xbf16, #tpu.memory_space<vmem>>, vector<32x64xbf16>
    %cst = arith.constant dense<0.000000e+00> : vector<8x64xf32>
    %4 = tpu.matmul %2, %3, %cst {dimension_numbers = #tpu.dot_dimension_numbers<[1], [0], [0], [1], [0, 0, 1, 1], [], []>} : vector<8x32xbf16>, vector<32x64xbf16>, vector<8x64xf32> -> vector<8x64xf32>
    %c0_4 = arith.constant 0 : index
    %c0_5 = arith.constant 0 : index
    %5 = vector.load %arg4[%c0_4, %c0_5] : memref<1x64xf32, #tpu.memory_space<vmem>>, vector<1x64xf32>
    %6 = vector.broadcast %5 : vector<1x64xf32> to vector<8x64xf32>
    %7 = arith.addf %4, %6 : vector<8x64xf32>
    %cst_6 = arith.constant 0.000000e+00 : f32
    %8 = vector.broadcast %cst_6 : f32 to vector<8x64xf32>
    %9 = arith.maximumf %7, %8 : vector<8x64xf32>
    %10 = arith.truncf %9 : vector<8x64xf32> to vector<8x64xbf16>
    %c0_7 = arith.constant 0 : index
    %c0_8 = arith.constant 0 : index
    %11 = vector.load %arg5[%c0_7, %c0_8] : memref<64x32xbf16, #tpu.memory_space<vmem>>, vector<64x32xbf16>
    %cst_9 = arith.constant dense<0.000000e+00> : vector<8x32xf32>
    %12 = tpu.matmul %10, %11, %cst_9 {dimension_numbers = #tpu.dot_dimension_numbers<[1], [0], [0], [1], [0, 0, 1, 1], [], []>} : vector<8x64xbf16>, vector<64x32xbf16>, vector<8x32xf32> -> vector<8x32xf32>
    %c0_10 = arith.constant 0 : index
    %c0_11 = arith.constant 0 : index
    %13 = vector.load %arg6[%c0_10, %c0_11] : memref<1x32xf32, #tpu.memory_space<vmem>>, vector<1x32xf32>
    %14 = vector.broadcast %13 : vector<1x32xf32> to vector<8x32xf32>
    %15 = arith.addf %12, %14 : vector<8x32xf32>
    %16 = arith.addf %1, %15 : vector<8x32xf32>
    %c0_12 = arith.constant 0 : index
    %c0_13 = arith.constant 0 : index
    %17 = vector.load %arg7[%c0_12, %c0_13] : memref<1x32xf32, #tpu.memory_space<vmem>>, vector<1x32xf32>
    %c0_14 = arith.constant 0 : index
    %c0_15 = arith.constant 0 : index
    %18 = vector.load %arg8[%c0_14, %c0_15] : memref<1x32xf32, #tpu.memory_space<vmem>>, vector<1x32xf32>
    %cst_16 = arith.constant dense<0.000000e+00> : vector<8xf32>
    %19 = vector.multi_reduction <add>, %16, %cst_16 [1] : vector<8x32xf32> to vector<8xf32>
    %20 = vector.shape_cast %19 : vector<8xf32> to vector<8x1xf32>
    %cst_17 = arith.constant 3.200000e+01 : f32
    %21 = vector.broadcast %cst_17 : f32 to vector<8x1xf32>
    %22 = arith.divf %20, %21 : vector<8x1xf32>
    %23 = vector.broadcast %22 : vector<8x1xf32> to vector<8x32xf32>
    %24 = arith.subf %16, %23 : vector<8x32xf32>
    %25 = arith.mulf %24, %24 : vector<8x32xf32>
    %cst_18 = arith.constant dense<0.000000e+00> : vector<8xf32>
    %26 = vector.multi_reduction <add>, %25, %cst_18 [1] : vector<8x32xf32> to vector<8xf32>
    %27 = vector.shape_cast %26 : vector<8xf32> to vector<8x1xf32>
    %cst_19 = arith.constant 3.200000e+01 : f32
    %28 = vector.broadcast %cst_19 : f32 to vector<8x1xf32>
    %29 = arith.divf %27, %28 : vector<8x1xf32>
    %cst_20 = arith.constant 9.99999974E-6 : f32
    %30 = vector.broadcast %cst_20 : f32 to vector<8x1xf32>
    %31 = arith.addf %29, %30 : vector<8x1xf32>
    %32 = math.rsqrt %31 : vector<8x1xf32>
    %33 = vector.broadcast %32 : vector<8x1xf32> to vector<8x32xf32>
    %34 = arith.mulf %24, %33 : vector<8x32xf32>
    %35 = vector.broadcast %17 : vector<1x32xf32> to vector<8x32xf32>
    %36 = arith.mulf %34, %35 : vector<8x32xf32>
    %37 = vector.broadcast %18 : vector<1x32xf32> to vector<8x32xf32>
    %38 = arith.addf %36, %37 : vector<8x32xf32>
    %c0_21 = arith.constant 0 : index
    %c0_22 = arith.constant 0 : index
    %c0_23 = arith.constant 0 : index
    %39 = vector.load %arg9[%c0_21, %c0_22, %c0_23] : memref<1x8x32xf32, #tpu.memory_space<vmem>>, vector<1x8x32xf32>
    %40 = vector.shape_cast %39 : vector<1x8x32xf32> to vector<8x32xf32>
    %41 = vector.shape_cast %38 : vector<8x32xf32> to vector<1x8x32xf32>
    tpu.vector_store %arg9[%c0_21, %c0_22, %c0_23], %41 {strides = array<i32>} : memref<1x8x32xf32, #tpu.memory_space<vmem>>, vector<1x8x32xf32>,
    return
  }
  func.func @transform_0(%arg0: i32, %arg1: i32) -> (i32, i32, i32) {
    %c0_i32 = arith.constant 0 : i32
    %c0_i32_0 = arith.constant 0 : i32
    return %arg0, %arg1, %c0_i32 : i32, i32, i32
  }
  func.func @transform_1(%arg0: i32, %arg1: i32) -> (i32, i32) {
    %c0_i32 = arith.constant 0 : i32
    %c0_i32_0 = arith.constant 0 : i32
    %c0_i32_1 = arith.constant 0 : i32
    return %c0_i32, %c0_i32_0 : i32, i32
  }
  func.func @transform_2(%arg0: i32, %arg1: i32) -> (i32, i32) {
    %c0_i32 = arith.constant 0 : i32
    %c0_i32_0 = arith.constant 0 : i32
    %c0_i32_1 = arith.constant 0 : i32
    return %c0_i32, %c0_i32_0 : i32, i32
  }
  func.func @transform_3(%arg0: i32, %arg1: i32) -> (i32, i32) {
    %c0_i32 = arith.constant 0 : i32
    %c0_i32_0 = arith.constant 0 : i32
    %c0_i32_1 = arith.constant 0 : i32
    return %c0_i32, %c0_i32_0 : i32, i32
  }
  func.func @transform_4(%arg0: i32, %arg1: i32) -> (i32, i32) {
    %c0_i32 = arith.constant 0 : i32
    %c0_i32_0 = arith.constant 0 : i32
    %c0_i32_1 = arith.constant 0 : i32
    return %c0_i32, %c0_i32_0 : i32, i32
  }
  func.func @transform_5(%arg0: i32, %arg1: i32) -> (i32, i32) {
    %c0_i32 = arith.constant 0 : i32
    %c0_i32_0 = arith.constant 0 : i32
    %c0_i32_1 = arith.constant 0 : i32
    return %c0_i32, %c0_i32_0 : i32, i32
  }
  func.func @transform_6(%arg0: i32, %arg1: i32) -> (i32, i32) {
    %c0_i32 = arith.constant 0 : i32
    %c0_i32_0 = arith.constant 0 : i32
    %c0_i32_1 = arith.constant 0 : i32
    return %c0_i32, %c0_i32_0 : i32, i32
  }
  func.func @transform_7(%arg0: i32, %arg1: i32) -> (i32, i32, i32) {
    %c0_i32 = arith.constant 0 : i32
    %c0_i32_0 = arith.constant 0 : i32
    return %arg0, %arg1, %c0_i32 : i32, i32, i32
  }
}

module attributes {stable_mosaic.version = 11 : i64} {
  func.func @_cross_attn_ln_kernel(%arg0: i32, %arg1: i32, %arg2: memref<1x8x32xf32, #tpu.memory_space<vmem>>, %arg3: memref<1x8x32xf32, #tpu.memory_space<vmem>>, %arg4: memref<1x64x32xf32, #tpu.memory_space<vmem>>, %arg5: memref<1x64x32xf32, #tpu.memory_space<vmem>>, %arg6: memref<32x16xbf16, #tpu.memory_space<vmem>>, %arg7: memref<1x16xf32, #tpu.memory_space<vmem>>, %arg8: memref<32x16xbf16, #tpu.memory_space<vmem>>, %arg9: memref<1x16xf32, #tpu.memory_space<vmem>>, %arg10: memref<32x16xbf16, #tpu.memory_space<vmem>>, %arg11: memref<1x16xf32, #tpu.memory_space<vmem>>, %arg12: memref<16x32xbf16, #tpu.memory_space<vmem>>, %arg13: memref<1x32xf32, #tpu.memory_space<vmem>>, %arg14: memref<1x32xf32, #tpu.memory_space<vmem>>, %arg15: memref<1x32xf32, #tpu.memory_space<vmem>>, %arg16: memref<1x8x32xf32, #tpu.memory_space<vmem>>, %arg17: memref<8x16xf32, #tpu.memory_space<vmem>>) attributes {dimension_semantics = [#tpu.dimension_semantics<parallel>, #tpu.dimension_semantics<parallel>], iteration_bounds = array<i64: 2, 1>, scalar_prefetch = 0 : i64, scratch_operands = 1 : i64, tpu.core_type = #tpu.core_type<tc>, window_params = [{transform_indices = @transform_0, window_bounds = array<i64: 1, 8, 32>}, {transform_indices = @transform_1, window_bounds = array<i64: 1, 8, 32>}, {transform_indices = @transform_2, window_bounds = array<i64: 1, 64, 32>}, {transform_indices = @transform_3, window_bounds = array<i64: 1, 64, 32>}, {pipeline_mode = #tpu.pipeline_mode<synchronous>, transform_indices = @transform_4, window_bounds = array<i64: 32, 16>}, {pipeline_mode = #tpu.pipeline_mode<synchronous>, transform_indices = @transform_5, window_bounds = array<i64: 1, 16>}, {pipeline_mode = #tpu.pipeline_mode<synchronous>, transform_indices = @transform_6, window_bounds = array<i64: 32, 16>}, {pipeline_mode = #tpu.pipeline_mode<synchronous>, transform_indices = @transform_7, window_bounds = array<i64: 1, 16>}, {pipeline_mode = #tpu.pipeline_mode<synchronous>, transform_indices = @transform_8, window_bounds = array<i64: 32, 16>}, {pipeline_mode = #tpu.pipeline_mode<synchronous>, transform_indices = @transform_9, window_bounds = array<i64: 1, 16>}, {pipeline_mode = #tpu.pipeline_mode<synchronous>, transform_indices = @transform_10, window_bounds = array<i64: 16, 32>}, {pipeline_mode = #tpu.pipeline_mode<synchronous>, transform_indices = @transform_11, window_bounds = array<i64: 1, 32>}, {pipeline_mode = #tpu.pipeline_mode<synchronous>, transform_indices = @transform_12, window_bounds = array<i64: 1, 32>}, {pipeline_mode = #tpu.pipeline_mode<synchronous>, transform_indices = @transform_13, window_bounds = array<i64: 1, 32>}, {transform_indices = @transform_14, window_bounds = array<i64: 1, 8, 32>}]} {
    %c0 = arith.constant 0 : index
    %c0_0 = arith.constant 0 : index
    %c0_1 = arith.constant 0 : index
    %0 = vector.load %arg2[%c0, %c0_0, %c0_1] : memref<1x8x32xf32, #tpu.memory_space<vmem>>, vector<1x8x32xf32>
    %1 = vector.shape_cast %0 : vector<1x8x32xf32> to vector<8x32xf32>
    %c0_2 = arith.constant 0 : index
    %c0_3 = arith.constant 0 : index
    %c0_4 = arith.constant 0 : index
    %2 = vector.load %arg4[%c0_2, %c0_3, %c0_4] : memref<1x64x32xf32, #tpu.memory_space<vmem>>, vector<1x64x32xf32>
    %3 = vector.shape_cast %2 : vector<1x64x32xf32> to vector<64x32xf32>
    %c0_5 = arith.constant 0 : index
    %c0_6 = arith.constant 0 : index
    %c0_7 = arith.constant 0 : index
    %4 = vector.load %arg3[%c0_5, %c0_6, %c0_7] : memref<1x8x32xf32, #tpu.memory_space<vmem>>, vector<1x8x32xf32>
    %5 = vector.shape_cast %4 : vector<1x8x32xf32> to vector<8x32xf32>
    %6 = arith.addf %1, %5 : vector<8x32xf32>
    %7 = arith.truncf %6 : vector<8x32xf32> to vector<8x32xbf16>
    %c0_8 = arith.constant 0 : index
    %c0_9 = arith.constant 0 : index
    %c0_10 = arith.constant 0 : index
    %8 = vector.load %arg5[%c0_8, %c0_9, %c0_10] : memref<1x64x32xf32, #tpu.memory_space<vmem>>, vector<1x64x32xf32>
    %9 = vector.shape_cast %8 : vector<1x64x32xf32> to vector<64x32xf32>
    %10 = arith.addf %3, %9 : vector<64x32xf32>
    %11 = arith.truncf %10 : vector<64x32xf32> to vector<64x32xbf16>
    %12 = arith.truncf %3 : vector<64x32xf32> to vector<64x32xbf16>
    %c0_11 = arith.constant 0 : index
    %c0_12 = arith.constant 0 : index
    %13 = vector.load %arg6[%c0_11, %c0_12] : memref<32x16xbf16, #tpu.memory_space<vmem>>, vector<32x16xbf16>
    %cst = arith.constant dense<0.000000e+00> : vector<8x16xf32>
    %14 = tpu.matmul %7, %13, %cst {dimension_numbers = #tpu.dot_dimension_numbers<[1], [0], [0], [1], [0, 0, 1, 1], [], []>} : vector<8x32xbf16>, vector<32x16xbf16>, vector<8x16xf32> -> vector<8x16xf32>
    %c0_13 = arith.constant 0 : index
    %c0_14 = arith.constant 0 : index
    %15 = vector.load %arg7[%c0_13, %c0_14] : memref<1x16xf32, #tpu.memory_space<vmem>>, vector<1x16xf32>
    %16 = vector.broadcast %15 : vector<1x16xf32> to vector<8x16xf32>
    %17 = arith.addf %14, %16 : vector<8x16xf32>
    %18 = arith.truncf %17 : vector<8x16xf32> to vector<8x16xbf16>
    %c0_15 = arith.constant 0 : index
    %c0_16 = arith.constant 0 : index
    %19 = vector.load %arg8[%c0_15, %c0_16] : memref<32x16xbf16, #tpu.memory_space<vmem>>, vector<32x16xbf16>
    %cst_17 = arith.constant dense<0.000000e+00> : vector<64x16xf32>
    %20 = tpu.matmul %11, %19, %cst_17 {dimension_numbers = #tpu.dot_dimension_numbers<[1], [0], [0], [1], [0, 0, 1, 1], [], []>} : vector<64x32xbf16>, vector<32x16xbf16>, vector<64x16xf32> -> vector<64x16xf32>
    %c0_18 = arith.constant 0 : index
    %c0_19 = arith.constant 0 : index
    %21 = vector.load %arg9[%c0_18, %c0_19] : memref<1x16xf32, #tpu.memory_space<vmem>>, vector<1x16xf32>
    %22 = vector.broadcast %21 : vector<1x16xf32> to vector<64x16xf32>
    %23 = arith.addf %20, %22 : vector<64x16xf32>
    %24 = arith.truncf %23 : vector<64x16xf32> to vector<64x16xbf16>
    %c0_20 = arith.constant 0 : index
    %c0_21 = arith.constant 0 : index
    %25 = vector.load %arg10[%c0_20, %c0_21] : memref<32x16xbf16, #tpu.memory_space<vmem>>, vector<32x16xbf16>
    %cst_22 = arith.constant dense<0.000000e+00> : vector<64x16xf32>
    %26 = tpu.matmul %12, %25, %cst_22 {dimension_numbers = #tpu.dot_dimension_numbers<[1], [0], [0], [1], [0, 0, 1, 1], [], []>} : vector<64x32xbf16>, vector<32x16xbf16>, vector<64x16xf32> -> vector<64x16xf32>
    %c0_23 = arith.constant 0 : index
    %c0_24 = arith.constant 0 : index
    %27 = vector.load %arg11[%c0_23, %c0_24] : memref<1x16xf32, #tpu.memory_space<vmem>>, vector<1x16xf32>
    %28 = vector.broadcast %27 : vector<1x16xf32> to vector<64x16xf32>
    %29 = arith.addf %26, %28 : vector<64x16xf32>
    %30 = arith.truncf %29 : vector<64x16xf32> to vector<64x16xbf16>
    %31 = vector.extract_strided_slice %18 {offsets = [0, 0], sizes = [8, 4], strides = [1, 1]} : vector<8x16xbf16> to vector<8x4xbf16>
    %32 = vector.extract_strided_slice %24 {offsets = [0, 0], sizes = [64, 4], strides = [1, 1]} : vector<64x16xbf16> to vector<64x4xbf16>
    %cst_25 = arith.constant dense<0.000000e+00> : vector<8x64xf32>
    %33 = tpu.matmul %31, %32, %cst_25 {dimension_numbers = #tpu.dot_dimension_numbers<[1], [1], [0], [0], [0, 0, 1, 0], [], []>} : vector<8x4xbf16>, vector<64x4xbf16>, vector<8x64xf32> -> vector<8x64xf32>
    %cst_26 = arith.constant dense<0xFF800000> : vector<8xf32>
    %34 = vector.multi_reduction <maximumf>, %33, %cst_26 [1] : vector<8x64xf32> to vector<8xf32>
    %35 = vector.shape_cast %34 : vector<8xf32> to vector<8x1xf32>
    %36 = vector.broadcast %35 : vector<8x1xf32> to vector<8x64xf32>
    %37 = arith.subf %33, %36 : vector<8x64xf32>
    %38 = math.exp %37 : vector<8x64xf32>
    %cst_27 = arith.constant dense<0.000000e+00> : vector<8xf32>
    %39 = vector.multi_reduction <add>, %38, %cst_27 [1] : vector<8x64xf32> to vector<8xf32>
    %40 = vector.shape_cast %39 : vector<8xf32> to vector<8x1xf32>
    %41 = tpu.reciprocal %40 {approx = true} : vector<8x1xf32> -> vector<8x1xf32>
    %42 = vector.broadcast %41 : vector<8x1xf32> to vector<8x64xf32>
    %43 = arith.mulf %38, %42 : vector<8x64xf32>
    %44 = arith.truncf %43 : vector<8x64xf32> to vector<8x64xbf16>
    %45 = vector.extract_strided_slice %30 {offsets = [0, 0], sizes = [64, 4], strides = [1, 1]} : vector<64x16xbf16> to vector<64x4xbf16>
    %cst_28 = arith.constant dense<0.000000e+00> : vector<8x4xf32>
    %46 = tpu.matmul %44, %45, %cst_28 {dimension_numbers = #tpu.dot_dimension_numbers<[1], [0], [0], [1], [0, 0, 1, 1], [], []>} : vector<8x64xbf16>, vector<64x4xbf16>, vector<8x4xf32> -> vector<8x4xf32>
    %c0_29 = arith.constant 0 : index
    %c0_30 = arith.constant 0 : index
    %47 = vector.load %arg17[%c0_29, %c0_30] : memref<8x16xf32, #tpu.memory_space<vmem>>, vector<8x4xf32>
    tpu.vector_store %arg17[%c0_29, %c0_30], %46 {strides = array<i32>} : memref<8x16xf32, #tpu.memory_space<vmem>>, vector<8x4xf32>,
    %48 = vector.extract_strided_slice %18 {offsets = [0, 4], sizes = [8, 4], strides = [1, 1]} : vector<8x16xbf16> to vector<8x4xbf16>
    %49 = vector.extract_strided_slice %24 {offsets = [0, 4], sizes = [64, 4], strides = [1, 1]} : vector<64x16xbf16> to vector<64x4xbf16>
    %cst_31 = arith.constant dense<0.000000e+00> : vector<8x64xf32>
    %50 = tpu.matmul %48, %49, %cst_31 {dimension_numbers = #tpu.dot_dimension_numbers<[1], [1], [0], [0], [0, 0, 1, 0], [], []>} : vector<8x4xbf16>, vector<64x4xbf16>, vector<8x64xf32> -> vector<8x64xf32>
    %cst_32 = arith.constant dense<0xFF800000> : vector<8xf32>
    %51 = vector.multi_reduction <maximumf>, %50, %cst_32 [1] : vector<8x64xf32> to vector<8xf32>
    %52 = vector.shape_cast %51 : vector<8xf32> to vector<8x1xf32>
    %53 = vector.broadcast %52 : vector<8x1xf32> to vector<8x64xf32>
    %54 = arith.subf %50, %53 : vector<8x64xf32>
    %55 = math.exp %54 : vector<8x64xf32>
    %cst_33 = arith.constant dense<0.000000e+00> : vector<8xf32>
    %56 = vector.multi_reduction <add>, %55, %cst_33 [1] : vector<8x64xf32> to vector<8xf32>
    %57 = vector.shape_cast %56 : vector<8xf32> to vector<8x1xf32>
    %58 = tpu.reciprocal %57 {approx = true} : vector<8x1xf32> -> vector<8x1xf32>
    %59 = vector.broadcast %58 : vector<8x1xf32> to vector<8x64xf32>
    %60 = arith.mulf %55, %59 : vector<8x64xf32>
    %61 = arith.truncf %60 : vector<8x64xf32> to vector<8x64xbf16>
    %62 = vector.extract_strided_slice %30 {offsets = [0, 4], sizes = [64, 4], strides = [1, 1]} : vector<64x16xbf16> to vector<64x4xbf16>
    %cst_34 = arith.constant dense<0.000000e+00> : vector<8x4xf32>
    %63 = tpu.matmul %61, %62, %cst_34 {dimension_numbers = #tpu.dot_dimension_numbers<[1], [0], [0], [1], [0, 0, 1, 1], [], []>} : vector<8x64xbf16>, vector<64x4xbf16>, vector<8x4xf32> -> vector<8x4xf32>
    %c0_35 = arith.constant 0 : index
    %c4 = arith.constant 4 : index
    %64 = vector.load %arg17[%c0_35, %c4] : memref<8x16xf32, #tpu.memory_space<vmem>>, vector<8x4xf32>
    tpu.vector_store %arg17[%c0_35, %c4], %63 {strides = array<i32>} : memref<8x16xf32, #tpu.memory_space<vmem>>, vector<8x4xf32>,
    %65 = vector.extract_strided_slice %18 {offsets = [0, 8], sizes = [8, 4], strides = [1, 1]} : vector<8x16xbf16> to vector<8x4xbf16>
    %66 = vector.extract_strided_slice %24 {offsets = [0, 8], sizes = [64, 4], strides = [1, 1]} : vector<64x16xbf16> to vector<64x4xbf16>
    %cst_36 = arith.constant dense<0.000000e+00> : vector<8x64xf32>
    %67 = tpu.matmul %65, %66, %cst_36 {dimension_numbers = #tpu.dot_dimension_numbers<[1], [1], [0], [0], [0, 0, 1, 0], [], []>} : vector<8x4xbf16>, vector<64x4xbf16>, vector<8x64xf32> -> vector<8x64xf32>
    %cst_37 = arith.constant dense<0xFF800000> : vector<8xf32>
    %68 = vector.multi_reduction <maximumf>, %67, %cst_37 [1] : vector<8x64xf32> to vector<8xf32>
    %69 = vector.shape_cast %68 : vector<8xf32> to vector<8x1xf32>
    %70 = vector.broadcast %69 : vector<8x1xf32> to vector<8x64xf32>
    %71 = arith.subf %67, %70 : vector<8x64xf32>
    %72 = math.exp %71 : vector<8x64xf32>
    %cst_38 = arith.constant dense<0.000000e+00> : vector<8xf32>
    %73 = vector.multi_reduction <add>, %72, %cst_38 [1] : vector<8x64xf32> to vector<8xf32>
    %74 = vector.shape_cast %73 : vector<8xf32> to vector<8x1xf32>
    %75 = tpu.reciprocal %74 {approx = true} : vector<8x1xf32> -> vector<8x1xf32>
    %76 = vector.broadcast %75 : vector<8x1xf32> to vector<8x64xf32>
    %77 = arith.mulf %72, %76 : vector<8x64xf32>
    %78 = arith.truncf %77 : vector<8x64xf32> to vector<8x64xbf16>
    %79 = vector.extract_strided_slice %30 {offsets = [0, 8], sizes = [64, 4], strides = [1, 1]} : vector<64x16xbf16> to vector<64x4xbf16>
    %cst_39 = arith.constant dense<0.000000e+00> : vector<8x4xf32>
    %80 = tpu.matmul %78, %79, %cst_39 {dimension_numbers = #tpu.dot_dimension_numbers<[1], [0], [0], [1], [0, 0, 1, 1], [], []>} : vector<8x64xbf16>, vector<64x4xbf16>, vector<8x4xf32> -> vector<8x4xf32>
    %c0_40 = arith.constant 0 : index
    %c8 = arith.constant 8 : index
    %81 = vector.load %arg17[%c0_40, %c8] : memref<8x16xf32, #tpu.memory_space<vmem>>, vector<8x4xf32>
    tpu.vector_store %arg17[%c0_40, %c8], %80 {strides = array<i32>} : memref<8x16xf32, #tpu.memory_space<vmem>>, vector<8x4xf32>,
    %82 = vector.extract_strided_slice %18 {offsets = [0, 12], sizes = [8, 4], strides = [1, 1]} : vector<8x16xbf16> to vector<8x4xbf16>
    %83 = vector.extract_strided_slice %24 {offsets = [0, 12], sizes = [64, 4], strides = [1, 1]} : vector<64x16xbf16> to vector<64x4xbf16>
    %cst_41 = arith.constant dense<0.000000e+00> : vector<8x64xf32>
    %84 = tpu.matmul %82, %83, %cst_41 {dimension_numbers = #tpu.dot_dimension_numbers<[1], [1], [0], [0], [0, 0, 1, 0], [], []>} : vector<8x4xbf16>, vector<64x4xbf16>, vector<8x64xf32> -> vector<8x64xf32>
    %cst_42 = arith.constant dense<0xFF800000> : vector<8xf32>
    %85 = vector.multi_reduction <maximumf>, %84, %cst_42 [1] : vector<8x64xf32> to vector<8xf32>
    %86 = vector.shape_cast %85 : vector<8xf32> to vector<8x1xf32>
    %87 = vector.broadcast %86 : vector<8x1xf32> to vector<8x64xf32>
    %88 = arith.subf %84, %87 : vector<8x64xf32>
    %89 = math.exp %88 : vector<8x64xf32>
    %cst_43 = arith.constant dense<0.000000e+00> : vector<8xf32>
    %90 = vector.multi_reduction <add>, %89, %cst_43 [1] : vector<8x64xf32> to vector<8xf32>
    %91 = vector.shape_cast %90 : vector<8xf32> to vector<8x1xf32>
    %92 = tpu.reciprocal %91 {approx = true} : vector<8x1xf32> -> vector<8x1xf32>
    %93 = vector.broadcast %92 : vector<8x1xf32> to vector<8x64xf32>
    %94 = arith.mulf %89, %93 : vector<8x64xf32>
    %95 = arith.truncf %94 : vector<8x64xf32> to vector<8x64xbf16>
    %96 = vector.extract_strided_slice %30 {offsets = [0, 12], sizes = [64, 4], strides = [1, 1]} : vector<64x16xbf16> to vector<64x4xbf16>
    %cst_44 = arith.constant dense<0.000000e+00> : vector<8x4xf32>
    %97 = tpu.matmul %95, %96, %cst_44 {dimension_numbers = #tpu.dot_dimension_numbers<[1], [0], [0], [1], [0, 0, 1, 1], [], []>} : vector<8x64xbf16>, vector<64x4xbf16>, vector<8x4xf32> -> vector<8x4xf32>
    %c0_45 = arith.constant 0 : index
    %c12 = arith.constant 12 : index
    %98 = vector.load %arg17[%c0_45, %c12] : memref<8x16xf32, #tpu.memory_space<vmem>>, vector<8x4xf32>
    tpu.vector_store %arg17[%c0_45, %c12], %97 {strides = array<i32>} : memref<8x16xf32, #tpu.memory_space<vmem>>, vector<8x4xf32>,
    %c0_46 = arith.constant 0 : index
    %c0_47 = arith.constant 0 : index
    %99 = vector.load %arg17[%c0_46, %c0_47] : memref<8x16xf32, #tpu.memory_space<vmem>>, vector<8x16xf32>
    %100 = arith.truncf %99 : vector<8x16xf32> to vector<8x16xbf16>
    %c0_48 = arith.constant 0 : index
    %c0_49 = arith.constant 0 : index
    %101 = vector.load %arg12[%c0_48, %c0_49] : memref<16x32xbf16, #tpu.memory_space<vmem>>, vector<16x32xbf16>
    %cst_50 = arith.constant dense<0.000000e+00> : vector<8x32xf32>
    %102 = tpu.matmul %100, %101, %cst_50 {dimension_numbers = #tpu.dot_dimension_numbers<[1], [0], [0], [1], [0, 0, 1, 1], [], []>} : vector<8x16xbf16>, vector<16x32xbf16>, vector<8x32xf32> -> vector<8x32xf32>
    %c0_51 = arith.constant 0 : index
    %c0_52 = arith.constant 0 : index
    %103 = vector.load %arg13[%c0_51, %c0_52] : memref<1x32xf32, #tpu.memory_space<vmem>>, vector<1x32xf32>
    %104 = vector.broadcast %103 : vector<1x32xf32> to vector<8x32xf32>
    %105 = arith.addf %102, %104 : vector<8x32xf32>
    %106 = arith.addf %1, %105 : vector<8x32xf32>
    %c0_53 = arith.constant 0 : index
    %c0_54 = arith.constant 0 : index
    %107 = vector.load %arg14[%c0_53, %c0_54] : memref<1x32xf32, #tpu.memory_space<vmem>>, vector<1x32xf32>
    %c0_55 = arith.constant 0 : index
    %c0_56 = arith.constant 0 : index
    %108 = vector.load %arg15[%c0_55, %c0_56] : memref<1x32xf32, #tpu.memory_space<vmem>>, vector<1x32xf32>
    %cst_57 = arith.constant dense<0.000000e+00> : vector<8xf32>
    %109 = vector.multi_reduction <add>, %106, %cst_57 [1] : vector<8x32xf32> to vector<8xf32>
    %110 = vector.shape_cast %109 : vector<8xf32> to vector<8x1xf32>
    %cst_58 = arith.constant 3.200000e+01 : f32
    %111 = vector.broadcast %cst_58 : f32 to vector<8x1xf32>
    %112 = arith.divf %110, %111 : vector<8x1xf32>
    %113 = vector.broadcast %112 : vector<8x1xf32> to vector<8x32xf32>
    %114 = arith.subf %106, %113 : vector<8x32xf32>
    %115 = arith.mulf %114, %114 : vector<8x32xf32>
    %cst_59 = arith.constant dense<0.000000e+00> : vector<8xf32>
    %116 = vector.multi_reduction <add>, %115, %cst_59 [1] : vector<8x32xf32> to vector<8xf32>
    %117 = vector.shape_cast %116 : vector<8xf32> to vector<8x1xf32>
    %cst_60 = arith.constant 3.200000e+01 : f32
    %118 = vector.broadcast %cst_60 : f32 to vector<8x1xf32>
    %119 = arith.divf %117, %118 : vector<8x1xf32>
    %cst_61 = arith.constant 9.99999974E-6 : f32
    %120 = vector.broadcast %cst_61 : f32 to vector<8x1xf32>
    %121 = arith.addf %119, %120 : vector<8x1xf32>
    %122 = math.rsqrt %121 : vector<8x1xf32>
    %123 = vector.broadcast %122 : vector<8x1xf32> to vector<8x32xf32>
    %124 = arith.mulf %114, %123 : vector<8x32xf32>
    %125 = vector.broadcast %107 : vector<1x32xf32> to vector<8x32xf32>
    %126 = arith.mulf %124, %125 : vector<8x32xf32>
    %127 = vector.broadcast %108 : vector<1x32xf32> to vector<8x32xf32>
    %128 = arith.addf %126, %127 : vector<8x32xf32>
    %c0_62 = arith.constant 0 : index
    %c0_63 = arith.constant 0 : index
    %c0_64 = arith.constant 0 : index
    %129 = vector.load %arg16[%c0_62, %c0_63, %c0_64] : memref<1x8x32xf32, #tpu.memory_space<vmem>>, vector<1x8x32xf32>
    %130 = vector.shape_cast %129 : vector<1x8x32xf32> to vector<8x32xf32>
    %131 = vector.shape_cast %128 : vector<8x32xf32> to vector<1x8x32xf32>
    tpu.vector_store %arg16[%c0_62, %c0_63, %c0_64], %131 {strides = array<i32>} : memref<1x8x32xf32, #tpu.memory_space<vmem>>, vector<1x8x32xf32>,
    return
  }
  func.func @transform_0(%arg0: i32, %arg1: i32) -> (i32, i32, i32) {
    %c0_i32 = arith.constant 0 : i32
    %c0_i32_0 = arith.constant 0 : i32
    return %arg0, %arg1, %c0_i32 : i32, i32, i32
  }
  func.func @transform_1(%arg0: i32, %arg1: i32) -> (i32, i32, i32) {
    %c0_i32 = arith.constant 0 : i32
    %c0_i32_0 = arith.constant 0 : i32
    return %arg0, %arg1, %c0_i32 : i32, i32, i32
  }
  func.func @transform_2(%arg0: i32, %arg1: i32) -> (i32, i32, i32) {
    %c0_i32 = arith.constant 0 : i32
    %c0_i32_0 = arith.constant 0 : i32
    %c0_i32_1 = arith.constant 0 : i32
    return %arg0, %c0_i32, %c0_i32_0 : i32, i32, i32
  }
  func.func @transform_3(%arg0: i32, %arg1: i32) -> (i32, i32, i32) {
    %c0_i32 = arith.constant 0 : i32
    %c0_i32_0 = arith.constant 0 : i32
    %c0_i32_1 = arith.constant 0 : i32
    return %arg0, %c0_i32, %c0_i32_0 : i32, i32, i32
  }
  func.func @transform_4(%arg0: i32, %arg1: i32) -> (i32, i32) {
    %c0_i32 = arith.constant 0 : i32
    %c0_i32_0 = arith.constant 0 : i32
    %c0_i32_1 = arith.constant 0 : i32
    return %c0_i32, %c0_i32_0 : i32, i32
  }
  func.func @transform_5(%arg0: i32, %arg1: i32) -> (i32, i32) {
    %c0_i32 = arith.constant 0 : i32
    %c0_i32_0 = arith.constant 0 : i32
    %c0_i32_1 = arith.constant 0 : i32
    return %c0_i32, %c0_i32_0 : i32, i32
  }
  func.func @transform_6(%arg0: i32, %arg1: i32) -> (i32, i32) {
    %c0_i32 = arith.constant 0 : i32
    %c0_i32_0 = arith.constant 0 : i32
    %c0_i32_1 = arith.constant 0 : i32
    return %c0_i32, %c0_i32_0 : i32, i32
  }
  func.func @transform_7(%arg0: i32, %arg1: i32) -> (i32, i32) {
    %c0_i32 = arith.constant 0 : i32
    %c0_i32_0 = arith.constant 0 : i32
    %c0_i32_1 = arith.constant 0 : i32
    return %c0_i32, %c0_i32_0 : i32, i32
  }
  func.func @transform_8(%arg0: i32, %arg1: i32) -> (i32, i32) {
    %c0_i32 = arith.constant 0 : i32
    %c0_i32_0 = arith.constant 0 : i32
    %c0_i32_1 = arith.constant 0 : i32
    return %c0_i32, %c0_i32_0 : i32, i32
  }
  func.func @transform_9(%arg0: i32, %arg1: i32) -> (i32, i32) {
    %c0_i32 = arith.constant 0 : i32
    %c0_i32_0 = arith.constant 0 : i32
    %c0_i32_1 = arith.constant 0 : i32
    return %c0_i32, %c0_i32_0 : i32, i32
  }
  func.func @transform_10(%arg0: i32, %arg1: i32) -> (i32, i32) {
    %c0_i32 = arith.constant 0 : i32
    %c0_i32_0 = arith.constant 0 : i32
    %c0_i32_1 = arith.constant 0 : i32
    return %c0_i32, %c0_i32_0 : i32, i32
  }
  func.func @transform_11(%arg0: i32, %arg1: i32) -> (i32, i32) {
    %c0_i32 = arith.constant 0 : i32
    %c0_i32_0 = arith.constant 0 : i32
    %c0_i32_1 = arith.constant 0 : i32
    return %c0_i32, %c0_i32_0 : i32, i32
  }
  func.func @transform_12(%arg0: i32, %arg1: i32) -> (i32, i32) {
    %c0_i32 = arith.constant 0 : i32
    %c0_i32_0 = arith.constant 0 : i32
    %c0_i32_1 = arith.constant 0 : i32
    return %c0_i32, %c0_i32_0 : i32, i32
  }
  func.func @transform_13(%arg0: i32, %arg1: i32) -> (i32, i32) {
    %c0_i32 = arith.constant 0 : i32
    %c0_i32_0 = arith.constant 0 : i32
    %c0_i32_1 = arith.constant 0 : i32
    return %c0_i32, %c0_i32_0 : i32, i32
  }
  func.func @transform_14(%arg0: i32, %arg1: i32) -> (i32, i32, i32) {
    %c0_i32 = arith.constant 0 : i32
    %c0_i32_0 = arith.constant 0 : i32
    return %arg0, %arg1, %c0_i32 : i32, i32, i32
  }
}

module attributes {stable_mosaic.version = 11 : i64} {
  func.func @_cross_attn_ln_kernel(%arg0: i32, %arg1: i32, %arg2: memref<1x64x32xf32, #tpu.memory_space<vmem>>, %arg3: memref<1x64x32xf32, #tpu.memory_space<vmem>>, %arg4: memref<1x8x32xf32, #tpu.memory_space<vmem>>, %arg5: memref<1x8x32xf32, #tpu.memory_space<vmem>>, %arg6: memref<32x16xbf16, #tpu.memory_space<vmem>>, %arg7: memref<1x16xf32, #tpu.memory_space<vmem>>, %arg8: memref<32x16xbf16, #tpu.memory_space<vmem>>, %arg9: memref<1x16xf32, #tpu.memory_space<vmem>>, %arg10: memref<32x16xbf16, #tpu.memory_space<vmem>>, %arg11: memref<1x16xf32, #tpu.memory_space<vmem>>, %arg12: memref<16x32xbf16, #tpu.memory_space<vmem>>, %arg13: memref<1x32xf32, #tpu.memory_space<vmem>>, %arg14: memref<1x32xf32, #tpu.memory_space<vmem>>, %arg15: memref<1x32xf32, #tpu.memory_space<vmem>>, %arg16: memref<1x64x32xf32, #tpu.memory_space<vmem>>, %arg17: memref<64x16xf32, #tpu.memory_space<vmem>>) attributes {dimension_semantics = [#tpu.dimension_semantics<parallel>, #tpu.dimension_semantics<parallel>], iteration_bounds = array<i64: 2, 1>, scalar_prefetch = 0 : i64, scratch_operands = 1 : i64, tpu.core_type = #tpu.core_type<tc>, window_params = [{transform_indices = @transform_0, window_bounds = array<i64: 1, 64, 32>}, {transform_indices = @transform_1, window_bounds = array<i64: 1, 64, 32>}, {transform_indices = @transform_2, window_bounds = array<i64: 1, 8, 32>}, {transform_indices = @transform_3, window_bounds = array<i64: 1, 8, 32>}, {pipeline_mode = #tpu.pipeline_mode<synchronous>, transform_indices = @transform_4, window_bounds = array<i64: 32, 16>}, {pipeline_mode = #tpu.pipeline_mode<synchronous>, transform_indices = @transform_5, window_bounds = array<i64: 1, 16>}, {pipeline_mode = #tpu.pipeline_mode<synchronous>, transform_indices = @transform_6, window_bounds = array<i64: 32, 16>}, {pipeline_mode = #tpu.pipeline_mode<synchronous>, transform_indices = @transform_7, window_bounds = array<i64: 1, 16>}, {pipeline_mode = #tpu.pipeline_mode<synchronous>, transform_indices = @transform_8, window_bounds = array<i64: 32, 16>}, {pipeline_mode = #tpu.pipeline_mode<synchronous>, transform_indices = @transform_9, window_bounds = array<i64: 1, 16>}, {pipeline_mode = #tpu.pipeline_mode<synchronous>, transform_indices = @transform_10, window_bounds = array<i64: 16, 32>}, {pipeline_mode = #tpu.pipeline_mode<synchronous>, transform_indices = @transform_11, window_bounds = array<i64: 1, 32>}, {pipeline_mode = #tpu.pipeline_mode<synchronous>, transform_indices = @transform_12, window_bounds = array<i64: 1, 32>}, {pipeline_mode = #tpu.pipeline_mode<synchronous>, transform_indices = @transform_13, window_bounds = array<i64: 1, 32>}, {transform_indices = @transform_14, window_bounds = array<i64: 1, 64, 32>}]} {
    %c0 = arith.constant 0 : index
    %c0_0 = arith.constant 0 : index
    %c0_1 = arith.constant 0 : index
    %0 = vector.load %arg2[%c0, %c0_0, %c0_1] : memref<1x64x32xf32, #tpu.memory_space<vmem>>, vector<1x64x32xf32>
    %1 = vector.shape_cast %0 : vector<1x64x32xf32> to vector<64x32xf32>
    %c0_2 = arith.constant 0 : index
    %c0_3 = arith.constant 0 : index
    %c0_4 = arith.constant 0 : index
    %2 = vector.load %arg4[%c0_2, %c0_3, %c0_4] : memref<1x8x32xf32, #tpu.memory_space<vmem>>, vector<1x8x32xf32>
    %3 = vector.shape_cast %2 : vector<1x8x32xf32> to vector<8x32xf32>
    %c0_5 = arith.constant 0 : index
    %c0_6 = arith.constant 0 : index
    %c0_7 = arith.constant 0 : index
    %4 = vector.load %arg3[%c0_5, %c0_6, %c0_7] : memref<1x64x32xf32, #tpu.memory_space<vmem>>, vector<1x64x32xf32>
    %5 = vector.shape_cast %4 : vector<1x64x32xf32> to vector<64x32xf32>
    %6 = arith.addf %1, %5 : vector<64x32xf32>
    %7 = arith.truncf %6 : vector<64x32xf32> to vector<64x32xbf16>
    %c0_8 = arith.constant 0 : index
    %c0_9 = arith.constant 0 : index
    %c0_10 = arith.constant 0 : index
    %8 = vector.load %arg5[%c0_8, %c0_9, %c0_10] : memref<1x8x32xf32, #tpu.memory_space<vmem>>, vector<1x8x32xf32>
    %9 = vector.shape_cast %8 : vector<1x8x32xf32> to vector<8x32xf32>
    %10 = arith.addf %3, %9 : vector<8x32xf32>
    %11 = arith.truncf %10 : vector<8x32xf32> to vector<8x32xbf16>
    %12 = arith.truncf %3 : vector<8x32xf32> to vector<8x32xbf16>
    %c0_11 = arith.constant 0 : index
    %c0_12 = arith.constant 0 : index
    %13 = vector.load %arg6[%c0_11, %c0_12] : memref<32x16xbf16, #tpu.memory_space<vmem>>, vector<32x16xbf16>
    %cst = arith.constant dense<0.000000e+00> : vector<64x16xf32>
    %14 = tpu.matmul %7, %13, %cst {dimension_numbers = #tpu.dot_dimension_numbers<[1], [0], [0], [1], [0, 0, 1, 1], [], []>} : vector<64x32xbf16>, vector<32x16xbf16>, vector<64x16xf32> -> vector<64x16xf32>
    %c0_13 = arith.constant 0 : index
    %c0_14 = arith.constant 0 : index
    %15 = vector.load %arg7[%c0_13, %c0_14] : memref<1x16xf32, #tpu.memory_space<vmem>>, vector<1x16xf32>
    %16 = vector.broadcast %15 : vector<1x16xf32> to vector<64x16xf32>
    %17 = arith.addf %14, %16 : vector<64x16xf32>
    %18 = arith.truncf %17 : vector<64x16xf32> to vector<64x16xbf16>
    %c0_15 = arith.constant 0 : index
    %c0_16 = arith.constant 0 : index
    %19 = vector.load %arg8[%c0_15, %c0_16] : memref<32x16xbf16, #tpu.memory_space<vmem>>, vector<32x16xbf16>
    %cst_17 = arith.constant dense<0.000000e+00> : vector<8x16xf32>
    %20 = tpu.matmul %11, %19, %cst_17 {dimension_numbers = #tpu.dot_dimension_numbers<[1], [0], [0], [1], [0, 0, 1, 1], [], []>} : vector<8x32xbf16>, vector<32x16xbf16>, vector<8x16xf32> -> vector<8x16xf32>
    %c0_18 = arith.constant 0 : index
    %c0_19 = arith.constant 0 : index
    %21 = vector.load %arg9[%c0_18, %c0_19] : memref<1x16xf32, #tpu.memory_space<vmem>>, vector<1x16xf32>
    %22 = vector.broadcast %21 : vector<1x16xf32> to vector<8x16xf32>
    %23 = arith.addf %20, %22 : vector<8x16xf32>
    %24 = arith.truncf %23 : vector<8x16xf32> to vector<8x16xbf16>
    %c0_20 = arith.constant 0 : index
    %c0_21 = arith.constant 0 : index
    %25 = vector.load %arg10[%c0_20, %c0_21] : memref<32x16xbf16, #tpu.memory_space<vmem>>, vector<32x16xbf16>
    %cst_22 = arith.constant dense<0.000000e+00> : vector<8x16xf32>
    %26 = tpu.matmul %12, %25, %cst_22 {dimension_numbers = #tpu.dot_dimension_numbers<[1], [0], [0], [1], [0, 0, 1, 1], [], []>} : vector<8x32xbf16>, vector<32x16xbf16>, vector<8x16xf32> -> vector<8x16xf32>
    %c0_23 = arith.constant 0 : index
    %c0_24 = arith.constant 0 : index
    %27 = vector.load %arg11[%c0_23, %c0_24] : memref<1x16xf32, #tpu.memory_space<vmem>>, vector<1x16xf32>
    %28 = vector.broadcast %27 : vector<1x16xf32> to vector<8x16xf32>
    %29 = arith.addf %26, %28 : vector<8x16xf32>
    %30 = arith.truncf %29 : vector<8x16xf32> to vector<8x16xbf16>
    %31 = vector.extract_strided_slice %18 {offsets = [0, 0], sizes = [64, 4], strides = [1, 1]} : vector<64x16xbf16> to vector<64x4xbf16>
    %32 = vector.extract_strided_slice %24 {offsets = [0, 0], sizes = [8, 4], strides = [1, 1]} : vector<8x16xbf16> to vector<8x4xbf16>
    %cst_25 = arith.constant dense<0.000000e+00> : vector<64x8xf32>
    %33 = tpu.matmul %31, %32, %cst_25 {dimension_numbers = #tpu.dot_dimension_numbers<[1], [1], [0], [0], [0, 0, 1, 0], [], []>} : vector<64x4xbf16>, vector<8x4xbf16>, vector<64x8xf32> -> vector<64x8xf32>
    %cst_26 = arith.constant dense<0xFF800000> : vector<64xf32>
    %34 = vector.multi_reduction <maximumf>, %33, %cst_26 [1] : vector<64x8xf32> to vector<64xf32>
    %35 = vector.shape_cast %34 : vector<64xf32> to vector<64x1xf32>
    %36 = vector.broadcast %35 : vector<64x1xf32> to vector<64x8xf32>
    %37 = arith.subf %33, %36 : vector<64x8xf32>
    %38 = math.exp %37 : vector<64x8xf32>
    %cst_27 = arith.constant dense<0.000000e+00> : vector<64xf32>
    %39 = vector.multi_reduction <add>, %38, %cst_27 [1] : vector<64x8xf32> to vector<64xf32>
    %40 = vector.shape_cast %39 : vector<64xf32> to vector<64x1xf32>
    %41 = tpu.reciprocal %40 {approx = true} : vector<64x1xf32> -> vector<64x1xf32>
    %42 = vector.broadcast %41 : vector<64x1xf32> to vector<64x8xf32>
    %43 = arith.mulf %38, %42 : vector<64x8xf32>
    %44 = arith.truncf %43 : vector<64x8xf32> to vector<64x8xbf16>
    %45 = vector.extract_strided_slice %30 {offsets = [0, 0], sizes = [8, 4], strides = [1, 1]} : vector<8x16xbf16> to vector<8x4xbf16>
    %cst_28 = arith.constant dense<0.000000e+00> : vector<64x4xf32>
    %46 = tpu.matmul %44, %45, %cst_28 {dimension_numbers = #tpu.dot_dimension_numbers<[1], [0], [0], [1], [0, 0, 1, 1], [], []>} : vector<64x8xbf16>, vector<8x4xbf16>, vector<64x4xf32> -> vector<64x4xf32>
    %c0_29 = arith.constant 0 : index
    %c0_30 = arith.constant 0 : index
    %47 = vector.load %arg17[%c0_29, %c0_30] : memref<64x16xf32, #tpu.memory_space<vmem>>, vector<64x4xf32>
    tpu.vector_store %arg17[%c0_29, %c0_30], %46 {strides = array<i32>} : memref<64x16xf32, #tpu.memory_space<vmem>>, vector<64x4xf32>,
    %48 = vector.extract_strided_slice %18 {offsets = [0, 4], sizes = [64, 4], strides = [1, 1]} : vector<64x16xbf16> to vector<64x4xbf16>
    %49 = vector.extract_strided_slice %24 {offsets = [0, 4], sizes = [8, 4], strides = [1, 1]} : vector<8x16xbf16> to vector<8x4xbf16>
    %cst_31 = arith.constant dense<0.000000e+00> : vector<64x8xf32>
    %50 = tpu.matmul %48, %49, %cst_31 {dimension_numbers = #tpu.dot_dimension_numbers<[1], [1], [0], [0], [0, 0, 1, 0], [], []>} : vector<64x4xbf16>, vector<8x4xbf16>, vector<64x8xf32> -> vector<64x8xf32>
    %cst_32 = arith.constant dense<0xFF800000> : vector<64xf32>
    %51 = vector.multi_reduction <maximumf>, %50, %cst_32 [1] : vector<64x8xf32> to vector<64xf32>
    %52 = vector.shape_cast %51 : vector<64xf32> to vector<64x1xf32>
    %53 = vector.broadcast %52 : vector<64x1xf32> to vector<64x8xf32>
    %54 = arith.subf %50, %53 : vector<64x8xf32>
    %55 = math.exp %54 : vector<64x8xf32>
    %cst_33 = arith.constant dense<0.000000e+00> : vector<64xf32>
    %56 = vector.multi_reduction <add>, %55, %cst_33 [1] : vector<64x8xf32> to vector<64xf32>
    %57 = vector.shape_cast %56 : vector<64xf32> to vector<64x1xf32>
    %58 = tpu.reciprocal %57 {approx = true} : vector<64x1xf32> -> vector<64x1xf32>
    %59 = vector.broadcast %58 : vector<64x1xf32> to vector<64x8xf32>
    %60 = arith.mulf %55, %59 : vector<64x8xf32>
    %61 = arith.truncf %60 : vector<64x8xf32> to vector<64x8xbf16>
    %62 = vector.extract_strided_slice %30 {offsets = [0, 4], sizes = [8, 4], strides = [1, 1]} : vector<8x16xbf16> to vector<8x4xbf16>
    %cst_34 = arith.constant dense<0.000000e+00> : vector<64x4xf32>
    %63 = tpu.matmul %61, %62, %cst_34 {dimension_numbers = #tpu.dot_dimension_numbers<[1], [0], [0], [1], [0, 0, 1, 1], [], []>} : vector<64x8xbf16>, vector<8x4xbf16>, vector<64x4xf32> -> vector<64x4xf32>
    %c0_35 = arith.constant 0 : index
    %c4 = arith.constant 4 : index
    %64 = vector.load %arg17[%c0_35, %c4] : memref<64x16xf32, #tpu.memory_space<vmem>>, vector<64x4xf32>
    tpu.vector_store %arg17[%c0_35, %c4], %63 {strides = array<i32>} : memref<64x16xf32, #tpu.memory_space<vmem>>, vector<64x4xf32>,
    %65 = vector.extract_strided_slice %18 {offsets = [0, 8], sizes = [64, 4], strides = [1, 1]} : vector<64x16xbf16> to vector<64x4xbf16>
    %66 = vector.extract_strided_slice %24 {offsets = [0, 8], sizes = [8, 4], strides = [1, 1]} : vector<8x16xbf16> to vector<8x4xbf16>
    %cst_36 = arith.constant dense<0.000000e+00> : vector<64x8xf32>
    %67 = tpu.matmul %65, %66, %cst_36 {dimension_numbers = #tpu.dot_dimension_numbers<[1], [1], [0], [0], [0, 0, 1, 0], [], []>} : vector<64x4xbf16>, vector<8x4xbf16>, vector<64x8xf32> -> vector<64x8xf32>
    %cst_37 = arith.constant dense<0xFF800000> : vector<64xf32>
    %68 = vector.multi_reduction <maximumf>, %67, %cst_37 [1] : vector<64x8xf32> to vector<64xf32>
    %69 = vector.shape_cast %68 : vector<64xf32> to vector<64x1xf32>
    %70 = vector.broadcast %69 : vector<64x1xf32> to vector<64x8xf32>
    %71 = arith.subf %67, %70 : vector<64x8xf32>
    %72 = math.exp %71 : vector<64x8xf32>
    %cst_38 = arith.constant dense<0.000000e+00> : vector<64xf32>
    %73 = vector.multi_reduction <add>, %72, %cst_38 [1] : vector<64x8xf32> to vector<64xf32>
    %74 = vector.shape_cast %73 : vector<64xf32> to vector<64x1xf32>
    %75 = tpu.reciprocal %74 {approx = true} : vector<64x1xf32> -> vector<64x1xf32>
    %76 = vector.broadcast %75 : vector<64x1xf32> to vector<64x8xf32>
    %77 = arith.mulf %72, %76 : vector<64x8xf32>
    %78 = arith.truncf %77 : vector<64x8xf32> to vector<64x8xbf16>
    %79 = vector.extract_strided_slice %30 {offsets = [0, 8], sizes = [8, 4], strides = [1, 1]} : vector<8x16xbf16> to vector<8x4xbf16>
    %cst_39 = arith.constant dense<0.000000e+00> : vector<64x4xf32>
    %80 = tpu.matmul %78, %79, %cst_39 {dimension_numbers = #tpu.dot_dimension_numbers<[1], [0], [0], [1], [0, 0, 1, 1], [], []>} : vector<64x8xbf16>, vector<8x4xbf16>, vector<64x4xf32> -> vector<64x4xf32>
    %c0_40 = arith.constant 0 : index
    %c8 = arith.constant 8 : index
    %81 = vector.load %arg17[%c0_40, %c8] : memref<64x16xf32, #tpu.memory_space<vmem>>, vector<64x4xf32>
    tpu.vector_store %arg17[%c0_40, %c8], %80 {strides = array<i32>} : memref<64x16xf32, #tpu.memory_space<vmem>>, vector<64x4xf32>,
    %82 = vector.extract_strided_slice %18 {offsets = [0, 12], sizes = [64, 4], strides = [1, 1]} : vector<64x16xbf16> to vector<64x4xbf16>
    %83 = vector.extract_strided_slice %24 {offsets = [0, 12], sizes = [8, 4], strides = [1, 1]} : vector<8x16xbf16> to vector<8x4xbf16>
    %cst_41 = arith.constant dense<0.000000e+00> : vector<64x8xf32>
    %84 = tpu.matmul %82, %83, %cst_41 {dimension_numbers = #tpu.dot_dimension_numbers<[1], [1], [0], [0], [0, 0, 1, 0], [], []>} : vector<64x4xbf16>, vector<8x4xbf16>, vector<64x8xf32> -> vector<64x8xf32>
    %cst_42 = arith.constant dense<0xFF800000> : vector<64xf32>
    %85 = vector.multi_reduction <maximumf>, %84, %cst_42 [1] : vector<64x8xf32> to vector<64xf32>
    %86 = vector.shape_cast %85 : vector<64xf32> to vector<64x1xf32>
    %87 = vector.broadcast %86 : vector<64x1xf32> to vector<64x8xf32>
    %88 = arith.subf %84, %87 : vector<64x8xf32>
    %89 = math.exp %88 : vector<64x8xf32>
    %cst_43 = arith.constant dense<0.000000e+00> : vector<64xf32>
    %90 = vector.multi_reduction <add>, %89, %cst_43 [1] : vector<64x8xf32> to vector<64xf32>
    %91 = vector.shape_cast %90 : vector<64xf32> to vector<64x1xf32>
    %92 = tpu.reciprocal %91 {approx = true} : vector<64x1xf32> -> vector<64x1xf32>
    %93 = vector.broadcast %92 : vector<64x1xf32> to vector<64x8xf32>
    %94 = arith.mulf %89, %93 : vector<64x8xf32>
    %95 = arith.truncf %94 : vector<64x8xf32> to vector<64x8xbf16>
    %96 = vector.extract_strided_slice %30 {offsets = [0, 12], sizes = [8, 4], strides = [1, 1]} : vector<8x16xbf16> to vector<8x4xbf16>
    %cst_44 = arith.constant dense<0.000000e+00> : vector<64x4xf32>
    %97 = tpu.matmul %95, %96, %cst_44 {dimension_numbers = #tpu.dot_dimension_numbers<[1], [0], [0], [1], [0, 0, 1, 1], [], []>} : vector<64x8xbf16>, vector<8x4xbf16>, vector<64x4xf32> -> vector<64x4xf32>
    %c0_45 = arith.constant 0 : index
    %c12 = arith.constant 12 : index
    %98 = vector.load %arg17[%c0_45, %c12] : memref<64x16xf32, #tpu.memory_space<vmem>>, vector<64x4xf32>
    tpu.vector_store %arg17[%c0_45, %c12], %97 {strides = array<i32>} : memref<64x16xf32, #tpu.memory_space<vmem>>, vector<64x4xf32>,
    %c0_46 = arith.constant 0 : index
    %c0_47 = arith.constant 0 : index
    %99 = vector.load %arg17[%c0_46, %c0_47] : memref<64x16xf32, #tpu.memory_space<vmem>>, vector<64x16xf32>
    %100 = arith.truncf %99 : vector<64x16xf32> to vector<64x16xbf16>
    %c0_48 = arith.constant 0 : index
    %c0_49 = arith.constant 0 : index
    %101 = vector.load %arg12[%c0_48, %c0_49] : memref<16x32xbf16, #tpu.memory_space<vmem>>, vector<16x32xbf16>
    %cst_50 = arith.constant dense<0.000000e+00> : vector<64x32xf32>
    %102 = tpu.matmul %100, %101, %cst_50 {dimension_numbers = #tpu.dot_dimension_numbers<[1], [0], [0], [1], [0, 0, 1, 1], [], []>} : vector<64x16xbf16>, vector<16x32xbf16>, vector<64x32xf32> -> vector<64x32xf32>
    %c0_51 = arith.constant 0 : index
    %c0_52 = arith.constant 0 : index
    %103 = vector.load %arg13[%c0_51, %c0_52] : memref<1x32xf32, #tpu.memory_space<vmem>>, vector<1x32xf32>
    %104 = vector.broadcast %103 : vector<1x32xf32> to vector<64x32xf32>
    %105 = arith.addf %102, %104 : vector<64x32xf32>
    %106 = arith.addf %1, %105 : vector<64x32xf32>
    %c0_53 = arith.constant 0 : index
    %c0_54 = arith.constant 0 : index
    %107 = vector.load %arg14[%c0_53, %c0_54] : memref<1x32xf32, #tpu.memory_space<vmem>>, vector<1x32xf32>
    %c0_55 = arith.constant 0 : index
    %c0_56 = arith.constant 0 : index
    %108 = vector.load %arg15[%c0_55, %c0_56] : memref<1x32xf32, #tpu.memory_space<vmem>>, vector<1x32xf32>
    %cst_57 = arith.constant dense<0.000000e+00> : vector<64xf32>
    %109 = vector.multi_reduction <add>, %106, %cst_57 [1] : vector<64x32xf32> to vector<64xf32>
    %110 = vector.shape_cast %109 : vector<64xf32> to vector<64x1xf32>
    %cst_58 = arith.constant 3.200000e+01 : f32
    %111 = vector.broadcast %cst_58 : f32 to vector<64x1xf32>
    %112 = arith.divf %110, %111 : vector<64x1xf32>
    %113 = vector.broadcast %112 : vector<64x1xf32> to vector<64x32xf32>
    %114 = arith.subf %106, %113 : vector<64x32xf32>
    %115 = arith.mulf %114, %114 : vector<64x32xf32>
    %cst_59 = arith.constant dense<0.000000e+00> : vector<64xf32>
    %116 = vector.multi_reduction <add>, %115, %cst_59 [1] : vector<64x32xf32> to vector<64xf32>
    %117 = vector.shape_cast %116 : vector<64xf32> to vector<64x1xf32>
    %cst_60 = arith.constant 3.200000e+01 : f32
    %118 = vector.broadcast %cst_60 : f32 to vector<64x1xf32>
    %119 = arith.divf %117, %118 : vector<64x1xf32>
    %cst_61 = arith.constant 9.99999974E-6 : f32
    %120 = vector.broadcast %cst_61 : f32 to vector<64x1xf32>
    %121 = arith.addf %119, %120 : vector<64x1xf32>
    %122 = math.rsqrt %121 : vector<64x1xf32>
    %123 = vector.broadcast %122 : vector<64x1xf32> to vector<64x32xf32>
    %124 = arith.mulf %114, %123 : vector<64x32xf32>
    %125 = vector.broadcast %107 : vector<1x32xf32> to vector<64x32xf32>
    %126 = arith.mulf %124, %125 : vector<64x32xf32>
    %127 = vector.broadcast %108 : vector<1x32xf32> to vector<64x32xf32>
    %128 = arith.addf %126, %127 : vector<64x32xf32>
    %c0_62 = arith.constant 0 : index
    %c0_63 = arith.constant 0 : index
    %c0_64 = arith.constant 0 : index
    %129 = vector.load %arg16[%c0_62, %c0_63, %c0_64] : memref<1x64x32xf32, #tpu.memory_space<vmem>>, vector<1x64x32xf32>
    %130 = vector.shape_cast %129 : vector<1x64x32xf32> to vector<64x32xf32>
    %131 = vector.shape_cast %128 : vector<64x32xf32> to vector<1x64x32xf32>
    tpu.vector_store %arg16[%c0_62, %c0_63, %c0_64], %131 {strides = array<i32>} : memref<1x64x32xf32, #tpu.memory_space<vmem>>, vector<1x64x32xf32>,
    return
  }
  func.func @transform_0(%arg0: i32, %arg1: i32) -> (i32, i32, i32) {
    %c0_i32 = arith.constant 0 : i32
    %c0_i32_0 = arith.constant 0 : i32
    return %arg0, %arg1, %c0_i32 : i32, i32, i32
  }
  func.func @transform_1(%arg0: i32, %arg1: i32) -> (i32, i32, i32) {
    %c0_i32 = arith.constant 0 : i32
    %c0_i32_0 = arith.constant 0 : i32
    return %arg0, %arg1, %c0_i32 : i32, i32, i32
  }
  func.func @transform_2(%arg0: i32, %arg1: i32) -> (i32, i32, i32) {
    %c0_i32 = arith.constant 0 : i32
    %c0_i32_0 = arith.constant 0 : i32
    %c0_i32_1 = arith.constant 0 : i32
    return %arg0, %c0_i32, %c0_i32_0 : i32, i32, i32
  }
  func.func @transform_3(%arg0: i32, %arg1: i32) -> (i32, i32, i32) {
    %c0_i32 = arith.constant 0 : i32
    %c0_i32_0 = arith.constant 0 : i32
    %c0_i32_1 = arith.constant 0 : i32
    return %arg0, %c0_i32, %c0_i32_0 : i32, i32, i32
  }
  func.func @transform_4(%arg0: i32, %arg1: i32) -> (i32, i32) {
    %c0_i32 = arith.constant 0 : i32
    %c0_i32_0 = arith.constant 0 : i32
    %c0_i32_1 = arith.constant 0 : i32
    return %c0_i32, %c0_i32_0 : i32, i32
  }
  func.func @transform_5(%arg0: i32, %arg1: i32) -> (i32, i32) {
    %c0_i32 = arith.constant 0 : i32
    %c0_i32_0 = arith.constant 0 : i32
    %c0_i32_1 = arith.constant 0 : i32
    return %c0_i32, %c0_i32_0 : i32, i32
  }
  func.func @transform_6(%arg0: i32, %arg1: i32) -> (i32, i32) {
    %c0_i32 = arith.constant 0 : i32
    %c0_i32_0 = arith.constant 0 : i32
    %c0_i32_1 = arith.constant 0 : i32
    return %c0_i32, %c0_i32_0 : i32, i32
  }
  func.func @transform_7(%arg0: i32, %arg1: i32) -> (i32, i32) {
    %c0_i32 = arith.constant 0 : i32
    %c0_i32_0 = arith.constant 0 : i32
    %c0_i32_1 = arith.constant 0 : i32
    return %c0_i32, %c0_i32_0 : i32, i32
  }
  func.func @transform_8(%arg0: i32, %arg1: i32) -> (i32, i32) {
    %c0_i32 = arith.constant 0 : i32
    %c0_i32_0 = arith.constant 0 : i32
    %c0_i32_1 = arith.constant 0 : i32
    return %c0_i32, %c0_i32_0 : i32, i32
  }
  func.func @transform_9(%arg0: i32, %arg1: i32) -> (i32, i32) {
    %c0_i32 = arith.constant 0 : i32
    %c0_i32_0 = arith.constant 0 : i32
    %c0_i32_1 = arith.constant 0 : i32
    return %c0_i32, %c0_i32_0 : i32, i32
  }
  func.func @transform_10(%arg0: i32, %arg1: i32) -> (i32, i32) {
    %c0_i32 = arith.constant 0 : i32
    %c0_i32_0 = arith.constant 0 : i32
    %c0_i32_1 = arith.constant 0 : i32
    return %c0_i32, %c0_i32_0 : i32, i32
  }
  func.func @transform_11(%arg0: i32, %arg1: i32) -> (i32, i32) {
    %c0_i32 = arith.constant 0 : i32
    %c0_i32_0 = arith.constant 0 : i32
    %c0_i32_1 = arith.constant 0 : i32
    return %c0_i32, %c0_i32_0 : i32, i32
  }
  func.func @transform_12(%arg0: i32, %arg1: i32) -> (i32, i32) {
    %c0_i32 = arith.constant 0 : i32
    %c0_i32_0 = arith.constant 0 : i32
    %c0_i32_1 = arith.constant 0 : i32
    return %c0_i32, %c0_i32_0 : i32, i32
  }
  func.func @transform_13(%arg0: i32, %arg1: i32) -> (i32, i32) {
    %c0_i32 = arith.constant 0 : i32
    %c0_i32_0 = arith.constant 0 : i32
    %c0_i32_1 = arith.constant 0 : i32
    return %c0_i32, %c0_i32_0 : i32, i32
  }
  func.func @transform_14(%arg0: i32, %arg1: i32) -> (i32, i32, i32) {
    %c0_i32 = arith.constant 0 : i32
    %c0_i32_0 = arith.constant 0 : i32
    return %arg0, %arg1, %c0_i32 : i32, i32, i32
  }
}

</mosaic_0001>

<llo_original>
// kernel: two_way_attention_block.6
$region0: #{two_way_attention_block.6}
  #allocation0 [shape = 'u32[]', space=smem, size = 0x4, offset = 0x4, fixed_abs, tag = 'smem constant byte address 0x4 - core index']
  #allocation1 [shape = 'u32[144,128]{1,0:T(1,128)}', space=vmem, size = 0x12000, scoped, tag = 'internal scratch']
  %s0 = inlined_call_operand.vmem [shape: f32[2,8,32], index: 0, kind: input, shape index: {}]
  %s1 = inlined_call_operand.vmem [shape: bf16[32,64], index: 1, kind: input, shape index: {}]
  %s2 = inlined_call_operand.vmem [shape: f32[1,64], index: 2, kind: input, shape index: {}]
  %s3 = inlined_call_operand.vmem [shape: bf16[64,32], index: 3, kind: input, shape index: {}]
  %s4 = inlined_call_operand.vmem [shape: f32[1,32], index: 4, kind: input, shape index: {}]
  %s5 = inlined_call_operand.vmem [shape: f32[1,32], index: 5, kind: input, shape index: {}]
  %s6 = inlined_call_operand.vmem [shape: f32[1,32], index: 6, kind: input, shape index: {}]
  %s7 = inlined_call_operand.vmem [shape: f32[2,8,32], index: 7, kind: output, shape index: {}]
  %s8 = sld [smem:[#allocation0]]
  $region61: #{two_way_attention_block.6} parent=0
    _
  %s10 = ssub.s32 1, %s8
  %s11 = scalar_select 0, %s10, %s8
  loop: start=0, step=1, limit=4
  $region2: #{two_way_attention_block.6} parent=0 // loop_pre_header
    _
  $region3: #{two_way_attention_block.6} parent=0 // loop_header
    %s13 = sphi 0, %s17
    %p14 = scmp.ge.s32.totalorder %s13, 4
    %s20 = sphi 0, %s32
    %s21 = sphi 0, %s28
    %s22 = sphi 0, %s20
    %s23 = sphi 0, %s21
    %s24 = sphi 0, %s22
    %s25 = sphi 0, %s23
    %s37 = sphi 0, %s39
    %s40 = sphi 0, %s37
    %s41 = sphi 0, %s40
    %s57 = sphi 0, %s41
    %s61 = sphi 0, %s61
    %s63 = sphi 0, %s61
    %s64 = sphi 0, %s63
    %s78 = sphi 0, %s64
    %s82 = sphi 0, %s82
    %s84 = sphi 0, %s82
    %s85 = sphi 0, %s84
    %s99 = sphi 0, %s85
    %s103 = sphi 0, %s103
    %s105 = sphi 0, %s103
    %s106 = sphi 0, %s105
    %s120 = sphi 0, %s106
    %s124 = sphi 0, %s124
    %s126 = sphi 0, %s124
    %s127 = sphi 0, %s126
    %s141 = sphi 0, %s127
    %s145 = sphi 0, %s145
    %s147 = sphi 0, %s145
    %s148 = sphi 0, %s147
    %s162 = sphi 0, %s148
    %s166 = sphi 0, %s166
    %s168 = sphi 0, %s166
    %s169 = sphi 0, %s168
    %s183 = sphi 0, %s169
    %s191 = sphi 0, %s193
    %s194 = sphi 0, %s191
    %s195 = sphi 0, %s194
    %s211 = sphi 0, %s195
  $region4: #{two_way_attention_block.6} parent=0 // loop_header_branch
    %16 = sbr.rel (%p14) target = $region8
  $region5: #{two_way_attention_block.6} parent=0 // loop_body
    %s18 = ssub.s32 %s13, 1
    %s19 = ssub.s32 %s13, 2
    %s26 = sadd.s32 1, %s21
    %p27 = scmp.ge.s32.totalorder %s26, 1
    %s28 = scalar_select %p27, 0, %s26
    %s29 = sadd.s32 1, %s20
    %s30 = scalar_select %p27, %s29, %s20
    %p31 = scmp.ge.s32.totalorder %s30, 2
    %s32 = scalar_select %p31, 0, %s30
    %s33 = ssub.s32 %s20, %s32
    %s34 = ssub.s32 %s21, %s28
    %s35 = sor.u32 %s33, %s34
    %p36 = scmp.eq.s32.totalorder %s35, 0
    %s38 = sadd.s32 %s37, 1
    %s39 = scalar_select %p36, %s37, %s38
    %p42 = pneg %p36
    %p43 = scmp.eq.s32.totalorder %s13, 1
    %p44 = por %p42, %p43
    %p45 = scmp.ne.s32.totalorder %s37, %s40
    %p46 = scmp.eq.s32.totalorder %s13, 0
    %p47 = por %p45, %p46
    %p48 = scmp.ne.s32.totalorder %s37, %s40
    %p49 = scmp.eq.s32.totalorder %s18, 1
    %p50 = por %p48, %p49
    %p51 = scmp.ne.s32.totalorder %s40, %s41
    %p52 = scmp.eq.s32.totalorder %s18, 0
    %p53 = por %p51, %p52
    %p54 = scmp.ne.s32.totalorder %s40, %s41
    %p55 = scmp.eq.s32.totalorder %s19, 1
    %p56 = por %p54, %p55
    %p58 = scmp.ne.s32.totalorder %s41, %s57
    %p59 = scmp.eq.s32.totalorder %s19, 0
    %p60 = por %p58, %p59
    %s62 = sadd.s32 %s61, 1
    %p65 = scmp.eq.s32.totalorder %s13, 1
    %p66 = scmp.ne.s32.totalorder %s61, %s63
    %p67 = scmp.eq.s32.totalorder %s13, 0
    %p68 = por %p66, %p67
    %p69 = scmp.ne.s32.totalorder %s61, %s63
    %p70 = scmp.eq.s32.totalorder %s18, 1
    %p71 = por %p69, %p70
    %p72 = scmp.ne.s32.totalorder %s63, %s64
    %p73 = scmp.eq.s32.totalorder %s18, 0
    %p74 = por %p72, %p73
    %p75 = scmp.ne.s32.totalorder %s63, %s64
    %p76 = scmp.eq.s32.totalorder %s19, 1
    %p77 = por %p75, %p76
    %p79 = scmp.ne.s32.totalorder %s64, %s78
    %p80 = scmp.eq.s32.totalorder %s19, 0
    %p81 = por %p79, %p80
    %s83 = sadd.s32 %s82, 1
    %p86 = scmp.eq.s32.totalorder %s13, 1
    %p87 = scmp.ne.s32.totalorder %s82, %s84
    %p88 = scmp.eq.s32.totalorder %s13, 0
    %p89 = por %p87, %p88
    %p90 = scmp.ne.s32.totalorder %s82, %s84
    %p91 = scmp.eq.s32.totalorder %s18, 1
    %p92 = por %p90, %p91
    %p93 = scmp.ne.s32.totalorder %s84, %s85
    %p94 = scmp.eq.s32.totalorder %s18, 0
    %p95 = por %p93, %p94
    %p96 = scmp.ne.s32.totalorder %s84, %s85
    %p97 = scmp.eq.s32.totalorder %s19, 1
    %p98 = por %p96, %p97
    %p100 = scmp.ne.s32.totalorder %s85, %s99
    %p101 = scmp.eq.s32.totalorder %s19, 0
    %p102 = por %p100, %p101
    %s104 = sadd.s32 %s103, 1
    %p107 = scmp.eq.s32.totalorder %s13, 1
    %p108 = scmp.ne.s32.totalorder %s103, %s105
    %p109 = scmp.eq.s32.totalorder %s13, 0
    %p110 = por %p108, %p109
    %p111 = scmp.ne.s32.totalorder %s103, %s105
    %p112 = scmp.eq.s32.totalorder %s18, 1
    %p113 = por %p111, %p112
    %p114 = scmp.ne.s32.totalorder %s105, %s106
    %p115 = scmp.eq.s32.totalorder %s18, 0
    %p116 = por %p114, %p115
    %p117 = scmp.ne.s32.totalorder %s105, %s106
    %p118 = scmp.eq.s32.totalorder %s19, 1
    %p119 = por %p117, %p118
    %p121 = scmp.ne.s32.totalorder %s106, %s120
    %p122 = scmp.eq.s32.totalorder %s19, 0
    %p123 = por %p121, %p122
    %s125 = sadd.s32 %s124, 1
    %p128 = scmp.eq.s32.totalorder %s13, 1
    %p129 = scmp.ne.s32.totalorder %s124, %s126
    %p130 = scmp.eq.s32.totalorder %s13, 0
    %p131 = por %p129, %p130
    %p132 = scmp.ne.s32.totalorder %s124, %s126
    %p133 = scmp.eq.s32.totalorder %s18, 1
    %p134 = por %p132, %p133
    %p135 = scmp.ne.s32.totalorder %s126, %s127
    %p136 = scmp.eq.s32.totalorder %s18, 0
    %p137 = por %p135, %p136
    %p138 = scmp.ne.s32.totalorder %s126, %s127
    %p139 = scmp.eq.s32.totalorder %s19, 1
    %p140 = por %p138, %p139
    %p142 = scmp.ne.s32.totalorder %s127, %s141
    %p143 = scmp.eq.s32.totalorder %s19, 0
    %p144 = por %p142, %p143
    %s146 = sadd.s32 %s145, 1
    %p149 = scmp.eq.s32.totalorder %s13, 1
    %p150 = scmp.ne.s32.totalorder %s145, %s147
    %p151 = scmp.eq.s32.totalorder %s13, 0
    %p152 = por %p150, %p151
    %p153 = scmp.ne.s32.totalorder %s145, %s147
    %p154 = scmp.eq.s32.totalorder %s18, 1
    %p155 = por %p153, %p154
    %p156 = scmp.ne.s32.totalorder %s147, %s148
    %p157 = scmp.eq.s32.totalorder %s18, 0
    %p158 = por %p156, %p157
    %p159 = scmp.ne.s32.totalorder %s147, %s148
    %p160 = scmp.eq.s32.totalorder %s19, 1
    %p161 = por %p159, %p160
    %p163 = scmp.ne.s32.totalorder %s148, %s162
    %p164 = scmp.eq.s32.totalorder %s19, 0
    %p165 = por %p163, %p164
    %s167 = sadd.s32 %s166, 1
    %p170 = scmp.eq.s32.totalorder %s13, 1
    %p171 = scmp.ne.s32.totalorder %s166, %s168
    %p172 = scmp.eq.s32.totalorder %s13, 0
    %p173 = por %p171, %p172
    %p174 = scmp.ne.s32.totalorder %s166, %s168
    %p175 = scmp.eq.s32.totalorder %s18, 1
    %p176 = por %p174, %p175
    %p177 = scmp.ne.s32.totalorder %s168, %s169
    %p178 = scmp.eq.s32.totalorder %s18, 0
    %p179 = por %p177, %p178
    %p180 = scmp.ne.s32.totalorder %s168, %s169
    %p181 = scmp.eq.s32.totalorder %s19, 1
    %p182 = por %p180, %p181
    %p184 = scmp.ne.s32.totalorder %s169, %s183
    %p185 = scmp.eq.s32.totalorder %s19, 0
    %p186 = por %p184, %p185
    %s187 = ssub.s32 %s20, %s32
    %s188 = ssub.s32 %s21, %s28
    %s189 = sor.u32 %s187, %s188
    %p190 = scmp.eq.s32.totalorder %s189, 0
    %s192 = sadd.s32 %s191, 1
    %s193 = scalar_select %p190, %s191, %s192
    %p196 = pneg %p190
    %p197 = scmp.eq.s32.totalorder %s13, 1
    %p198 = por %p196, %p197
    %p199 = scmp.ne.s32.totalorder %s191, %s194
    %p200 = scmp.eq.s32.totalorder %s13, 0
    %p201 = por %p199, %p200
    %p202 = scmp.ne.s32.totalorder %s191, %s194
    %p203 = scmp.eq.s32.totalorder %s18, 1
    %p204 = por %p202, %p203
    %p205 = scmp.ne.s32.totalorder %s194, %s195
    %p206 = scmp.eq.s32.totalorder %s18, 0
    %p207 = por %p205, %p206
    %p208 = scmp.ne.s32.totalorder %s194, %s195
    %p209 = scmp.eq.s32.totalorder %s19, 1
    %p210 = por %p208, %p209
    %p212 = scmp.ne.s32.totalorder %s195, %s211
    %p213 = scmp.eq.s32.totalorder %s19, 0
    %p214 = por %p212, %p213
    %p215 = scmp.le.s32.totalorder 1, %s13
    %p216 = scmp.lt.s32.totalorder %s13, 3
    %p217 = pnand %p215, %p216
    %p218 = pneg %p217
    // Predicated region
    $region9: #{two_way_attention_block.6} parent=5 // pred_check
      _
    $region10: #{two_way_attention_block.6} parent=5 // pred_check_branch
      %220 = sbr.rel (%p217) target = $region12
    $region11: #{two_way_attention_block.6} parent=5 // pred_region
      %s221 = ssub.s32 %s13, 1
      // Predicated region
      $region13: #{two_way_attention_block.6} parent=11 // pred_check
        %p222 = pneg %p74
      $region14: #{two_way_attention_block.6} parent=11 // pred_check_branch
        %224 = sbr.rel (%p222) target = $region16
      $region15: #{two_way_attention_block.6} parent=11 // pred_region
        _
      $region16: #{two_way_attention_block.6} parent=11 // pred_fallthru
        _
      // Predicated region
      $region17: #{two_way_attention_block.6} parent=11 // pred_check
        %p225 = pneg %p95
      $region18: #{two_way_attention_block.6} parent=11 // pred_check_branch
        %227 = sbr.rel (%p225) target = $region20
      $region19: #{two_way_attention_block.6} parent=11 // pred_region
        _
      $region20: #{two_way_attention_block.6} parent=11 // pred_fallthru
        _
      // Predicated region
      $region21: #{two_way_attention_block.6} parent=11 // pred_check
        %p228 = pneg %p116
      $region22: #{two_way_attention_block.6} parent=11 // pred_check_branch
        %230 = sbr.rel (%p228) target = $region24
      $region23: #{two_way_attention_block.6} parent=11 // pred_region
        _
      $region24: #{two_way_attention_block.6} parent=11 // pred_fallthru
        _
      // Predicated region
      $region25: #{two_way_attention_block.6} parent=11 // pred_check
        %p231 = pneg %p137
      $region26: #{two_way_attention_block.6} parent=11 // pred_check_branch
        %233 = sbr.rel (%p231) target = $region28
      $region27: #{two_way_attention_block.6} parent=11 // pred_region
        _
      $region28: #{two_way_attention_block.6} parent=11 // pred_fallthru
        _
      // Predicated region
      $region29: #{two_way_attention_block.6} parent=11 // pred_check
        %p234 = pneg %p158
      $region30: #{two_way_attention_block.6} parent=11 // pred_check_branch
        %236 = sbr.rel (%p234) target = $region32
      $region31: #{two_way_attention_block.6} parent=11 // pred_region
        _
      $region32: #{two_way_attention_block.6} parent=11 // pred_fallthru
        _
      // Predicated region
      $region33: #{two_way_attention_block.6} parent=11 // pred_check
        %p237 = pneg %p179
      $region34: #{two_way_attention_block.6} parent=11 // pred_check_branch
        %239 = sbr.rel (%p237) target = $region36
      $region35: #{two_way_attention_block.6} parent=11 // pred_region
        _
      $region36: #{two_way_attention_block.6} parent=11 // pred_fallthru
        _
    $region12: #{two_way_attention_block.6} parent=5 // pred_fallthru
      _
    %p240 = scmp.lt.s32.totalorder %s13, 2
    // Predicated region
    $region37: #{two_way_attention_block.6} parent=5 // pred_check
      %p241 = pneg %p240
    $region38: #{two_way_attention_block.6} parent=5 // pred_check_branch
      %243 = sbr.rel (%p241) target = $region40
    $region39: #{two_way_attention_block.6} parent=5 // pred_region
      // Predicated region
      $region41: #{two_way_attention_block.6} parent=39 // pred_check
        %p244 = pneg %p47
      $region42: #{two_way_attention_block.6} parent=39 // pred_check_branch
        %246 = sbr.rel (%p244) target = $region44
      $region43: #{two_way_attention_block.6} parent=39 // pred_region
        %p247 = scmp.lt.s32.totalorder %s20, 1
        %s248 = scalar_select %p247, %s20, 1
        %p249 = scmp.lt.s32.totalorder %s21, 0
        %s250 = scalar_select %p249, %s21, 0
        %s251 = sadd.s32 %s250, %s248
        %s252 = smul.addr %s251, 8
        %s253 = scalar_lea.vmem %s0, %s252
      $region44: #{two_way_attention_block.6} parent=39 // pred_fallthru
        _
    $region40: #{two_way_attention_block.6} parent=5 // pred_fallthru
      _
    %p254 = scmp.le.s32.totalorder 1, %s13
    %p255 = scmp.lt.s32.totalorder %s13, 3
    %p256 = pnand %p254, %p255
    %p257 = pneg %p256
    // Predicated region
    $region45: #{two_way_attention_block.6} parent=5 // pred_check
      _
    $region46: #{two_way_attention_block.6} parent=5 // pred_check_branch
      %259 = sbr.rel (%p256) target = $region48
    $region47: #{two_way_attention_block.6} parent=5 // pred_region
      %s260 = ssub.s32 %s13, 1
      %p261 = scmp.lt.s32.totalorder %s22, 1
      %s262 = scalar_select %p261, %s22, 1
      %p263 = scmp.lt.s32.totalorder %s23, 0
      %s264 = scalar_select %p263, %s23, 0
      %s265 = sadd.s32 %s264, %s262
      %s266 = smul.addr %s265, 8
      %s267 = scalar_lea.vmem %s0, %s266
      %p268 = pneg %p53
      %p269 = pneg %p50
      %p270 = pneg %p74
      %p271 = pneg %p71
      %p272 = pneg %p95
      %p273 = pneg %p92
      %p274 = pneg %p116
      %p275 = pneg %p113
      %p276 = pneg %p137
      %p277 = pneg %p134
      %p278 = pneg %p158
      %p279 = pneg %p155
      %p280 = pneg %p179
      %p281 = pneg %p176
      %p282 = pneg %p207
      %p283 = pneg %p204
      %p284 = scmp.lt.s32.totalorder %s22, 1
      %s285 = scalar_select %p284, %s22, 1
      %p286 = scmp.lt.s32.totalorder %s23, 0
      %s287 = scalar_select %p286, %s23, 0
      %s288 = sadd.s32 %s287, %s285
      %s289 = smul.addr %s288, 8
      %s290 = scalar_lea.vmem %s7, %s289
      %p291 = scmp.lt.s32.totalorder %s22, 1
      %s292 = scalar_select %p291, %s22, 1
      %p293 = scmp.lt.s32.totalorder %s23, 0
      %s294 = scalar_select %p293, %s23, 0
      %s295 = sadd.s32 %s294, %s292
      %s296 = smul.addr %s295, 8
      %s297 = scalar_lea.vmem %s0, %s296
      %p298 = scmp.lt.s32.totalorder %s22, 1
      %s299 = scalar_select %p298, %s22, 1
      %p300 = scmp.lt.s32.totalorder %s23, 0
      %s301 = scalar_select %p300, %s23, 0
      %s302 = sadd.s32 %s301, %s299
      %s303 = smul.addr %s302, 8
      %s304 = scalar_lea.vmem %s7, %s303
      %v306 = vld [vmem:[%s297] sm:$0xff]
      %v307 = vpack.c.bf16 %v306, %v306
      %v308 = vld [vmem:[%s1] sm:$0xf]
      %v309 = vld [vmem:[%s1 + $0x4] sm:$0xf]
      %v310 = vld [vmem:[%s1 + $0x8] sm:$0xf]
      %v311 = vld [vmem:[%s1 + $0xc] sm:$0xf]
      %v312 = vld [vmem:[%s2] sm:$0x1]
      %v314 = vlaneseq
      %v315 = vshrl.u32 %v314, 7
      %v316 = vsub.s32 0, %v315
      %v317 = vrot.slane %v312, %v316
      %v323 = vunpack.c.l.b16 %v308
      %v324 = vunpack.c.l.b16 %v309
      %v325 = vunpack.c.l.b16 %v310
      %v326 = vunpack.c.l.b16 %v311
      %v327 = vpack.c.b16 %v324, %v323
      %v328 = vpack.c.b16 %v326, %v325
      %vm331 = vcmask 261120
      %v333 = vsel %vm331, %v307, 0
      %335 = vmatprep.subr.bf16.mxu0 0
      %336 = vmatpush1.bf16.msra.mxu0 0
      %337 = vmatprep.subr.bf16.mxu0 0
      %338 = vmatpush1.bf16.msra.mxu0 0
      %339 = vmatprep.subr.bf16.mxu0 0
      %340 = vmatpush1.bf16.msra.mxu0 0
      %341 = vmatprep.subr.bf16.mxu0 0
      %342 = vmatpush1.bf16.msra.mxu0 0
      %343 = vmatprep.subr.bf16.mxu0 0
      %344 = vmatpush1.bf16.msra.mxu0 0
      %345 = vmatprep.subr.bf16.mxu0 0
      %346 = vmatpush1.bf16.msra.mxu0 0
      %347 = vmatprep.subr.bf16.mxu0 0
      %348 = vmatpush1.bf16.msra.mxu0 %v328
      %349 = vmatprep.subr.bf16.mxu0 0
      %350 = vmatpush1.bf16.msra.mxu0 %v327
      %351 = vmatprep.subr.bf16.mxu0 0
      %352 = vmatpush2.bf16.msra.mxu0 0
      %353 = vmatprep.subr.bf16.mxu0 0
      %354 = vmatpush2.bf16.msra.mxu0 0
      %355 = vmatprep.subr.bf16.mxu0 0
      %356 = vmatpush2.bf16.msra.mxu0 0
      %357 = vmatprep.subr.bf16.mxu0 0
      %358 = vmatpush2.bf16.msra.mxu0 0
      %359 = vmatprep.subr.bf16.mxu0 0
      %360 = vmatpush2.bf16.msra.mxu0 0
      %361 = vmatprep.subr.bf16.mxu0 0
      %362 = vmatpush2.bf16.msra.mxu0 0
      %363 = vmatprep.subr.bf16.mxu0 0
      %364 = vmatpush2.bf16.msra.mxu0 0
      %365 = vmatprep.subr.bf16.mxu0 0
      %366 = vmatpush2.bf16.msra.mxu0 0
      %367 = vmatprep.mubr.bf16.mxu0 0
      %368 = vmatmul.mubr.bf16.gmra.mxu0 %v333
      %v369 = vpop.f32.mrf.mxu0
      %v370 = vadd.f32 %v317, %v369
      %v371 = vpop.f32.mrf.mxu0
      %v372 = vpop.f32.mrf.mxu0
      %v373 = vpop.f32.mrf.mxu0
      %374 = vdwg.mxu0
      %v375 = vmax.f32 %v370, 0.0
      %v376 = vpack.c.bf16 %v375, %v375
      %v377 = vld [vmem:[%s3] sm:$0xf]
      %v378 = vld [vmem:[%s3 + $0x4] sm:$0xf]
      %v379 = vld [vmem:[%s3 + $0x8] sm:$0xf]
      %v380 = vld [vmem:[%s3 + $0xc] sm:$0xf]
      %v381 = vld [vmem:[%s3 + $0x10] sm:$0xf]
      %v382 = vld [vmem:[%s3 + $0x14] sm:$0xf]
      %v383 = vld [vmem:[%s3 + $0x18] sm:$0xf]
      %v384 = vld [vmem:[%s3 + $0x1c] sm:$0xf]
      %v385 = vld [vmem:[%s4] sm:$0x1]
      %v387 = vlaneseq
      %v388 = vshrl.u32 %v387, 7
      %v389 = vsub.s32 0, %v388
      %v390 = vrot.slane %v385, %v389
      %v400 = vunpack.c.l.b16 %v377
      %v401 = vunpack.c.l.b16 %v378
      %v402 = vunpack.c.l.b16 %v379
      %v403 = vunpack.c.l.b16 %v380
      %v404 = vunpack.c.l.b16 %v381
      %v405 = vunpack.c.l.b16 %v382
      %v406 = vunpack.c.l.b16 %v383
      %v407 = vunpack.c.l.b16 %v384
      %v408 = vpack.c.b16 %v401, %v400
      %v409 = vpack.c.b16 %v403, %v402
      %v410 = vpack.c.b16 %v405, %v404
      %v411 = vpack.c.b16 %v407, %v406
      %vm416 = vcmask 523264
      %v418 = vsel %vm416, %v376, 0
      %420 = vmatprep.subr.bf16.mxu0 0
      %421 = vmatpush1.bf16.msra.mxu0 0
      %422 = vmatprep.subr.bf16.mxu0 0
      %423 = vmatpush1.bf16.msra.mxu0 0
      %424 = vmatprep.subr.bf16.mxu0 0
      %425 = vmatpush1.bf16.msra.mxu0 0
      %426 = vmatprep.subr.bf16.mxu0 0
      %427 = vmatpush1.bf16.msra.mxu0 0
      %428 = vmatprep.subr.bf16.mxu0 0
      %429 = vmatpush1.bf16.msra.mxu0 %v411
      %430 = vmatprep.subr.bf16.mxu0 0
      %431 = vmatpush1.bf16.msra.mxu0 %v410
      %432 = vmatprep.subr.bf16.mxu0 0
      %433 = vmatpush1.bf16.msra.mxu0 %v409
      %434 = vmatprep.subr.bf16.mxu0 0
      %435 = vmatpush1.bf16.msra.mxu0 %v408
      %436 = vmatprep.subr.bf16.mxu0 0
      %437 = vmatpush2.bf16.msra.mxu0 0
      %438 = vmatprep.subr.bf16.mxu0 0
      %439 = vmatpush2.bf16.msra.mxu0 0
      %440 = vmatprep.subr.bf16.mxu0 0
      %441 = vmatpush2.bf16.msra.mxu0 0
      %442 = vmatprep.subr.bf16.mxu0 0
      %443 = vmatpush2.bf16.msra.mxu0 0
      %444 = vmatprep.subr.bf16.mxu0 0
      %445 = vmatpush2.bf16.msra.mxu0 0
      %446 = vmatprep.subr.bf16.mxu0 0
      %447 = vmatpush2.bf16.msra.mxu0 0
      %448 = vmatprep.subr.bf16.mxu0 0
      %449 = vmatpush2.bf16.msra.mxu0 0
      %450 = vmatprep.subr.bf16.mxu0 0
      %451 = vmatpush2.bf16.msra.mxu0 0
      %452 = vmatprep.mubr.bf16.mxu0 0
      %453 = vmatmul.mubr.bf16.gmra.mxu0 %v418
      %v454 = vpop.f32.mrf.mxu0
      %v455 = vadd.f32 %v390, %v454
      %v456 = vpop.f32.mrf.mxu0
      %v457 = vpop.f32.mrf.mxu0
      %v458 = vpop.f32.mrf.mxu0
      %459 = vdwg.mxu0
      %v460 = vadd.f32 %v306, %v455
      %v461 = vld [vmem:[%s5] sm:$0x1]
      %v462 = vld [vmem:[%s6] sm:$0x1]
      %v463 = vsel %vm331, %v460, 0.0
      %464 = vadd.xlane.f32.xlu0 %v463
      %v465 = vpop.xlane.xlu0 %464
      %v466 = vrcp.pop 32.0
      %v467 = vmul.f32 %v465, %v466
      %v468 = vsub.f32 %v460, %v467
      %v469 = vmul.f32 %v468, %v468
      %v470 = vsel %vm331, %v469, 0.0
      %471 = vadd.xlane.f32.xlu0 %v470
      %v472 = vpop.xlane.xlu0 %471
      %v473 = vmul.f32 %v472, %v466
      %v474 = vadd.f32 %v473, 1e-05
      %v475 = vrsqrt.pop %v474
      %v476 = vmul.f32 %v468, %v475
      %v478 = vlaneseq
      %v479 = vshrl.u32 %v478, 7
      %v480 = vsub.s32 0, %v479
      %v481 = vrot.slane %v461, %v480
      %v483 = vmul.f32 %v476, %v481
      %v485 = vlaneseq
      %v486 = vshrl.u32 %v485, 7
      %v487 = vsub.s32 0, %v486
      %v488 = vrot.slane %v462, %v487
      %v490 = vadd.f32 %v483, %v488
      %491 = vst.msk [vmem:[%s304] sm:$0xff] %vm331, %v490
      %p492 = scmp.lt.s32.totalorder %s22, 1
      %s493 = scalar_select %p492, %s22, 1
      %p494 = scmp.lt.s32.totalorder %s23, 0
      %s495 = scalar_select %p494, %s23, 0
      %s496 = sadd.s32 %s495, %s493
      %s497 = smul.addr %s496, 8
      %s498 = scalar_lea.vmem %s7, %s497
      // Predicated region
      $region49: #{two_way_attention_block.6} parent=47 // pred_check
        %p499 = pneg %p204
      $region50: #{two_way_attention_block.6} parent=47 // pred_check_branch
        %501 = sbr.rel (%p499) target = $region52
      $region51: #{two_way_attention_block.6} parent=47 // pred_region
        _
      $region52: #{two_way_attention_block.6} parent=47 // pred_fallthru
        _
    $region48: #{two_way_attention_block.6} parent=5 // pred_fallthru
      _
    %p502 = scmp.le.s32.totalorder 2, %s13
    // Predicated region
    $region53: #{two_way_attention_block.6} parent=5 // pred_check
      %p503 = pneg %p502
    $region54: #{two_way_attention_block.6} parent=5 // pred_check_branch
      %505 = sbr.rel (%p503) target = $region56
    $region55: #{two_way_attention_block.6} parent=5 // pred_region
      %s506 = ssub.s32 %s13, 2
      // Predicated region
      $region57: #{two_way_attention_block.6} parent=55 // pred_check
        %p507 = pneg %p210
      $region58: #{two_way_attention_block.6} parent=55 // pred_check_branch
        %509 = sbr.rel (%p507) target = $region60
      $region59: #{two_way_attention_block.6} parent=55 // pred_region
        %p510 = scmp.lt.s32.totalorder %s24, 1
        %s511 = scalar_select %p510, %s24, 1
        %p512 = scmp.lt.s32.totalorder %s25, 0
        %s513 = scalar_select %p512, %s25, 0
        %s514 = sadd.s32 %s513, %s511
        %s515 = smul.addr %s514, 8
        %s516 = scalar_lea.vmem %s7, %s515
      $region60: #{two_way_attention_block.6} parent=55 // pred_fallthru
        _
    $region56: #{two_way_attention_block.6} parent=5 // pred_fallthru
      _
  $region6: #{two_way_attention_block.6} parent=0 // loop_footer
    %s17 = sadd.s32 1, %s13
  $region7: #{two_way_attention_block.6} parent=0 // loop_footer_branch
    %12 = sbr.rel target = $region3
  $region8: #{two_way_attention_block.6} parent=0 // loop_exit
    _

// kernel: two_way_attention_block.4
$region0: #{two_way_attention_block.4}
  #allocation0 [shape = 'u32[]', space=smem, size = 0x4, offset = 0x4, fixed_abs, tag = 'smem constant byte address 0x4 - core index']
  #allocation1 [shape = 'u32[144,128]{1,0:T(1,128)}', space=vmem, size = 0x12000, scoped, tag = 'internal scratch']
  #allocation2 [shape = 'f32[8,32]{1,0:T(8,128)}', space=vmem, size = 0x1000, scoped, tag = 'scratch operand']
  %s0 = inlined_call_operand.vmem [shape: f32[2,8,32], index: 0, kind: input, shape index: {}]
  %s1 = inlined_call_operand.vmem [shape: f32[2,8,32], index: 1, kind: input, shape index: {}]
  %s2 = inlined_call_operand.vmem [shape: bf16[32,32], index: 2, kind: input, shape index: {}]
  %s3 = inlined_call_operand.vmem [shape: f32[1,32], index: 3, kind: input, shape index: {}]
  %s4 = inlined_call_operand.vmem [shape: bf16[32,32], index: 4, kind: input, shape index: {}]
  %s5 = inlined_call_operand.vmem [shape: f32[1,32], index: 5, kind: input, shape index: {}]
  %s6 = inlined_call_operand.vmem [shape: bf16[32,32], index: 6, kind: input, shape index: {}]
  %s7 = inlined_call_operand.vmem [shape: f32[1,32], index: 7, kind: input, shape index: {}]
  %s8 = inlined_call_operand.vmem [shape: bf16[32,32], index: 8, kind: input, shape index: {}]
  %s9 = inlined_call_operand.vmem [shape: f32[1,32], index: 9, kind: input, shape index: {}]
  %s10 = inlined_call_operand.vmem [shape: f32[1,32], index: 10, kind: input, shape index: {}]
  %s11 = inlined_call_operand.vmem [shape: f32[1,32], index: 11, kind: input, shape index: {}]
  %s12 = inlined_call_operand.vmem [shape: f32[2,8,32], index: 12, kind: output, shape index: {}]
  %s13 = sld [smem:[#allocation0]]
  $region81: #{two_way_attention_block.4} parent=0
    _
  %s15 = ssub.s32 1, %s13
  %s16 = scalar_select 0, %s15, %s13
  loop: start=0, step=1, limit=4
  $region2: #{two_way_attention_block.4} parent=0 // loop_pre_header
    _
  $region3: #{two_way_attention_block.4} parent=0 // loop_header
    %s18 = sphi 0, %s22
    %p19 = scmp.ge.s32.totalorder %s18, 4
    %s28 = sphi 0, %s30
    %s31 = sphi 0, %s28
    %s32 = sphi 0, %s31
    %s48 = sphi 0, %s32
    %s54 = sphi 0, %s56
    %s57 = sphi 0, %s54
    %s58 = sphi 0, %s57
    %s74 = sphi 0, %s58
    %s78 = sphi 0, %s78
    %s80 = sphi 0, %s78
    %s81 = sphi 0, %s80
    %s95 = sphi 0, %s81
    %s99 = sphi 0, %s99
    %s101 = sphi 0, %s99
    %s102 = sphi 0, %s101
    %s116 = sphi 0, %s102
    %s120 = sphi 0, %s120
    %s122 = sphi 0, %s120
    %s123 = sphi 0, %s122
    %s137 = sphi 0, %s123
    %s141 = sphi 0, %s141
    %s143 = sphi 0, %s141
    %s144 = sphi 0, %s143
    %s158 = sphi 0, %s144
    %s162 = sphi 0, %s162
    %s164 = sphi 0, %s162
    %s165 = sphi 0, %s164
    %s179 = sphi 0, %s165
    %s183 = sphi 0, %s183
    %s185 = sphi 0, %s183
    %s186 = sphi 0, %s185
    %s200 = sphi 0, %s186
    %s204 = sphi 0, %s204
    %s206 = sphi 0, %s204
    %s207 = sphi 0, %s206
    %s221 = sphi 0, %s207
    %s225 = sphi 0, %s225
    %s227 = sphi 0, %s225
    %s228 = sphi 0, %s227
    %s242 = sphi 0, %s228
    %s246 = sphi 0, %s246
    %s248 = sphi 0, %s246
    %s249 = sphi 0, %s248
    %s263 = sphi 0, %s249
    %s267 = sphi 0, %s267
    %s269 = sphi 0, %s267
    %s270 = sphi 0, %s269
    %s284 = sphi 0, %s270
    %s290 = sphi 0, %s292
    %s293 = sphi 0, %s290
    %s294 = sphi 0, %s293
    %s310 = sphi 0, %s294
  $region4: #{two_way_attention_block.4} parent=0 // loop_header_branch
    %21 = sbr.rel (%p19) target = $region8
  $region5: #{two_way_attention_block.4} parent=0 // loop_body
    %s23 = ssub.s32 %s18, 1
    %s24 = ssub.s32 %s18, 2
    %s25 = sadd.s32 %s18, 1
    %s26 = ssub.s32 %s18, %s25
    %p27 = scmp.eq.s32.totalorder %s26, 0
    %s29 = sadd.s32 %s28, 1
    %s30 = scalar_select %p27, %s28, %s29
    %p33 = pneg %p27
    %p34 = scmp.eq.s32.totalorder %s18, 1
    %p35 = por %p33, %p34
    %p36 = scmp.ne.s32.totalorder %s28, %s31
    %p37 = scmp.eq.s32.totalorder %s18, 0
    %p38 = por %p36, %p37
    %p39 = scmp.ne.s32.totalorder %s28, %s31
    %p40 = scmp.eq.s32.totalorder %s23, 1
    %p41 = por %p39, %p40
    %p42 = scmp.ne.s32.totalorder %s31, %s32
    %p43 = scmp.eq.s32.totalorder %s23, 0
    %p44 = por %p42, %p43
    %p45 = scmp.ne.s32.totalorder %s31, %s32
    %p46 = scmp.eq.s32.totalorder %s24, 1
    %p47 = por %p45, %p46
    %p49 = scmp.ne.s32.totalorder %s32, %s48
    %p50 = scmp.eq.s32.totalorder %s24, 0
    %p51 = por %p49, %p50
    %s52 = ssub.s32 %s18, %s25
    %p53 = scmp.eq.s32.totalorder %s52, 0
    %s55 = sadd.s32 %s54, 1
    %s56 = scalar_select %p53, %s54, %s55
    %p59 = pneg %p53
    %p60 = scmp.eq.s32.totalorder %s18, 1
    %p61 = por %p59, %p60
    %p62 = scmp.ne.s32.totalorder %s54, %s57
    %p63 = scmp.eq.s32.totalorder %s18, 0
    %p64 = por %p62, %p63
    %p65 = scmp.ne.s32.totalorder %s54, %s57
    %p66 = scmp.eq.s32.totalorder %s23, 1
    %p67 = por %p65, %p66
    %p68 = scmp.ne.s32.totalorder %s57, %s58
    %p69 = scmp.eq.s32.totalorder %s23, 0
    %p70 = por %p68, %p69
    %p71 = scmp.ne.s32.totalorder %s57, %s58
    %p72 = scmp.eq.s32.totalorder %s24, 1
    %p73 = por %p71, %p72
    %p75 = scmp.ne.s32.totalorder %s58, %s74
    %p76 = scmp.eq.s32.totalorder %s24, 0
    %p77 = por %p75, %p76
    %s79 = sadd.s32 %s78, 1
    %p82 = scmp.eq.s32.totalorder %s18, 1
    %p83 = scmp.ne.s32.totalorder %s78, %s80
    %p84 = scmp.eq.s32.totalorder %s18, 0
    %p85 = por %p83, %p84
    %p86 = scmp.ne.s32.totalorder %s78, %s80
    %p87 = scmp.eq.s32.totalorder %s23, 1
    %p88 = por %p86, %p87
    %p89 = scmp.ne.s32.totalorder %s80, %s81
    %p90 = scmp.eq.s32.totalorder %s23, 0
    %p91 = por %p89, %p90
    %p92 = scmp.ne.s32.totalorder %s80, %s81
    %p93 = scmp.eq.s32.totalorder %s24, 1
    %p94 = por %p92, %p93
    %p96 = scmp.ne.s32.totalorder %s81, %s95
    %p97 = scmp.eq.s32.totalorder %s24, 0
    %p98 = por %p96, %p97
    %s100 = sadd.s32 %s99, 1
    %p103 = scmp.eq.s32.totalorder %s18, 1
    %p104 = scmp.ne.s32.totalorder %s99, %s101
    %p105 = scmp.eq.s32.totalorder %s18, 0
    %p106 = por %p104, %p105
    %p107 = scmp.ne.s32.totalorder %s99, %s101
    %p108 = scmp.eq.s32.totalorder %s23, 1
    %p109 = por %p107, %p108
    %p110 = scmp.ne.s32.totalorder %s101, %s102
    %p111 = scmp.eq.s32.totalorder %s23, 0
    %p112 = por %p110, %p111
    %p113 = scmp.ne.s32.totalorder %s101, %s102
    %p114 = scmp.eq.s32.totalorder %s24, 1
    %p115 = por %p113, %p114
    %p117 = scmp.ne.s32.totalorder %s102, %s116
    %p118 = scmp.eq.s32.totalorder %s24, 0
    %p119 = por %p117, %p118
    %s121 = sadd.s32 %s120, 1
    %p124 = scmp.eq.s32.totalorder %s18, 1
    %p125 = scmp.ne.s32.totalorder %s120, %s122
    %p126 = scmp.eq.s32.totalorder %s18, 0
    %p127 = por %p125, %p126
    %p128 = scmp.ne.s32.totalorder %s120, %s122
    %p129 = scmp.eq.s32.totalorder %s23, 1
    %p130 = por %p128, %p129
    %p131 = scmp.ne.s32.totalorder %s122, %s123
    %p132 = scmp.eq.s32.totalorder %s23, 0
    %p133 = por %p131, %p132
    %p134 = scmp.ne.s32.totalorder %s122, %s123
    %p135 = scmp.eq.s32.totalorder %s24, 1
    %p136 = por %p134, %p135
    %p138 = scmp.ne.s32.totalorder %s123, %s137
    %p139 = scmp.eq.s32.totalorder %s24, 0
    %p140 = por %p138, %p139
    %s142 = sadd.s32 %s141, 1
    %p145 = scmp.eq.s32.totalorder %s18, 1
    %p146 = scmp.ne.s32.totalorder %s141, %s143
    %p147 = scmp.eq.s32.totalorder %s18, 0
    %p148 = por %p146, %p147
    %p149 = scmp.ne.s32.totalorder %s141, %s143
    %p150 = scmp.eq.s32.totalorder %s23, 1
    %p151 = por %p149, %p150
    %p152 = scmp.ne.s32.totalorder %s143, %s144
    %p153 = scmp.eq.s32.totalorder %s23, 0
    %p154 = por %p152, %p153
    %p155 = scmp.ne.s32.totalorder %s143, %s144
    %p156 = scmp.eq.s32.totalorder %s24, 1
    %p157 = por %p155, %p156
    %p159 = scmp.ne.s32.totalorder %s144, %s158
    %p160 = scmp.eq.s32.totalorder %s24, 0
    %p161 = por %p159, %p160
    %s163 = sadd.s32 %s162, 1
    %p166 = scmp.eq.s32.totalorder %s18, 1
    %p167 = scmp.ne.s32.totalorder %s162, %s164
    %p168 = scmp.eq.s32.totalorder %s18, 0
    %p169 = por %p167, %p168
    %p170 = scmp.ne.s32.totalorder %s162, %s164
    %p171 = scmp.eq.s32.totalorder %s23, 1
    %p172 = por %p170, %p171
    %p173 = scmp.ne.s32.totalorder %s164, %s165
    %p174 = scmp.eq.s32.totalorder %s23, 0
    %p175 = por %p173, %p174
    %p176 = scmp.ne.s32.totalorder %s164, %s165
    %p177 = scmp.eq.s32.totalorder %s24, 1
    %p178 = por %p176, %p177
    %p180 = scmp.ne.s32.totalorder %s165, %s179
    %p181 = scmp.eq.s32.totalorder %s24, 0
    %p182 = por %p180, %p181
    %s184 = sadd.s32 %s183, 1
    %p187 = scmp.eq.s32.totalorder %s18, 1
    %p188 = scmp.ne.s32.totalorder %s183, %s185
    %p189 = scmp.eq.s32.totalorder %s18, 0
    %p190 = por %p188, %p189
    %p191 = scmp.ne.s32.totalorder %s183, %s185
    %p192 = scmp.eq.s32.totalorder %s23, 1
    %p193 = por %p191, %p192
    %p194 = scmp.ne.s32.totalorder %s185, %s186
    %p195 = scmp.eq.s32.totalorder %s23, 0
    %p196 = por %p194, %p195
    %p197 = scmp.ne.s32.totalorder %s185, %s186
    %p198 = scmp.eq.s32.totalorder %s24, 1
    %p199 = por %p197, %p198
    %p201 = scmp.ne.s32.totalorder %s186, %s200
    %p202 = scmp.eq.s32.totalorder %s24, 0
    %p203 = por %p201, %p202
    %s205 = sadd.s32 %s204, 1
    %p208 = scmp.eq.s32.totalorder %s18, 1
    %p209 = scmp.ne.s32.totalorder %s204, %s206
    %p210 = scmp.eq.s32.totalorder %s18, 0
    %p211 = por %p209, %p210
    %p212 = scmp.ne.s32.totalorder %s204, %s206
    %p213 = scmp.eq.s32.totalorder %s23, 1
    %p214 = por %p212, %p213
    %p215 = scmp.ne.s32.totalorder %s206, %s207
    %p216 = scmp.eq.s32.totalorder %s23, 0
    %p217 = por %p215, %p216
    %p218 = scmp.ne.s32.totalorder %s206, %s207
    %p219 = scmp.eq.s32.totalorder %s24, 1
    %p220 = por %p218, %p219
    %p222 = scmp.ne.s32.totalorder %s207, %s221
    %p223 = scmp.eq.s32.totalorder %s24, 0
    %p224 = por %p222, %p223
    %s226 = sadd.s32 %s225, 1
    %p229 = scmp.eq.s32.totalorder %s18, 1
    %p230 = scmp.ne.s32.totalorder %s225, %s227
    %p231 = scmp.eq.s32.totalorder %s18, 0
    %p232 = por %p230, %p231
    %p233 = scmp.ne.s32.totalorder %s225, %s227
    %p234 = scmp.eq.s32.totalorder %s23, 1
    %p235 = por %p233, %p234
    %p236 = scmp.ne.s32.totalorder %s227, %s228
    %p237 = scmp.eq.s32.totalorder %s23, 0
    %p238 = por %p236, %p237
    %p239 = scmp.ne.s32.totalorder %s227, %s228
    %p240 = scmp.eq.s32.totalorder %s24, 1
    %p241 = por %p239, %p240
    %p243 = scmp.ne.s32.totalorder %s228, %s242
    %p244 = scmp.eq.s32.totalorder %s24, 0
    %p245 = por %p243, %p244
    %s247 = sadd.s32 %s246, 1
    %p250 = scmp.eq.s32.totalorder %s18, 1
    %p251 = scmp.ne.s32.totalorder %s246, %s248
    %p252 = scmp.eq.s32.totalorder %s18, 0
    %p253 = por %p251, %p252
    %p254 = scmp.ne.s32.totalorder %s246, %s248
    %p255 = scmp.eq.s32.totalorder %s23, 1
    %p256 = por %p254, %p255
    %p257 = scmp.ne.s32.totalorder %s248, %s249
    %p258 = scmp.eq.s32.totalorder %s23, 0
    %p259 = por %p257, %p258
    %p260 = scmp.ne.s32.totalorder %s248, %s249
    %p261 = scmp.eq.s32.totalorder %s24, 1
    %p262 = por %p260, %p261
    %p264 = scmp.ne.s32.totalorder %s249, %s263
    %p265 = scmp.eq.s32.totalorder %s24, 0
    %p266 = por %p264, %p265
    %s268 = sadd.s32 %s267, 1
    %p271 = scmp.eq.s32.totalorder %s18, 1
    %p272 = scmp.ne.s32.totalorder %s267, %s269
    %p273 = scmp.eq.s32.totalorder %s18, 0
    %p274 = por %p272, %p273
    %p275 = scmp.ne.s32.totalorder %s267, %s269
    %p276 = scmp.eq.s32.totalorder %s23, 1
    %p277 = por %p275, %p276
    %p278 = scmp.ne.s32.totalorder %s269, %s270
    %p279 = scmp.eq.s32.totalorder %s23, 0
    %p280 = por %p278, %p279
    %p281 = scmp.ne.s32.totalorder %s269, %s270
    %p282 = scmp.eq.s32.totalorder %s24, 1
    %p283 = por %p281, %p282
    %p285 = scmp.ne.s32.totalorder %s270, %s284
    %p286 = scmp.eq.s32.totalorder %s24, 0
    %p287 = por %p285, %p286
    %s288 = ssub.s32 %s18, %s25
    %p289 = scmp.eq.s32.totalorder %s288, 0
    %s291 = sadd.s32 %s290, 1
    %s292 = scalar_select %p289, %s290, %s291
    %p295 = pneg %p289
    %p296 = scmp.eq.s32.totalorder %s18, 1
    %p297 = por %p295, %p296
    %p298 = scmp.ne.s32.totalorder %s290, %s293
    %p299 = scmp.eq.s32.totalorder %s18, 0
    %p300 = por %p298, %p299
    %p301 = scmp.ne.s32.totalorder %s290, %s293
    %p302 = scmp.eq.s32.totalorder %s23, 1
    %p303 = por %p301, %p302
    %p304 = scmp.ne.s32.totalorder %s293, %s294
    %p305 = scmp.eq.s32.totalorder %s23, 0
    %p306 = por %p304, %p305
    %p307 = scmp.ne.s32.totalorder %s293, %s294
    %p308 = scmp.eq.s32.totalorder %s24, 1
    %p309 = por %p307, %p308
    %p311 = scmp.ne.s32.totalorder %s294, %s310
    %p312 = scmp.eq.s32.totalorder %s24, 0
    %p313 = por %p311, %p312
    %p314 = scmp.le.s32.totalorder 1, %s18
    %p315 = scmp.lt.s32.totalorder %s18, 3
    %p316 = pnand %p314, %p315
    %p317 = pneg %p316
    // Predicated region
    $region9: #{two_way_attention_block.4} parent=5 // pred_check
      _
    $region10: #{two_way_attention_block.4} parent=5 // pred_check_branch
      %319 = sbr.rel (%p316) target = $region12
    $region11: #{two_way_attention_block.4} parent=5 // pred_region
      %s320 = ssub.s32 %s18, 1
      // Predicated region
      $region13: #{two_way_attention_block.4} parent=11 // pred_check
        %p321 = pneg %p91
      $region14: #{two_way_attention_block.4} parent=11 // pred_check_branch
        %323 = sbr.rel (%p321) target = $region16
      $region15: #{two_way_attention_block.4} parent=11 // pred_region
        _
      $region16: #{two_way_attention_block.4} parent=11 // pred_fallthru
        _
      // Predicated region
      $region17: #{two_way_attention_block.4} parent=11 // pred_check
        %p324 = pneg %p112
      $region18: #{two_way_attention_block.4} parent=11 // pred_check_branch
        %326 = sbr.rel (%p324) target = $region20
      $region19: #{two_way_attention_block.4} parent=11 // pred_region
        _
      $region20: #{two_way_attention_block.4} parent=11 // pred_fallthru
        _
      // Predicated region
      $region21: #{two_way_attention_block.4} parent=11 // pred_check
        %p327 = pneg %p133
      $region22: #{two_way_attention_block.4} parent=11 // pred_check_branch
        %329 = sbr.rel (%p327) target = $region24
      $region23: #{two_way_attention_block.4} parent=11 // pred_region
        _
      $region24: #{two_way_attention_block.4} parent=11 // pred_fallthru
        _
      // Predicated region
      $region25: #{two_way_attention_block.4} parent=11 // pred_check
        %p330 = pneg %p154
      $region26: #{two_way_attention_block.4} parent=11 // pred_check_branch
        %332 = sbr.rel (%p330) target = $region28
      $region27: #{two_way_attention_block.4} parent=11 // pred_region
        _
      $region28: #{two_way_attention_block.4} parent=11 // pred_fallthru
        _
      // Predicated region
      $region29: #{two_way_attention_block.4} parent=11 // pred_check
        %p333 = pneg %p175
      $region30: #{two_way_attention_block.4} parent=11 // pred_check_branch
        %335 = sbr.rel (%p333) target = $region32
      $region31: #{two_way_attention_block.4} parent=11 // pred_region
        _
      $region32: #{two_way_attention_block.4} parent=11 // pred_fallthru
        _
      // Predicated region
      $region33: #{two_way_attention_block.4} parent=11 // pred_check
        %p336 = pneg %p196
      $region34: #{two_way_attention_block.4} parent=11 // pred_check_branch
        %338 = sbr.rel (%p336) target = $region36
      $region35: #{two_way_attention_block.4} parent=11 // pred_region
        _
      $region36: #{two_way_attention_block.4} parent=11 // pred_fallthru
        _
      // Predicated region
      $region37: #{two_way_attention_block.4} parent=11 // pred_check
        %p339 = pneg %p217
      $region38: #{two_way_attention_block.4} parent=11 // pred_check_branch
        %341 = sbr.rel (%p339) target = $region40
      $region39: #{two_way_attention_block.4} parent=11 // pred_region
        _
      $region40: #{two_way_attention_block.4} parent=11 // pred_fallthru
        _
      // Predicated region
      $region41: #{two_way_attention_block.4} parent=11 // pred_check
        %p342 = pneg %p238
      $region42: #{two_way_attention_block.4} parent=11 // pred_check_branch
        %344 = sbr.rel (%p342) target = $region44
      $region43: #{two_way_attention_block.4} parent=11 // pred_region
        _
      $region44: #{two_way_attention_block.4} parent=11 // pred_fallthru
        _
      // Predicated region
      $region45: #{two_way_attention_block.4} parent=11 // pred_check
        %p345 = pneg %p259
      $region46: #{two_way_attention_block.4} parent=11 // pred_check_branch
        %347 = sbr.rel (%p345) target = $region48
      $region47: #{two_way_attention_block.4} parent=11 // pred_region
        _
      $region48: #{two_way_attention_block.4} parent=11 // pred_fallthru
        _
      // Predicated region
      $region49: #{two_way_attention_block.4} parent=11 // pred_check
        %p348 = pneg %p280
      $region50: #{two_way_attention_block.4} parent=11 // pred_check_branch
        %350 = sbr.rel (%p348) target = $region52
      $region51: #{two_way_attention_block.4} parent=11 // pred_region
        _
      $region52: #{two_way_attention_block.4} parent=11 // pred_fallthru
        _
    $region12: #{two_way_attention_block.4} parent=5 // pred_fallthru
      _
    %p351 = scmp.lt.s32.totalorder %s18, 2
    // Predicated region
    $region53: #{two_way_attention_block.4} parent=5 // pred_check
      %p352 = pneg %p351
    $region54: #{two_way_attention_block.4} parent=5 // pred_check_branch
      %354 = sbr.rel (%p352) target = $region56
    $region55: #{two_way_attention_block.4} parent=5 // pred_region
      // Predicated region
      $region57: #{two_way_attention_block.4} parent=55 // pred_check
        %p355 = pneg %p38
      $region58: #{two_way_attention_block.4} parent=55 // pred_check_branch
        %357 = sbr.rel (%p355) target = $region60
      $region59: #{two_way_attention_block.4} parent=55 // pred_region
        %p358 = scmp.lt.s32.totalorder %s18, 1
        %s359 = scalar_select %p358, %s18, 1
        %s360 = smul.addr %s359, 8
        %s361 = scalar_lea.vmem %s0, %s360
      $region60: #{two_way_attention_block.4} parent=55 // pred_fallthru
        _
      // Predicated region
      $region61: #{two_way_attention_block.4} parent=55 // pred_check
        %p362 = pneg %p64
      $region62: #{two_way_attention_block.4} parent=55 // pred_check_branch
        %364 = sbr.rel (%p362) target = $region64
      $region63: #{two_way_attention_block.4} parent=55 // pred_region
        %p365 = scmp.lt.s32.totalorder %s18, 1
        %s366 = scalar_select %p365, %s18, 1
        %s367 = smul.addr %s366, 8
        %s368 = scalar_lea.vmem %s1, %s367
      $region64: #{two_way_attention_block.4} parent=55 // pred_fallthru
        _
    $region56: #{two_way_attention_block.4} parent=5 // pred_fallthru
      _
    %p369 = scmp.le.s32.totalorder 1, %s18
    %p370 = scmp.lt.s32.totalorder %s18, 3
    %p371 = pnand %p369, %p370
    %p372 = pneg %p371
    // Predicated region
    $region65: #{two_way_attention_block.4} parent=5 // pred_check
      _
    $region66: #{two_way_attention_block.4} parent=5 // pred_check_branch
      %374 = sbr.rel (%p371) target = $region68
    $region67: #{two_way_attention_block.4} parent=5 // pred_region
      %s375 = ssub.s32 %s18, 1
      %p376 = scmp.lt.s32.totalorder %s23, 1
      %s377 = scalar_select %p376, %s23, 1
      %s378 = smul.addr %s377, 8
      %s379 = scalar_lea.vmem %s0, %s378
      %p380 = pneg %p44
      %p381 = pneg %p41
      %p382 = scmp.lt.s32.totalorder %s23, 1
      %s383 = scalar_select %p382, %s23, 1
      %s384 = smul.addr %s383, 8
      %s385 = scalar_lea.vmem %s1, %s384
      %p386 = pneg %p70
      %p387 = pneg %p67
      %p388 = pneg %p91
      %p389 = pneg %p88
      %p390 = pneg %p112
      %p391 = pneg %p109
      %p392 = pneg %p133
      %p393 = pneg %p130
      %p394 = pneg %p154
      %p395 = pneg %p151
      %p396 = pneg %p175
      %p397 = pneg %p172
      %p398 = pneg %p196
      %p399 = pneg %p193
      %p400 = pneg %p217
      %p401 = pneg %p214
      %p402 = pneg %p238
      %p403 = pneg %p235
      %p404 = pneg %p259
      %p405 = pneg %p256
      %p406 = pneg %p280
      %p407 = pneg %p277
      %p408 = pneg %p306
      %p409 = pneg %p303
      %p410 = scmp.lt.s32.totalorder %s23, 1
      %s411 = scalar_select %p410, %s23, 1
      %s412 = smul.addr %s411, 8
      %s413 = scalar_lea.vmem %s12, %s412
      %p414 = scmp.lt.s32.totalorder %s23, 1
      %s415 = scalar_select %p414, %s23, 1
      %s416 = smul.addr %s415, 8
      %s417 = scalar_lea.vmem %s0, %s416
      %p418 = scmp.lt.s32.totalorder %s23, 1
      %s419 = scalar_select %p418, %s23, 1
      %s420 = smul.addr %s419, 8
      %s421 = scalar_lea.vmem %s1, %s420
      %p422 = scmp.lt.s32.totalorder %s23, 1
      %s423 = scalar_select %p422, %s23, 1
      %s424 = smul.addr %s423, 8
      %s425 = scalar_lea.vmem %s12, %s424
      %v427 = vld [vmem:[%s417] sm:$0xff]
      %v428 = vld [vmem:[%s421] sm:$0xff]
      %v429 = vadd.f32 %v427, %v428
      %v430 = vpack.c.bf16 %v429, %v429
      %v431 = vpack.c.bf16 %v427, %v427
      %v432 = vld [vmem:[%s2] sm:$0xf]
      %v433 = vld [vmem:[%s2 + $0x4] sm:$0xf]
      %v434 = vld [vmem:[%s2 + $0x8] sm:$0xf]
      %v435 = vld [vmem:[%s2 + $0xc] sm:$0xf]
      %v436 = vld [vmem:[%s3] sm:$0x1]
      %v438 = vlaneseq
      %v439 = vshrl.u32 %v438, 7
      %v440 = vsub.s32 0, %v439
      %v441 = vrot.slane %v436, %v440
      %v447 = vunpack.c.l.b16 %v432
      %v448 = vunpack.c.l.b16 %v433
      %v449 = vunpack.c.l.b16 %v434
      %v450 = vunpack.c.l.b16 %v435
      %v451 = vpack.c.b16 %v448, %v447
      %v452 = vpack.c.b16 %v450, %v449
      %vm455 = vcmask 261120
      %v457 = vsel %vm455, %v430, 0
      %459 = vmatprep.subr.bf16.mxu0 0
      %460 = vmatpush1.bf16.msra.mxu0 0
      %461 = vmatprep.subr.bf16.mxu0 0
      %462 = vmatpush1.bf16.msra.mxu0 0
      %463 = vmatprep.subr.bf16.mxu0 0
      %464 = vmatpush1.bf16.msra.mxu0 0
      %465 = vmatprep.subr.bf16.mxu0 0
      %466 = vmatpush1.bf16.msra.mxu0 0
      %467 = vmatprep.subr.bf16.mxu0 0
      %468 = vmatpush1.bf16.msra.mxu0 0
      %469 = vmatprep.subr.bf16.mxu0 0
      %470 = vmatpush1.bf16.msra.mxu0 0
      %471 = vmatprep.subr.bf16.mxu0 0
      %472 = vmatpush1.bf16.msra.mxu0 %v452
      %473 = vmatprep.subr.bf16.mxu0 0
      %474 = vmatpush1.bf16.msra.mxu0 %v451
      %475 = vmatprep.subr.bf16.mxu0 0
      %476 = vmatpush2.bf16.msra.mxu0 0
      %477 = vmatprep.subr.bf16.mxu0 0
      %478 = vmatpush2.bf16.msra.mxu0 0
      %479 = vmatprep.subr.bf16.mxu0 0
      %480 = vmatpush2.bf16.msra.mxu0 0
      %481 = vmatprep.subr.bf16.mxu0 0
      %482 = vmatpush2.bf16.msra.mxu0 0
      %483 = vmatprep.subr.bf16.mxu0 0
      %484 = vmatpush2.bf16.msra.mxu0 0
      %485 = vmatprep.subr.bf16.mxu0 0
      %486 = vmatpush2.bf16.msra.mxu0 0
      %487 = vmatprep.subr.bf16.mxu0 0
      %488 = vmatpush2.bf16.msra.mxu0 0
      %489 = vmatprep.subr.bf16.mxu0 0
      %490 = vmatpush2.bf16.msra.mxu0 0
      %491 = vmatprep.mubr.bf16.mxu0 0
      %492 = vmatmul.mubr.bf16.gmra.mxu0 %v457
      %v493 = vpop.f32.mrf.mxu0
      %v494 = vadd.f32 %v441, %v493
      %v495 = vpop.f32.mrf.mxu0
      %v496 = vpop.f32.mrf.mxu0
      %v497 = vpop.f32.mrf.mxu0
      %498 = vdwg.mxu0
      %v499 = vpack.c.bf16 %v494, %v494
      %v500 = vld [vmem:[%s4] sm:$0xf]
      %v501 = vld [vmem:[%s4 + $0x4] sm:$0xf]
      %v502 = vld [vmem:[%s4 + $0x8] sm:$0xf]
      %v503 = vld [vmem:[%s4 + $0xc] sm:$0xf]
      %v504 = vld [vmem:[%s5] sm:$0x1]
      %v506 = vlaneseq
      %v507 = vshrl.u32 %v506, 7
      %v508 = vsub.s32 0, %v507
      %v509 = vrot.slane %v504, %v508
      %v515 = vunpack.c.l.b16 %v500
      %v516 = vunpack.c.l.b16 %v501
      %v517 = vunpack.c.l.b16 %v502
      %v518 = vunpack.c.l.b16 %v503
      %v519 = vpack.c.b16 %v516, %v515
      %v520 = vpack.c.b16 %v518, %v517
      %523 = vmatprep.subr.bf16.mxu0 0
      %524 = vmatpush1.bf16.msra.mxu0 0
      %525 = vmatprep.subr.bf16.mxu0 0
      %526 = vmatpush1.bf16.msra.mxu0 0
      %527 = vmatprep.subr.bf16.mxu0 0
      %528 = vmatpush1.bf16.msra.mxu0 0
      %529 = vmatprep.subr.bf16.mxu0 0
      %530 = vmatpush1.bf16.msra.mxu0 0
      %531 = vmatprep.subr.bf16.mxu0 0
      %532 = vmatpush1.bf16.msra.mxu0 0
      %533 = vmatprep.subr.bf16.mxu0 0
      %534 = vmatpush1.bf16.msra.mxu0 0
      %535 = vmatprep.subr.bf16.mxu0 0
      %536 = vmatpush1.bf16.msra.mxu0 %v520
      %537 = vmatprep.subr.bf16.mxu0 0
      %538 = vmatpush1.bf16.msra.mxu0 %v519
      %539 = vmatprep.subr.bf16.mxu0 0
      %540 = vmatpush2.bf16.msra.mxu0 0
      %541 = vmatprep.subr.bf16.mxu0 0
      %542 = vmatpush2.bf16.msra.mxu0 0
      %543 = vmatprep.subr.bf16.mxu0 0
      %544 = vmatpush2.bf16.msra.mxu0 0
      %545 = vmatprep.subr.bf16.mxu0 0
      %546 = vmatpush2.bf16.msra.mxu0 0
      %547 = vmatprep.subr.bf16.mxu0 0
      %548 = vmatpush2.bf16.msra.mxu0 0
      %549 = vmatprep.subr.bf16.mxu0 0
      %550 = vmatpush2.bf16.msra.mxu0 0
      %551 = vmatprep.subr.bf16.mxu0 0
      %552 = vmatpush2.bf16.msra.mxu0 0
      %553 = vmatprep.subr.bf16.mxu0 0
      %554 = vmatpush2.bf16.msra.mxu0 0
      %555 = vmatprep.mubr.bf16.mxu0 0
      %556 = vmatmul.mubr.bf16.gmra.mxu0 %v457
      %v557 = vpop.f32.mrf.mxu0
      %v558 = vadd.f32 %v509, %v557
      %v559 = vpop.f32.mrf.mxu0
      %v560 = vpop.f32.mrf.mxu0
      %v561 = vpop.f32.mrf.mxu0
      %562 = vdwg.mxu0
      %v563 = vpack.c.bf16 %v558, %v558
      %v564 = vld [vmem:[%s6] sm:$0xf]
      %v565 = vld [vmem:[%s6 + $0x4] sm:$0xf]
      %v566 = vld [vmem:[%s6 + $0x8] sm:$0xf]
      %v567 = vld [vmem:[%s6 + $0xc] sm:$0xf]
      %v568 = vld [vmem:[%s7] sm:$0x1]
      %v570 = vlaneseq
      %v571 = vshrl.u32 %v570, 7
      %v572 = vsub.s32 0, %v571
      %v573 = vrot.slane %v568, %v572
      %v579 = vunpack.c.l.b16 %v564
      %v580 = vunpack.c.l.b16 %v565
      %v581 = vunpack.c.l.b16 %v566
      %v582 = vunpack.c.l.b16 %v567
      %v583 = vpack.c.b16 %v580, %v579
      %v584 = vpack.c.b16 %v582, %v581
      %v588 = vsel %vm455, %v431, 0
      %590 = vmatprep.subr.bf16.mxu0 0
      %591 = vmatpush1.bf16.msra.mxu0 0
      %592 = vmatprep.subr.bf16.mxu0 0
      %593 = vmatpush1.bf16.msra.mxu0 0
      %594 = vmatprep.subr.bf16.mxu0 0
      %595 = vmatpush1.bf16.msra.mxu0 0
      %596 = vmatprep.subr.bf16.mxu0 0
      %597 = vmatpush1.bf16.msra.mxu0 0
      %598 = vmatprep.subr.bf16.mxu0 0
      %599 = vmatpush1.bf16.msra.mxu0 0
      %600 = vmatprep.subr.bf16.mxu0 0
      %601 = vmatpush1.bf16.msra.mxu0 0
      %602 = vmatprep.subr.bf16.mxu0 0
      %603 = vmatpush1.bf16.msra.mxu0 %v584
      %604 = vmatprep.subr.bf16.mxu0 0
      %605 = vmatpush1.bf16.msra.mxu0 %v583
      %606 = vmatprep.subr.bf16.mxu0 0
      %607 = vmatpush2.bf16.msra.mxu0 0
      %608 = vmatprep.subr.bf16.mxu0 0
      %609 = vmatpush2.bf16.msra.mxu0 0
      %610 = vmatprep.subr.bf16.mxu0 0
      %611 = vmatpush2.bf16.msra.mxu0 0
      %612 = vmatprep.subr.bf16.mxu0 0
      %613 = vmatpush2.bf16.msra.mxu0 0
      %614 = vmatprep.subr.bf16.mxu0 0
      %615 = vmatpush2.bf16.msra.mxu0 0
      %616 = vmatprep.subr.bf16.mxu0 0
      %617 = vmatpush2.bf16.msra.mxu0 0
      %618 = vmatprep.subr.bf16.mxu0 0
      %619 = vmatpush2.bf16.msra.mxu0 0
      %620 = vmatprep.subr.bf16.mxu0 0
      %621 = vmatpush2.bf16.msra.mxu0 0
      %622 = vmatprep.mubr.bf16.mxu0 0
      %623 = vmatmul.mubr.bf16.gmra.mxu0 %v588
      %v624 = vpop.f32.mrf.mxu0
      %v625 = vadd.f32 %v573, %v624
      %v626 = vpop.f32.mrf.mxu0
      %v627 = vpop.f32.mrf.mxu0
      %v628 = vpop.f32.mrf.mxu0
      %629 = vdwg.mxu0
      %v630 = vpack.c.bf16 %v625, %v625
      %vm631 = vcmask 64512
      %v633 = vsel %vm631, %v499, 0
      %v636 = vsel %vm631, %v563, 0
      %638 = vmatprep.subr.bf16.mxu0 0
      %639 = vmatpush1.bf16.xpose.msra.mxu0 0
      %640 = vmatprep.subr.bf16.mxu0 0
      %641 = vmatpush1.bf16.xpose.msra.mxu0 0
      %642 = vmatprep.subr.bf16.mxu0 0
      %643 = vmatpush1.bf16.xpose.msra.mxu0 0
      %644 = vmatprep.subr.bf16.mxu0 0
      %645 = vmatpush1.bf16.xpose.msra.mxu0 0
      %646 = vmatprep.subr.bf16.mxu0 0
      %647 = vmatpush1.bf16.xpose.msra.mxu0 0
      %648 = vmatprep.subr.bf16.mxu0 0
      %649 = vmatpush1.bf16.xpose.msra.mxu0 0
      %650 = vmatprep.subr.bf16.mxu0 0
      %651 = vmatpush1.bf16.xpose.msra.mxu0 0
      %652 = vmatprep.subr.bf16.mxu0 0
      %653 = vmatpush1.bf16.xpose.msra.mxu0 %v636
      %654 = vmatprep.subr.bf16.mxu0 0
      %655 = vmatpush2.bf16.xpose.msra.mxu0 0
      %656 = vmatprep.subr.bf16.mxu0 0
      %657 = vmatpush2.bf16.xpose.msra.mxu0 0
      %658 = vmatprep.subr.bf16.mxu0 0
      %659 = vmatpush2.bf16.xpose.msra.mxu0 0
      %660 = vmatprep.subr.bf16.mxu0 0
      %661 = vmatpush2.bf16.xpose.msra.mxu0 0
      %662 = vmatprep.subr.bf16.mxu0 0
      %663 = vmatpush2.bf16.xpose.msra.mxu0 0
      %664 = vmatprep.subr.bf16.mxu0 0
      %665 = vmatpush2.bf16.xpose.msra.mxu0 0
      %666 = vmatprep.subr.bf16.mxu0 0
      %667 = vmatpush2.bf16.xpose.msra.mxu0 0
      %668 = vmatprep.subr.bf16.mxu0 0
      %669 = vmatpush2.bf16.xpose.msra.mxu0 0
      %670 = vmatprep.mubr.bf16.mxu0 0
      %671 = vmatmul.mubr.bf16.gmra.mxu0 %v633
      %v672 = vpop.f32.mrf.mxu0
      %v673 = vadd.f32 0.0, %v672
      %v674 = vpop.f32.mrf.mxu0
      %v675 = vpop.f32.mrf.mxu0
      %v676 = vpop.f32.mrf.mxu0
      %677 = vdwg.mxu0
      %v678 = vsel %vm631, %v673, -inf
      %679 = vmax.xlane.f32.xlu0 %v678
      %v680 = vpop.xlane.xlu0 %679
      %v681 = vsub.f32 %v673, %v680
      %v682 = vmul.f32 %v681, 1.442695
      %v683 = vpow.pop %v682
      %v684 = vsel %vm631, %v683, 0.0
      %685 = vadd.xlane.f32.xlu0 %v684
      %v686 = vpop.xlane.xlu0 %685
      %v687 = vrcp.pop %v686
      %v688 = vmul.f32 %v683, %v687
      %v689 = vpack.c.bf16 %v688, %v688
      %v691 = vsel %vm631, %v689, 0
      %vm693 = vcmask 1043456
      %v695 = vsel %vm693, %v630, 0
      %697 = vmatprep.subr.bf16.mxu0 0
      %698 = vmatpush1.bf16.msra.mxu0 0
      %699 = vmatprep.subr.bf16.mxu0 0
      %700 = vmatpush1.bf16.msra.mxu0 0
      %701 = vmatprep.subr.bf16.mxu0 0
      %702 = vmatpush1.bf16.msra.mxu0 0
      %703 = vmatprep.subr.bf16.mxu0 0
      %704 = vmatpush1.bf16.msra.mxu0 0
      %705 = vmatprep.subr.bf16.mxu0 0
      %706 = vmatpush1.bf16.msra.mxu0 0
      %707 = vmatprep.subr.bf16.mxu0 0
      %708 = vmatpush1.bf16.msra.mxu0 0
      %709 = vmatprep.subr.bf16.mxu0 0
      %710 = vmatpush1.bf16.msra.mxu0 0
      %711 = vmatprep.subr.bf16.mxu0 0
      %712 = vmatpush1.bf16.msra.mxu0 %v695
      %713 = vmatprep.subr.bf16.mxu0 0
      %714 = vmatpush2.bf16.msra.mxu0 0
      %715 = vmatprep.subr.bf16.mxu0 0
      %716 = vmatpush2.bf16.msra.mxu0 0
      %717 = vmatprep.subr.bf16.mxu0 0
      %718 = vmatpush2.bf16.msra.mxu0 0
      %719 = vmatprep.subr.bf16.mxu0 0
      %720 = vmatpush2.bf16.msra.mxu0 0
      %721 = vmatprep.subr.bf16.mxu0 0
      %722 = vmatpush2.bf16.msra.mxu0 0
      %723 = vmatprep.subr.bf16.mxu0 0
      %724 = vmatpush2.bf16.msra.mxu0 0
      %725 = vmatprep.subr.bf16.mxu0 0
      %726 = vmatpush2.bf16.msra.mxu0 0
      %727 = vmatprep.subr.bf16.mxu0 0
      %728 = vmatpush2.bf16.msra.mxu0 0
      %729 = vmatprep.mubr.bf16.mxu0 0
      %730 = vmatmul.mubr.bf16.gmra.mxu0 %v691
      %v731 = vpop.f32.mrf.mxu0
      %v732 = vadd.f32 0.0, %v731
      %v733 = vpop.f32.mrf.mxu0
      %v734 = vpop.f32.mrf.mxu0
      %v735 = vpop.f32.mrf.mxu0
      %736 = vdwg.mxu0
      %737 = vst.msk [vmem:[#allocation2] sm:$0xff] %vm631, %v732
      %739 = vrot.lane.b32.xlu0 %v499, 120
      %v740 = vpop.permute.xlu0 %739
      %742 = vrot.lane.b32.xlu0 %v563, 120
      %v743 = vpop.permute.xlu0 %742
      %v745 = vsel %vm631, %v740, 0
      %v748 = vsel %vm631, %v743, 0
      %750 = vmatprep.subr.bf16.mxu0 0
      %751 = vmatpush1.bf16.xpose.msra.mxu0 0
      %752 = vmatprep.subr.bf16.mxu0 0
      %753 = vmatpush1.bf16.xpose.msra.mxu0 0
      %754 = vmatprep.subr.bf16.mxu0 0
      %755 = vmatpush1.bf16.xpose.msra.mxu0 0
      %756 = vmatprep.subr.bf16.mxu0 0
      %757 = vmatpush1.bf16.xpose.msra.mxu0 0
      %758 = vmatprep.subr.bf16.mxu0 0
      %759 = vmatpush1.bf16.xpose.msra.mxu0 0
      %760 = vmatprep.subr.bf16.mxu0 0
      %761 = vmatpush1.bf16.xpose.msra.mxu0 0
      %762 = vmatprep.subr.bf16.mxu0 0
      %763 = vmatpush1.bf16.xpose.msra.mxu0 0
      %764 = vmatprep.subr.bf16.mxu0 0
      %765 = vmatpush1.bf16.xpose.msra.mxu0 %v748
      %766 = vmatprep.subr.bf16.mxu0 0
      %767 = vmatpush2.bf16.xpose.msra.mxu0 0
      %768 = vmatprep.subr.bf16.mxu0 0
      %769 = vmatpush2.bf16.xpose.msra.mxu0 0
      %770 = vmatprep.subr.bf16.mxu0 0
      %771 = vmatpush2.bf16.xpose.msra.mxu0 0
      %772 = vmatprep.subr.bf16.mxu0 0
      %773 = vmatpush2.bf16.xpose.msra.mxu0 0
      %774 = vmatprep.subr.bf16.mxu0 0
      %775 = vmatpush2.bf16.xpose.msra.mxu0 0
      %776 = vmatprep.subr.bf16.mxu0 0
      %777 = vmatpush2.bf16.xpose.msra.mxu0 0
      %778 = vmatprep.subr.bf16.mxu0 0
      %779 = vmatpush2.bf16.xpose.msra.mxu0 0
      %780 = vmatprep.subr.bf16.mxu0 0
      %781 = vmatpush2.bf16.xpose.msra.mxu0 0
      %782 = vmatprep.mubr.bf16.mxu0 0
      %783 = vmatmul.mubr.bf16.gmra.mxu0 %v745
      %v784 = vpop.f32.mrf.mxu0
      %v785 = vadd.f32 0.0, %v784
      %v786 = vpop.f32.mrf.mxu0
      %v787 = vpop.f32.mrf.mxu0
      %v788 = vpop.f32.mrf.mxu0
      %789 = vdwg.mxu0
      %v790 = vsel %vm631, %v785, -inf
      %791 = vmax.xlane.f32.xlu0 %v790
      %v792 = vpop.xlane.xlu0 %791
      %v793 = vsub.f32 %v785, %v792
      %v794 = vmul.f32 %v793, 1.442695
      %v795 = vpow.pop %v794
      %v796 = vsel %vm631, %v795, 0.0
      %797 = vadd.xlane.f32.xlu0 %v796
      %v798 = vpop.xlane.xlu0 %797
      %v799 = vrcp.pop %v798
      %v800 = vmul.f32 %v795, %v799
      %v801 = vpack.c.bf16 %v800, %v800
      %803 = vrot.lane.b32.xlu0 %v630, 120
      %v804 = vpop.permute.xlu0 %803
      %v806 = vsel %vm631, %v801, 0
      %v809 = vsel %vm693, %v804, 0
      %811 = vmatprep.subr.bf16.mxu0 0
      %812 = vmatpush1.bf16.msra.mxu0 0
      %813 = vmatprep.subr.bf16.mxu0 0
      %814 = vmatpush1.bf16.msra.mxu0 0
      %815 = vmatprep.subr.bf16.mxu0 0
      %816 = vmatpush1.bf16.msra.mxu0 0
      %817 = vmatprep.subr.bf16.mxu0 0
      %818 = vmatpush1.bf16.msra.mxu0 0
      %819 = vmatprep.subr.bf16.mxu0 0
      %820 = vmatpush1.bf16.msra.mxu0 0
      %821 = vmatprep.subr.bf16.mxu0 0
      %822 = vmatpush1.bf16.msra.mxu0 0
      %823 = vmatprep.subr.bf16.mxu0 0
      %824 = vmatpush1.bf16.msra.mxu0 0
      %825 = vmatprep.subr.bf16.mxu0 0
      %826 = vmatpush1.bf16.msra.mxu0 %v809
      %827 = vmatprep.subr.bf16.mxu0 0
      %828 = vmatpush2.bf16.msra.mxu0 0
      %829 = vmatprep.subr.bf16.mxu0 0
      %830 = vmatpush2.bf16.msra.mxu0 0
      %831 = vmatprep.subr.bf16.mxu0 0
      %832 = vmatpush2.bf16.msra.mxu0 0
      %833 = vmatprep.subr.bf16.mxu0 0
      %834 = vmatpush2.bf16.msra.mxu0 0
      %835 = vmatprep.subr.bf16.mxu0 0
      %836 = vmatpush2.bf16.msra.mxu0 0
      %837 = vmatprep.subr.bf16.mxu0 0
      %838 = vmatpush2.bf16.msra.mxu0 0
      %839 = vmatprep.subr.bf16.mxu0 0
      %840 = vmatpush2.bf16.msra.mxu0 0
      %841 = vmatprep.subr.bf16.mxu0 0
      %842 = vmatpush2.bf16.msra.mxu0 0
      %843 = vmatprep.mubr.bf16.mxu0 0
      %844 = vmatmul.mubr.bf16.gmra.mxu0 %v806
      %v845 = vpop.f32.mrf.mxu0
      %v846 = vadd.f32 0.0, %v845
      %v847 = vpop.f32.mrf.mxu0
      %v848 = vpop.f32.mrf.mxu0
      %v849 = vpop.f32.mrf.mxu0
      %850 = vdwg.mxu0
      %852 = vrot.lane.b32.xlu0 %v846, 8
      %v853 = vpop.permute.xlu0 %852
      %vm855 = vcmask 130112
      %856 = vst.msk [vmem:[#allocation2] sm:$0xff] %vm855, %v853
      %857 = vrot.lane.b32.xlu0 %v499, 112
      %v858 = vpop.permute.xlu0 %857
      %859 = vrot.lane.b32.xlu0 %v563, 112
      %v860 = vpop.permute.xlu0 %859
      %v862 = vsel %vm631, %v858, 0
      %v865 = vsel %vm631, %v860, 0
      %867 = vmatprep.subr.bf16.mxu0 0
      %868 = vmatpush1.bf16.xpose.msra.mxu0 0
      %869 = vmatprep.subr.bf16.mxu0 0
      %870 = vmatpush1.bf16.xpose.msra.mxu0 0
      %871 = vmatprep.subr.bf16.mxu0 0
      %872 = vmatpush1.bf16.xpose.msra.mxu0 0
      %873 = vmatprep.subr.bf16.mxu0 0
      %874 = vmatpush1.bf16.xpose.msra.mxu0 0
      %875 = vmatprep.subr.bf16.mxu0 0
      %876 = vmatpush1.bf16.xpose.msra.mxu0 0
      %877 = vmatprep.subr.bf16.mxu0 0
      %878 = vmatpush1.bf16.xpose.msra.mxu0 0
      %879 = vmatprep.subr.bf16.mxu0 0
      %880 = vmatpush1.bf16.xpose.msra.mxu0 0
      %881 = vmatprep.subr.bf16.mxu0 0
      %882 = vmatpush1.bf16.xpose.msra.mxu0 %v865
      %883 = vmatprep.subr.bf16.mxu0 0
      %884 = vmatpush2.bf16.xpose.msra.mxu0 0
      %885 = vmatprep.subr.bf16.mxu0 0
      %886 = vmatpush2.bf16.xpose.msra.mxu0 0
      %887 = vmatprep.subr.bf16.mxu0 0
      %888 = vmatpush2.bf16.xpose.msra.mxu0 0
      %889 = vmatprep.subr.bf16.mxu0 0
      %890 = vmatpush2.bf16.xpose.msra.mxu0 0
      %891 = vmatprep.subr.bf16.mxu0 0
      %892 = vmatpush2.bf16.xpose.msra.mxu0 0
      %893 = vmatprep.subr.bf16.mxu0 0
      %894 = vmatpush2.bf16.xpose.msra.mxu0 0
      %895 = vmatprep.subr.bf16.mxu0 0
      %896 = vmatpush2.bf16.xpose.msra.mxu0 0
      %897 = vmatprep.subr.bf16.mxu0 0
      %898 = vmatpush2.bf16.xpose.msra.mxu0 0
      %899 = vmatprep.mubr.bf16.mxu0 0
      %900 = vmatmul.mubr.bf16.gmra.mxu0 %v862
      %v901 = vpop.f32.mrf.mxu0
      %v902 = vadd.f32 0.0, %v901
      %v903 = vpop.f32.mrf.mxu0
      %v904 = vpop.f32.mrf.mxu0
      %v905 = vpop.f32.mrf.mxu0
      %906 = vdwg.mxu0
      %v907 = vsel %vm631, %v902, -inf
      %908 = vmax.xlane.f32.xlu0 %v907
      %v909 = vpop.xlane.xlu0 %908
      %v910 = vsub.f32 %v902, %v909
      %v911 = vmul.f32 %v910, 1.442695
      %v912 = vpow.pop %v911
      %v913 = vsel %vm631, %v912, 0.0
      %914 = vadd.xlane.f32.xlu0 %v913
      %v915 = vpop.xlane.xlu0 %914
      %v916 = vrcp.pop %v915
      %v917 = vmul.f32 %v912, %v916
      %v918 = vpack.c.bf16 %v917, %v917
      %919 = vrot.lane.b32.xlu0 %v630, 112
      %v920 = vpop.permute.xlu0 %919
      %v922 = vsel %vm631, %v918, 0
      %v925 = vsel %vm693, %v920, 0
      %927 = vmatprep.subr.bf16.mxu0 0
      %928 = vmatpush1.bf16.msra.mxu0 0
      %929 = vmatprep.subr.bf16.mxu0 0
      %930 = vmatpush1.bf16.msra.mxu0 0
      %931 = vmatprep.subr.bf16.mxu0 0
      %932 = vmatpush1.bf16.msra.mxu0 0
      %933 = vmatprep.subr.bf16.mxu0 0
      %934 = vmatpush1.bf16.msra.mxu0 0
      %935 = vmatprep.subr.bf16.mxu0 0
      %936 = vmatpush1.bf16.msra.mxu0 0
      %937 = vmatprep.subr.bf16.mxu0 0
      %938 = vmatpush1.bf16.msra.mxu0 0
      %939 = vmatprep.subr.bf16.mxu0 0
      %940 = vmatpush1.bf16.msra.mxu0 0
      %941 = vmatprep.subr.bf16.mxu0 0
      %942 = vmatpush1.bf16.msra.mxu0 %v925
      %943 = vmatprep.subr.bf16.mxu0 0
      %944 = vmatpush2.bf16.msra.mxu0 0
      %945 = vmatprep.subr.bf16.mxu0 0
      %946 = vmatpush2.bf16.msra.mxu0 0
      %947 = vmatprep.subr.bf16.mxu0 0
      %948 = vmatpush2.bf16.msra.mxu0 0
      %949 = vmatprep.subr.bf16.mxu0 0
      %950 = vmatpush2.bf16.msra.mxu0 0
      %951 = vmatprep.subr.bf16.mxu0 0
      %952 = vmatpush2.bf16.msra.mxu0 0
      %953 = vmatprep.subr.bf16.mxu0 0
      %954 = vmatpush2.bf16.msra.mxu0 0
      %955 = vmatprep.subr.bf16.mxu0 0
      %956 = vmatpush2.bf16.msra.mxu0 0
      %957 = vmatprep.subr.bf16.mxu0 0
      %958 = vmatpush2.bf16.msra.mxu0 0
      %959 = vmatprep.mubr.bf16.mxu0 0
      %960 = vmatmul.mubr.bf16.gmra.mxu0 %v922
      %v961 = vpop.f32.mrf.mxu0
      %v962 = vadd.f32 0.0, %v961
      %v963 = vpop.f32.mrf.mxu0
      %v964 = vpop.f32.mrf.mxu0
      %v965 = vpop.f32.mrf.mxu0
      %966 = vdwg.mxu0
      %968 = vrot.lane.b32.xlu0 %v962, 16
      %v969 = vpop.permute.xlu0 %968
      %vm971 = vcmask 195712
      %972 = vst.msk [vmem:[#allocation2] sm:$0xff] %vm971, %v969
      %973 = vrot.lane.b32.xlu0 %v499, 104
      %v974 = vpop.permute.xlu0 %973
      %975 = vrot.lane.b32.xlu0 %v563, 104
      %v976 = vpop.permute.xlu0 %975
      %v978 = vsel %vm631, %v974, 0
      %v981 = vsel %vm631, %v976, 0
      %983 = vmatprep.subr.bf16.mxu0 0
      %984 = vmatpush1.bf16.xpose.msra.mxu0 0
      %985 = vmatprep.subr.bf16.mxu0 0
      %986 = vmatpush1.bf16.xpose.msra.mxu0 0
      %987 = vmatprep.subr.bf16.mxu0 0
      %988 = vmatpush1.bf16.xpose.msra.mxu0 0
      %989 = vmatprep.subr.bf16.mxu0 0
      %990 = vmatpush1.bf16.xpose.msra.mxu0 0
      %991 = vmatprep.subr.bf16.mxu0 0
      %992 = vmatpush1.bf16.xpose.msra.mxu0 0
      %993 = vmatprep.subr.bf16.mxu0 0
      %994 = vmatpush1.bf16.xpose.msra.mxu0 0
      %995 = vmatprep.subr.bf16.mxu0 0
      %996 = vmatpush1.bf16.xpose.msra.mxu0 0
      %997 = vmatprep.subr.bf16.mxu0 0
      %998 = vmatpush1.bf16.xpose.msra.mxu0 %v981
      %999 = vmatprep.subr.bf16.mxu0 0
      %1000 = vmatpush2.bf16.xpose.msra.mxu0 0
      %1001 = vmatprep.subr.bf16.mxu0 0
      %1002 = vmatpush2.bf16.xpose.msra.mxu0 0
      %1003 = vmatprep.subr.bf16.mxu0 0
      %1004 = vmatpush2.bf16.xpose.msra.mxu0 0
      %1005 = vmatprep.subr.bf16.mxu0 0
      %1006 = vmatpush2.bf16.xpose.msra.mxu0 0
      %1007 = vmatprep.subr.bf16.mxu0 0
      %1008 = vmatpush2.bf16.xpose.msra.mxu0 0
      %1009 = vmatprep.subr.bf16.mxu0 0
      %1010 = vmatpush2.bf16.xpose.msra.mxu0 0
      %1011 = vmatprep.subr.bf16.mxu0 0
      %1012 = vmatpush2.bf16.xpose.msra.mxu0 0
      %1013 = vmatprep.subr.bf16.mxu0 0
      %1014 = vmatpush2.bf16.xpose.msra.mxu0 0
      %1015 = vmatprep.mubr.bf16.mxu0 0
      %1016 = vmatmul.mubr.bf16.gmra.mxu0 %v978
      %v1017 = vpop.f32.mrf.mxu0
      %v1018 = vadd.f32 0.0, %v1017
      %v1019 = vpop.f32.mrf.mxu0
      %v1020 = vpop.f32.mrf.mxu0
      %v1021 = vpop.f32.mrf.mxu0
      %1022 = vdwg.mxu0
      %v1023 = vsel %vm631, %v1018, -inf
      %1024 = vmax.xlane.f32.xlu0 %v1023
      %v1025 = vpop.xlane.xlu0 %1024
      %v1026 = vsub.f32 %v1018, %v1025
      %v1027 = vmul.f32 %v1026, 1.442695
      %v1028 = vpow.pop %v1027
      %v1029 = vsel %vm631, %v1028, 0.0
      %1030 = vadd.xlane.f32.xlu0 %v1029
      %v1031 = vpop.xlane.xlu0 %1030
      %v1032 = vrcp.pop %v1031
      %v1033 = vmul.f32 %v1028, %v1032
      %v1034 = vpack.c.bf16 %v1033, %v1033
      %1035 = vrot.lane.b32.xlu0 %v630, 104
      %v1036 = vpop.permute.xlu0 %1035
      %v1038 = vsel %vm631, %v1034, 0
      %v1041 = vsel %vm693, %v1036, 0
      %1043 = vmatprep.subr.bf16.mxu0 0
      %1044 = vmatpush1.bf16.msra.mxu0 0
      %1045 = vmatprep.subr.bf16.mxu0 0
      %1046 = vmatpush1.bf16.msra.mxu0 0
      %1047 = vmatprep.subr.bf16.mxu0 0
      %1048 = vmatpush1.bf16.msra.mxu0 0
      %1049 = vmatprep.subr.bf16.mxu0 0
      %1050 = vmatpush1.bf16.msra.mxu0 0
      %1051 = vmatprep.subr.bf16.mxu0 0
      %1052 = vmatpush1.bf16.msra.mxu0 0
      %1053 = vmatprep.subr.bf16.mxu0 0
      %1054 = vmatpush1.bf16.msra.mxu0 0
      %1055 = vmatprep.subr.bf16.mxu0 0
      %1056 = vmatpush1.bf16.msra.mxu0 0
      %1057 = vmatprep.subr.bf16.mxu0 0
      %1058 = vmatpush1.bf16.msra.mxu0 %v1041
      %1059 = vmatprep.subr.bf16.mxu0 0
      %1060 = vmatpush2.bf16.msra.mxu0 0
      %1061 = vmatprep.subr.bf16.mxu0 0
      %1062 = vmatpush2.bf16.msra.mxu0 0
      %1063 = vmatprep.subr.bf16.mxu0 0
      %1064 = vmatpush2.bf16.msra.mxu0 0
      %1065 = vmatprep.subr.bf16.mxu0 0
      %1066 = vmatpush2.bf16.msra.mxu0 0
      %1067 = vmatprep.subr.bf16.mxu0 0
      %1068 = vmatpush2.bf16.msra.mxu0 0
      %1069 = vmatprep.subr.bf16.mxu0 0
      %1070 = vmatpush2.bf16.msra.mxu0 0
      %1071 = vmatprep.subr.bf16.mxu0 0
      %1072 = vmatpush2.bf16.msra.mxu0 0
      %1073 = vmatprep.subr.bf16.mxu0 0
      %1074 = vmatpush2.bf16.msra.mxu0 0
      %1075 = vmatprep.mubr.bf16.mxu0 0
      %1076 = vmatmul.mubr.bf16.gmra.mxu0 %v1038
      %v1077 = vpop.f32.mrf.mxu0
      %v1078 = vadd.f32 0.0, %v1077
      %v1079 = vpop.f32.mrf.mxu0
      %v1080 = vpop.f32.mrf.mxu0
      %v1081 = vpop.f32.mrf.mxu0
      %1082 = vdwg.mxu0
      %1084 = vrot.lane.b32.xlu0 %v1078, 24
      %v1085 = vpop.permute.xlu0 %1084
      %vm1087 = vcmask 261312
      %1088 = vst.msk [vmem:[#allocation2] sm:$0xff] %vm1087, %v1085
      %v1089 = vld [vmem:[#allocation2] sm:$0xff]
      %v1090 = vpack.c.bf16 %v1089, %v1089
      %v1091 = vld [vmem:[%s8] sm:$0xf]
      %v1092 = vld [vmem:[%s8 + $0x4] sm:$0xf]
      %v1093 = vld [vmem:[%s8 + $0x8] sm:$0xf]
      %v1094 = vld [vmem:[%s8 + $0xc] sm:$0xf]
      %v1095 = vld [vmem:[%s9] sm:$0x1]
      %v1097 = vlaneseq
      %v1098 = vshrl.u32 %v1097, 7
      %v1099 = vsub.s32 0, %v1098
      %v1100 = vrot.slane %v1095, %v1099
      %v1106 = vunpack.c.l.b16 %v1091
      %v1107 = vunpack.c.l.b16 %v1092
      %v1108 = vunpack.c.l.b16 %v1093
      %v1109 = vunpack.c.l.b16 %v1094
      %v1110 = vpack.c.b16 %v1107, %v1106
      %v1111 = vpack.c.b16 %v1109, %v1108
      %v1115 = vsel %vm455, %v1090, 0
      %1117 = vmatprep.subr.bf16.mxu0 0
      %1118 = vmatpush1.bf16.msra.mxu0 0
      %1119 = vmatprep.subr.bf16.mxu0 0
      %1120 = vmatpush1.bf16.msra.mxu0 0
      %1121 = vmatprep.subr.bf16.mxu0 0
      %1122 = vmatpush1.bf16.msra.mxu0 0
      %1123 = vmatprep.subr.bf16.mxu0 0
      %1124 = vmatpush1.bf16.msra.mxu0 0
      %1125 = vmatprep.subr.bf16.mxu0 0
      %1126 = vmatpush1.bf16.msra.mxu0 0
      %1127 = vmatprep.subr.bf16.mxu0 0
      %1128 = vmatpush1.bf16.msra.mxu0 0
      %1129 = vmatprep.subr.bf16.mxu0 0
      %1130 = vmatpush1.bf16.msra.mxu0 %v1111
      %1131 = vmatprep.subr.bf16.mxu0 0
      %1132 = vmatpush1.bf16.msra.mxu0 %v1110
      %1133 = vmatprep.subr.bf16.mxu0 0
      %1134 = vmatpush2.bf16.msra.mxu0 0
      %1135 = vmatprep.subr.bf16.mxu0 0
      %1136 = vmatpush2.bf16.msra.mxu0 0
      %1137 = vmatprep.subr.bf16.mxu0 0
      %1138 = vmatpush2.bf16.msra.mxu0 0
      %1139 = vmatprep.subr.bf16.mxu0 0
      %1140 = vmatpush2.bf16.msra.mxu0 0
      %1141 = vmatprep.subr.bf16.mxu0 0
      %1142 = vmatpush2.bf16.msra.mxu0 0
      %1143 = vmatprep.subr.bf16.mxu0 0
      %1144 = vmatpush2.bf16.msra.mxu0 0
      %1145 = vmatprep.subr.bf16.mxu0 0
      %1146 = vmatpush2.bf16.msra.mxu0 0
      %1147 = vmatprep.subr.bf16.mxu0 0
      %1148 = vmatpush2.bf16.msra.mxu0 0
      %1149 = vmatprep.mubr.bf16.mxu0 0
      %1150 = vmatmul.mubr.bf16.gmra.mxu0 %v1115
      %v1151 = vpop.f32.mrf.mxu0
      %v1152 = vadd.f32 %v1100, %v1151
      %v1153 = vpop.f32.mrf.mxu0
      %v1154 = vpop.f32.mrf.mxu0
      %v1155 = vpop.f32.mrf.mxu0
      %1156 = vdwg.mxu0
      %v1157 = vadd.f32 %v427, %v1152
      %v1158 = vld [vmem:[%s10] sm:$0x1]
      %v1159 = vld [vmem:[%s11] sm:$0x1]
      %v1160 = vsel %vm455, %v1157, 0.0
      %1161 = vadd.xlane.f32.xlu0 %v1160
      %v1162 = vpop.xlane.xlu0 %1161
      %v1163 = vrcp.pop 32.0
      %v1164 = vmul.f32 %v1162, %v1163
      %v1165 = vsub.f32 %v1157, %v1164
      %v1166 = vmul.f32 %v1165, %v1165
      %v1167 = vsel %vm455, %v1166, 0.0
      %1168 = vadd.xlane.f32.xlu0 %v1167
      %v1169 = vpop.xlane.xlu0 %1168
      %v1170 = vmul.f32 %v1169, %v1163
      %v1171 = vadd.f32 %v1170, 1e-05
      %v1172 = vrsqrt.pop %v1171
      %v1173 = vmul.f32 %v1165, %v1172
      %v1175 = vlaneseq
      %v1176 = vshrl.u32 %v1175, 7
      %v1177 = vsub.s32 0, %v1176
      %v1178 = vrot.slane %v1158, %v1177
      %v1180 = vmul.f32 %v1173, %v1178
      %v1182 = vlaneseq
      %v1183 = vshrl.u32 %v1182, 7
      %v1184 = vsub.s32 0, %v1183
      %v1185 = vrot.slane %v1159, %v1184
      %v1187 = vadd.f32 %v1180, %v1185
      %1188 = vst.msk [vmem:[%s425] sm:$0xff] %vm455, %v1187
      %p1189 = scmp.lt.s32.totalorder %s23, 1
      %s1190 = scalar_select %p1189, %s23, 1
      %s1191 = smul.addr %s1190, 8
      %s1192 = scalar_lea.vmem %s12, %s1191
      // Predicated region
      $region69: #{two_way_attention_block.4} parent=67 // pred_check
        %p1193 = pneg %p303
      $region70: #{two_way_attention_block.4} parent=67 // pred_check_branch
        %1195 = sbr.rel (%p1193) target = $region72
      $region71: #{two_way_attention_block.4} parent=67 // pred_region
        _
      $region72: #{two_way_attention_block.4} parent=67 // pred_fallthru
        _
    $region68: #{two_way_attention_block.4} parent=5 // pred_fallthru
      _
    %p1196 = scmp.le.s32.totalorder 2, %s18
    // Predicated region
    $region73: #{two_way_attention_block.4} parent=5 // pred_check
      %p1197 = pneg %p1196
    $region74: #{two_way_attention_block.4} parent=5 // pred_check_branch
      %1199 = sbr.rel (%p1197) target = $region76
    $region75: #{two_way_attention_block.4} parent=5 // pred_region
      %s1200 = ssub.s32 %s18, 2
      // Predicated region
      $region77: #{two_way_attention_block.4} parent=75 // pred_check
        %p1201 = pneg %p309
      $region78: #{two_way_attention_block.4} parent=75 // pred_check_branch
        %1203 = sbr.rel (%p1201) target = $region80
      $region79: #{two_way_attention_block.4} parent=75 // pred_region
        %p1204 = scmp.lt.s32.totalorder %s24, 1
        %s1205 = scalar_select %p1204, %s24, 1
        %s1206 = smul.addr %s1205, 8
        %s1207 = scalar_lea.vmem %s12, %s1206
      $region80: #{two_way_attention_block.4} parent=75 // pred_fallthru
        _
    $region76: #{two_way_attention_block.4} parent=5 // pred_fallthru
      _
  $region6: #{two_way_attention_block.4} parent=0 // loop_footer
    %s22 = sadd.s32 1, %s18
  $region7: #{two_way_attention_block.4} parent=0 // loop_footer_branch
    %17 = sbr.rel target = $region3
  $region8: #{two_way_attention_block.4} parent=0 // loop_exit
    _

// kernel: two_way_attention_block.5
$region0: #{two_way_attention_block.5}
  #allocation0 [shape = 'u32[]', space=smem, size = 0x4, offset = 0x4, fixed_abs, tag = 'smem constant byte address 0x4 - core index']
  #allocation1 [shape = 'u32[144,128]{1,0:T(1,128)}', space=vmem, size = 0x12000, scoped, tag = 'internal scratch']
  #allocation2 [shape = 'f32[8,16]{1,0:T(8,128)}', space=vmem, size = 0x1000, scoped, tag = 'scratch operand']
  %s0 = inlined_call_operand.vmem [shape: f32[2,8,32], index: 0, kind: input, shape index: {}]
  %s1 = inlined_call_operand.vmem [shape: f32[2,8,32], index: 1, kind: input, shape index: {}]
  %s2 = inlined_call_operand.vmem [shape: f32[2,64,32], index: 2, kind: input, shape index: {}]
  %s3 = inlined_call_operand.vmem [shape: f32[2,64,32], index: 3, kind: input, shape index: {}]
  %s4 = inlined_call_operand.vmem [shape: bf16[32,16], index: 4, kind: input, shape index: {}]
  %s5 = inlined_call_operand.vmem [shape: f32[1,16], index: 5, kind: input, shape index: {}]
  %s6 = inlined_call_operand.vmem [shape: bf16[32,16], index: 6, kind: input, shape index: {}]
  %s7 = inlined_call_operand.vmem [shape: f32[1,16], index: 7, kind: input, shape index: {}]
  %s8 = inlined_call_operand.vmem [shape: bf16[32,16], index: 8, kind: input, shape index: {}]
  %s9 = inlined_call_operand.vmem [shape: f32[1,16], index: 9, kind: input, shape index: {}]
  %s10 = inlined_call_operand.vmem [shape: bf16[16,32], index: 10, kind: input, shape index: {}]
  %s11 = inlined_call_operand.vmem [shape: f32[1,32], index: 11, kind: input, shape index: {}]
  %s12 = inlined_call_operand.vmem [shape: f32[1,32], index: 12, kind: input, shape index: {}]
  %s13 = inlined_call_operand.vmem [shape: f32[1,32], index: 13, kind: input, shape index: {}]
  %s14 = inlined_call_operand.vmem [shape: f32[2,8,32], index: 14, kind: output, shape index: {}]
  %s15 = sld [smem:[#allocation0]]
  $region89: #{two_way_attention_block.5} parent=0
    _
  %s17 = ssub.s32 1, %s15
  %s18 = scalar_select 0, %s17, %s15
  loop: start=0, step=1, limit=4
  $region2: #{two_way_attention_block.5} parent=0 // loop_pre_header
    _
  $region3: #{two_way_attention_block.5} parent=0 // loop_header
    %s20 = sphi 0, %s24
    %p21 = scmp.ge.s32.totalorder %s20, 4
    %s27 = sphi 0, %s39
    %s28 = sphi 0, %s35
    %s29 = sphi 0, %s27
    %s30 = sphi 0, %s28
    %s31 = sphi 0, %s29
    %s32 = sphi 0, %s30
    %s44 = sphi 0, %s46
    %s47 = sphi 0, %s44
    %s48 = sphi 0, %s47
    %s64 = sphi 0, %s48
    %s72 = sphi 0, %s74
    %s75 = sphi 0, %s72
    %s76 = sphi 0, %s75
    %s92 = sphi 0, %s76
    %s98 = sphi 0, %s100
    %s101 = sphi 0, %s98
    %s102 = sphi 0, %s101
    %s118 = sphi 0, %s102
    %s124 = sphi 0, %s126
    %s127 = sphi 0, %s124
    %s128 = sphi 0, %s127
    %s144 = sphi 0, %s128
    %s148 = sphi 0, %s148
    %s150 = sphi 0, %s148
    %s151 = sphi 0, %s150
    %s165 = sphi 0, %s151
    %s169 = sphi 0, %s169
    %s171 = sphi 0, %s169
    %s172 = sphi 0, %s171
    %s186 = sphi 0, %s172
    %s190 = sphi 0, %s190
    %s192 = sphi 0, %s190
    %s193 = sphi 0, %s192
    %s207 = sphi 0, %s193
    %s211 = sphi 0, %s211
    %s213 = sphi 0, %s211
    %s214 = sphi 0, %s213
    %s228 = sphi 0, %s214
    %s232 = sphi 0, %s232
    %s234 = sphi 0, %s232
    %s235 = sphi 0, %s234
    %s249 = sphi 0, %s235
    %s253 = sphi 0, %s253
    %s255 = sphi 0, %s253
    %s256 = sphi 0, %s255
    %s270 = sphi 0, %s256
    %s274 = sphi 0, %s274
    %s276 = sphi 0, %s274
    %s277 = sphi 0, %s276
    %s291 = sphi 0, %s277
    %s295 = sphi 0, %s295
    %s297 = sphi 0, %s295
    %s298 = sphi 0, %s297
    %s312 = sphi 0, %s298
    %s316 = sphi 0, %s316
    %s318 = sphi 0, %s316
    %s319 = sphi 0, %s318
    %s333 = sphi 0, %s319
    %s337 = sphi 0, %s337
    %s339 = sphi 0, %s337
    %s340 = sphi 0, %s339
    %s354 = sphi 0, %s340
    %s362 = sphi 0, %s364
    %s365 = sphi 0, %s362
    %s366 = sphi 0, %s365
    %s382 = sphi 0, %s366
  $region4: #{two_way_attention_block.5} parent=0 // loop_header_branch
    %23 = sbr.rel (%p21) target = $region8
  $region5: #{two_way_attention_block.5} parent=0 // loop_body
    %s25 = ssub.s32 %s20, 1
    %s26 = ssub.s32 %s20, 2
    %s33 = sadd.s32 1, %s28
    %p34 = scmp.ge.s32.totalorder %s33, 1
    %s35 = scalar_select %p34, 0, %s33
    %s36 = sadd.s32 1, %s27
    %s37 = scalar_select %p34, %s36, %s27
    %p38 = scmp.ge.s32.totalorder %s37, 2
    %s39 = scalar_select %p38, 0, %s37
    %s40 = ssub.s32 %s27, %s39
    %s41 = ssub.s32 %s28, %s35
    %s42 = sor.u32 %s40, %s41
    %p43 = scmp.eq.s32.totalorder %s42, 0
    %s45 = sadd.s32 %s44, 1
    %s46 = scalar_select %p43, %s44, %s45
    %p49 = pneg %p43
    %p50 = scmp.eq.s32.totalorder %s20, 1
    %p51 = por %p49, %p50
    %p52 = scmp.ne.s32.totalorder %s44, %s47
    %p53 = scmp.eq.s32.totalorder %s20, 0
    %p54 = por %p52, %p53
    %p55 = scmp.ne.s32.totalorder %s44, %s47
    %p56 = scmp.eq.s32.totalorder %s25, 1
    %p57 = por %p55, %p56
    %p58 = scmp.ne.s32.totalorder %s47, %s48
    %p59 = scmp.eq.s32.totalorder %s25, 0
    %p60 = por %p58, %p59
    %p61 = scmp.ne.s32.totalorder %s47, %s48
    %p62 = scmp.eq.s32.totalorder %s26, 1
    %p63 = por %p61, %p62
    %p65 = scmp.ne.s32.totalorder %s48, %s64
    %p66 = scmp.eq.s32.totalorder %s26, 0
    %p67 = por %p65, %p66
    %s68 = ssub.s32 %s27, %s39
    %s69 = ssub.s32 %s28, %s35
    %s70 = sor.u32 %s68, %s69
    %p71 = scmp.eq.s32.totalorder %s70, 0
    %s73 = sadd.s32 %s72, 1
    %s74 = scalar_select %p71, %s72, %s73
    %p77 = pneg %p71
    %p78 = scmp.eq.s32.totalorder %s20, 1
    %p79 = por %p77, %p78
    %p80 = scmp.ne.s32.totalorder %s72, %s75
    %p81 = scmp.eq.s32.totalorder %s20, 0
    %p82 = por %p80, %p81
    %p83 = scmp.ne.s32.totalorder %s72, %s75
    %p84 = scmp.eq.s32.totalorder %s25, 1
    %p85 = por %p83, %p84
    %p86 = scmp.ne.s32.totalorder %s75, %s76
    %p87 = scmp.eq.s32.totalorder %s25, 0
    %p88 = por %p86, %p87
    %p89 = scmp.ne.s32.totalorder %s75, %s76
    %p90 = scmp.eq.s32.totalorder %s26, 1
    %p91 = por %p89, %p90
    %p93 = scmp.ne.s32.totalorder %s76, %s92
    %p94 = scmp.eq.s32.totalorder %s26, 0
    %p95 = por %p93, %p94
    %s96 = ssub.s32 %s27, %s39
    %p97 = scmp.eq.s32.totalorder %s96, 0
    %s99 = sadd.s32 %s98, 1
    %s100 = scalar_select %p97, %s98, %s99
    %p103 = pneg %p97
    %p104 = scmp.eq.s32.totalorder %s20, 1
    %p105 = por %p103, %p104
    %p106 = scmp.ne.s32.totalorder %s98, %s101
    %p107 = scmp.eq.s32.totalorder %s20, 0
    %p108 = por %p106, %p107
    %p109 = scmp.ne.s32.totalorder %s98, %s101
    %p110 = scmp.eq.s32.totalorder %s25, 1
    %p111 = por %p109, %p110
    %p112 = scmp.ne.s32.totalorder %s101, %s102
    %p113 = scmp.eq.s32.totalorder %s25, 0
    %p114 = por %p112, %p113
    %p115 = scmp.ne.s32.totalorder %s101, %s102
    %p116 = scmp.eq.s32.totalorder %s26, 1
    %p117 = por %p115, %p116
    %p119 = scmp.ne.s32.totalorder %s102, %s118
    %p120 = scmp.eq.s32.totalorder %s26, 0
    %p121 = por %p119, %p120
    %s122 = ssub.s32 %s27, %s39
    %p123 = scmp.eq.s32.totalorder %s122, 0
    %s125 = sadd.s32 %s124, 1
    %s126 = scalar_select %p123, %s124, %s125
    %p129 = pneg %p123
    %p130 = scmp.eq.s32.totalorder %s20, 1
    %p131 = por %p129, %p130
    %p132 = scmp.ne.s32.totalorder %s124, %s127
    %p133 = scmp.eq.s32.totalorder %s20, 0
    %p134 = por %p132, %p133
    %p135 = scmp.ne.s32.totalorder %s124, %s127
    %p136 = scmp.eq.s32.totalorder %s25, 1
    %p137 = por %p135, %p136
    %p138 = scmp.ne.s32.totalorder %s127, %s128
    %p139 = scmp.eq.s32.totalorder %s25, 0
    %p140 = por %p138, %p139
    %p141 = scmp.ne.s32.totalorder %s127, %s128
    %p142 = scmp.eq.s32.totalorder %s26, 1
    %p143 = por %p141, %p142
    %p145 = scmp.ne.s32.totalorder %s128, %s144
    %p146 = scmp.eq.s32.totalorder %s26, 0
    %p147 = por %p145, %p146
    %s149 = sadd.s32 %s148, 1
    %p152 = scmp.eq.s32.totalorder %s20, 1
    %p153 = scmp.ne.s32.totalorder %s148, %s150
    %p154 = scmp.eq.s32.totalorder %s20, 0
    %p155 = por %p153, %p154
    %p156 = scmp.ne.s32.totalorder %s148, %s150
    %p157 = scmp.eq.s32.totalorder %s25, 1
    %p158 = por %p156, %p157
    %p159 = scmp.ne.s32.totalorder %s150, %s151
    %p160 = scmp.eq.s32.totalorder %s25, 0
    %p161 = por %p159, %p160
    %p162 = scmp.ne.s32.totalorder %s150, %s151
    %p163 = scmp.eq.s32.totalorder %s26, 1
    %p164 = por %p162, %p163
    %p166 = scmp.ne.s32.totalorder %s151, %s165
    %p167 = scmp.eq.s32.totalorder %s26, 0
    %p168 = por %p166, %p167
    %s170 = sadd.s32 %s169, 1
    %p173 = scmp.eq.s32.totalorder %s20, 1
    %p174 = scmp.ne.s32.totalorder %s169, %s171
    %p175 = scmp.eq.s32.totalorder %s20, 0
    %p176 = por %p174, %p175
    %p177 = scmp.ne.s32.totalorder %s169, %s171
    %p178 = scmp.eq.s32.totalorder %s25, 1
    %p179 = por %p177, %p178
    %p180 = scmp.ne.s32.totalorder %s171, %s172
    %p181 = scmp.eq.s32.totalorder %s25, 0
    %p182 = por %p180, %p181
    %p183 = scmp.ne.s32.totalorder %s171, %s172
    %p184 = scmp.eq.s32.totalorder %s26, 1
    %p185 = por %p183, %p184
    %p187 = scmp.ne.s32.totalorder %s172, %s186
    %p188 = scmp.eq.s32.totalorder %s26, 0
    %p189 = por %p187, %p188
    %s191 = sadd.s32 %s190, 1
    %p194 = scmp.eq.s32.totalorder %s20, 1
    %p195 = scmp.ne.s32.totalorder %s190, %s192
    %p196 = scmp.eq.s32.totalorder %s20, 0
    %p197 = por %p195, %p196
    %p198 = scmp.ne.s32.totalorder %s190, %s192
    %p199 = scmp.eq.s32.totalorder %s25, 1
    %p200 = por %p198, %p199
    %p201 = scmp.ne.s32.totalorder %s192, %s193
    %p202 = scmp.eq.s32.totalorder %s25, 0
    %p203 = por %p201, %p202
    %p204 = scmp.ne.s32.totalorder %s192, %s193
    %p205 = scmp.eq.s32.totalorder %s26, 1
    %p206 = por %p204, %p205
    %p208 = scmp.ne.s32.totalorder %s193, %s207
    %p209 = scmp.eq.s32.totalorder %s26, 0
    %p210 = por %p208, %p209
    %s212 = sadd.s32 %s211, 1
    %p215 = scmp.eq.s32.totalorder %s20, 1
    %p216 = scmp.ne.s32.totalorder %s211, %s213
    %p217 = scmp.eq.s32.totalorder %s20, 0
    %p218 = por %p216, %p217
    %p219 = scmp.ne.s32.totalorder %s211, %s213
    %p220 = scmp.eq.s32.totalorder %s25, 1
    %p221 = por %p219, %p220
    %p222 = scmp.ne.s32.totalorder %s213, %s214
    %p223 = scmp.eq.s32.totalorder %s25, 0
    %p224 = por %p222, %p223
    %p225 = scmp.ne.s32.totalorder %s213, %s214
    %p226 = scmp.eq.s32.totalorder %s26, 1
    %p227 = por %p225, %p226
    %p229 = scmp.ne.s32.totalorder %s214, %s228
    %p230 = scmp.eq.s32.totalorder %s26, 0
    %p231 = por %p229, %p230
    %s233 = sadd.s32 %s232, 1
    %p236 = scmp.eq.s32.totalorder %s20, 1
    %p237 = scmp.ne.s32.totalorder %s232, %s234
    %p238 = scmp.eq.s32.totalorder %s20, 0
    %p239 = por %p237, %p238
    %p240 = scmp.ne.s32.totalorder %s232, %s234
    %p241 = scmp.eq.s32.totalorder %s25, 1
    %p242 = por %p240, %p241
    %p243 = scmp.ne.s32.totalorder %s234, %s235
    %p244 = scmp.eq.s32.totalorder %s25, 0
    %p245 = por %p243, %p244
    %p246 = scmp.ne.s32.totalorder %s234, %s235
    %p247 = scmp.eq.s32.totalorder %s26, 1
    %p248 = por %p246, %p247
    %p250 = scmp.ne.s32.totalorder %s235, %s249
    %p251 = scmp.eq.s32.totalorder %s26, 0
    %p252 = por %p250, %p251
    %s254 = sadd.s32 %s253, 1
    %p257 = scmp.eq.s32.totalorder %s20, 1
    %p258 = scmp.ne.s32.totalorder %s253, %s255
    %p259 = scmp.eq.s32.totalorder %s20, 0
    %p260 = por %p258, %p259
    %p261 = scmp.ne.s32.totalorder %s253, %s255
    %p262 = scmp.eq.s32.totalorder %s25, 1
    %p263 = por %p261, %p262
    %p264 = scmp.ne.s32.totalorder %s255, %s256
    %p265 = scmp.eq.s32.totalorder %s25, 0
    %p266 = por %p264, %p265
    %p267 = scmp.ne.s32.totalorder %s255, %s256
    %p268 = scmp.eq.s32.totalorder %s26, 1
    %p269 = por %p267, %p268
    %p271 = scmp.ne.s32.totalorder %s256, %s270
    %p272 = scmp.eq.s32.totalorder %s26, 0
    %p273 = por %p271, %p272
    %s275 = sadd.s32 %s274, 1
    %p278 = scmp.eq.s32.totalorder %s20, 1
    %p279 = scmp.ne.s32.totalorder %s274, %s276
    %p280 = scmp.eq.s32.totalorder %s20, 0
    %p281 = por %p279, %p280
    %p282 = scmp.ne.s32.totalorder %s274, %s276
    %p283 = scmp.eq.s32.totalorder %s25, 1
    %p284 = por %p282, %p283
    %p285 = scmp.ne.s32.totalorder %s276, %s277
    %p286 = scmp.eq.s32.totalorder %s25, 0
    %p287 = por %p285, %p286
    %p288 = scmp.ne.s32.totalorder %s276, %s277
    %p289 = scmp.eq.s32.totalorder %s26, 1
    %p290 = por %p288, %p289
    %p292 = scmp.ne.s32.totalorder %s277, %s291
    %p293 = scmp.eq.s32.totalorder %s26, 0
    %p294 = por %p292, %p293
    %s296 = sadd.s32 %s295, 1
    %p299 = scmp.eq.s32.totalorder %s20, 1
    %p300 = scmp.ne.s32.totalorder %s295, %s297
    %p301 = scmp.eq.s32.totalorder %s20, 0
    %p302 = por %p300, %p301
    %p303 = scmp.ne.s32.totalorder %s295, %s297
    %p304 = scmp.eq.s32.totalorder %s25, 1
    %p305 = por %p303, %p304
    %p306 = scmp.ne.s32.totalorder %s297, %s298
    %p307 = scmp.eq.s32.totalorder %s25, 0
    %p308 = por %p306, %p307
    %p309 = scmp.ne.s32.totalorder %s297, %s298
    %p310 = scmp.eq.s32.totalorder %s26, 1
    %p311 = por %p309, %p310
    %p313 = scmp.ne.s32.totalorder %s298, %s312
    %p314 = scmp.eq.s32.totalorder %s26, 0
    %p315 = por %p313, %p314
    %s317 = sadd.s32 %s316, 1
    %p320 = scmp.eq.s32.totalorder %s20, 1
    %p321 = scmp.ne.s32.totalorder %s316, %s318
    %p322 = scmp.eq.s32.totalorder %s20, 0
    %p323 = por %p321, %p322
    %p324 = scmp.ne.s32.totalorder %s316, %s318
    %p325 = scmp.eq.s32.totalorder %s25, 1
    %p326 = por %p324, %p325
    %p327 = scmp.ne.s32.totalorder %s318, %s319
    %p328 = scmp.eq.s32.totalorder %s25, 0
    %p329 = por %p327, %p328
    %p330 = scmp.ne.s32.totalorder %s318, %s319
    %p331 = scmp.eq.s32.totalorder %s26, 1
    %p332 = por %p330, %p331
    %p334 = scmp.ne.s32.totalorder %s319, %s333
    %p335 = scmp.eq.s32.totalorder %s26, 0
    %p336 = por %p334, %p335
    %s338 = sadd.s32 %s337, 1
    %p341 = scmp.eq.s32.totalorder %s20, 1
    %p342 = scmp.ne.s32.totalorder %s337, %s339
    %p343 = scmp.eq.s32.totalorder %s20, 0
    %p344 = por %p342, %p343
    %p345 = scmp.ne.s32.totalorder %s337, %s339
    %p346 = scmp.eq.s32.totalorder %s25, 1
    %p347 = por %p345, %p346
    %p348 = scmp.ne.s32.totalorder %s339, %s340
    %p349 = scmp.eq.s32.totalorder %s25, 0
    %p350 = por %p348, %p349
    %p351 = scmp.ne.s32.totalorder %s339, %s340
    %p352 = scmp.eq.s32.totalorder %s26, 1
    %p353 = por %p351, %p352
    %p355 = scmp.ne.s32.totalorder %s340, %s354
    %p356 = scmp.eq.s32.totalorder %s26, 0
    %p357 = por %p355, %p356
    %s358 = ssub.s32 %s27, %s39
    %s359 = ssub.s32 %s28, %s35
    %s360 = sor.u32 %s358, %s359
    %p361 = scmp.eq.s32.totalorder %s360, 0
    %s363 = sadd.s32 %s362, 1
    %s364 = scalar_select %p361, %s362, %s363
    %p367 = pneg %p361
    %p368 = scmp.eq.s32.totalorder %s20, 1
    %p369 = por %p367, %p368
    %p370 = scmp.ne.s32.totalorder %s362, %s365
    %p371 = scmp.eq.s32.totalorder %s20, 0
    %p372 = por %p370, %p371
    %p373 = scmp.ne.s32.totalorder %s362, %s365
    %p374 = scmp.eq.s32.totalorder %s25, 1
    %p375 = por %p373, %p374
    %p376 = scmp.ne.s32.totalorder %s365, %s366
    %p377 = scmp.eq.s32.totalorder %s25, 0
    %p378 = por %p376, %p377
    %p379 = scmp.ne.s32.totalorder %s365, %s366
    %p380 = scmp.eq.s32.totalorder %s26, 1
    %p381 = por %p379, %p380
    %p383 = scmp.ne.s32.totalorder %s366, %s382
    %p384 = scmp.eq.s32.totalorder %s26, 0
    %p385 = por %p383, %p384
    %p386 = scmp.le.s32.totalorder 1, %s20
    %p387 = scmp.lt.s32.totalorder %s20, 3
    %p388 = pnand %p386, %p387
    %p389 = pneg %p388
    // Predicated region
    $region9: #{two_way_attention_block.5} parent=5 // pred_check
      _
    $region10: #{two_way_attention_block.5} parent=5 // pred_check_branch
      %391 = sbr.rel (%p388) target = $region12
    $region11: #{two_way_attention_block.5} parent=5 // pred_region
      %s392 = ssub.s32 %s20, 1
      // Predicated region
      $region13: #{two_way_attention_block.5} parent=11 // pred_check
        %p393 = pneg %p161
      $region14: #{two_way_attention_block.5} parent=11 // pred_check_branch
        %395 = sbr.rel (%p393) target = $region16
      $region15: #{two_way_attention_block.5} parent=11 // pred_region
        _
      $region16: #{two_way_attention_block.5} parent=11 // pred_fallthru
        _
      // Predicated region
      $region17: #{two_way_attention_block.5} parent=11 // pred_check
        %p396 = pneg %p182
      $region18: #{two_way_attention_block.5} parent=11 // pred_check_branch
        %398 = sbr.rel (%p396) target = $region20
      $region19: #{two_way_attention_block.5} parent=11 // pred_region
        _
      $region20: #{two_way_attention_block.5} parent=11 // pred_fallthru
        _
      // Predicated region
      $region21: #{two_way_attention_block.5} parent=11 // pred_check
        %p399 = pneg %p203
      $region22: #{two_way_attention_block.5} parent=11 // pred_check_branch
        %401 = sbr.rel (%p399) target = $region24
      $region23: #{two_way_attention_block.5} parent=11 // pred_region
        _
      $region24: #{two_way_attention_block.5} parent=11 // pred_fallthru
        _
      // Predicated region
      $region25: #{two_way_attention_block.5} parent=11 // pred_check
        %p402 = pneg %p224
      $region26: #{two_way_attention_block.5} parent=11 // pred_check_branch
        %404 = sbr.rel (%p402) target = $region28
      $region27: #{two_way_attention_block.5} parent=11 // pred_region
        _
      $region28: #{two_way_attention_block.5} parent=11 // pred_fallthru
        _
      // Predicated region
      $region29: #{two_way_attention_block.5} parent=11 // pred_check
        %p405 = pneg %p245
      $region30: #{two_way_attention_block.5} parent=11 // pred_check_branch
        %407 = sbr.rel (%p405) target = $region32
      $region31: #{two_way_attention_block.5} parent=11 // pred_region
        _
      $region32: #{two_way_attention_block.5} parent=11 // pred_fallthru
        _
      // Predicated region
      $region33: #{two_way_attention_block.5} parent=11 // pred_check
        %p408 = pneg %p266
      $region34: #{two_way_attention_block.5} parent=11 // pred_check_branch
        %410 = sbr.rel (%p408) target = $region36
      $region35: #{two_way_attention_block.5} parent=11 // pred_region
        _
      $region36: #{two_way_attention_block.5} parent=11 // pred_fallthru
        _
      // Predicated region
      $region37: #{two_way_attention_block.5} parent=11 // pred_check
        %p411 = pneg %p287
      $region38: #{two_way_attention_block.5} parent=11 // pred_check_branch
        %413 = sbr.rel (%p411) target = $region40
      $region39: #{two_way_attention_block.5} parent=11 // pred_region
        _
      $region40: #{two_way_attention_block.5} parent=11 // pred_fallthru
        _
      // Predicated region
      $region41: #{two_way_attention_block.5} parent=11 // pred_check
        %p414 = pneg %p308
      $region42: #{two_way_attention_block.5} parent=11 // pred_check_branch
        %416 = sbr.rel (%p414) target = $region44
      $region43: #{two_way_attention_block.5} parent=11 // pred_region
        _
      $region44: #{two_way_attention_block.5} parent=11 // pred_fallthru
        _
      // Predicated region
      $region45: #{two_way_attention_block.5} parent=11 // pred_check
        %p417 = pneg %p329
      $region46: #{two_way_attention_block.5} parent=11 // pred_check_branch
        %419 = sbr.rel (%p417) target = $region48
      $region47: #{two_way_attention_block.5} parent=11 // pred_region
        _
      $region48: #{two_way_attention_block.5} parent=11 // pred_fallthru
        _
      // Predicated region
      $region49: #{two_way_attention_block.5} parent=11 // pred_check
        %p420 = pneg %p350
      $region50: #{two_way_attention_block.5} parent=11 // pred_check_branch
        %422 = sbr.rel (%p420) target = $region52
      $region51: #{two_way_attention_block.5} parent=11 // pred_region
        _
      $region52: #{two_way_attention_block.5} parent=11 // pred_fallthru
        _
    $region12: #{two_way_attention_block.5} parent=5 // pred_fallthru
      _
    %p423 = scmp.lt.s32.totalorder %s20, 2
    // Predicated region
    $region53: #{two_way_attention_block.5} parent=5 // pred_check
      %p424 = pneg %p423
    $region54: #{two_way_attention_block.5} parent=5 // pred_check_branch
      %426 = sbr.rel (%p424) target = $region56
    $region55: #{two_way_attention_block.5} parent=5 // pred_region
      // Predicated region
      $region57: #{two_way_attention_block.5} parent=55 // pred_check
        %p427 = pneg %p54
      $region58: #{two_way_attention_block.5} parent=55 // pred_check_branch
        %429 = sbr.rel (%p427) target = $region60
      $region59: #{two_way_attention_block.5} parent=55 // pred_region
        %p430 = scmp.lt.s32.totalorder %s27, 1
        %s431 = scalar_select %p430, %s27, 1
        %p432 = scmp.lt.s32.totalorder %s28, 0
        %s433 = scalar_select %p432, %s28, 0
        %s434 = sadd.s32 %s433, %s431
        %s435 = smul.addr %s434, 8
        %s436 = scalar_lea.vmem %s0, %s435
      $region60: #{two_way_attention_block.5} parent=55 // pred_fallthru
        _
      // Predicated region
      $region61: #{two_way_attention_block.5} parent=55 // pred_check
        %p437 = pneg %p82
      $region62: #{two_way_attention_block.5} parent=55 // pred_check_branch
        %439 = sbr.rel (%p437) target = $region64
      $region63: #{two_way_attention_block.5} parent=55 // pred_region
        %p440 = scmp.lt.s32.totalorder %s27, 1
        %s441 = scalar_select %p440, %s27, 1
        %p442 = scmp.lt.s32.totalorder %s28, 0
        %s443 = scalar_select %p442, %s28, 0
        %s444 = sadd.s32 %s443, %s441
        %s445 = smul.addr %s444, 8
        %s446 = scalar_lea.vmem %s1, %s445
      $region64: #{two_way_attention_block.5} parent=55 // pred_fallthru
        _
      // Predicated region
      $region65: #{two_way_attention_block.5} parent=55 // pred_check
        %p447 = pneg %p108
      $region66: #{two_way_attention_block.5} parent=55 // pred_check_branch
        %449 = sbr.rel (%p447) target = $region68
      $region67: #{two_way_attention_block.5} parent=55 // pred_region
        %p450 = scmp.lt.s32.totalorder %s27, 1
        %s451 = scalar_select %p450, %s27, 1
        %s452 = smul.addr %s451, 8
        %s453 = smul.addr %s452, 8
        %s454 = scalar_lea.vmem %s2, %s453
      $region68: #{two_way_attention_block.5} parent=55 // pred_fallthru
        _
      // Predicated region
      $region69: #{two_way_attention_block.5} parent=55 // pred_check
        %p455 = pneg %p134
      $region70: #{two_way_attention_block.5} parent=55 // pred_check_branch
        %457 = sbr.rel (%p455) target = $region72
      $region71: #{two_way_attention_block.5} parent=55 // pred_region
        %p458 = scmp.lt.s32.totalorder %s27, 1
        %s459 = scalar_select %p458, %s27, 1
        %s460 = smul.addr %s459, 8
        %s461 = smul.addr %s460, 8
        %s462 = scalar_lea.vmem %s3, %s461
      $region72: #{two_way_attention_block.5} parent=55 // pred_fallthru
        _
    $region56: #{two_way_attention_block.5} parent=5 // pred_fallthru
      _
    %p463 = scmp.le.s32.totalorder 1, %s20
    %p464 = scmp.lt.s32.totalorder %s20, 3
    %p465 = pnand %p463, %p464
    %p466 = pneg %p465
    // Predicated region
    $region73: #{two_way_attention_block.5} parent=5 // pred_check
      _
    $region74: #{two_way_attention_block.5} parent=5 // pred_check_branch
      %468 = sbr.rel (%p465) target = $region76
    $region75: #{two_way_attention_block.5} parent=5 // pred_region
      %s469 = ssub.s32 %s20, 1
      %p470 = scmp.lt.s32.totalorder %s29, 1
      %s471 = scalar_select %p470, %s29, 1
      %p472 = scmp.lt.s32.totalorder %s30, 0
      %s473 = scalar_select %p472, %s30, 0
      %s474 = sadd.s32 %s473, %s471
      %s475 = smul.addr %s474, 8
      %s476 = scalar_lea.vmem %s0, %s475
      %p477 = pneg %p60
      %p478 = pneg %p57
      %p479 = scmp.lt.s32.totalorder %s29, 1
      %s480 = scalar_select %p479, %s29, 1
      %p481 = scmp.lt.s32.totalorder %s30, 0
      %s482 = scalar_select %p481, %s30, 0
      %s483 = sadd.s32 %s482, %s480
      %s484 = smul.addr %s483, 8
      %s485 = scalar_lea.vmem %s1, %s484
      %p486 = pneg %p88
      %p487 = pneg %p85
      %p488 = scmp.lt.s32.totalorder %s29, 1
      %s489 = scalar_select %p488, %s29, 1
      %s490 = smul.addr %s489, 8
      %s491 = smul.addr %s490, 8
      %s492 = scalar_lea.vmem %s2, %s491
      %p493 = pneg %p114
      %p494 = pneg %p111
      %p495 = scmp.lt.s32.totalorder %s29, 1
      %s496 = scalar_select %p495, %s29, 1
      %s497 = smul.addr %s496, 8
      %s498 = smul.addr %s497, 8
      %s499 = scalar_lea.vmem %s3, %s498
      %p500 = pneg %p140
      %p501 = pneg %p137
      %p502 = pneg %p161
      %p503 = pneg %p158
      %p504 = pneg %p182
      %p505 = pneg %p179
      %p506 = pneg %p203
      %p507 = pneg %p200
      %p508 = pneg %p224
      %p509 = pneg %p221
      %p510 = pneg %p245
      %p511 = pneg %p242
      %p512 = pneg %p266
      %p513 = pneg %p263
      %p514 = pneg %p287
      %p515 = pneg %p284
      %p516 = pneg %p308
      %p517 = pneg %p305
      %p518 = pneg %p329
      %p519 = pneg %p326
      %p520 = pneg %p350
      %p521 = pneg %p347
      %p522 = pneg %p378
      %p523 = pneg %p375
      %p524 = scmp.lt.s32.totalorder %s29, 1
      %s525 = scalar_select %p524, %s29, 1
      %p526 = scmp.lt.s32.totalorder %s30, 0
      %s527 = scalar_select %p526, %s30, 0
      %s528 = sadd.s32 %s527, %s525
      %s529 = smul.addr %s528, 8
      %s530 = scalar_lea.vmem %s14, %s529
      %p531 = scmp.lt.s32.totalorder %s29, 1
      %s532 = scalar_select %p531, %s29, 1
      %p533 = scmp.lt.s32.totalorder %s30, 0
      %s534 = scalar_select %p533, %s30, 0
      %s535 = sadd.s32 %s534, %s532
      %s536 = smul.addr %s535, 8
      %s537 = scalar_lea.vmem %s0, %s536
      %p538 = scmp.lt.s32.totalorder %s29, 1
      %s539 = scalar_select %p538, %s29, 1
      %p540 = scmp.lt.s32.totalorder %s30, 0
      %s541 = scalar_select %p540, %s30, 0
      %s542 = sadd.s32 %s541, %s539
      %s543 = smul.addr %s542, 8
      %s544 = scalar_lea.vmem %s1, %s543
      %p545 = scmp.lt.s32.totalorder %s29, 1
      %s546 = scalar_select %p545, %s29, 1
      %s547 = smul.addr %s546, 8
      %s548 = smul.addr %s547, 8
      %s549 = scalar_lea.vmem %s2, %s548
      %p550 = scmp.lt.s32.totalorder %s29, 1
      %s551 = scalar_select %p550, %s29, 1
      %s552 = smul.addr %s551, 8
      %s553 = smul.addr %s552, 8
      %s554 = scalar_lea.vmem %s3, %s553
      %p555 = scmp.lt.s32.totalorder %s29, 1
      %s556 = scalar_select %p555, %s29, 1
      %p557 = scmp.lt.s32.totalorder %s30, 0
      %s558 = scalar_select %p557, %s30, 0
      %s559 = sadd.s32 %s558, %s556
      %s560 = smul.addr %s559, 8
      %s561 = scalar_lea.vmem %s14, %s560
      %v563 = vld [vmem:[%s537] sm:$0xff]
      %v564 = vld [vmem:[%s549] sm:$0xff]
      %v565 = vld [vmem:[%s549 + $0x8] sm:$0xff]
      %v566 = vld [vmem:[%s549 + $0x10] sm:$0xff]
      %v567 = vld [vmem:[%s549 + $0x18] sm:$0xff]
      %v568 = vld [vmem:[%s549 + $0x20] sm:$0xff]
      %v569 = vld [vmem:[%s549 + $0x28] sm:$0xff]
      %v570 = vld [vmem:[%s549 + $0x30] sm:$0xff]
      %v571 = vld [vmem:[%s549 + $0x38] sm:$0xff]
      %v572 = vld [vmem:[%s544] sm:$0xff]
      %v573 = vadd.f32 %v563, %v572
      %v574 = vpack.c.bf16 %v573, %v573
      %v575 = vld [vmem:[%s554] sm:$0xff]
      %v576 = vld [vmem:[%s554 + $0x8] sm:$0xff]
      %v577 = vld [vmem:[%s554 + $0x10] sm:$0xff]
      %v578 = vld [vmem:[%s554 + $0x18] sm:$0xff]
      %v579 = vld [vmem:[%s554 + $0x20] sm:$0xff]
      %v580 = vld [vmem:[%s554 + $0x28] sm:$0xff]
      %v581 = vld [vmem:[%s554 + $0x30] sm:$0xff]
      %v582 = vld [vmem:[%s554 + $0x38] sm:$0xff]
      %v583 = vadd.f32 %v564, %v575
      %v584 = vadd.f32 %v565, %v576
      %v585 = vadd.f32 %v566, %v577
      %v586 = vadd.f32 %v567, %v578
      %v587 = vadd.f32 %v568, %v579
      %v588 = vadd.f32 %v569, %v580
      %v589 = vadd.f32 %v570, %v581
      %v590 = vadd.f32 %v571, %v582
      %v591 = vpack.c.bf16 %v584, %v583
      %v592 = vpack.c.bf16 %v586, %v585
      %v593 = vpack.c.bf16 %v588, %v587
      %v594 = vpack.c.bf16 %v590, %v589
      %v595 = vpack.c.bf16 %v565, %v564
      %v596 = vpack.c.bf16 %v567, %v566
      %v597 = vpack.c.bf16 %v569, %v568
      %v598 = vpack.c.bf16 %v571, %v570
      %v599 = vld [vmem:[%s4] sm:$0xf]
      %v600 = vld [vmem:[%s4 + $0x4] sm:$0xf]
      %v601 = vld [vmem:[%s4 + $0x8] sm:$0xf]
      %v602 = vld [vmem:[%s4 + $0xc] sm:$0xf]
      %v603 = vld [vmem:[%s5] sm:$0x1]
      %v605 = vlaneseq
      %v606 = vshrl.u32 %v605, 7
      %v607 = vsub.s32 0, %v606
      %v608 = vrot.slane %v603, %v607
      %v614 = vunpack.c.l.b16 %v599
      %v615 = vunpack.c.l.b16 %v600
      %v616 = vunpack.c.l.b16 %v601
      %v617 = vunpack.c.l.b16 %v602
      %v618 = vpack.c.b16 %v615, %v614
      %v619 = vpack.c.b16 %v617, %v616
      %vm622 = vcmask 261120
      %v624 = vsel %vm622, %v574, 0
      %626 = vmatprep.subr.bf16.mxu0 0
      %627 = vmatpush1.bf16.msra.mxu0 0
      %628 = vmatprep.subr.bf16.mxu0 0
      %629 = vmatpush1.bf16.msra.mxu0 0
      %630 = vmatprep.subr.bf16.mxu0 0
      %631 = vmatpush1.bf16.msra.mxu0 0
      %632 = vmatprep.subr.bf16.mxu0 0
      %633 = vmatpush1.bf16.msra.mxu0 0
      %634 = vmatprep.subr.bf16.mxu0 0
      %635 = vmatpush1.bf16.msra.mxu0 0
      %636 = vmatprep.subr.bf16.mxu0 0
      %637 = vmatpush1.bf16.msra.mxu0 0
      %638 = vmatprep.subr.bf16.mxu0 0
      %639 = vmatpush1.bf16.msra.mxu0 %v619
      %640 = vmatprep.subr.bf16.mxu0 0
      %641 = vmatpush1.bf16.msra.mxu0 %v618
      %642 = vmatprep.subr.bf16.mxu0 0
      %643 = vmatpush2.bf16.msra.mxu0 0
      %644 = vmatprep.subr.bf16.mxu0 0
      %645 = vmatpush2.bf16.msra.mxu0 0
      %646 = vmatprep.subr.bf16.mxu0 0
      %647 = vmatpush2.bf16.msra.mxu0 0
      %648 = vmatprep.subr.bf16.mxu0 0
      %649 = vmatpush2.bf16.msra.mxu0 0
      %650 = vmatprep.subr.bf16.mxu0 0
      %651 = vmatpush2.bf16.msra.mxu0 0
      %652 = vmatprep.subr.bf16.mxu0 0
      %653 = vmatpush2.bf16.msra.mxu0 0
      %654 = vmatprep.subr.bf16.mxu0 0
      %655 = vmatpush2.bf16.msra.mxu0 0
      %656 = vmatprep.subr.bf16.mxu0 0
      %657 = vmatpush2.bf16.msra.mxu0 0
      %658 = vmatprep.mubr.bf16.mxu0 0
      %659 = vmatmul.mubr.bf16.gmra.mxu0 %v624
      %v660 = vpop.f32.mrf.mxu0
      %v661 = vadd.f32 %v608, %v660
      %v662 = vpop.f32.mrf.mxu0
      %v663 = vpop.f32.mrf.mxu0
      %v664 = vpop.f32.mrf.mxu0
      %665 = vdwg.mxu0
      %v666 = vpack.c.bf16 %v661, %v661
      %v667 = vld [vmem:[%s6] sm:$0xf]
      %v668 = vld [vmem:[%s6 + $0x4] sm:$0xf]
      %v669 = vld [vmem:[%s6 + $0x8] sm:$0xf]
      %v670 = vld [vmem:[%s6 + $0xc] sm:$0xf]
      %v671 = vld [vmem:[%s7] sm:$0x1]
      %v673 = vlaneseq
      %v674 = vshrl.u32 %v673, 7
      %v675 = vsub.s32 0, %v674
      %v676 = vrot.slane %v671, %v675
      %v682 = vunpack.c.l.b16 %v667
      %v683 = vunpack.c.l.b16 %v668
      %v684 = vunpack.c.l.b16 %v669
      %v685 = vunpack.c.l.b16 %v670
      %v686 = vpack.c.b16 %v683, %v682
      %v687 = vpack.c.b16 %v685, %v684
      %v691 = vsel %vm622, %v591, 0
      %v694 = vsel %vm622, %v592, 0
      %v697 = vsel %vm622, %v593, 0
      %v700 = vsel %vm622, %v594, 0
      %702 = vmatprep.subr.bf16.mxu0 0
      %703 = vmatpush1.bf16.msra.mxu0 0
      %704 = vmatprep.subr.bf16.mxu0 0
      %705 = vmatpush1.bf16.msra.mxu0 0
      %706 = vmatprep.subr.bf16.mxu0 0
      %707 = vmatpush1.bf16.msra.mxu0 0
      %708 = vmatprep.subr.bf16.mxu0 0
      %709 = vmatpush1.bf16.msra.mxu0 0
      %710 = vmatprep.subr.bf16.mxu0 0
      %711 = vmatpush1.bf16.msra.mxu0 0
      %712 = vmatprep.subr.bf16.mxu0 0
      %713 = vmatpush1.bf16.msra.mxu0 0
      %714 = vmatprep.subr.bf16.mxu0 0
      %715 = vmatpush1.bf16.msra.mxu0 %v687
      %716 = vmatprep.subr.bf16.mxu0 0
      %717 = vmatpush1.bf16.msra.mxu0 %v686
      %718 = vmatprep.subr.bf16.mxu0 0
      %719 = vmatpush2.bf16.msra.mxu0 0
      %720 = vmatprep.subr.bf16.mxu0 0
      %721 = vmatpush2.bf16.msra.mxu0 0
      %722 = vmatprep.subr.bf16.mxu0 0
      %723 = vmatpush2.bf16.msra.mxu0 0
      %724 = vmatprep.subr.bf16.mxu0 0
      %725 = vmatpush2.bf16.msra.mxu0 0
      %726 = vmatprep.subr.bf16.mxu0 0
      %727 = vmatpush2.bf16.msra.mxu0 0
      %728 = vmatprep.subr.bf16.mxu0 0
      %729 = vmatpush2.bf16.msra.mxu0 0
      %730 = vmatprep.subr.bf16.mxu0 0
      %731 = vmatpush2.bf16.msra.mxu0 0
      %732 = vmatprep.subr.bf16.mxu0 0
      %733 = vmatpush2.bf16.msra.mxu0 0
      %734 = vmatprep.mubr.bf16.mxu0 0
      %735 = vmatmul.mubr.bf16.gmra.mxu0 %v691
      %v736 = vpop.f32.mrf.mxu0
      %v737 = vadd.f32 %v676, %v736
      %v738 = vpop.f32.mrf.mxu0
      %v739 = vpop.f32.mrf.mxu0
      %v740 = vadd.f32 %v676, %v739
      %v741 = vpop.f32.mrf.mxu0
      %742 = vmatprep.mubr.bf16.mxu0 0
      %743 = vmatmul.mubr.bf16.gmra.mxu0 %v694
      %v744 = vpop.f32.mrf.mxu0
      %v745 = vadd.f32 %v676, %v744
      %v746 = vpop.f32.mrf.mxu0
      %v747 = vpop.f32.mrf.mxu0
      %v748 = vadd.f32 %v676, %v747
      %v749 = vpop.f32.mrf.mxu0
      %750 = vmatprep.mubr.bf16.mxu0 0
      %751 = vmatmul.mubr.bf16.gmra.mxu0 %v697
      %v752 = vpop.f32.mrf.mxu0
      %v753 = vadd.f32 %v676, %v752
      %v754 = vpop.f32.mrf.mxu0
      %v755 = vpop.f32.mrf.mxu0
      %v756 = vadd.f32 %v676, %v755
      %v757 = vpop.f32.mrf.mxu0
      %758 = vmatprep.mubr.bf16.mxu0 0
      %759 = vmatmul.mubr.bf16.gmra.mxu0 %v700
      %v760 = vpop.f32.mrf.mxu0
      %v761 = vadd.f32 %v676, %v760
      %v762 = vpop.f32.mrf.mxu0
      %v763 = vpop.f32.mrf.mxu0
      %v764 = vadd.f32 %v676, %v763
      %v765 = vpop.f32.mrf.mxu0
      %766 = vdwg.mxu0
      %v767 = vpack.c.bf16 %v740, %v737
      %v768 = vpack.c.bf16 %v748, %v745
      %v769 = vpack.c.bf16 %v756, %v753
      %v770 = vpack.c.bf16 %v764, %v761
      %v771 = vld [vmem:[%s8] sm:$0xf]
      %v772 = vld [vmem:[%s8 + $0x4] sm:$0xf]
      %v773 = vld [vmem:[%s8 + $0x8] sm:$0xf]
      %v774 = vld [vmem:[%s8 + $0xc] sm:$0xf]
      %v775 = vld [vmem:[%s9] sm:$0x1]
      %v777 = vlaneseq
      %v778 = vshrl.u32 %v777, 7
      %v779 = vsub.s32 0, %v778
      %v780 = vrot.slane %v775, %v779
      %v786 = vunpack.c.l.b16 %v771
      %v787 = vunpack.c.l.b16 %v772
      %v788 = vunpack.c.l.b16 %v773
      %v789 = vunpack.c.l.b16 %v774
      %v790 = vpack.c.b16 %v787, %v786
      %v791 = vpack.c.b16 %v789, %v788
      %v795 = vsel %vm622, %v595, 0
      %v798 = vsel %vm622, %v596, 0
      %v801 = vsel %vm622, %v597, 0
      %v804 = vsel %vm622, %v598, 0
      %806 = vmatprep.subr.bf16.mxu0 0
      %807 = vmatpush1.bf16.msra.mxu0 0
      %808 = vmatprep.subr.bf16.mxu0 0
      %809 = vmatpush1.bf16.msra.mxu0 0
      %810 = vmatprep.subr.bf16.mxu0 0
      %811 = vmatpush1.bf16.msra.mxu0 0
      %812 = vmatprep.subr.bf16.mxu0 0
      %813 = vmatpush1.bf16.msra.mxu0 0
      %814 = vmatprep.subr.bf16.mxu0 0
      %815 = vmatpush1.bf16.msra.mxu0 0
      %816 = vmatprep.subr.bf16.mxu0 0
      %817 = vmatpush1.bf16.msra.mxu0 0
      %818 = vmatprep.subr.bf16.mxu0 0
      %819 = vmatpush1.bf16.msra.mxu0 %v791
      %820 = vmatprep.subr.bf16.mxu0 0
      %821 = vmatpush1.bf16.msra.mxu0 %v790
      %822 = vmatprep.subr.bf16.mxu0 0
      %823 = vmatpush2.bf16.msra.mxu0 0
      %824 = vmatprep.subr.bf16.mxu0 0
      %825 = vmatpush2.bf16.msra.mxu0 0
      %826 = vmatprep.subr.bf16.mxu0 0
      %827 = vmatpush2.bf16.msra.mxu0 0
      %828 = vmatprep.subr.bf16.mxu0 0
      %829 = vmatpush2.bf16.msra.mxu0 0
      %830 = vmatprep.subr.bf16.mxu0 0
      %831 = vmatpush2.bf16.msra.mxu0 0
      %832 = vmatprep.subr.bf16.mxu0 0
      %833 = vmatpush2.bf16.msra.mxu0 0
      %834 = vmatprep.subr.bf16.mxu0 0
      %835 = vmatpush2.bf16.msra.mxu0 0
      %836 = vmatprep.subr.bf16.mxu0 0
      %837 = vmatpush2.bf16.msra.mxu0 0
      %838 = vmatprep.mubr.bf16.mxu0 0
      %839 = vmatmul.mubr.bf16.gmra.mxu0 %v795
      %v840 = vpop.f32.mrf.mxu0
      %v841 = vadd.f32 %v780, %v840
      %v842 = vpop.f32.mrf.mxu0
      %v843 = vpop.f32.mrf.mxu0
      %v844 = vadd.f32 %v780, %v843
      %v845 = vpop.f32.mrf.mxu0
      %846 = vmatprep.mubr.bf16.mxu0 0
      %847 = vmatmul.mubr.bf16.gmra.mxu0 %v798
      %v848 = vpop.f32.mrf.mxu0
      %v849 = vadd.f32 %v780, %v848
      %v850 = vpop.f32.mrf.mxu0
      %v851 = vpop.f32.mrf.mxu0
      %v852 = vadd.f32 %v780, %v851
      %v853 = vpop.f32.mrf.mxu0
      %854 = vmatprep.mubr.bf16.mxu0 0
      %855 = vmatmul.mubr.bf16.gmra.mxu0 %v801
      %v856 = vpop.f32.mrf.mxu0
      %v857 = vadd.f32 %v780, %v856
      %v858 = vpop.f32.mrf.mxu0
      %v859 = vpop.f32.mrf.mxu0
      %v860 = vadd.f32 %v780, %v859
      %v861 = vpop.f32.mrf.mxu0
      %862 = vmatprep.mubr.bf16.mxu0 0
      %863 = vmatmul.mubr.bf16.gmra.mxu0 %v804
      %v864 = vpop.f32.mrf.mxu0
      %v865 = vadd.f32 %v780, %v864
      %v866 = vpop.f32.mrf.mxu0
      %v867 = vpop.f32.mrf.mxu0
      %v868 = vadd.f32 %v780, %v867
      %v869 = vpop.f32.mrf.mxu0
      %870 = vdwg.mxu0
      %v871 = vpack.c.bf16 %v844, %v841
      %v872 = vpack.c.bf16 %v852, %v849
      %v873 = vpack.c.bf16 %v860, %v857
      %v874 = vpack.c.bf16 %v868, %v865
      %vm875 = vcmask 31744
      %v877 = vsel %vm875, %v666, 0
      %v880 = vsel %vm875, %v767, 0
      %v883 = vsel %vm875, %v768, 0
      %v886 = vsel %vm875, %v769, 0
      %v889 = vsel %vm875, %v770, 0
      %891 = vmatprep.subr.bf16.mxu0 0
      %892 = vmatpush1.bf16.xpose.msra.mxu0 0
      %893 = vmatprep.subr.bf16.mxu0 0
      %894 = vmatpush1.bf16.xpose.msra.mxu0 0
      %895 = vmatprep.subr.bf16.mxu0 0
      %896 = vmatpush1.bf16.xpose.msra.mxu0 0
      %897 = vmatprep.subr.bf16.mxu0 0
      %898 = vmatpush1.bf16.xpose.msra.mxu0 0
      %899 = vmatprep.subr.bf16.mxu0 0
      %900 = vmatpush1.bf16.xpose.msra.mxu0 %v889
      %901 = vmatprep.subr.bf16.mxu0 0
      %902 = vmatpush1.bf16.xpose.msra.mxu0 %v886
      %903 = vmatprep.subr.bf16.mxu0 0
      %904 = vmatpush1.bf16.xpose.msra.mxu0 %v883
      %905 = vmatprep.subr.bf16.mxu0 0
      %906 = vmatpush1.bf16.xpose.msra.mxu0 %v880
      %907 = vmatprep.subr.bf16.mxu0 0
      %908 = vmatpush2.bf16.xpose.msra.mxu0 0
      %909 = vmatprep.subr.bf16.mxu0 0
      %910 = vmatpush2.bf16.xpose.msra.mxu0 0
      %911 = vmatprep.subr.bf16.mxu0 0
      %912 = vmatpush2.bf16.xpose.msra.mxu0 0
      %913 = vmatprep.subr.bf16.mxu0 0
      %914 = vmatpush2.bf16.xpose.msra.mxu0 0
      %915 = vmatprep.subr.bf16.mxu0 0
      %916 = vmatpush2.bf16.xpose.msra.mxu0 0
      %917 = vmatprep.subr.bf16.mxu0 0
      %918 = vmatpush2.bf16.xpose.msra.mxu0 0
      %919 = vmatprep.subr.bf16.mxu0 0
      %920 = vmatpush2.bf16.xpose.msra.mxu0 0
      %921 = vmatprep.subr.bf16.mxu0 0
      %922 = vmatpush2.bf16.xpose.msra.mxu0 0
      %923 = vmatprep.mubr.bf16.mxu0 0
      %924 = vmatmul.mubr.bf16.gmra.mxu0 %v877
      %v925 = vpop.f32.mrf.mxu0
      %v926 = vadd.f32 0.0, %v925
      %v927 = vpop.f32.mrf.mxu0
      %v928 = vpop.f32.mrf.mxu0
      %v929 = vpop.f32.mrf.mxu0
      %930 = vdwg.mxu0
      %vm931 = vcmask 523264
      %v932 = vsel %vm931, %v926, -inf
      %933 = vmax.xlane.f32.xlu0 %v932
      %v934 = vpop.xlane.xlu0 %933
      %v935 = vsub.f32 %v926, %v934
      %v936 = vmul.f32 %v935, 1.442695
      %v937 = vpow.pop %v936
      %v938 = vsel %vm931, %v937, 0.0
      %939 = vadd.xlane.f32.xlu0 %v938
      %v940 = vpop.xlane.xlu0 %939
      %v941 = vrcp.pop %v940
      %v942 = vmul.f32 %v937, %v941
      %v943 = vpack.c.bf16 %v942, %v942
      %v945 = vsel %vm931, %v943, 0
      %947 = vmatprep.subr.bf16.mxu0 0
      %948 = vmatpush1.bf16.msra.mxu0 0
      %949 = vmatprep.subr.bf16.mxu0 0
      %950 = vmatpush1.bf16.msra.mxu0 0
      %951 = vmatprep.subr.bf16.mxu0 0
      %952 = vmatpush1.bf16.msra.mxu0 0
      %953 = vmatprep.subr.bf16.mxu0 0
      %954 = vmatpush1.bf16.msra.mxu0 0
      %955 = vmatprep.subr.bf16.mxu0 0
      %956 = vmatpush1.bf16.msra.mxu0 %v874
      %957 = vmatprep.subr.bf16.mxu0 0
      %958 = vmatpush1.bf16.msra.mxu0 %v873
      %959 = vmatprep.subr.bf16.mxu0 0
      %960 = vmatpush1.bf16.msra.mxu0 %v872
      %961 = vmatprep.subr.bf16.mxu0 0
      %962 = vmatpush1.bf16.msra.mxu0 %v871
      %963 = vmatprep.subr.bf16.mxu0 0
      %964 = vmatpush2.bf16.msra.mxu0 0
      %965 = vmatprep.subr.bf16.mxu0 0
      %966 = vmatpush2.bf16.msra.mxu0 0
      %967 = vmatprep.subr.bf16.mxu0 0
      %968 = vmatpush2.bf16.msra.mxu0 0
      %969 = vmatprep.subr.bf16.mxu0 0
      %970 = vmatpush2.bf16.msra.mxu0 0
      %971 = vmatprep.subr.bf16.mxu0 0
      %972 = vmatpush2.bf16.msra.mxu0 0
      %973 = vmatprep.subr.bf16.mxu0 0
      %974 = vmatpush2.bf16.msra.mxu0 0
      %975 = vmatprep.subr.bf16.mxu0 0
      %976 = vmatpush2.bf16.msra.mxu0 0
      %977 = vmatprep.subr.bf16.mxu0 0
      %978 = vmatpush2.bf16.msra.mxu0 0
      %979 = vmatprep.mubr.bf16.mxu0 0
      %980 = vmatmul.mubr.bf16.gmra.mxu0 %v945
      %v981 = vpop.f32.mrf.mxu0
      %v982 = vadd.f32 0.0, %v981
      %v983 = vpop.f32.mrf.mxu0
      %v984 = vpop.f32.mrf.mxu0
      %v985 = vpop.f32.mrf.mxu0
      %986 = vdwg.mxu0
      %987 = vst.msk [vmem:[#allocation2] sm:$0xff] %vm875, %v982
      %989 = vrot.lane.b32.xlu0 %v666, 124
      %v990 = vpop.permute.xlu0 %989
      %995 = vrot.lane.b32.xlu0 %v767, 124
      %v996 = vpop.permute.xlu0 %995
      %997 = vrot.lane.b32.xlu0 %v768, 124
      %v998 = vpop.permute.xlu0 %997
      %999 = vrot.lane.b32.xlu0 %v769, 124
      %v1000 = vpop.permute.xlu0 %999
      %1001 = vrot.lane.b32.xlu0 %v770, 124
      %v1002 = vpop.permute.xlu0 %1001
      %v1004 = vsel %vm875, %v990, 0
      %v1007 = vsel %vm875, %v996, 0
      %v1010 = vsel %vm875, %v998, 0
      %v1013 = vsel %vm875, %v1000, 0
      %v1016 = vsel %vm875, %v1002, 0
      %1018 = vmatprep.subr.bf16.mxu0 0
      %1019 = vmatpush1.bf16.xpose.msra.mxu0 0
      %1020 = vmatprep.subr.bf16.mxu0 0
      %1021 = vmatpush1.bf16.xpose.msra.mxu0 0
      %1022 = vmatprep.subr.bf16.mxu0 0
      %1023 = vmatpush1.bf16.xpose.msra.mxu0 0
      %1024 = vmatprep.subr.bf16.mxu0 0
      %1025 = vmatpush1.bf16.xpose.msra.mxu0 0
      %1026 = vmatprep.subr.bf16.mxu0 0
      %1027 = vmatpush1.bf16.xpose.msra.mxu0 %v1016
      %1028 = vmatprep.subr.bf16.mxu0 0
      %1029 = vmatpush1.bf16.xpose.msra.mxu0 %v1013
      %1030 = vmatprep.subr.bf16.mxu0 0
      %1031 = vmatpush1.bf16.xpose.msra.mxu0 %v1010
      %1032 = vmatprep.subr.bf16.mxu0 0
      %1033 = vmatpush1.bf16.xpose.msra.mxu0 %v1007
      %1034 = vmatprep.subr.bf16.mxu0 0
      %1035 = vmatpush2.bf16.xpose.msra.mxu0 0
      %1036 = vmatprep.subr.bf16.mxu0 0
      %1037 = vmatpush2.bf16.xpose.msra.mxu0 0
      %1038 = vmatprep.subr.bf16.mxu0 0
      %1039 = vmatpush2.bf16.xpose.msra.mxu0 0
      %1040 = vmatprep.subr.bf16.mxu0 0
      %1041 = vmatpush2.bf16.xpose.msra.mxu0 0
      %1042 = vmatprep.subr.bf16.mxu0 0
      %1043 = vmatpush2.bf16.xpose.msra.mxu0 0
      %1044 = vmatprep.subr.bf16.mxu0 0
      %1045 = vmatpush2.bf16.xpose.msra.mxu0 0
      %1046 = vmatprep.subr.bf16.mxu0 0
      %1047 = vmatpush2.bf16.xpose.msra.mxu0 0
      %1048 = vmatprep.subr.bf16.mxu0 0
      %1049 = vmatpush2.bf16.xpose.msra.mxu0 0
      %1050 = vmatprep.mubr.bf16.mxu0 0
      %1051 = vmatmul.mubr.bf16.gmra.mxu0 %v1004
      %v1052 = vpop.f32.mrf.mxu0
      %v1053 = vadd.f32 0.0, %v1052
      %v1054 = vpop.f32.mrf.mxu0
      %v1055 = vpop.f32.mrf.mxu0
      %v1056 = vpop.f32.mrf.mxu0
      %1057 = vdwg.mxu0
      %v1058 = vsel %vm931, %v1053, -inf
      %1059 = vmax.xlane.f32.xlu0 %v1058
      %v1060 = vpop.xlane.xlu0 %1059
      %v1061 = vsub.f32 %v1053, %v1060
      %v1062 = vmul.f32 %v1061, 1.442695
      %v1063 = vpow.pop %v1062
      %v1064 = vsel %vm931, %v1063, 0.0
      %1065 = vadd.xlane.f32.xlu0 %v1064
      %v1066 = vpop.xlane.xlu0 %1065
      %v1067 = vrcp.pop %v1066
      %v1068 = vmul.f32 %v1063, %v1067
      %v1069 = vpack.c.bf16 %v1068, %v1068
      %1074 = vrot.lane.b32.xlu0 %v871, 124
      %v1075 = vpop.permute.xlu0 %1074
      %1076 = vrot.lane.b32.xlu0 %v872, 124
      %v1077 = vpop.permute.xlu0 %1076
      %1078 = vrot.lane.b32.xlu0 %v873, 124
      %v1079 = vpop.permute.xlu0 %1078
      %1080 = vrot.lane.b32.xlu0 %v874, 124
      %v1081 = vpop.permute.xlu0 %1080
      %v1087 = vsel %vm931, %v1069, 0
      %1089 = vmatprep.subr.bf16.mxu0 0
      %1090 = vmatpush1.bf16.msra.mxu0 0
      %1091 = vmatprep.subr.bf16.mxu0 0
      %1092 = vmatpush1.bf16.msra.mxu0 0
      %1093 = vmatprep.subr.bf16.mxu0 0
      %1094 = vmatpush1.bf16.msra.mxu0 0
      %1095 = vmatprep.subr.bf16.mxu0 0
      %1096 = vmatpush1.bf16.msra.mxu0 0
      %1097 = vmatprep.subr.bf16.mxu0 0
      %1098 = vmatpush1.bf16.msra.mxu0 %v1081
      %1099 = vmatprep.subr.bf16.mxu0 0
      %1100 = vmatpush1.bf16.msra.mxu0 %v1079
      %1101 = vmatprep.subr.bf16.mxu0 0
      %1102 = vmatpush1.bf16.msra.mxu0 %v1077
      %1103 = vmatprep.subr.bf16.mxu0 0
      %1104 = vmatpush1.bf16.msra.mxu0 %v1075
      %1105 = vmatprep.subr.bf16.mxu0 0
      %1106 = vmatpush2.bf16.msra.mxu0 0
      %1107 = vmatprep.subr.bf16.mxu0 0
      %1108 = vmatpush2.bf16.msra.mxu0 0
      %1109 = vmatprep.subr.bf16.mxu0 0
      %1110 = vmatpush2.bf16.msra.mxu0 0
      %1111 = vmatprep.subr.bf16.mxu0 0
      %1112 = vmatpush2.bf16.msra.mxu0 0
      %1113 = vmatprep.subr.bf16.mxu0 0
      %1114 = vmatpush2.bf16.msra.mxu0 0
      %1115 = vmatprep.subr.bf16.mxu0 0
      %1116 = vmatpush2.bf16.msra.mxu0 0
      %1117 = vmatprep.subr.bf16.mxu0 0
      %1118 = vmatpush2.bf16.msra.mxu0 0
      %1119 = vmatprep.subr.bf16.mxu0 0
      %1120 = vmatpush2.bf16.msra.mxu0 0
      %1121 = vmatprep.mubr.bf16.mxu0 0
      %1122 = vmatmul.mubr.bf16.gmra.mxu0 %v1087
      %v1123 = vpop.f32.mrf.mxu0
      %v1124 = vadd.f32 0.0, %v1123
      %v1125 = vpop.f32.mrf.mxu0
      %v1126 = vpop.f32.mrf.mxu0
      %v1127 = vpop.f32.mrf.mxu0
      %1128 = vdwg.mxu0
      %1130 = vrot.lane.b32.xlu0 %v1124, 4
      %v1131 = vpop.permute.xlu0 %1130
      %vm1133 = vcmask 64544
      %1134 = vst.msk [vmem:[#allocation2] sm:$0xff] %vm1133, %v1131
      %1135 = vrot.lane.b32.xlu0 %v666, 120
      %v1136 = vpop.permute.xlu0 %1135
      %1137 = vrot.lane.b32.xlu0 %v767, 120
      %v1138 = vpop.permute.xlu0 %1137
      %1139 = vrot.lane.b32.xlu0 %v768, 120
      %v1140 = vpop.permute.xlu0 %1139
      %1141 = vrot.lane.b32.xlu0 %v769, 120
      %v1142 = vpop.permute.xlu0 %1141
      %1143 = vrot.lane.b32.xlu0 %v770, 120
      %v1144 = vpop.permute.xlu0 %1143
      %v1146 = vsel %vm875, %v1136, 0
      %v1149 = vsel %vm875, %v1138, 0
      %v1152 = vsel %vm875, %v1140, 0
      %v1155 = vsel %vm875, %v1142, 0
      %v1158 = vsel %vm875, %v1144, 0
      %1160 = vmatprep.subr.bf16.mxu0 0
      %1161 = vmatpush1.bf16.xpose.msra.mxu0 0
      %1162 = vmatprep.subr.bf16.mxu0 0
      %1163 = vmatpush1.bf16.xpose.msra.mxu0 0
      %1164 = vmatprep.subr.bf16.mxu0 0
      %1165 = vmatpush1.bf16.xpose.msra.mxu0 0
      %1166 = vmatprep.subr.bf16.mxu0 0
      %1167 = vmatpush1.bf16.xpose.msra.mxu0 0
      %1168 = vmatprep.subr.bf16.mxu0 0
      %1169 = vmatpush1.bf16.xpose.msra.mxu0 %v1158
      %1170 = vmatprep.subr.bf16.mxu0 0
      %1171 = vmatpush1.bf16.xpose.msra.mxu0 %v1155
      %1172 = vmatprep.subr.bf16.mxu0 0
      %1173 = vmatpush1.bf16.xpose.msra.mxu0 %v1152
      %1174 = vmatprep.subr.bf16.mxu0 0
      %1175 = vmatpush1.bf16.xpose.msra.mxu0 %v1149
      %1176 = vmatprep.subr.bf16.mxu0 0
      %1177 = vmatpush2.bf16.xpose.msra.mxu0 0
      %1178 = vmatprep.subr.bf16.mxu0 0
      %1179 = vmatpush2.bf16.xpose.msra.mxu0 0
      %1180 = vmatprep.subr.bf16.mxu0 0
      %1181 = vmatpush2.bf16.xpose.msra.mxu0 0
      %1182 = vmatprep.subr.bf16.mxu0 0
      %1183 = vmatpush2.bf16.xpose.msra.mxu0 0
      %1184 = vmatprep.subr.bf16.mxu0 0
      %1185 = vmatpush2.bf16.xpose.msra.mxu0 0
      %1186 = vmatprep.subr.bf16.mxu0 0
      %1187 = vmatpush2.bf16.xpose.msra.mxu0 0
      %1188 = vmatprep.subr.bf16.mxu0 0
      %1189 = vmatpush2.bf16.xpose.msra.mxu0 0
      %1190 = vmatprep.subr.bf16.mxu0 0
      %1191 = vmatpush2.bf16.xpose.msra.mxu0 0
      %1192 = vmatprep.mubr.bf16.mxu0 0
      %1193 = vmatmul.mubr.bf16.gmra.mxu0 %v1146
      %v1194 = vpop.f32.mrf.mxu0
      %v1195 = vadd.f32 0.0, %v1194
      %v1196 = vpop.f32.mrf.mxu0
      %v1197 = vpop.f32.mrf.mxu0
      %v1198 = vpop.f32.mrf.mxu0
      %1199 = vdwg.mxu0
      %v1200 = vsel %vm931, %v1195, -inf
      %1201 = vmax.xlane.f32.xlu0 %v1200
      %v1202 = vpop.xlane.xlu0 %1201
      %v1203 = vsub.f32 %v1195, %v1202
      %v1204 = vmul.f32 %v1203, 1.442695
      %v1205 = vpow.pop %v1204
      %v1206 = vsel %vm931, %v1205, 0.0
      %1207 = vadd.xlane.f32.xlu0 %v1206
      %v1208 = vpop.xlane.xlu0 %1207
      %v1209 = vrcp.pop %v1208
      %v1210 = vmul.f32 %v1205, %v1209
      %v1211 = vpack.c.bf16 %v1210, %v1210
      %1212 = vrot.lane.b32.xlu0 %v871, 120
      %v1213 = vpop.permute.xlu0 %1212
      %1214 = vrot.lane.b32.xlu0 %v872, 120
      %v1215 = vpop.permute.xlu0 %1214
      %1216 = vrot.lane.b32.xlu0 %v873, 120
      %v1217 = vpop.permute.xlu0 %1216
      %1218 = vrot.lane.b32.xlu0 %v874, 120
      %v1219 = vpop.permute.xlu0 %1218
      %v1225 = vsel %vm931, %v1211, 0
      %1227 = vmatprep.subr.bf16.mxu0 0
      %1228 = vmatpush1.bf16.msra.mxu0 0
      %1229 = vmatprep.subr.bf16.mxu0 0
      %1230 = vmatpush1.bf16.msra.mxu0 0
      %1231 = vmatprep.subr.bf16.mxu0 0
      %1232 = vmatpush1.bf16.msra.mxu0 0
      %1233 = vmatprep.subr.bf16.mxu0 0
      %1234 = vmatpush1.bf16.msra.mxu0 0
      %1235 = vmatprep.subr.bf16.mxu0 0
      %1236 = vmatpush1.bf16.msra.mxu0 %v1219
      %1237 = vmatprep.subr.bf16.mxu0 0
      %1238 = vmatpush1.bf16.msra.mxu0 %v1217
      %1239 = vmatprep.subr.bf16.mxu0 0
      %1240 = vmatpush1.bf16.msra.mxu0 %v1215
      %1241 = vmatprep.subr.bf16.mxu0 0
      %1242 = vmatpush1.bf16.msra.mxu0 %v1213
      %1243 = vmatprep.subr.bf16.mxu0 0
      %1244 = vmatpush2.bf16.msra.mxu0 0
      %1245 = vmatprep.subr.bf16.mxu0 0
      %1246 = vmatpush2.bf16.msra.mxu0 0
      %1247 = vmatprep.subr.bf16.mxu0 0
      %1248 = vmatpush2.bf16.msra.mxu0 0
      %1249 = vmatprep.subr.bf16.mxu0 0
      %1250 = vmatpush2.bf16.msra.mxu0 0
      %1251 = vmatprep.subr.bf16.mxu0 0
      %1252 = vmatpush2.bf16.msra.mxu0 0
      %1253 = vmatprep.subr.bf16.mxu0 0
      %1254 = vmatpush2.bf16.msra.mxu0 0
      %1255 = vmatprep.subr.bf16.mxu0 0
      %1256 = vmatpush2.bf16.msra.mxu0 0
      %1257 = vmatprep.subr.bf16.mxu0 0
      %1258 = vmatpush2.bf16.msra.mxu0 0
      %1259 = vmatprep.mubr.bf16.mxu0 0
      %1260 = vmatmul.mubr.bf16.gmra.mxu0 %v1225
      %v1261 = vpop.f32.mrf.mxu0
      %v1262 = vadd.f32 0.0, %v1261
      %v1263 = vpop.f32.mrf.mxu0
      %v1264 = vpop.f32.mrf.mxu0
      %v1265 = vpop.f32.mrf.mxu0
      %1266 = vdwg.mxu0
      %1268 = vrot.lane.b32.xlu0 %v1262, 8
      %v1269 = vpop.permute.xlu0 %1268
      %vm1271 = vcmask 97344
      %1272 = vst.msk [vmem:[#allocation2] sm:$0xff] %vm1271, %v1269
      %1273 = vrot.lane.b32.xlu0 %v666, 116
      %v1274 = vpop.permute.xlu0 %1273
      %1275 = vrot.lane.b32.xlu0 %v767, 116
      %v1276 = vpop.permute.xlu0 %1275
      %1277 = vrot.lane.b32.xlu0 %v768, 116
      %v1278 = vpop.permute.xlu0 %1277
      %1279 = vrot.lane.b32.xlu0 %v769, 116
      %v1280 = vpop.permute.xlu0 %1279
      %1281 = vrot.lane.b32.xlu0 %v770, 116
      %v1282 = vpop.permute.xlu0 %1281
      %v1284 = vsel %vm875, %v1274, 0
      %v1287 = vsel %vm875, %v1276, 0
      %v1290 = vsel %vm875, %v1278, 0
      %v1293 = vsel %vm875, %v1280, 0
      %v1296 = vsel %vm875, %v1282, 0
      %1298 = vmatprep.subr.bf16.mxu0 0
      %1299 = vmatpush1.bf16.xpose.msra.mxu0 0
      %1300 = vmatprep.subr.bf16.mxu0 0
      %1301 = vmatpush1.bf16.xpose.msra.mxu0 0
      %1302 = vmatprep.subr.bf16.mxu0 0
      %1303 = vmatpush1.bf16.xpose.msra.mxu0 0
      %1304 = vmatprep.subr.bf16.mxu0 0
      %1305 = vmatpush1.bf16.xpose.msra.mxu0 0
      %1306 = vmatprep.subr.bf16.mxu0 0
      %1307 = vmatpush1.bf16.xpose.msra.mxu0 %v1296
      %1308 = vmatprep.subr.bf16.mxu0 0
      %1309 = vmatpush1.bf16.xpose.msra.mxu0 %v1293
      %1310 = vmatprep.subr.bf16.mxu0 0
      %1311 = vmatpush1.bf16.xpose.msra.mxu0 %v1290
      %1312 = vmatprep.subr.bf16.mxu0 0
      %1313 = vmatpush1.bf16.xpose.msra.mxu0 %v1287
      %1314 = vmatprep.subr.bf16.mxu0 0
      %1315 = vmatpush2.bf16.xpose.msra.mxu0 0
      %1316 = vmatprep.subr.bf16.mxu0 0
      %1317 = vmatpush2.bf16.xpose.msra.mxu0 0
      %1318 = vmatprep.subr.bf16.mxu0 0
      %1319 = vmatpush2.bf16.xpose.msra.mxu0 0
      %1320 = vmatprep.subr.bf16.mxu0 0
      %1321 = vmatpush2.bf16.xpose.msra.mxu0 0
      %1322 = vmatprep.subr.bf16.mxu0 0
      %1323 = vmatpush2.bf16.xpose.msra.mxu0 0
      %1324 = vmatprep.subr.bf16.mxu0 0
      %1325 = vmatpush2.bf16.xpose.msra.mxu0 0
      %1326 = vmatprep.subr.bf16.mxu0 0
      %1327 = vmatpush2.bf16.xpose.msra.mxu0 0
      %1328 = vmatprep.subr.bf16.mxu0 0
      %1329 = vmatpush2.bf16.xpose.msra.mxu0 0
      %1330 = vmatprep.mubr.bf16.mxu0 0
      %1331 = vmatmul.mubr.bf16.gmra.mxu0 %v1284
      %v1332 = vpop.f32.mrf.mxu0
      %v1333 = vadd.f32 0.0, %v1332
      %v1334 = vpop.f32.mrf.mxu0
      %v1335 = vpop.f32.mrf.mxu0
      %v1336 = vpop.f32.mrf.mxu0
      %1337 = vdwg.mxu0
      %v1338 = vsel %vm931, %v1333, -inf
      %1339 = vmax.xlane.f32.xlu0 %v1338
      %v1340 = vpop.xlane.xlu0 %1339
      %v1341 = vsub.f32 %v1333, %v1340
      %v1342 = vmul.f32 %v1341, 1.442695
      %v1343 = vpow.pop %v1342
      %v1344 = vsel %vm931, %v1343, 0.0
      %1345 = vadd.xlane.f32.xlu0 %v1344
      %v1346 = vpop.xlane.xlu0 %1345
      %v1347 = vrcp.pop %v1346
      %v1348 = vmul.f32 %v1343, %v1347
      %v1349 = vpack.c.bf16 %v1348, %v1348
      %1350 = vrot.lane.b32.xlu0 %v871, 116
      %v1351 = vpop.permute.xlu0 %1350
      %1352 = vrot.lane.b32.xlu0 %v872, 116
      %v1353 = vpop.permute.xlu0 %1352
      %1354 = vrot.lane.b32.xlu0 %v873, 116
      %v1355 = vpop.permute.xlu0 %1354
      %1356 = vrot.lane.b32.xlu0 %v874, 116
      %v1357 = vpop.permute.xlu0 %1356
      %v1363 = vsel %vm931, %v1349, 0
      %1365 = vmatprep.subr.bf16.mxu0 0
      %1366 = vmatpush1.bf16.msra.mxu0 0
      %1367 = vmatprep.subr.bf16.mxu0 0
      %1368 = vmatpush1.bf16.msra.mxu0 0
      %1369 = vmatprep.subr.bf16.mxu0 0
      %1370 = vmatpush1.bf16.msra.mxu0 0
      %1371 = vmatprep.subr.bf16.mxu0 0
      %1372 = vmatpush1.bf16.msra.mxu0 0
      %1373 = vmatprep.subr.bf16.mxu0 0
      %1374 = vmatpush1.bf16.msra.mxu0 %v1357
      %1375 = vmatprep.subr.bf16.mxu0 0
      %1376 = vmatpush1.bf16.msra.mxu0 %v1355
      %1377 = vmatprep.subr.bf16.mxu0 0
      %1378 = vmatpush1.bf16.msra.mxu0 %v1353
      %1379 = vmatprep.subr.bf16.mxu0 0
      %1380 = vmatpush1.bf16.msra.mxu0 %v1351
      %1381 = vmatprep.subr.bf16.mxu0 0
      %1382 = vmatpush2.bf16.msra.mxu0 0
      %1383 = vmatprep.subr.bf16.mxu0 0
      %1384 = vmatpush2.bf16.msra.mxu0 0
      %1385 = vmatprep.subr.bf16.mxu0 0
      %1386 = vmatpush2.bf16.msra.mxu0 0
      %1387 = vmatprep.subr.bf16.mxu0 0
      %1388 = vmatpush2.bf16.msra.mxu0 0
      %1389 = vmatprep.subr.bf16.mxu0 0
      %1390 = vmatpush2.bf16.msra.mxu0 0
      %1391 = vmatprep.subr.bf16.mxu0 0
      %1392 = vmatpush2.bf16.msra.mxu0 0
      %1393 = vmatprep.subr.bf16.mxu0 0
      %1394 = vmatpush2.bf16.msra.mxu0 0
      %1395 = vmatprep.subr.bf16.mxu0 0
      %1396 = vmatpush2.bf16.msra.mxu0 0
      %1397 = vmatprep.mubr.bf16.mxu0 0
      %1398 = vmatmul.mubr.bf16.gmra.mxu0 %v1363
      %v1399 = vpop.f32.mrf.mxu0
      %v1400 = vadd.f32 0.0, %v1399
      %v1401 = vpop.f32.mrf.mxu0
      %v1402 = vpop.f32.mrf.mxu0
      %v1403 = vpop.f32.mrf.mxu0
      %1404 = vdwg.mxu0
      %1406 = vrot.lane.b32.xlu0 %v1400, 12
      %v1407 = vpop.permute.xlu0 %1406
      %vm1409 = vcmask 130144
      %1410 = vst.msk [vmem:[#allocation2] sm:$0xff] %vm1409, %v1407
      %v1411 = vld [vmem:[#allocation2] sm:$0xff]
      %v1412 = vpack.c.bf16 %v1411, %v1411
      %v1413 = vld [vmem:[%s10] sm:$0xf]
      %v1414 = vld [vmem:[%s10 + $0x4] sm:$0xf]
      %v1415 = vld [vmem:[%s11] sm:$0x1]
      %v1417 = vlaneseq
      %v1418 = vshrl.u32 %v1417, 7
      %v1419 = vsub.s32 0, %v1418
      %v1420 = vrot.slane %v1415, %v1419
      %v1424 = vunpack.c.l.b16 %v1413
      %v1425 = vunpack.c.l.b16 %v1414
      %v1426 = vpack.c.b16 %v1425, %v1424
      %vm1428 = vcmask 130048
      %v1430 = vsel %vm1428, %v1412, 0
      %1432 = vmatprep.subr.bf16.mxu0 0
      %1433 = vmatpush1.bf16.msra.mxu0 0
      %1434 = vmatprep.subr.bf16.mxu0 0
      %1435 = vmatpush1.bf16.msra.mxu0 0
      %1436 = vmatprep.subr.bf16.mxu0 0
      %1437 = vmatpush1.bf16.msra.mxu0 0
      %1438 = vmatprep.subr.bf16.mxu0 0
      %1439 = vmatpush1.bf16.msra.mxu0 0
      %1440 = vmatprep.subr.bf16.mxu0 0
      %1441 = vmatpush1.bf16.msra.mxu0 0
      %1442 = vmatprep.subr.bf16.mxu0 0
      %1443 = vmatpush1.bf16.msra.mxu0 0
      %1444 = vmatprep.subr.bf16.mxu0 0
      %1445 = vmatpush1.bf16.msra.mxu0 0
      %1446 = vmatprep.subr.bf16.mxu0 0
      %1447 = vmatpush1.bf16.msra.mxu0 %v1426
      %1448 = vmatprep.subr.bf16.mxu0 0
      %1449 = vmatpush2.bf16.msra.mxu0 0
      %1450 = vmatprep.subr.bf16.mxu0 0
      %1451 = vmatpush2.bf16.msra.mxu0 0
      %1452 = vmatprep.subr.bf16.mxu0 0
      %1453 = vmatpush2.bf16.msra.mxu0 0
      %1454 = vmatprep.subr.bf16.mxu0 0
      %1455 = vmatpush2.bf16.msra.mxu0 0
      %1456 = vmatprep.subr.bf16.mxu0 0
      %1457 = vmatpush2.bf16.msra.mxu0 0
      %1458 = vmatprep.subr.bf16.mxu0 0
      %1459 = vmatpush2.bf16.msra.mxu0 0
      %1460 = vmatprep.subr.bf16.mxu0 0
      %1461 = vmatpush2.bf16.msra.mxu0 0
      %1462 = vmatprep.subr.bf16.mxu0 0
      %1463 = vmatpush2.bf16.msra.mxu0 0
      %1464 = vmatprep.mubr.bf16.mxu0 0
      %1465 = vmatmul.mubr.bf16.gmra.mxu0 %v1430
      %v1466 = vpop.f32.mrf.mxu0
      %v1467 = vadd.f32 %v1420, %v1466
      %v1468 = vpop.f32.mrf.mxu0
      %v1469 = vpop.f32.mrf.mxu0
      %v1470 = vpop.f32.mrf.mxu0
      %1471 = vdwg.mxu0
      %v1472 = vadd.f32 %v563, %v1467
      %v1473 = vld [vmem:[%s12] sm:$0x1]
      %v1474 = vld [vmem:[%s13] sm:$0x1]
      %v1475 = vsel %vm622, %v1472, 0.0
      %1476 = vadd.xlane.f32.xlu0 %v1475
      %v1477 = vpop.xlane.xlu0 %1476
      %v1478 = vrcp.pop 32.0
      %v1479 = vmul.f32 %v1477, %v1478
      %v1480 = vsub.f32 %v1472, %v1479
      %v1481 = vmul.f32 %v1480, %v1480
      %v1482 = vsel %vm622, %v1481, 0.0
      %1483 = vadd.xlane.f32.xlu0 %v1482
      %v1484 = vpop.xlane.xlu0 %1483
      %v1485 = vmul.f32 %v1484, %v1478
      %v1486 = vadd.f32 %v1485, 1e-05
      %v1487 = vrsqrt.pop %v1486
      %v1488 = vmul.f32 %v1480, %v1487
      %v1490 = vlaneseq
      %v1491 = vshrl.u32 %v1490, 7
      %v1492 = vsub.s32 0, %v1491
      %v1493 = vrot.slane %v1473, %v1492
      %v1495 = vmul.f32 %v1488, %v1493
      %v1497 = vlaneseq
      %v1498 = vshrl.u32 %v1497, 7
      %v1499 = vsub.s32 0, %v1498
      %v1500 = vrot.slane %v1474, %v1499
      %v1502 = vadd.f32 %v1495, %v1500
      %1503 = vst.msk [vmem:[%s561] sm:$0xff] %vm622, %v1502
      %p1504 = scmp.lt.s32.totalorder %s29, 1
      %s1505 = scalar_select %p1504, %s29, 1
      %p1506 = scmp.lt.s32.totalorder %s30, 0
      %s1507 = scalar_select %p1506, %s30, 0
      %s1508 = sadd.s32 %s1507, %s1505
      %s1509 = smul.addr %s1508, 8
      %s1510 = scalar_lea.vmem %s14, %s1509
      // Predicated region
      $region77: #{two_way_attention_block.5} parent=75 // pred_check
        %p1511 = pneg %p375
      $region78: #{two_way_attention_block.5} parent=75 // pred_check_branch
        %1513 = sbr.rel (%p1511) target = $region80
      $region79: #{two_way_attention_block.5} parent=75 // pred_region
        _
      $region80: #{two_way_attention_block.5} parent=75 // pred_fallthru
        _
    $region76: #{two_way_attention_block.5} parent=5 // pred_fallthru
      _
    %p1514 = scmp.le.s32.totalorder 2, %s20
    // Predicated region
    $region81: #{two_way_attention_block.5} parent=5 // pred_check
      %p1515 = pneg %p1514
    $region82: #{two_way_attention_block.5} parent=5 // pred_check_branch
      %1517 = sbr.rel (%p1515) target = $region84
    $region83: #{two_way_attention_block.5} parent=5 // pred_region
      %s1518 = ssub.s32 %s20, 2
      // Predicated region
      $region85: #{two_way_attention_block.5} parent=83 // pred_check
        %p1519 = pneg %p381
      $region86: #{two_way_attention_block.5} parent=83 // pred_check_branch
        %1521 = sbr.rel (%p1519) target = $region88
      $region87: #{two_way_attention_block.5} parent=83 // pred_region
        %p1522 = scmp.lt.s32.totalorder %s31, 1
        %s1523 = scalar_select %p1522, %s31, 1
        %p1524 = scmp.lt.s32.totalorder %s32, 0
        %s1525 = scalar_select %p1524, %s32, 0
        %s1526 = sadd.s32 %s1525, %s1523
        %s1527 = smul.addr %s1526, 8
        %s1528 = scalar_lea.vmem %s14, %s1527
      $region88: #{two_way_attention_block.5} parent=83 // pred_fallthru
        _
    $region84: #{two_way_attention_block.5} parent=5 // pred_fallthru
      _
  $region6: #{two_way_attention_block.5} parent=0 // loop_footer
    %s24 = sadd.s32 1, %s20
  $region7: #{two_way_attention_block.5} parent=0 // loop_footer_branch
    %19 = sbr.rel target = $region3
  $region8: #{two_way_attention_block.5} parent=0 // loop_exit
    _

// kernel: two_way_attention_block.7
$region0: #{two_way_attention_block.7}
  #allocation0 [shape = 'u32[]', space=smem, size = 0x4, offset = 0x4, fixed_abs, tag = 'smem constant byte address 0x4 - core index']
  #allocation1 [shape = 'u32[144,128]{1,0:T(1,128)}', space=vmem, size = 0x12000, scoped, tag = 'internal scratch']
  #allocation2 [shape = 'f32[64,16]{1,0:T(8,128)}', space=vmem, size = 0x8000, scoped, tag = 'scratch operand']
  %s0 = inlined_call_operand.vmem [shape: f32[2,64,32], index: 0, kind: input, shape index: {}]
  %s1 = inlined_call_operand.vmem [shape: f32[2,64,32], index: 1, kind: input, shape index: {}]
  %s2 = inlined_call_operand.vmem [shape: f32[2,8,32], index: 2, kind: input, shape index: {}]
  %s3 = inlined_call_operand.vmem [shape: f32[2,8,32], index: 3, kind: input, shape index: {}]
  %s4 = inlined_call_operand.vmem [shape: bf16[32,16], index: 4, kind: input, shape index: {}]
  %s5 = inlined_call_operand.vmem [shape: f32[1,16], index: 5, kind: input, shape index: {}]
  %s6 = inlined_call_operand.vmem [shape: bf16[32,16], index: 6, kind: input, shape index: {}]
  %s7 = inlined_call_operand.vmem [shape: f32[1,16], index: 7, kind: input, shape index: {}]
  %s8 = inlined_call_operand.vmem [shape: bf16[32,16], index: 8, kind: input, shape index: {}]
  %s9 = inlined_call_operand.vmem [shape: f32[1,16], index: 9, kind: input, shape index: {}]
  %s10 = inlined_call_operand.vmem [shape: bf16[16,32], index: 10, kind: input, shape index: {}]
  %s11 = inlined_call_operand.vmem [shape: f32[1,32], index: 11, kind: input, shape index: {}]
  %s12 = inlined_call_operand.vmem [shape: f32[1,32], index: 12, kind: input, shape index: {}]
  %s13 = inlined_call_operand.vmem [shape: f32[1,32], index: 13, kind: input, shape index: {}]
  %s14 = inlined_call_operand.vmem [shape: f32[2,64,32], index: 14, kind: output, shape index: {}]
  %s15 = sld [smem:[#allocation0]]
  $region89: #{two_way_attention_block.7} parent=0
    _
  %s17 = ssub.s32 1, %s15
  %s18 = scalar_select 0, %s17, %s15
  loop: start=0, step=1, limit=4
  $region2: #{two_way_attention_block.7} parent=0 // loop_pre_header
    _
  $region3: #{two_way_attention_block.7} parent=0 // loop_header
    %s20 = sphi 0, %s24
    %p21 = scmp.ge.s32.totalorder %s20, 4
    %s27 = sphi 0, %s39
    %s28 = sphi 0, %s35
    %s29 = sphi 0, %s27
    %s30 = sphi 0, %s28
    %s31 = sphi 0, %s29
    %s32 = sphi 0, %s30
    %s44 = sphi 0, %s46
    %s47 = sphi 0, %s44
    %s48 = sphi 0, %s47
    %s64 = sphi 0, %s48
    %s72 = sphi 0, %s74
    %s75 = sphi 0, %s72
    %s76 = sphi 0, %s75
    %s92 = sphi 0, %s76
    %s98 = sphi 0, %s100
    %s101 = sphi 0, %s98
    %s102 = sphi 0, %s101
    %s118 = sphi 0, %s102
    %s124 = sphi 0, %s126
    %s127 = sphi 0, %s124
    %s128 = sphi 0, %s127
    %s144 = sphi 0, %s128
    %s148 = sphi 0, %s148
    %s150 = sphi 0, %s148
    %s151 = sphi 0, %s150
    %s165 = sphi 0, %s151
    %s169 = sphi 0, %s169
    %s171 = sphi 0, %s169
    %s172 = sphi 0, %s171
    %s186 = sphi 0, %s172
    %s190 = sphi 0, %s190
    %s192 = sphi 0, %s190
    %s193 = sphi 0, %s192
    %s207 = sphi 0, %s193
    %s211 = sphi 0, %s211
    %s213 = sphi 0, %s211
    %s214 = sphi 0, %s213
    %s228 = sphi 0, %s214
    %s232 = sphi 0, %s232
    %s234 = sphi 0, %s232
    %s235 = sphi 0, %s234
    %s249 = sphi 0, %s235
    %s253 = sphi 0, %s253
    %s255 = sphi 0, %s253
    %s256 = sphi 0, %s255
    %s270 = sphi 0, %s256
    %s274 = sphi 0, %s274
    %s276 = sphi 0, %s274
    %s277 = sphi 0, %s276
    %s291 = sphi 0, %s277
    %s295 = sphi 0, %s295
    %s297 = sphi 0, %s295
    %s298 = sphi 0, %s297
    %s312 = sphi 0, %s298
    %s316 = sphi 0, %s316
    %s318 = sphi 0, %s316
    %s319 = sphi 0, %s318
    %s333 = sphi 0, %s319
    %s337 = sphi 0, %s337
    %s339 = sphi 0, %s337
    %s340 = sphi 0, %s339
    %s354 = sphi 0, %s340
    %s362 = sphi 0, %s364
    %s365 = sphi 0, %s362
    %s366 = sphi 0, %s365
    %s382 = sphi 0, %s366
  $region4: #{two_way_attention_block.7} parent=0 // loop_header_branch
    %23 = sbr.rel (%p21) target = $region8
  $region5: #{two_way_attention_block.7} parent=0 // loop_body
    %s25 = ssub.s32 %s20, 1
    %s26 = ssub.s32 %s20, 2
    %s33 = sadd.s32 1, %s28
    %p34 = scmp.ge.s32.totalorder %s33, 1
    %s35 = scalar_select %p34, 0, %s33
    %s36 = sadd.s32 1, %s27
    %s37 = scalar_select %p34, %s36, %s27
    %p38 = scmp.ge.s32.totalorder %s37, 2
    %s39 = scalar_select %p38, 0, %s37
    %s40 = ssub.s32 %s27, %s39
    %s41 = ssub.s32 %s28, %s35
    %s42 = sor.u32 %s40, %s41
    %p43 = scmp.eq.s32.totalorder %s42, 0
    %s45 = sadd.s32 %s44, 1
    %s46 = scalar_select %p43, %s44, %s45
    %p49 = pneg %p43
    %p50 = scmp.eq.s32.totalorder %s20, 1
    %p51 = por %p49, %p50
    %p52 = scmp.ne.s32.totalorder %s44, %s47
    %p53 = scmp.eq.s32.totalorder %s20, 0
    %p54 = por %p52, %p53
    %p55 = scmp.ne.s32.totalorder %s44, %s47
    %p56 = scmp.eq.s32.totalorder %s25, 1
    %p57 = por %p55, %p56
    %p58 = scmp.ne.s32.totalorder %s47, %s48
    %p59 = scmp.eq.s32.totalorder %s25, 0
    %p60 = por %p58, %p59
    %p61 = scmp.ne.s32.totalorder %s47, %s48
    %p62 = scmp.eq.s32.totalorder %s26, 1
    %p63 = por %p61, %p62
    %p65 = scmp.ne.s32.totalorder %s48, %s64
    %p66 = scmp.eq.s32.totalorder %s26, 0
    %p67 = por %p65, %p66
    %s68 = ssub.s32 %s27, %s39
    %s69 = ssub.s32 %s28, %s35
    %s70 = sor.u32 %s68, %s69
    %p71 = scmp.eq.s32.totalorder %s70, 0
    %s73 = sadd.s32 %s72, 1
    %s74 = scalar_select %p71, %s72, %s73
    %p77 = pneg %p71
    %p78 = scmp.eq.s32.totalorder %s20, 1
    %p79 = por %p77, %p78
    %p80 = scmp.ne.s32.totalorder %s72, %s75
    %p81 = scmp.eq.s32.totalorder %s20, 0
    %p82 = por %p80, %p81
    %p83 = scmp.ne.s32.totalorder %s72, %s75
    %p84 = scmp.eq.s32.totalorder %s25, 1
    %p85 = por %p83, %p84
    %p86 = scmp.ne.s32.totalorder %s75, %s76
    %p87 = scmp.eq.s32.totalorder %s25, 0
    %p88 = por %p86, %p87
    %p89 = scmp.ne.s32.totalorder %s75, %s76
    %p90 = scmp.eq.s32.totalorder %s26, 1
    %p91 = por %p89, %p90
    %p93 = scmp.ne.s32.totalorder %s76, %s92
    %p94 = scmp.eq.s32.totalorder %s26, 0
    %p95 = por %p93, %p94
    %s96 = ssub.s32 %s27, %s39
    %p97 = scmp.eq.s32.totalorder %s96, 0
    %s99 = sadd.s32 %s98, 1
    %s100 = scalar_select %p97, %s98, %s99
    %p103 = pneg %p97
    %p104 = scmp.eq.s32.totalorder %s20, 1
    %p105 = por %p103, %p104
    %p106 = scmp.ne.s32.totalorder %s98, %s101
    %p107 = scmp.eq.s32.totalorder %s20, 0
    %p108 = por %p106, %p107
    %p109 = scmp.ne.s32.totalorder %s98, %s101
    %p110 = scmp.eq.s32.totalorder %s25, 1
    %p111 = por %p109, %p110
    %p112 = scmp.ne.s32.totalorder %s101, %s102
    %p113 = scmp.eq.s32.totalorder %s25, 0
    %p114 = por %p112, %p113
    %p115 = scmp.ne.s32.totalorder %s101, %s102
    %p116 = scmp.eq.s32.totalorder %s26, 1
    %p117 = por %p115, %p116
    %p119 = scmp.ne.s32.totalorder %s102, %s118
    %p120 = scmp.eq.s32.totalorder %s26, 0
    %p121 = por %p119, %p120
    %s122 = ssub.s32 %s27, %s39
    %p123 = scmp.eq.s32.totalorder %s122, 0
    %s125 = sadd.s32 %s124, 1
    %s126 = scalar_select %p123, %s124, %s125
    %p129 = pneg %p123
    %p130 = scmp.eq.s32.totalorder %s20, 1
    %p131 = por %p129, %p130
    %p132 = scmp.ne.s32.totalorder %s124, %s127
    %p133 = scmp.eq.s32.totalorder %s20, 0
    %p134 = por %p132, %p133
    %p135 = scmp.ne.s32.totalorder %s124, %s127
    %p136 = scmp.eq.s32.totalorder %s25, 1
    %p137 = por %p135, %p136
    %p138 = scmp.ne.s32.totalorder %s127, %s128
    %p139 = scmp.eq.s32.totalorder %s25, 0
    %p140 = por %p138, %p139
    %p141 = scmp.ne.s32.totalorder %s127, %s128
    %p142 = scmp.eq.s32.totalorder %s26, 1
    %p143 = por %p141, %p142
    %p145 = scmp.ne.s32.totalorder %s128, %s144
    %p146 = scmp.eq.s32.totalorder %s26, 0
    %p147 = por %p145, %p146
    %s149 = sadd.s32 %s148, 1
    %p152 = scmp.eq.s32.totalorder %s20, 1
    %p153 = scmp.ne.s32.totalorder %s148, %s150
    %p154 = scmp.eq.s32.totalorder %s20, 0
    %p155 = por %p153, %p154
    %p156 = scmp.ne.s32.totalorder %s148, %s150
    %p157 = scmp.eq.s32.totalorder %s25, 1
    %p158 = por %p156, %p157
    %p159 = scmp.ne.s32.totalorder %s150, %s151
    %p160 = scmp.eq.s32.totalorder %s25, 0
    %p161 = por %p159, %p160
    %p162 = scmp.ne.s32.totalorder %s150, %s151
    %p163 = scmp.eq.s32.totalorder %s26, 1
    %p164 = por %p162, %p163
    %p166 = scmp.ne.s32.totalorder %s151, %s165
    %p167 = scmp.eq.s32.totalorder %s26, 0
    %p168 = por %p166, %p167
    %s170 = sadd.s32 %s169, 1
    %p173 = scmp.eq.s32.totalorder %s20, 1
    %p174 = scmp.ne.s32.totalorder %s169, %s171
    %p175 = scmp.eq.s32.totalorder %s20, 0
    %p176 = por %p174, %p175
    %p177 = scmp.ne.s32.totalorder %s169, %s171
    %p178 = scmp.eq.s32.totalorder %s25, 1
    %p179 = por %p177, %p178
    %p180 = scmp.ne.s32.totalorder %s171, %s172
    %p181 = scmp.eq.s32.totalorder %s25, 0
    %p182 = por %p180, %p181
    %p183 = scmp.ne.s32.totalorder %s171, %s172
    %p184 = scmp.eq.s32.totalorder %s26, 1
    %p185 = por %p183, %p184
    %p187 = scmp.ne.s32.totalorder %s172, %s186
    %p188 = scmp.eq.s32.totalorder %s26, 0
    %p189 = por %p187, %p188
    %s191 = sadd.s32 %s190, 1
    %p194 = scmp.eq.s32.totalorder %s20, 1
    %p195 = scmp.ne.s32.totalorder %s190, %s192
    %p196 = scmp.eq.s32.totalorder %s20, 0
    %p197 = por %p195, %p196
    %p198 = scmp.ne.s32.totalorder %s190, %s192
    %p199 = scmp.eq.s32.totalorder %s25, 1
    %p200 = por %p198, %p199
    %p201 = scmp.ne.s32.totalorder %s192, %s193
    %p202 = scmp.eq.s32.totalorder %s25, 0
    %p203 = por %p201, %p202
    %p204 = scmp.ne.s32.totalorder %s192, %s193
    %p205 = scmp.eq.s32.totalorder %s26, 1
    %p206 = por %p204, %p205
    %p208 = scmp.ne.s32.totalorder %s193, %s207
    %p209 = scmp.eq.s32.totalorder %s26, 0
    %p210 = por %p208, %p209
    %s212 = sadd.s32 %s211, 1
    %p215 = scmp.eq.s32.totalorder %s20, 1
    %p216 = scmp.ne.s32.totalorder %s211, %s213
    %p217 = scmp.eq.s32.totalorder %s20, 0
    %p218 = por %p216, %p217
    %p219 = scmp.ne.s32.totalorder %s211, %s213
    %p220 = scmp.eq.s32.totalorder %s25, 1
    %p221 = por %p219, %p220
    %p222 = scmp.ne.s32.totalorder %s213, %s214
    %p223 = scmp.eq.s32.totalorder %s25, 0
    %p224 = por %p222, %p223
    %p225 = scmp.ne.s32.totalorder %s213, %s214
    %p226 = scmp.eq.s32.totalorder %s26, 1
    %p227 = por %p225, %p226
    %p229 = scmp.ne.s32.totalorder %s214, %s228
    %p230 = scmp.eq.s32.totalorder %s26, 0
    %p231 = por %p229, %p230
    %s233 = sadd.s32 %s232, 1
    %p236 = scmp.eq.s32.totalorder %s20, 1
    %p237 = scmp.ne.s32.totalorder %s232, %s234
    %p238 = scmp.eq.s32.totalorder %s20, 0
    %p239 = por %p237, %p238
    %p240 = scmp.ne.s32.totalorder %s232, %s234
    %p241 = scmp.eq.s32.totalorder %s25, 1
    %p242 = por %p240, %p241
    %p243 = scmp.ne.s32.totalorder %s234, %s235
    %p244 = scmp.eq.s32.totalorder %s25, 0
    %p245 = por %p243, %p244
    %p246 = scmp.ne.s32.totalorder %s234, %s235
    %p247 = scmp.eq.s32.totalorder %s26, 1
    %p248 = por %p246, %p247
    %p250 = scmp.ne.s32.totalorder %s235, %s249
    %p251 = scmp.eq.s32.totalorder %s26, 0
    %p252 = por %p250, %p251
    %s254 = sadd.s32 %s253, 1
    %p257 = scmp.eq.s32.totalorder %s20, 1
    %p258 = scmp.ne.s32.totalorder %s253, %s255
    %p259 = scmp.eq.s32.totalorder %s20, 0
    %p260 = por %p258, %p259
    %p261 = scmp.ne.s32.totalorder %s253, %s255
    %p262 = scmp.eq.s32.totalorder %s25, 1
    %p263 = por %p261, %p262
    %p264 = scmp.ne.s32.totalorder %s255, %s256
    %p265 = scmp.eq.s32.totalorder %s25, 0
    %p266 = por %p264, %p265
    %p267 = scmp.ne.s32.totalorder %s255, %s256
    %p268 = scmp.eq.s32.totalorder %s26, 1
    %p269 = por %p267, %p268
    %p271 = scmp.ne.s32.totalorder %s256, %s270
    %p272 = scmp.eq.s32.totalorder %s26, 0
    %p273 = por %p271, %p272
    %s275 = sadd.s32 %s274, 1
    %p278 = scmp.eq.s32.totalorder %s20, 1
    %p279 = scmp.ne.s32.totalorder %s274, %s276
    %p280 = scmp.eq.s32.totalorder %s20, 0
    %p281 = por %p279, %p280
    %p282 = scmp.ne.s32.totalorder %s274, %s276
    %p283 = scmp.eq.s32.totalorder %s25, 1
    %p284 = por %p282, %p283
    %p285 = scmp.ne.s32.totalorder %s276, %s277
    %p286 = scmp.eq.s32.totalorder %s25, 0
    %p287 = por %p285, %p286
    %p288 = scmp.ne.s32.totalorder %s276, %s277
    %p289 = scmp.eq.s32.totalorder %s26, 1
    %p290 = por %p288, %p289
    %p292 = scmp.ne.s32.totalorder %s277, %s291
    %p293 = scmp.eq.s32.totalorder %s26, 0
    %p294 = por %p292, %p293
    %s296 = sadd.s32 %s295, 1
    %p299 = scmp.eq.s32.totalorder %s20, 1
    %p300 = scmp.ne.s32.totalorder %s295, %s297
    %p301 = scmp.eq.s32.totalorder %s20, 0
    %p302 = por %p300, %p301
    %p303 = scmp.ne.s32.totalorder %s295, %s297
    %p304 = scmp.eq.s32.totalorder %s25, 1
    %p305 = por %p303, %p304
    %p306 = scmp.ne.s32.totalorder %s297, %s298
    %p307 = scmp.eq.s32.totalorder %s25, 0
    %p308 = por %p306, %p307
    %p309 = scmp.ne.s32.totalorder %s297, %s298
    %p310 = scmp.eq.s32.totalorder %s26, 1
    %p311 = por %p309, %p310
    %p313 = scmp.ne.s32.totalorder %s298, %s312
    %p314 = scmp.eq.s32.totalorder %s26, 0
    %p315 = por %p313, %p314
    %s317 = sadd.s32 %s316, 1
    %p320 = scmp.eq.s32.totalorder %s20, 1
    %p321 = scmp.ne.s32.totalorder %s316, %s318
    %p322 = scmp.eq.s32.totalorder %s20, 0
    %p323 = por %p321, %p322
    %p324 = scmp.ne.s32.totalorder %s316, %s318
    %p325 = scmp.eq.s32.totalorder %s25, 1
    %p326 = por %p324, %p325
    %p327 = scmp.ne.s32.totalorder %s318, %s319
    %p328 = scmp.eq.s32.totalorder %s25, 0
    %p329 = por %p327, %p328
    %p330 = scmp.ne.s32.totalorder %s318, %s319
    %p331 = scmp.eq.s32.totalorder %s26, 1
    %p332 = por %p330, %p331
    %p334 = scmp.ne.s32.totalorder %s319, %s333
    %p335 = scmp.eq.s32.totalorder %s26, 0
    %p336 = por %p334, %p335
    %s338 = sadd.s32 %s337, 1
    %p341 = scmp.eq.s32.totalorder %s20, 1
    %p342 = scmp.ne.s32.totalorder %s337, %s339
    %p343 = scmp.eq.s32.totalorder %s20, 0
    %p344 = por %p342, %p343
    %p345 = scmp.ne.s32.totalorder %s337, %s339
    %p346 = scmp.eq.s32.totalorder %s25, 1
    %p347 = por %p345, %p346
    %p348 = scmp.ne.s32.totalorder %s339, %s340
    %p349 = scmp.eq.s32.totalorder %s25, 0
    %p350 = por %p348, %p349
    %p351 = scmp.ne.s32.totalorder %s339, %s340
    %p352 = scmp.eq.s32.totalorder %s26, 1
    %p353 = por %p351, %p352
    %p355 = scmp.ne.s32.totalorder %s340, %s354
    %p356 = scmp.eq.s32.totalorder %s26, 0
    %p357 = por %p355, %p356
    %s358 = ssub.s32 %s27, %s39
    %s359 = ssub.s32 %s28, %s35
    %s360 = sor.u32 %s358, %s359
    %p361 = scmp.eq.s32.totalorder %s360, 0
    %s363 = sadd.s32 %s362, 1
    %s364 = scalar_select %p361, %s362, %s363
    %p367 = pneg %p361
    %p368 = scmp.eq.s32.totalorder %s20, 1
    %p369 = por %p367, %p368
    %p370 = scmp.ne.s32.totalorder %s362, %s365
    %p371 = scmp.eq.s32.totalorder %s20, 0
    %p372 = por %p370, %p371
    %p373 = scmp.ne.s32.totalorder %s362, %s365
    %p374 = scmp.eq.s32.totalorder %s25, 1
    %p375 = por %p373, %p374
    %p376 = scmp.ne.s32.totalorder %s365, %s366
    %p377 = scmp.eq.s32.totalorder %s25, 0
    %p378 = por %p376, %p377
    %p379 = scmp.ne.s32.totalorder %s365, %s366
    %p380 = scmp.eq.s32.totalorder %s26, 1
    %p381 = por %p379, %p380
    %p383 = scmp.ne.s32.totalorder %s366, %s382
    %p384 = scmp.eq.s32.totalorder %s26, 0
    %p385 = por %p383, %p384
    %p386 = scmp.le.s32.totalorder 1, %s20
    %p387 = scmp.lt.s32.totalorder %s20, 3
    %p388 = pnand %p386, %p387
    %p389 = pneg %p388
    // Predicated region
    $region9: #{two_way_attention_block.7} parent=5 // pred_check
      _
    $region10: #{two_way_attention_block.7} parent=5 // pred_check_branch
      %391 = sbr.rel (%p388) target = $region12
    $region11: #{two_way_attention_block.7} parent=5 // pred_region
      %s392 = ssub.s32 %s20, 1
      // Predicated region
      $region13: #{two_way_attention_block.7} parent=11 // pred_check
        %p393 = pneg %p161
      $region14: #{two_way_attention_block.7} parent=11 // pred_check_branch
        %395 = sbr.rel (%p393) target = $region16
      $region15: #{two_way_attention_block.7} parent=11 // pred_region
        _
      $region16: #{two_way_attention_block.7} parent=11 // pred_fallthru
        _
      // Predicated region
      $region17: #{two_way_attention_block.7} parent=11 // pred_check
        %p396 = pneg %p182
      $region18: #{two_way_attention_block.7} parent=11 // pred_check_branch
        %398 = sbr.rel (%p396) target = $region20
      $region19: #{two_way_attention_block.7} parent=11 // pred_region
        _
      $region20: #{two_way_attention_block.7} parent=11 // pred_fallthru
        _
      // Predicated region
      $region21: #{two_way_attention_block.7} parent=11 // pred_check
        %p399 = pneg %p203
      $region22: #{two_way_attention_block.7} parent=11 // pred_check_branch
        %401 = sbr.rel (%p399) target = $region24
      $region23: #{two_way_attention_block.7} parent=11 // pred_region
        _
      $region24: #{two_way_attention_block.7} parent=11 // pred_fallthru
        _
      // Predicated region
      $region25: #{two_way_attention_block.7} parent=11 // pred_check
        %p402 = pneg %p224
      $region26: #{two_way_attention_block.7} parent=11 // pred_check_branch
        %404 = sbr.rel (%p402) target = $region28
      $region27: #{two_way_attention_block.7} parent=11 // pred_region
        _
      $region28: #{two_way_attention_block.7} parent=11 // pred_fallthru
        _
      // Predicated region
      $region29: #{two_way_attention_block.7} parent=11 // pred_check
        %p405 = pneg %p245
      $region30: #{two_way_attention_block.7} parent=11 // pred_check_branch
        %407 = sbr.rel (%p405) target = $region32
      $region31: #{two_way_attention_block.7} parent=11 // pred_region
        _
      $region32: #{two_way_attention_block.7} parent=11 // pred_fallthru
        _
      // Predicated region
      $region33: #{two_way_attention_block.7} parent=11 // pred_check
        %p408 = pneg %p266
      $region34: #{two_way_attention_block.7} parent=11 // pred_check_branch
        %410 = sbr.rel (%p408) target = $region36
      $region35: #{two_way_attention_block.7} parent=11 // pred_region
        _
      $region36: #{two_way_attention_block.7} parent=11 // pred_fallthru
        _
      // Predicated region
      $region37: #{two_way_attention_block.7} parent=11 // pred_check
        %p411 = pneg %p287
      $region38: #{two_way_attention_block.7} parent=11 // pred_check_branch
        %413 = sbr.rel (%p411) target = $region40
      $region39: #{two_way_attention_block.7} parent=11 // pred_region
        _
      $region40: #{two_way_attention_block.7} parent=11 // pred_fallthru
        _
      // Predicated region
      $region41: #{two_way_attention_block.7} parent=11 // pred_check
        %p414 = pneg %p308
      $region42: #{two_way_attention_block.7} parent=11 // pred_check_branch
        %416 = sbr.rel (%p414) target = $region44
      $region43: #{two_way_attention_block.7} parent=11 // pred_region
        _
      $region44: #{two_way_attention_block.7} parent=11 // pred_fallthru
        _
      // Predicated region
      $region45: #{two_way_attention_block.7} parent=11 // pred_check
        %p417 = pneg %p329
      $region46: #{two_way_attention_block.7} parent=11 // pred_check_branch
        %419 = sbr.rel (%p417) target = $region48
      $region47: #{two_way_attention_block.7} parent=11 // pred_region
        _
      $region48: #{two_way_attention_block.7} parent=11 // pred_fallthru
        _
      // Predicated region
      $region49: #{two_way_attention_block.7} parent=11 // pred_check
        %p420 = pneg %p350
      $region50: #{two_way_attention_block.7} parent=11 // pred_check_branch
        %422 = sbr.rel (%p420) target = $region52
      $region51: #{two_way_attention_block.7} parent=11 // pred_region
        _
      $region52: #{two_way_attention_block.7} parent=11 // pred_fallthru
        _
    $region12: #{two_way_attention_block.7} parent=5 // pred_fallthru
      _
    %p423 = scmp.lt.s32.totalorder %s20, 2
    // Predicated region
    $region53: #{two_way_attention_block.7} parent=5 // pred_check
      %p424 = pneg %p423
    $region54: #{two_way_attention_block.7} parent=5 // pred_check_branch
      %426 = sbr.rel (%p424) target = $region56
    $region55: #{two_way_attention_block.7} parent=5 // pred_region
      // Predicated region
      $region57: #{two_way_attention_block.7} parent=55 // pred_check
        %p427 = pneg %p54
      $region58: #{two_way_attention_block.7} parent=55 // pred_check_branch
        %429 = sbr.rel (%p427) target = $region60
      $region59: #{two_way_attention_block.7} parent=55 // pred_region
        %s430 = smul.u32 8, %s28
        %p431 = scmp.lt.s32.totalorder %s27, 1
        %s432 = scalar_select %p431, %s27, 1
        %p433 = scmp.lt.s32.totalorder %s430, 7
        %s434 = scalar_select %p433, %s430, 7
        %s435 = smul.addr %s432, 8
        %s436 = sadd.s32 %s434, %s435
        %s437 = smul.addr %s436, 8
        %s438 = scalar_lea.vmem %s0, %s437
        %s439 = smul.u32 8, %s28
      $region60: #{two_way_attention_block.7} parent=55 // pred_fallthru
        _
      // Predicated region
      $region61: #{two_way_attention_block.7} parent=55 // pred_check
        %p440 = pneg %p82
      $region62: #{two_way_attention_block.7} parent=55 // pred_check_branch
        %442 = sbr.rel (%p440) target = $region64
      $region63: #{two_way_attention_block.7} parent=55 // pred_region
        %s443 = smul.u32 8, %s28
        %p444 = scmp.lt.s32.totalorder %s27, 1
        %s445 = scalar_select %p444, %s27, 1
        %p446 = scmp.lt.s32.totalorder %s443, 7
        %s447 = scalar_select %p446, %s443, 7
        %s448 = smul.addr %s445, 8
        %s449 = sadd.s32 %s447, %s448
        %s450 = smul.addr %s449, 8
        %s451 = scalar_lea.vmem %s1, %s450
        %s452 = smul.u32 8, %s28
      $region64: #{two_way_attention_block.7} parent=55 // pred_fallthru
        _
      // Predicated region
      $region65: #{two_way_attention_block.7} parent=55 // pred_check
        %p453 = pneg %p108
      $region66: #{two_way_attention_block.7} parent=55 // pred_check_branch
        %455 = sbr.rel (%p453) target = $region68
      $region67: #{two_way_attention_block.7} parent=55 // pred_region
        %p456 = scmp.lt.s32.totalorder %s27, 1
        %s457 = scalar_select %p456, %s27, 1
        %s458 = smul.addr %s457, 8
        %s459 = scalar_lea.vmem %s2, %s458
      $region68: #{two_way_attention_block.7} parent=55 // pred_fallthru
        _
      // Predicated region
      $region69: #{two_way_attention_block.7} parent=55 // pred_check
        %p460 = pneg %p134
      $region70: #{two_way_attention_block.7} parent=55 // pred_check_branch
        %462 = sbr.rel (%p460) target = $region72
      $region71: #{two_way_attention_block.7} parent=55 // pred_region
        %p463 = scmp.lt.s32.totalorder %s27, 1
        %s464 = scalar_select %p463, %s27, 1
        %s465 = smul.addr %s464, 8
        %s466 = scalar_lea.vmem %s3, %s465
      $region72: #{two_way_attention_block.7} parent=55 // pred_fallthru
        _
    $region56: #{two_way_attention_block.7} parent=5 // pred_fallthru
      _
    %p467 = scmp.le.s32.totalorder 1, %s20
    %p468 = scmp.lt.s32.totalorder %s20, 3
    %p469 = pnand %p467, %p468
    %p470 = pneg %p469
    // Predicated region
    $region73: #{two_way_attention_block.7} parent=5 // pred_check
      _
    $region74: #{two_way_attention_block.7} parent=5 // pred_check_branch
      %472 = sbr.rel (%p469) target = $region76
    $region75: #{two_way_attention_block.7} parent=5 // pred_region
      %s473 = ssub.s32 %s20, 1
      %s474 = smul.u32 8, %s30
      %p475 = scmp.lt.s32.totalorder %s29, 1
      %s476 = scalar_select %p475, %s29, 1
      %p477 = scmp.lt.s32.totalorder %s474, 7
      %s478 = scalar_select %p477, %s474, 7
      %s479 = smul.addr %s476, 8
      %s480 = sadd.s32 %s478, %s479
      %s481 = smul.addr %s480, 8
      %s482 = scalar_lea.vmem %s0, %s481
      %p483 = pneg %p60
      %p484 = pneg %p57
      %s485 = smul.u32 8, %s30
      %p486 = scmp.lt.s32.totalorder %s29, 1
      %s487 = scalar_select %p486, %s29, 1
      %p488 = scmp.lt.s32.totalorder %s485, 7
      %s489 = scalar_select %p488, %s485, 7
      %s490 = smul.addr %s487, 8
      %s491 = sadd.s32 %s489, %s490
      %s492 = smul.addr %s491, 8
      %s493 = scalar_lea.vmem %s1, %s492
      %p494 = pneg %p88
      %p495 = pneg %p85
      %p496 = scmp.lt.s32.totalorder %s29, 1
      %s497 = scalar_select %p496, %s29, 1
      %s498 = smul.addr %s497, 8
      %s499 = scalar_lea.vmem %s2, %s498
      %p500 = pneg %p114
      %p501 = pneg %p111
      %p502 = scmp.lt.s32.totalorder %s29, 1
      %s503 = scalar_select %p502, %s29, 1
      %s504 = smul.addr %s503, 8
      %s505 = scalar_lea.vmem %s3, %s504
      %p506 = pneg %p140
      %p507 = pneg %p137
      %p508 = pneg %p161
      %p509 = pneg %p158
      %p510 = pneg %p182
      %p511 = pneg %p179
      %p512 = pneg %p203
      %p513 = pneg %p200
      %p514 = pneg %p224
      %p515 = pneg %p221
      %p516 = pneg %p245
      %p517 = pneg %p242
      %p518 = pneg %p266
      %p519 = pneg %p263
      %p520 = pneg %p287
      %p521 = pneg %p284
      %p522 = pneg %p308
      %p523 = pneg %p305
      %p524 = pneg %p329
      %p525 = pneg %p326
      %p526 = pneg %p350
      %p527 = pneg %p347
      %p528 = pneg %p378
      %p529 = pneg %p375
      %s530 = smul.u32 8, %s30
      %p531 = scmp.lt.s32.totalorder %s29, 1
      %s532 = scalar_select %p531, %s29, 1
      %p533 = scmp.lt.s32.totalorder %s530, 7
      %s534 = scalar_select %p533, %s530, 7
      %s535 = smul.addr %s532, 8
      %s536 = sadd.s32 %s534, %s535
      %s537 = smul.addr %s536, 8
      %s538 = scalar_lea.vmem %s14, %s537
      %s539 = smul.u32 8, %s30
      %p540 = scmp.lt.s32.totalorder %s29, 1
      %s541 = scalar_select %p540, %s29, 1
      %p542 = scmp.lt.s32.totalorder %s539, 7
      %s543 = scalar_select %p542, %s539, 7
      %s544 = smul.addr %s541, 8
      %s545 = sadd.s32 %s543, %s544
      %s546 = smul.addr %s545, 8
      %s547 = scalar_lea.vmem %s0, %s546
      %s548 = smul.u32 8, %s30
      %s549 = smul.u32 8, %s30
      %p550 = scmp.lt.s32.totalorder %s29, 1
      %s551 = scalar_select %p550, %s29, 1
      %p552 = scmp.lt.s32.totalorder %s549, 7
      %s553 = scalar_select %p552, %s549, 7
      %s554 = smul.addr %s551, 8
      %s555 = sadd.s32 %s553, %s554
      %s556 = smul.addr %s555, 8
      %s557 = scalar_lea.vmem %s1, %s556
      %s558 = smul.u32 8, %s30
      %p559 = scmp.lt.s32.totalorder %s29, 1
      %s560 = scalar_select %p559, %s29, 1
      %s561 = smul.addr %s560, 8
      %s562 = scalar_lea.vmem %s2, %s561
      %p563 = scmp.lt.s32.totalorder %s29, 1
      %s564 = scalar_select %p563, %s29, 1
      %s565 = smul.addr %s564, 8
      %s566 = scalar_lea.vmem %s3, %s565
      %s567 = smul.u32 8, %s30
      %p568 = scmp.lt.s32.totalorder %s29, 1
      %s569 = scalar_select %p568, %s29, 1
      %p570 = scmp.lt.s32.totalorder %s567, 7
      %s571 = scalar_select %p570, %s567, 7
      %s572 = smul.addr %s569, 8
      %s573 = sadd.s32 %s571, %s572
      %s574 = smul.addr %s573, 8
      %s575 = scalar_lea.vmem %s14, %s574
      %s576 = smul.u32 8, %s30
      %v578 = vld [vmem:[%s547] sm:$0xff]
      %v579 = vld [vmem:[%s547 + $0x8] sm:$0xff]
      %v580 = vld [vmem:[%s547 + $0x10] sm:$0xff]
      %v581 = vld [vmem:[%s547 + $0x18] sm:$0xff]
      %v582 = vld [vmem:[%s547 + $0x20] sm:$0xff]
      %v583 = vld [vmem:[%s547 + $0x28] sm:$0xff]
      %v584 = vld [vmem:[%s547 + $0x30] sm:$0xff]
      %v585 = vld [vmem:[%s547 + $0x38] sm:$0xff]
      %v586 = vld [vmem:[%s562] sm:$0xff]
      %v587 = vld [vmem:[%s557] sm:$0xff]
      %v588 = vld [vmem:[%s557 + $0x8] sm:$0xff]
      %v589 = vld [vmem:[%s557 + $0x10] sm:$0xff]
      %v590 = vld [vmem:[%s557 + $0x18] sm:$0xff]
      %v591 = vld [vmem:[%s557 + $0x20] sm:$0xff]
      %v592 = vld [vmem:[%s557 + $0x28] sm:$0xff]
      %v593 = vld [vmem:[%s557 + $0x30] sm:$0xff]
      %v594 = vld [vmem:[%s557 + $0x38] sm:$0xff]
      %v595 = vadd.f32 %v578, %v587
      %v596 = vadd.f32 %v579, %v588
      %v597 = vadd.f32 %v580, %v589
      %v598 = vadd.f32 %v581, %v590
      %v599 = vadd.f32 %v582, %v591
      %v600 = vadd.f32 %v583, %v592
      %v601 = vadd.f32 %v584, %v593
      %v602 = vadd.f32 %v585, %v594
      %v603 = vpack.c.bf16 %v596, %v595
      %v604 = vpack.c.bf16 %v598, %v597
      %v605 = vpack.c.bf16 %v600, %v599
      %v606 = vpack.c.bf16 %v602, %v601
      %v607 = vld [vmem:[%s566] sm:$0xff]
      %v608 = vadd.f32 %v586, %v607
      %v609 = vpack.c.bf16 %v608, %v608
      %v610 = vpack.c.bf16 %v586, %v586
      %v611 = vld [vmem:[%s4] sm:$0xf]
      %v612 = vld [vmem:[%s4 + $0x4] sm:$0xf]
      %v613 = vld [vmem:[%s4 + $0x8] sm:$0xf]
      %v614 = vld [vmem:[%s4 + $0xc] sm:$0xf]
      %v615 = vld [vmem:[%s5] sm:$0x1]
      %v617 = vlaneseq
      %v618 = vshrl.u32 %v617, 7
      %v619 = vsub.s32 0, %v618
      %v620 = vrot.slane %v615, %v619
      %v626 = vunpack.c.l.b16 %v611
      %v627 = vunpack.c.l.b16 %v612
      %v628 = vunpack.c.l.b16 %v613
      %v629 = vunpack.c.l.b16 %v614
      %v630 = vpack.c.b16 %v627, %v626
      %v631 = vpack.c.b16 %v629, %v628
      %vm634 = vcmask 261120
      %v636 = vsel %vm634, %v603, 0
      %v639 = vsel %vm634, %v604, 0
      %v642 = vsel %vm634, %v605, 0
      %v645 = vsel %vm634, %v606, 0
      %647 = vmatprep.subr.bf16.mxu0 0
      %648 = vmatpush1.bf16.msra.mxu0 0
      %649 = vmatprep.subr.bf16.mxu0 0
      %650 = vmatpush1.bf16.msra.mxu0 0
      %651 = vmatprep.subr.bf16.mxu0 0
      %652 = vmatpush1.bf16.msra.mxu0 0
      %653 = vmatprep.subr.bf16.mxu0 0
      %654 = vmatpush1.bf16.msra.mxu0 0
      %655 = vmatprep.subr.bf16.mxu0 0
      %656 = vmatpush1.bf16.msra.mxu0 0
      %657 = vmatprep.subr.bf16.mxu0 0
      %658 = vmatpush1.bf16.msra.mxu0 0
      %659 = vmatprep.subr.bf16.mxu0 0
      %660 = vmatpush1.bf16.msra.mxu0 %v631
      %661 = vmatprep.subr.bf16.mxu0 0
      %662 = vmatpush1.bf16.msra.mxu0 %v630
      %663 = vmatprep.subr.bf16.mxu0 0
      %664 = vmatpush2.bf16.msra.mxu0 0
      %665 = vmatprep.subr.bf16.mxu0 0
      %666 = vmatpush2.bf16.msra.mxu0 0
      %667 = vmatprep.subr.bf16.mxu0 0
      %668 = vmatpush2.bf16.msra.mxu0 0
      %669 = vmatprep.subr.bf16.mxu0 0
      %670 = vmatpush2.bf16.msra.mxu0 0
      %671 = vmatprep.subr.bf16.mxu0 0
      %672 = vmatpush2.bf16.msra.mxu0 0
      %673 = vmatprep.subr.bf16.mxu0 0
      %674 = vmatpush2.bf16.msra.mxu0 0
      %675 = vmatprep.subr.bf16.mxu0 0
      %676 = vmatpush2.bf16.msra.mxu0 0
      %677 = vmatprep.subr.bf16.mxu0 0
      %678 = vmatpush2.bf16.msra.mxu0 0
      %679 = vmatprep.mubr.bf16.mxu0 0
      %680 = vmatmul.mubr.bf16.gmra.mxu0 %v636
      %v681 = vpop.f32.mrf.mxu0
      %v682 = vadd.f32 %v620, %v681
      %v683 = vpop.f32.mrf.mxu0
      %v684 = vpop.f32.mrf.mxu0
      %v685 = vadd.f32 %v620, %v684
      %v686 = vpop.f32.mrf.mxu0
      %687 = vmatprep.mubr.bf16.mxu0 0
      %688 = vmatmul.mubr.bf16.gmra.mxu0 %v639
      %v689 = vpop.f32.mrf.mxu0
      %v690 = vadd.f32 %v620, %v689
      %v691 = vpop.f32.mrf.mxu0
      %v692 = vpop.f32.mrf.mxu0
      %v693 = vadd.f32 %v620, %v692
      %v694 = vpop.f32.mrf.mxu0
      %695 = vmatprep.mubr.bf16.mxu0 0
      %696 = vmatmul.mubr.bf16.gmra.mxu0 %v642
      %v697 = vpop.f32.mrf.mxu0
      %v698 = vadd.f32 %v620, %v697
      %v699 = vpop.f32.mrf.mxu0
      %v700 = vpop.f32.mrf.mxu0
      %v701 = vadd.f32 %v620, %v700
      %v702 = vpop.f32.mrf.mxu0
      %703 = vmatprep.mubr.bf16.mxu0 0
      %704 = vmatmul.mubr.bf16.gmra.mxu0 %v645
      %v705 = vpop.f32.mrf.mxu0
      %v706 = vadd.f32 %v620, %v705
      %v707 = vpop.f32.mrf.mxu0
      %v708 = vpop.f32.mrf.mxu0
      %v709 = vadd.f32 %v620, %v708
      %v710 = vpop.f32.mrf.mxu0
      %711 = vdwg.mxu0
      %v712 = vpack.c.bf16 %v685, %v682
      %v713 = vpack.c.bf16 %v693, %v690
      %v714 = vpack.c.bf16 %v701, %v698
      %v715 = vpack.c.bf16 %v709, %v706
      %v716 = vld [vmem:[%s6] sm:$0xf]
      %v717 = vld [vmem:[%s6 + $0x4] sm:$0xf]
      %v718 = vld [vmem:[%s6 + $0x8] sm:$0xf]
      %v719 = vld [vmem:[%s6 + $0xc] sm:$0xf]
      %v720 = vld [vmem:[%s7] sm:$0x1]
      %v722 = vlaneseq
      %v723 = vshrl.u32 %v722, 7
      %v724 = vsub.s32 0, %v723
      %v725 = vrot.slane %v720, %v724
      %v731 = vunpack.c.l.b16 %v716
      %v732 = vunpack.c.l.b16 %v717
      %v733 = vunpack.c.l.b16 %v718
      %v734 = vunpack.c.l.b16 %v719
      %v735 = vpack.c.b16 %v732, %v731
      %v736 = vpack.c.b16 %v734, %v733
      %v740 = vsel %vm634, %v609, 0
      %742 = vmatprep.subr.bf16.mxu0 0
      %743 = vmatpush1.bf16.msra.mxu0 0
      %744 = vmatprep.subr.bf16.mxu0 0
      %745 = vmatpush1.bf16.msra.mxu0 0
      %746 = vmatprep.subr.bf16.mxu0 0
      %747 = vmatpush1.bf16.msra.mxu0 0
      %748 = vmatprep.subr.bf16.mxu0 0
      %749 = vmatpush1.bf16.msra.mxu0 0
      %750 = vmatprep.subr.bf16.mxu0 0
      %751 = vmatpush1.bf16.msra.mxu0 0
      %752 = vmatprep.subr.bf16.mxu0 0
      %753 = vmatpush1.bf16.msra.mxu0 0
      %754 = vmatprep.subr.bf16.mxu0 0
      %755 = vmatpush1.bf16.msra.mxu0 %v736
      %756 = vmatprep.subr.bf16.mxu0 0
      %757 = vmatpush1.bf16.msra.mxu0 %v735
      %758 = vmatprep.subr.bf16.mxu0 0
      %759 = vmatpush2.bf16.msra.mxu0 0
      %760 = vmatprep.subr.bf16.mxu0 0
      %761 = vmatpush2.bf16.msra.mxu0 0
      %762 = vmatprep.subr.bf16.mxu0 0
      %763 = vmatpush2.bf16.msra.mxu0 0
      %764 = vmatprep.subr.bf16.mxu0 0
      %765 = vmatpush2.bf16.msra.mxu0 0
      %766 = vmatprep.subr.bf16.mxu0 0
      %767 = vmatpush2.bf16.msra.mxu0 0
      %768 = vmatprep.subr.bf16.mxu0 0
      %769 = vmatpush2.bf16.msra.mxu0 0
      %770 = vmatprep.subr.bf16.mxu0 0
      %771 = vmatpush2.bf16.msra.mxu0 0
      %772 = vmatprep.subr.bf16.mxu0 0
      %773 = vmatpush2.bf16.msra.mxu0 0
      %774 = vmatprep.mubr.bf16.mxu0 0
      %775 = vmatmul.mubr.bf16.gmra.mxu0 %v740
      %v776 = vpop.f32.mrf.mxu0
      %v777 = vadd.f32 %v725, %v776
      %v778 = vpop.f32.mrf.mxu0
      %v779 = vpop.f32.mrf.mxu0
      %v780 = vpop.f32.mrf.mxu0
      %781 = vdwg.mxu0
      %v782 = vpack.c.bf16 %v777, %v777
      %v783 = vld [vmem:[%s8] sm:$0xf]
      %v784 = vld [vmem:[%s8 + $0x4] sm:$0xf]
      %v785 = vld [vmem:[%s8 + $0x8] sm:$0xf]
      %v786 = vld [vmem:[%s8 + $0xc] sm:$0xf]
      %v787 = vld [vmem:[%s9] sm:$0x1]
      %v789 = vlaneseq
      %v790 = vshrl.u32 %v789, 7
      %v791 = vsub.s32 0, %v790
      %v792 = vrot.slane %v787, %v791
      %v798 = vunpack.c.l.b16 %v783
      %v799 = vunpack.c.l.b16 %v784
      %v800 = vunpack.c.l.b16 %v785
      %v801 = vunpack.c.l.b16 %v786
      %v802 = vpack.c.b16 %v799, %v798
      %v803 = vpack.c.b16 %v801, %v800
      %v807 = vsel %vm634, %v610, 0
      %809 = vmatprep.subr.bf16.mxu0 0
      %810 = vmatpush1.bf16.msra.mxu0 0
      %811 = vmatprep.subr.bf16.mxu0 0
      %812 = vmatpush1.bf16.msra.mxu0 0
      %813 = vmatprep.subr.bf16.mxu0 0
      %814 = vmatpush1.bf16.msra.mxu0 0
      %815 = vmatprep.subr.bf16.mxu0 0
      %816 = vmatpush1.bf16.msra.mxu0 0
      %817 = vmatprep.subr.bf16.mxu0 0
      %818 = vmatpush1.bf16.msra.mxu0 0
      %819 = vmatprep.subr.bf16.mxu0 0
      %820 = vmatpush1.bf16.msra.mxu0 0
      %821 = vmatprep.subr.bf16.mxu0 0
      %822 = vmatpush1.bf16.msra.mxu0 %v803
      %823 = vmatprep.subr.bf16.mxu0 0
      %824 = vmatpush1.bf16.msra.mxu0 %v802
      %825 = vmatprep.subr.bf16.mxu0 0
      %826 = vmatpush2.bf16.msra.mxu0 0
      %827 = vmatprep.subr.bf16.mxu0 0
      %828 = vmatpush2.bf16.msra.mxu0 0
      %829 = vmatprep.subr.bf16.mxu0 0
      %830 = vmatpush2.bf16.msra.mxu0 0
      %831 = vmatprep.subr.bf16.mxu0 0
      %832 = vmatpush2.bf16.msra.mxu0 0
      %833 = vmatprep.subr.bf16.mxu0 0
      %834 = vmatpush2.bf16.msra.mxu0 0
      %835 = vmatprep.subr.bf16.mxu0 0
      %836 = vmatpush2.bf16.msra.mxu0 0
      %837 = vmatprep.subr.bf16.mxu0 0
      %838 = vmatpush2.bf16.msra.mxu0 0
      %839 = vmatprep.subr.bf16.mxu0 0
      %840 = vmatpush2.bf16.msra.mxu0 0
      %841 = vmatprep.mubr.bf16.mxu0 0
      %842 = vmatmul.mubr.bf16.gmra.mxu0 %v807
      %v843 = vpop.f32.mrf.mxu0
      %v844 = vadd.f32 %v792, %v843
      %v845 = vpop.f32.mrf.mxu0
      %v846 = vpop.f32.mrf.mxu0
      %v847 = vpop.f32.mrf.mxu0
      %848 = vdwg.mxu0
      %v849 = vpack.c.bf16 %v844, %v844
      %vm850 = vcmask 31744
      %v852 = vsel %vm850, %v712, 0
      %v855 = vsel %vm850, %v713, 0
      %v858 = vsel %vm850, %v714, 0
      %v861 = vsel %vm850, %v715, 0
      %v864 = vsel %vm850, %v782, 0
      %866 = vmatprep.subr.bf16.mxu0 0
      %867 = vmatpush1.bf16.xpose.msra.mxu0 0
      %868 = vmatprep.subr.bf16.mxu0 0
      %869 = vmatpush1.bf16.xpose.msra.mxu0 0
      %870 = vmatprep.subr.bf16.mxu0 0
      %871 = vmatpush1.bf16.xpose.msra.mxu0 0
      %872 = vmatprep.subr.bf16.mxu0 0
      %873 = vmatpush1.bf16.xpose.msra.mxu0 0
      %874 = vmatprep.subr.bf16.mxu0 0
      %875 = vmatpush1.bf16.xpose.msra.mxu0 0
      %876 = vmatprep.subr.bf16.mxu0 0
      %877 = vmatpush1.bf16.xpose.msra.mxu0 0
      %878 = vmatprep.subr.bf16.mxu0 0
      %879 = vmatpush1.bf16.xpose.msra.mxu0 0
      %880 = vmatprep.subr.bf16.mxu0 0
      %881 = vmatpush1.bf16.xpose.msra.mxu0 %v864
      %882 = vmatprep.subr.bf16.mxu0 0
      %883 = vmatpush2.bf16.xpose.msra.mxu0 0
      %884 = vmatprep.subr.bf16.mxu0 0
      %885 = vmatpush2.bf16.xpose.msra.mxu0 0
      %886 = vmatprep.subr.bf16.mxu0 0
      %887 = vmatpush2.bf16.xpose.msra.mxu0 0
      %888 = vmatprep.subr.bf16.mxu0 0
      %889 = vmatpush2.bf16.xpose.msra.mxu0 0
      %890 = vmatprep.subr.bf16.mxu0 0
      %891 = vmatpush2.bf16.xpose.msra.mxu0 0
      %892 = vmatprep.subr.bf16.mxu0 0
      %893 = vmatpush2.bf16.xpose.msra.mxu0 0
      %894 = vmatprep.subr.bf16.mxu0 0
      %895 = vmatpush2.bf16.xpose.msra.mxu0 0
      %896 = vmatprep.subr.bf16.mxu0 0
      %897 = vmatpush2.bf16.xpose.msra.mxu0 0
      %898 = vmatprep.mubr.bf16.mxu0 0
      %899 = vmatmul.mubr.bf16.gmra.mxu0 %v852
      %v900 = vpop.f32.mrf.mxu0
      %v901 = vadd.f32 0.0, %v900
      %v902 = vpop.f32.mrf.mxu0
      %v903 = vpop.f32.mrf.mxu0
      %v904 = vadd.f32 0.0, %v903
      %v905 = vpop.f32.mrf.mxu0
      %906 = vmatprep.mubr.bf16.mxu0 0
      %907 = vmatmul.mubr.bf16.gmra.mxu0 %v855
      %v908 = vpop.f32.mrf.mxu0
      %v909 = vadd.f32 0.0, %v908
      %v910 = vpop.f32.mrf.mxu0
      %v911 = vpop.f32.mrf.mxu0
      %v912 = vadd.f32 0.0, %v911
      %v913 = vpop.f32.mrf.mxu0
      %914 = vmatprep.mubr.bf16.mxu0 0
      %915 = vmatmul.mubr.bf16.gmra.mxu0 %v858
      %v916 = vpop.f32.mrf.mxu0
      %v917 = vadd.f32 0.0, %v916
      %v918 = vpop.f32.mrf.mxu0
      %v919 = vpop.f32.mrf.mxu0
      %v920 = vadd.f32 0.0, %v919
      %v921 = vpop.f32.mrf.mxu0
      %922 = vmatprep.mubr.bf16.mxu0 0
      %923 = vmatmul.mubr.bf16.gmra.mxu0 %v861
      %v924 = vpop.f32.mrf.mxu0
      %v925 = vadd.f32 0.0, %v924
      %v926 = vpop.f32.mrf.mxu0
      %v927 = vpop.f32.mrf.mxu0
      %v928 = vadd.f32 0.0, %v927
      %v929 = vpop.f32.mrf.mxu0
      %930 = vdwg.mxu0
      %vm931 = vcmask 64512
      %v932 = vsel %vm931, %v901, -inf
      %933 = vmax.xlane.f32.xlu0 %v932
      %v934 = vpop.xlane.xlu0 %933
      %v935 = vsel %vm931, %v904, -inf
      %936 = vmax.xlane.f32.xlu0 %v935
      %v937 = vpop.xlane.xlu0 %936
      %v938 = vsel %vm931, %v909, -inf
      %939 = vmax.xlane.f32.xlu0 %v938
      %v940 = vpop.xlane.xlu0 %939
      %v941 = vsel %vm931, %v912, -inf
      %942 = vmax.xlane.f32.xlu0 %v941
      %v943 = vpop.xlane.xlu0 %942
      %v944 = vsel %vm931, %v917, -inf
      %945 = vmax.xlane.f32.xlu0 %v944
      %v946 = vpop.xlane.xlu0 %945
      %v947 = vsel %vm931, %v920, -inf
      %948 = vmax.xlane.f32.xlu0 %v947
      %v949 = vpop.xlane.xlu0 %948
      %v950 = vsel %vm931, %v925, -inf
      %951 = vmax.xlane.f32.xlu0 %v950
      %v952 = vpop.xlane.xlu0 %951
      %v953 = vsel %vm931, %v928, -inf
      %954 = vmax.xlane.f32.xlu0 %v953
      %v955 = vpop.xlane.xlu0 %954
      %v956 = vsub.f32 %v901, %v934
      %v957 = vsub.f32 %v904, %v937
      %v958 = vsub.f32 %v909, %v940
      %v959 = vsub.f32 %v912, %v943
      %v960 = vsub.f32 %v917, %v946
      %v961 = vsub.f32 %v920, %v949
      %v962 = vsub.f32 %v925, %v952
      %v963 = vsub.f32 %v928, %v955
      %v964 = vmul.f32 %v956, 1.442695
      %v965 = vpow.pop %v964
      %v966 = vmul.f32 %v957, 1.442695
      %v967 = vpow.pop %v966
      %v968 = vmul.f32 %v958, 1.442695
      %v969 = vpow.pop %v968
      %v970 = vmul.f32 %v959, 1.442695
      %v971 = vpow.pop %v970
      %v972 = vmul.f32 %v960, 1.442695
      %v973 = vpow.pop %v972
      %v974 = vmul.f32 %v961, 1.442695
      %v975 = vpow.pop %v974
      %v976 = vmul.f32 %v962, 1.442695
      %v977 = vpow.pop %v976
      %v978 = vmul.f32 %v963, 1.442695
      %v979 = vpow.pop %v978
      %v980 = vsel %vm931, %v965, 0.0
      %981 = vadd.xlane.f32.xlu0 %v980
      %v982 = vpop.xlane.xlu0 %981
      %v983 = vsel %vm931, %v967, 0.0
      %984 = vadd.xlane.f32.xlu0 %v983
      %v985 = vpop.xlane.xlu0 %984
      %v986 = vsel %vm931, %v969, 0.0
      %987 = vadd.xlane.f32.xlu0 %v986
      %v988 = vpop.xlane.xlu0 %987
      %v989 = vsel %vm931, %v971, 0.0
      %990 = vadd.xlane.f32.xlu0 %v989
      %v991 = vpop.xlane.xlu0 %990
      %v992 = vsel %vm931, %v973, 0.0
      %993 = vadd.xlane.f32.xlu0 %v992
      %v994 = vpop.xlane.xlu0 %993
      %v995 = vsel %vm931, %v975, 0.0
      %996 = vadd.xlane.f32.xlu0 %v995
      %v997 = vpop.xlane.xlu0 %996
      %v998 = vsel %vm931, %v977, 0.0
      %999 = vadd.xlane.f32.xlu0 %v998
      %v1000 = vpop.xlane.xlu0 %999
      %v1001 = vsel %vm931, %v979, 0.0
      %1002 = vadd.xlane.f32.xlu0 %v1001
      %v1003 = vpop.xlane.xlu0 %1002
      %v1004 = vrcp.pop %v982
      %v1005 = vrcp.pop %v985
      %v1006 = vrcp.pop %v988
      %v1007 = vrcp.pop %v991
      %v1008 = vrcp.pop %v994
      %v1009 = vrcp.pop %v997
      %v1010 = vrcp.pop %v1000
      %v1011 = vrcp.pop %v1003
      %v1012 = vmul.f32 %v965, %v1004
      %v1013 = vmul.f32 %v967, %v1005
      %v1014 = vmul.f32 %v969, %v1006
      %v1015 = vmul.f32 %v971, %v1007
      %v1016 = vmul.f32 %v973, %v1008
      %v1017 = vmul.f32 %v975, %v1009
      %v1018 = vmul.f32 %v977, %v1010
      %v1019 = vmul.f32 %v979, %v1011
      %v1020 = vpack.c.bf16 %v1013, %v1012
      %v1021 = vpack.c.bf16 %v1015, %v1014
      %v1022 = vpack.c.bf16 %v1017, %v1016
      %v1023 = vpack.c.bf16 %v1019, %v1018
      %v1025 = vsel %vm931, %v1020, 0
      %v1028 = vsel %vm931, %v1021, 0
      %v1031 = vsel %vm931, %v1022, 0
      %v1034 = vsel %vm931, %v1023, 0
      %vm1036 = vcmask 1043456
      %v1038 = vsel %vm1036, %v849, 0
      %1040 = vmatprep.subr.bf16.mxu0 0
      %1041 = vmatpush1.bf16.msra.mxu0 0
      %1042 = vmatprep.subr.bf16.mxu0 0
      %1043 = vmatpush1.bf16.msra.mxu0 0
      %1044 = vmatprep.subr.bf16.mxu0 0
      %1045 = vmatpush1.bf16.msra.mxu0 0
      %1046 = vmatprep.subr.bf16.mxu0 0
      %1047 = vmatpush1.bf16.msra.mxu0 0
      %1048 = vmatprep.subr.bf16.mxu0 0
      %1049 = vmatpush1.bf16.msra.mxu0 0
      %1050 = vmatprep.subr.bf16.mxu0 0
      %1051 = vmatpush1.bf16.msra.mxu0 0
      %1052 = vmatprep.subr.bf16.mxu0 0
      %1053 = vmatpush1.bf16.msra.mxu0 0
      %1054 = vmatprep.subr.bf16.mxu0 0
      %1055 = vmatpush1.bf16.msra.mxu0 %v1038
      %1056 = vmatprep.subr.bf16.mxu0 0
      %1057 = vmatpush2.bf16.msra.mxu0 0
      %1058 = vmatprep.subr.bf16.mxu0 0
      %1059 = vmatpush2.bf16.msra.mxu0 0
      %1060 = vmatprep.subr.bf16.mxu0 0
      %1061 = vmatpush2.bf16.msra.mxu0 0
      %1062 = vmatprep.subr.bf16.mxu0 0
      %1063 = vmatpush2.bf16.msra.mxu0 0
      %1064 = vmatprep.subr.bf16.mxu0 0
      %1065 = vmatpush2.bf16.msra.mxu0 0
      %1066 = vmatprep.subr.bf16.mxu0 0
      %1067 = vmatpush2.bf16.msra.mxu0 0
      %1068 = vmatprep.subr.bf16.mxu0 0
      %1069 = vmatpush2.bf16.msra.mxu0 0
      %1070 = vmatprep.subr.bf16.mxu0 0
      %1071 = vmatpush2.bf16.msra.mxu0 0
      %1072 = vmatprep.mubr.bf16.mxu0 0
      %1073 = vmatmul.mubr.bf16.gmra.mxu0 %v1025
      %v1074 = vpop.f32.mrf.mxu0
      %v1075 = vadd.f32 0.0, %v1074
      %v1076 = vpop.f32.mrf.mxu0
      %v1077 = vpop.f32.mrf.mxu0
      %v1078 = vadd.f32 0.0, %v1077
      %v1079 = vpop.f32.mrf.mxu0
      %1080 = vmatprep.mubr.bf16.mxu0 0
      %1081 = vmatmul.mubr.bf16.gmra.mxu0 %v1028
      %v1082 = vpop.f32.mrf.mxu0
      %v1083 = vadd.f32 0.0, %v1082
      %v1084 = vpop.f32.mrf.mxu0
      %v1085 = vpop.f32.mrf.mxu0
      %v1086 = vadd.f32 0.0, %v1085
      %v1087 = vpop.f32.mrf.mxu0
      %1088 = vmatprep.mubr.bf16.mxu0 0
      %1089 = vmatmul.mubr.bf16.gmra.mxu0 %v1031
      %v1090 = vpop.f32.mrf.mxu0
      %v1091 = vadd.f32 0.0, %v1090
      %v1092 = vpop.f32.mrf.mxu0
      %v1093 = vpop.f32.mrf.mxu0
      %v1094 = vadd.f32 0.0, %v1093
      %v1095 = vpop.f32.mrf.mxu0
      %1096 = vmatprep.mubr.bf16.mxu0 0
      %1097 = vmatmul.mubr.bf16.gmra.mxu0 %v1034
      %v1098 = vpop.f32.mrf.mxu0
      %v1099 = vadd.f32 0.0, %v1098
      %v1100 = vpop.f32.mrf.mxu0
      %v1101 = vpop.f32.mrf.mxu0
      %v1102 = vadd.f32 0.0, %v1101
      %v1103 = vpop.f32.mrf.mxu0
      %1104 = vdwg.mxu0
      %1105 = vst.msk [vmem:[#allocation2] sm:$0xff] %vm850, %v1075
      %1106 = vst.msk [vmem:[#allocation2 + $0x8] sm:$0xff] %vm850, %v1078
      %1107 = vst.msk [vmem:[#allocation2 + $0x10] sm:$0xff] %vm850, %v1083
      %1108 = vst.msk [vmem:[#allocation2 + $0x18] sm:$0xff] %vm850, %v1086
      %1109 = vst.msk [vmem:[#allocation2 + $0x20] sm:$0xff] %vm850, %v1091
      %1110 = vst.msk [vmem:[#allocation2 + $0x28] sm:$0xff] %vm850, %v1094
      %1111 = vst.msk [vmem:[#allocation2 + $0x30] sm:$0xff] %vm850, %v1099
      %1112 = vst.msk [vmem:[#allocation2 + $0x38] sm:$0xff] %vm850, %v1102
      %1117 = vrot.lane.b32.xlu0 %v712, 124
      %v1118 = vpop.permute.xlu0 %1117
      %1119 = vrot.lane.b32.xlu0 %v713, 124
      %v1120 = vpop.permute.xlu0 %1119
      %1121 = vrot.lane.b32.xlu0 %v714, 124
      %v1122 = vpop.permute.xlu0 %1121
      %1123 = vrot.lane.b32.xlu0 %v715, 124
      %v1124 = vpop.permute.xlu0 %1123
      %1126 = vrot.lane.b32.xlu0 %v782, 124
      %v1127 = vpop.permute.xlu0 %1126
      %v1129 = vsel %vm850, %v1118, 0
      %v1132 = vsel %vm850, %v1120, 0
      %v1135 = vsel %vm850, %v1122, 0
      %v1138 = vsel %vm850, %v1124, 0
      %v1141 = vsel %vm850, %v1127, 0
      %1143 = vmatprep.subr.bf16.mxu0 0
      %1144 = vmatpush1.bf16.xpose.msra.mxu0 0
      %1145 = vmatprep.subr.bf16.mxu0 0
      %1146 = vmatpush1.bf16.xpose.msra.mxu0 0
      %1147 = vmatprep.subr.bf16.mxu0 0
      %1148 = vmatpush1.bf16.xpose.msra.mxu0 0
      %1149 = vmatprep.subr.bf16.mxu0 0
      %1150 = vmatpush1.bf16.xpose.msra.mxu0 0
      %1151 = vmatprep.subr.bf16.mxu0 0
      %1152 = vmatpush1.bf16.xpose.msra.mxu0 0
      %1153 = vmatprep.subr.bf16.mxu0 0
      %1154 = vmatpush1.bf16.xpose.msra.mxu0 0
      %1155 = vmatprep.subr.bf16.mxu0 0
      %1156 = vmatpush1.bf16.xpose.msra.mxu0 0
      %1157 = vmatprep.subr.bf16.mxu0 0
      %1158 = vmatpush1.bf16.xpose.msra.mxu0 %v1141
      %1159 = vmatprep.subr.bf16.mxu0 0
      %1160 = vmatpush2.bf16.xpose.msra.mxu0 0
      %1161 = vmatprep.subr.bf16.mxu0 0
      %1162 = vmatpush2.bf16.xpose.msra.mxu0 0
      %1163 = vmatprep.subr.bf16.mxu0 0
      %1164 = vmatpush2.bf16.xpose.msra.mxu0 0
      %1165 = vmatprep.subr.bf16.mxu0 0
      %1166 = vmatpush2.bf16.xpose.msra.mxu0 0
      %1167 = vmatprep.subr.bf16.mxu0 0
      %1168 = vmatpush2.bf16.xpose.msra.mxu0 0
      %1169 = vmatprep.subr.bf16.mxu0 0
      %1170 = vmatpush2.bf16.xpose.msra.mxu0 0
      %1171 = vmatprep.subr.bf16.mxu0 0
      %1172 = vmatpush2.bf16.xpose.msra.mxu0 0
      %1173 = vmatprep.subr.bf16.mxu0 0
      %1174 = vmatpush2.bf16.xpose.msra.mxu0 0
      %1175 = vmatprep.mubr.bf16.mxu0 0
      %1176 = vmatmul.mubr.bf16.gmra.mxu0 %v1129
      %v1177 = vpop.f32.mrf.mxu0
      %v1178 = vadd.f32 0.0, %v1177
      %v1179 = vpop.f32.mrf.mxu0
      %v1180 = vpop.f32.mrf.mxu0
      %v1181 = vadd.f32 0.0, %v1180
      %v1182 = vpop.f32.mrf.mxu0
      %1183 = vmatprep.mubr.bf16.mxu0 0
      %1184 = vmatmul.mubr.bf16.gmra.mxu0 %v1132
      %v1185 = vpop.f32.mrf.mxu0
      %v1186 = vadd.f32 0.0, %v1185
      %v1187 = vpop.f32.mrf.mxu0
      %v1188 = vpop.f32.mrf.mxu0
      %v1189 = vadd.f32 0.0, %v1188
      %v1190 = vpop.f32.mrf.mxu0
      %1191 = vmatprep.mubr.bf16.mxu0 0
      %1192 = vmatmul.mubr.bf16.gmra.mxu0 %v1135
      %v1193 = vpop.f32.mrf.mxu0
      %v1194 = vadd.f32 0.0, %v1193
      %v1195 = vpop.f32.mrf.mxu0
      %v1196 = vpop.f32.mrf.mxu0
      %v1197 = vadd.f32 0.0, %v1196
      %v1198 = vpop.f32.mrf.mxu0
      %1199 = vmatprep.mubr.bf16.mxu0 0
      %1200 = vmatmul.mubr.bf16.gmra.mxu0 %v1138
      %v1201 = vpop.f32.mrf.mxu0
      %v1202 = vadd.f32 0.0, %v1201
      %v1203 = vpop.f32.mrf.mxu0
      %v1204 = vpop.f32.mrf.mxu0
      %v1205 = vadd.f32 0.0, %v1204
      %v1206 = vpop.f32.mrf.mxu0
      %1207 = vdwg.mxu0
      %v1208 = vsel %vm931, %v1178, -inf
      %1209 = vmax.xlane.f32.xlu0 %v1208
      %v1210 = vpop.xlane.xlu0 %1209
      %v1211 = vsel %vm931, %v1181, -inf
      %1212 = vmax.xlane.f32.xlu0 %v1211
      %v1213 = vpop.xlane.xlu0 %1212
      %v1214 = vsel %vm931, %v1186, -inf
      %1215 = vmax.xlane.f32.xlu0 %v1214
      %v1216 = vpop.xlane.xlu0 %1215
      %v1217 = vsel %vm931, %v1189, -inf
      %1218 = vmax.xlane.f32.xlu0 %v1217
      %v1219 = vpop.xlane.xlu0 %1218
      %v1220 = vsel %vm931, %v1194, -inf
      %1221 = vmax.xlane.f32.xlu0 %v1220
      %v1222 = vpop.xlane.xlu0 %1221
      %v1223 = vsel %vm931, %v1197, -inf
      %1224 = vmax.xlane.f32.xlu0 %v1223
      %v1225 = vpop.xlane.xlu0 %1224
      %v1226 = vsel %vm931, %v1202, -inf
      %1227 = vmax.xlane.f32.xlu0 %v1226
      %v1228 = vpop.xlane.xlu0 %1227
      %v1229 = vsel %vm931, %v1205, -inf
      %1230 = vmax.xlane.f32.xlu0 %v1229
      %v1231 = vpop.xlane.xlu0 %1230
      %v1232 = vsub.f32 %v1178, %v1210
      %v1233 = vsub.f32 %v1181, %v1213
      %v1234 = vsub.f32 %v1186, %v1216
      %v1235 = vsub.f32 %v1189, %v1219
      %v1236 = vsub.f32 %v1194, %v1222
      %v1237 = vsub.f32 %v1197, %v1225
      %v1238 = vsub.f32 %v1202, %v1228
      %v1239 = vsub.f32 %v1205, %v1231
      %v1240 = vmul.f32 %v1232, 1.442695
      %v1241 = vpow.pop %v1240
      %v1242 = vmul.f32 %v1233, 1.442695
      %v1243 = vpow.pop %v1242
      %v1244 = vmul.f32 %v1234, 1.442695
      %v1245 = vpow.pop %v1244
      %v1246 = vmul.f32 %v1235, 1.442695
      %v1247 = vpow.pop %v1246
      %v1248 = vmul.f32 %v1236, 1.442695
      %v1249 = vpow.pop %v1248
      %v1250 = vmul.f32 %v1237, 1.442695
      %v1251 = vpow.pop %v1250
      %v1252 = vmul.f32 %v1238, 1.442695
      %v1253 = vpow.pop %v1252
      %v1254 = vmul.f32 %v1239, 1.442695
      %v1255 = vpow.pop %v1254
      %v1256 = vsel %vm931, %v1241, 0.0
      %1257 = vadd.xlane.f32.xlu0 %v1256
      %v1258 = vpop.xlane.xlu0 %1257
      %v1259 = vsel %vm931, %v1243, 0.0
      %1260 = vadd.xlane.f32.xlu0 %v1259
      %v1261 = vpop.xlane.xlu0 %1260
      %v1262 = vsel %vm931, %v1245, 0.0
      %1263 = vadd.xlane.f32.xlu0 %v1262
      %v1264 = vpop.xlane.xlu0 %1263
      %v1265 = vsel %vm931, %v1247, 0.0
      %1266 = vadd.xlane.f32.xlu0 %v1265
      %v1267 = vpop.xlane.xlu0 %1266
      %v1268 = vsel %vm931, %v1249, 0.0
      %1269 = vadd.xlane.f32.xlu0 %v1268
      %v1270 = vpop.xlane.xlu0 %1269
      %v1271 = vsel %vm931, %v1251, 0.0
      %1272 = vadd.xlane.f32.xlu0 %v1271
      %v1273 = vpop.xlane.xlu0 %1272
      %v1274 = vsel %vm931, %v1253, 0.0
      %1275 = vadd.xlane.f32.xlu0 %v1274
      %v1276 = vpop.xlane.xlu0 %1275
      %v1277 = vsel %vm931, %v1255, 0.0
      %1278 = vadd.xlane.f32.xlu0 %v1277
      %v1279 = vpop.xlane.xlu0 %1278
      %v1280 = vrcp.pop %v1258
      %v1281 = vrcp.pop %v1261
      %v1282 = vrcp.pop %v1264
      %v1283 = vrcp.pop %v1267
      %v1284 = vrcp.pop %v1270
      %v1285 = vrcp.pop %v1273
      %v1286 = vrcp.pop %v1276
      %v1287 = vrcp.pop %v1279
      %v1288 = vmul.f32 %v1241, %v1280
      %v1289 = vmul.f32 %v1243, %v1281
      %v1290 = vmul.f32 %v1245, %v1282
      %v1291 = vmul.f32 %v1247, %v1283
      %v1292 = vmul.f32 %v1249, %v1284
      %v1293 = vmul.f32 %v1251, %v1285
      %v1294 = vmul.f32 %v1253, %v1286
      %v1295 = vmul.f32 %v1255, %v1287
      %v1296 = vpack.c.bf16 %v1289, %v1288
      %v1297 = vpack.c.bf16 %v1291, %v1290
      %v1298 = vpack.c.bf16 %v1293, %v1292
      %v1299 = vpack.c.bf16 %v1295, %v1294
      %1301 = vrot.lane.b32.xlu0 %v849, 124
      %v1302 = vpop.permute.xlu0 %1301
      %v1304 = vsel %vm931, %v1296, 0
      %v1307 = vsel %vm931, %v1297, 0
      %v1310 = vsel %vm931, %v1298, 0
      %v1313 = vsel %vm931, %v1299, 0
      %v1316 = vsel %vm1036, %v1302, 0
      %1318 = vmatprep.subr.bf16.mxu0 0
      %1319 = vmatpush1.bf16.msra.mxu0 0
      %1320 = vmatprep.subr.bf16.mxu0 0
      %1321 = vmatpush1.bf16.msra.mxu0 0
      %1322 = vmatprep.subr.bf16.mxu0 0
      %1323 = vmatpush1.bf16.msra.mxu0 0
      %1324 = vmatprep.subr.bf16.mxu0 0
      %1325 = vmatpush1.bf16.msra.mxu0 0
      %1326 = vmatprep.subr.bf16.mxu0 0
      %1327 = vmatpush1.bf16.msra.mxu0 0
      %1328 = vmatprep.subr.bf16.mxu0 0
      %1329 = vmatpush1.bf16.msra.mxu0 0
      %1330 = vmatprep.subr.bf16.mxu0 0
      %1331 = vmatpush1.bf16.msra.mxu0 0
      %1332 = vmatprep.subr.bf16.mxu0 0
      %1333 = vmatpush1.bf16.msra.mxu0 %v1316
      %1334 = vmatprep.subr.bf16.mxu0 0
      %1335 = vmatpush2.bf16.msra.mxu0 0
      %1336 = vmatprep.subr.bf16.mxu0 0
      %1337 = vmatpush2.bf16.msra.mxu0 0
      %1338 = vmatprep.subr.bf16.mxu0 0
      %1339 = vmatpush2.bf16.msra.mxu0 0
      %1340 = vmatprep.subr.bf16.mxu0 0
      %1341 = vmatpush2.bf16.msra.mxu0 0
      %1342 = vmatprep.subr.bf16.mxu0 0
      %1343 = vmatpush2.bf16.msra.mxu0 0
      %1344 = vmatprep.subr.bf16.mxu0 0
      %1345 = vmatpush2.bf16.msra.mxu0 0
      %1346 = vmatprep.subr.bf16.mxu0 0
      %1347 = vmatpush2.bf16.msra.mxu0 0
      %1348 = vmatprep.subr.bf16.mxu0 0
      %1349 = vmatpush2.bf16.msra.mxu0 0
      %1350 = vmatprep.mubr.bf16.mxu0 0
      %1351 = vmatmul.mubr.bf16.gmra.mxu0 %v1304
      %v1352 = vpop.f32.mrf.mxu0
      %v1353 = vadd.f32 0.0, %v1352
      %v1354 = vpop.f32.mrf.mxu0
      %v1355 = vpop.f32.mrf.mxu0
      %v1356 = vadd.f32 0.0, %v1355
      %v1357 = vpop.f32.mrf.mxu0
      %1358 = vmatprep.mubr.bf16.mxu0 0
      %1359 = vmatmul.mubr.bf16.gmra.mxu0 %v1307
      %v1360 = vpop.f32.mrf.mxu0
      %v1361 = vadd.f32 0.0, %v1360
      %v1362 = vpop.f32.mrf.mxu0
      %v1363 = vpop.f32.mrf.mxu0
      %v1364 = vadd.f32 0.0, %v1363
      %v1365 = vpop.f32.mrf.mxu0
      %1366 = vmatprep.mubr.bf16.mxu0 0
      %1367 = vmatmul.mubr.bf16.gmra.mxu0 %v1310
      %v1368 = vpop.f32.mrf.mxu0
      %v1369 = vadd.f32 0.0, %v1368
      %v1370 = vpop.f32.mrf.mxu0
      %v1371 = vpop.f32.mrf.mxu0
      %v1372 = vadd.f32 0.0, %v1371
      %v1373 = vpop.f32.mrf.mxu0
      %1374 = vmatprep.mubr.bf16.mxu0 0
      %1375 = vmatmul.mubr.bf16.gmra.mxu0 %v1313
      %v1376 = vpop.f32.mrf.mxu0
      %v1377 = vadd.f32 0.0, %v1376
      %v1378 = vpop.f32.mrf.mxu0
      %v1379 = vpop.f32.mrf.mxu0
      %v1380 = vadd.f32 0.0, %v1379
      %v1381 = vpop.f32.mrf.mxu0
      %1382 = vdwg.mxu0
      %1391 = vrot.lane.b32.xlu0 %v1353, 4
      %v1392 = vpop.permute.xlu0 %1391
      %1393 = vrot.lane.b32.xlu0 %v1356, 4
      %v1394 = vpop.permute.xlu0 %1393
      %1395 = vrot.lane.b32.xlu0 %v1361, 4
      %v1396 = vpop.permute.xlu0 %1395
      %1397 = vrot.lane.b32.xlu0 %v1364, 4
      %v1398 = vpop.permute.xlu0 %1397
      %1399 = vrot.lane.b32.xlu0 %v1369, 4
      %v1400 = vpop.permute.xlu0 %1399
      %1401 = vrot.lane.b32.xlu0 %v1372, 4
      %v1402 = vpop.permute.xlu0 %1401
      %1403 = vrot.lane.b32.xlu0 %v1377, 4
      %v1404 = vpop.permute.xlu0 %1403
      %1405 = vrot.lane.b32.xlu0 %v1380, 4
      %v1406 = vpop.permute.xlu0 %1405
      %vm1415 = vcmask 64544
      %1416 = vst.msk [vmem:[#allocation2] sm:$0xff] %vm1415, %v1392
      %1417 = vst.msk [vmem:[#allocation2 + $0x8] sm:$0xff] %vm1415, %v1394
      %1418 = vst.msk [vmem:[#allocation2 + $0x10] sm:$0xff] %vm1415, %v1396
      %1419 = vst.msk [vmem:[#allocation2 + $0x18] sm:$0xff] %vm1415, %v1398
      %1420 = vst.msk [vmem:[#allocation2 + $0x20] sm:$0xff] %vm1415, %v1400
      %1421 = vst.msk [vmem:[#allocation2 + $0x28] sm:$0xff] %vm1415, %v1402
      %1422 = vst.msk [vmem:[#allocation2 + $0x30] sm:$0xff] %vm1415, %v1404
      %1423 = vst.msk [vmem:[#allocation2 + $0x38] sm:$0xff] %vm1415, %v1406
      %1424 = vrot.lane.b32.xlu0 %v712, 120
      %v1425 = vpop.permute.xlu0 %1424
      %1426 = vrot.lane.b32.xlu0 %v713, 120
      %v1427 = vpop.permute.xlu0 %1426
      %1428 = vrot.lane.b32.xlu0 %v714, 120
      %v1429 = vpop.permute.xlu0 %1428
      %1430 = vrot.lane.b32.xlu0 %v715, 120
      %v1431 = vpop.permute.xlu0 %1430
      %1432 = vrot.lane.b32.xlu0 %v782, 120
      %v1433 = vpop.permute.xlu0 %1432
      %v1435 = vsel %vm850, %v1425, 0
      %v1438 = vsel %vm850, %v1427, 0
      %v1441 = vsel %vm850, %v1429, 0
      %v1444 = vsel %vm850, %v1431, 0
      %v1447 = vsel %vm850, %v1433, 0
      %1449 = vmatprep.subr.bf16.mxu0 0
      %1450 = vmatpush1.bf16.xpose.msra.mxu0 0
      %1451 = vmatprep.subr.bf16.mxu0 0
      %1452 = vmatpush1.bf16.xpose.msra.mxu0 0
      %1453 = vmatprep.subr.bf16.mxu0 0
      %1454 = vmatpush1.bf16.xpose.msra.mxu0 0
      %1455 = vmatprep.subr.bf16.mxu0 0
      %1456 = vmatpush1.bf16.xpose.msra.mxu0 0
      %1457 = vmatprep.subr.bf16.mxu0 0
      %1458 = vmatpush1.bf16.xpose.msra.mxu0 0
      %1459 = vmatprep.subr.bf16.mxu0 0
      %1460 = vmatpush1.bf16.xpose.msra.mxu0 0
      %1461 = vmatprep.subr.bf16.mxu0 0
      %1462 = vmatpush1.bf16.xpose.msra.mxu0 0
      %1463 = vmatprep.subr.bf16.mxu0 0
      %1464 = vmatpush1.bf16.xpose.msra.mxu0 %v1447
      %1465 = vmatprep.subr.bf16.mxu0 0
      %1466 = vmatpush2.bf16.xpose.msra.mxu0 0
      %1467 = vmatprep.subr.bf16.mxu0 0
      %1468 = vmatpush2.bf16.xpose.msra.mxu0 0
      %1469 = vmatprep.subr.bf16.mxu0 0
      %1470 = vmatpush2.bf16.xpose.msra.mxu0 0
      %1471 = vmatprep.subr.bf16.mxu0 0
      %1472 = vmatpush2.bf16.xpose.msra.mxu0 0
      %1473 = vmatprep.subr.bf16.mxu0 0
      %1474 = vmatpush2.bf16.xpose.msra.mxu0 0
      %1475 = vmatprep.subr.bf16.mxu0 0
      %1476 = vmatpush2.bf16.xpose.msra.mxu0 0
      %1477 = vmatprep.subr.bf16.mxu0 0
      %1478 = vmatpush2.bf16.xpose.msra.mxu0 0
      %1479 = vmatprep.subr.bf16.mxu0 0
      %1480 = vmatpush2.bf16.xpose.msra.mxu0 0
      %1481 = vmatprep.mubr.bf16.mxu0 0
      %1482 = vmatmul.mubr.bf16.gmra.mxu0 %v1435
      %v1483 = vpop.f32.mrf.mxu0
      %v1484 = vadd.f32 0.0, %v1483
      %v1485 = vpop.f32.mrf.mxu0
      %v1486 = vpop.f32.mrf.mxu0
      %v1487 = vadd.f32 0.0, %v1486
      %v1488 = vpop.f32.mrf.mxu0
      %1489 = vmatprep.mubr.bf16.mxu0 0
      %1490 = vmatmul.mubr.bf16.gmra.mxu0 %v1438
      %v1491 = vpop.f32.mrf.mxu0
      %v1492 = vadd.f32 0.0, %v1491
      %v1493 = vpop.f32.mrf.mxu0
      %v1494 = vpop.f32.mrf.mxu0
      %v1495 = vadd.f32 0.0, %v1494
      %v1496 = vpop.f32.mrf.mxu0
      %1497 = vmatprep.mubr.bf16.mxu0 0
      %1498 = vmatmul.mubr.bf16.gmra.mxu0 %v1441
      %v1499 = vpop.f32.mrf.mxu0
      %v1500 = vadd.f32 0.0, %v1499
      %v1501 = vpop.f32.mrf.mxu0
      %v1502 = vpop.f32.mrf.mxu0
      %v1503 = vadd.f32 0.0, %v1502
      %v1504 = vpop.f32.mrf.mxu0
      %1505 = vmatprep.mubr.bf16.mxu0 0
      %1506 = vmatmul.mubr.bf16.gmra.mxu0 %v1444
      %v1507 = vpop.f32.mrf.mxu0
      %v1508 = vadd.f32 0.0, %v1507
      %v1509 = vpop.f32.mrf.mxu0
      %v1510 = vpop.f32.mrf.mxu0
      %v1511 = vadd.f32 0.0, %v1510
      %v1512 = vpop.f32.mrf.mxu0
      %1513 = vdwg.mxu0
      %v1514 = vsel %vm931, %v1484, -inf
      %1515 = vmax.xlane.f32.xlu0 %v1514
      %v1516 = vpop.xlane.xlu0 %1515
      %v1517 = vsel %vm931, %v1487, -inf
      %1518 = vmax.xlane.f32.xlu0 %v1517
      %v1519 = vpop.xlane.xlu0 %1518
      %v1520 = vsel %vm931, %v1492, -inf
      %1521 = vmax.xlane.f32.xlu0 %v1520
      %v1522 = vpop.xlane.xlu0 %1521
      %v1523 = vsel %vm931, %v1495, -inf
      %1524 = vmax.xlane.f32.xlu0 %v1523
      %v1525 = vpop.xlane.xlu0 %1524
      %v1526 = vsel %vm931, %v1500, -inf
      %1527 = vmax.xlane.f32.xlu0 %v1526
      %v1528 = vpop.xlane.xlu0 %1527
      %v1529 = vsel %vm931, %v1503, -inf
      %1530 = vmax.xlane.f32.xlu0 %v1529
      %v1531 = vpop.xlane.xlu0 %1530
      %v1532 = vsel %vm931, %v1508, -inf
      %1533 = vmax.xlane.f32.xlu0 %v1532
      %v1534 = vpop.xlane.xlu0 %1533
      %v1535 = vsel %vm931, %v1511, -inf
      %1536 = vmax.xlane.f32.xlu0 %v1535
      %v1537 = vpop.xlane.xlu0 %1536
      %v1538 = vsub.f32 %v1484, %v1516
      %v1539 = vsub.f32 %v1487, %v1519
      %v1540 = vsub.f32 %v1492, %v1522
      %v1541 = vsub.f32 %v1495, %v1525
      %v1542 = vsub.f32 %v1500, %v1528
      %v1543 = vsub.f32 %v1503, %v1531
      %v1544 = vsub.f32 %v1508, %v1534
      %v1545 = vsub.f32 %v1511, %v1537
      %v1546 = vmul.f32 %v1538, 1.442695
      %v1547 = vpow.pop %v1546
      %v1548 = vmul.f32 %v1539, 1.442695
      %v1549 = vpow.pop %v1548
      %v1550 = vmul.f32 %v1540, 1.442695
      %v1551 = vpow.pop %v1550
      %v1552 = vmul.f32 %v1541, 1.442695
      %v1553 = vpow.pop %v1552
      %v1554 = vmul.f32 %v1542, 1.442695
      %v1555 = vpow.pop %v1554
      %v1556 = vmul.f32 %v1543, 1.442695
      %v1557 = vpow.pop %v1556
      %v1558 = vmul.f32 %v1544, 1.442695
      %v1559 = vpow.pop %v1558
      %v1560 = vmul.f32 %v1545, 1.442695
      %v1561 = vpow.pop %v1560
      %v1562 = vsel %vm931, %v1547, 0.0
      %1563 = vadd.xlane.f32.xlu0 %v1562
      %v1564 = vpop.xlane.xlu0 %1563
      %v1565 = vsel %vm931, %v1549, 0.0
      %1566 = vadd.xlane.f32.xlu0 %v1565
      %v1567 = vpop.xlane.xlu0 %1566
      %v1568 = vsel %vm931, %v1551, 0.0
      %1569 = vadd.xlane.f32.xlu0 %v1568
      %v1570 = vpop.xlane.xlu0 %1569
      %v1571 = vsel %vm931, %v1553, 0.0
      %1572 = vadd.xlane.f32.xlu0 %v1571
      %v1573 = vpop.xlane.xlu0 %1572
      %v1574 = vsel %vm931, %v1555, 0.0
      %1575 = vadd.xlane.f32.xlu0 %v1574
      %v1576 = vpop.xlane.xlu0 %1575
      %v1577 = vsel %vm931, %v1557, 0.0
      %1578 = vadd.xlane.f32.xlu0 %v1577
      %v1579 = vpop.xlane.xlu0 %1578
      %v1580 = vsel %vm931, %v1559, 0.0
      %1581 = vadd.xlane.f32.xlu0 %v1580
      %v1582 = vpop.xlane.xlu0 %1581
      %v1583 = vsel %vm931, %v1561, 0.0
      %1584 = vadd.xlane.f32.xlu0 %v1583
      %v1585 = vpop.xlane.xlu0 %1584
      %v1586 = vrcp.pop %v1564
      %v1587 = vrcp.pop %v1567
      %v1588 = vrcp.pop %v1570
      %v1589 = vrcp.pop %v1573
      %v1590 = vrcp.pop %v1576
      %v1591 = vrcp.pop %v1579
      %v1592 = vrcp.pop %v1582
      %v1593 = vrcp.pop %v1585
      %v1594 = vmul.f32 %v1547, %v1586
      %v1595 = vmul.f32 %v1549, %v1587
      %v1596 = vmul.f32 %v1551, %v1588
      %v1597 = vmul.f32 %v1553, %v1589
      %v1598 = vmul.f32 %v1555, %v1590
      %v1599 = vmul.f32 %v1557, %v1591
      %v1600 = vmul.f32 %v1559, %v1592
      %v1601 = vmul.f32 %v1561, %v1593
      %v1602 = vpack.c.bf16 %v1595, %v1594
      %v1603 = vpack.c.bf16 %v1597, %v1596
      %v1604 = vpack.c.bf16 %v1599, %v1598
      %v1605 = vpack.c.bf16 %v1601, %v1600
      %1606 = vrot.lane.b32.xlu0 %v849, 120
      %v1607 = vpop.permute.xlu0 %1606
      %v1609 = vsel %vm931, %v1602, 0
      %v1612 = vsel %vm931, %v1603, 0
      %v1615 = vsel %vm931, %v1604, 0
      %v1618 = vsel %vm931, %v1605, 0
      %v1621 = vsel %vm1036, %v1607, 0
      %1623 = vmatprep.subr.bf16.mxu0 0
      %1624 = vmatpush1.bf16.msra.mxu0 0
      %1625 = vmatprep.subr.bf16.mxu0 0
      %1626 = vmatpush1.bf16.msra.mxu0 0
      %1627 = vmatprep.subr.bf16.mxu0 0
      %1628 = vmatpush1.bf16.msra.mxu0 0
      %1629 = vmatprep.subr.bf16.mxu0 0
      %1630 = vmatpush1.bf16.msra.mxu0 0
      %1631 = vmatprep.subr.bf16.mxu0 0
      %1632 = vmatpush1.bf16.msra.mxu0 0
      %1633 = vmatprep.subr.bf16.mxu0 0
      %1634 = vmatpush1.bf16.msra.mxu0 0
      %1635 = vmatprep.subr.bf16.mxu0 0
      %1636 = vmatpush1.bf16.msra.mxu0 0
      %1637 = vmatprep.subr.bf16.mxu0 0
      %1638 = vmatpush1.bf16.msra.mxu0 %v1621
      %1639 = vmatprep.subr.bf16.mxu0 0
      %1640 = vmatpush2.bf16.msra.mxu0 0
      %1641 = vmatprep.subr.bf16.mxu0 0
      %1642 = vmatpush2.bf16.msra.mxu0 0
      %1643 = vmatprep.subr.bf16.mxu0 0
      %1644 = vmatpush2.bf16.msra.mxu0 0
      %1645 = vmatprep.subr.bf16.mxu0 0
      %1646 = vmatpush2.bf16.msra.mxu0 0
      %1647 = vmatprep.subr.bf16.mxu0 0
      %1648 = vmatpush2.bf16.msra.mxu0 0
      %1649 = vmatprep.subr.bf16.mxu0 0
      %1650 = vmatpush2.bf16.msra.mxu0 0
      %1651 = vmatprep.subr.bf16.mxu0 0
      %1652 = vmatpush2.bf16.msra.mxu0 0
      %1653 = vmatprep.subr.bf16.mxu0 0
      %1654 = vmatpush2.bf16.msra.mxu0 0
      %1655 = vmatprep.mubr.bf16.mxu0 0
      %1656 = vmatmul.mubr.bf16.gmra.mxu0 %v1609
      %v1657 = vpop.f32.mrf.mxu0
      %v1658 = vadd.f32 0.0, %v1657
      %v1659 = vpop.f32.mrf.mxu0
      %v1660 = vpop.f32.mrf.mxu0
      %v1661 = vadd.f32 0.0, %v1660
      %v1662 = vpop.f32.mrf.mxu0
      %1663 = vmatprep.mubr.bf16.mxu0 0
      %1664 = vmatmul.mubr.bf16.gmra.mxu0 %v1612
      %v1665 = vpop.f32.mrf.mxu0
      %v1666 = vadd.f32 0.0, %v1665
      %v1667 = vpop.f32.mrf.mxu0
      %v1668 = vpop.f32.mrf.mxu0
      %v1669 = vadd.f32 0.0, %v1668
      %v1670 = vpop.f32.mrf.mxu0
      %1671 = vmatprep.mubr.bf16.mxu0 0
      %1672 = vmatmul.mubr.bf16.gmra.mxu0 %v1615
      %v1673 = vpop.f32.mrf.mxu0
      %v1674 = vadd.f32 0.0, %v1673
      %v1675 = vpop.f32.mrf.mxu0
      %v1676 = vpop.f32.mrf.mxu0
      %v1677 = vadd.f32 0.0, %v1676
      %v1678 = vpop.f32.mrf.mxu0
      %1679 = vmatprep.mubr.bf16.mxu0 0
      %1680 = vmatmul.mubr.bf16.gmra.mxu0 %v1618
      %v1681 = vpop.f32.mrf.mxu0
      %v1682 = vadd.f32 0.0, %v1681
      %v1683 = vpop.f32.mrf.mxu0
      %v1684 = vpop.f32.mrf.mxu0
      %v1685 = vadd.f32 0.0, %v1684
      %v1686 = vpop.f32.mrf.mxu0
      %1687 = vdwg.mxu0
      %1696 = vrot.lane.b32.xlu0 %v1658, 8
      %v1697 = vpop.permute.xlu0 %1696
      %1698 = vrot.lane.b32.xlu0 %v1661, 8
      %v1699 = vpop.permute.xlu0 %1698
      %1700 = vrot.lane.b32.xlu0 %v1666, 8
      %v1701 = vpop.permute.xlu0 %1700
      %1702 = vrot.lane.b32.xlu0 %v1669, 8
      %v1703 = vpop.permute.xlu0 %1702
      %1704 = vrot.lane.b32.xlu0 %v1674, 8
      %v1705 = vpop.permute.xlu0 %1704
      %1706 = vrot.lane.b32.xlu0 %v1677, 8
      %v1707 = vpop.permute.xlu0 %1706
      %1708 = vrot.lane.b32.xlu0 %v1682, 8
      %v1709 = vpop.permute.xlu0 %1708
      %1710 = vrot.lane.b32.xlu0 %v1685, 8
      %v1711 = vpop.permute.xlu0 %1710
      %vm1720 = vcmask 97344
      %1721 = vst.msk [vmem:[#allocation2] sm:$0xff] %vm1720, %v1697
      %1722 = vst.msk [vmem:[#allocation2 + $0x8] sm:$0xff] %vm1720, %v1699
      %1723 = vst.msk [vmem:[#allocation2 + $0x10] sm:$0xff] %vm1720, %v1701
      %1724 = vst.msk [vmem:[#allocation2 + $0x18] sm:$0xff] %vm1720, %v1703
      %1725 = vst.msk [vmem:[#allocation2 + $0x20] sm:$0xff] %vm1720, %v1705
      %1726 = vst.msk [vmem:[#allocation2 + $0x28] sm:$0xff] %vm1720, %v1707
      %1727 = vst.msk [vmem:[#allocation2 + $0x30] sm:$0xff] %vm1720, %v1709
      %1728 = vst.msk [vmem:[#allocation2 + $0x38] sm:$0xff] %vm1720, %v1711
      %1729 = vrot.lane.b32.xlu0 %v712, 116
      %v1730 = vpop.permute.xlu0 %1729
      %1731 = vrot.lane.b32.xlu0 %v713, 116
      %v1732 = vpop.permute.xlu0 %1731
      %1733 = vrot.lane.b32.xlu0 %v714, 116
      %v1734 = vpop.permute.xlu0 %1733
      %1735 = vrot.lane.b32.xlu0 %v715, 116
      %v1736 = vpop.permute.xlu0 %1735
      %1737 = vrot.lane.b32.xlu0 %v782, 116
      %v1738 = vpop.permute.xlu0 %1737
      %v1740 = vsel %vm850, %v1730, 0
      %v1743 = vsel %vm850, %v1732, 0
      %v1746 = vsel %vm850, %v1734, 0
      %v1749 = vsel %vm850, %v1736, 0
      %v1752 = vsel %vm850, %v1738, 0
      %1754 = vmatprep.subr.bf16.mxu0 0
      %1755 = vmatpush1.bf16.xpose.msra.mxu0 0
      %1756 = vmatprep.subr.bf16.mxu0 0
      %1757 = vmatpush1.bf16.xpose.msra.mxu0 0
      %1758 = vmatprep.subr.bf16.mxu0 0
      %1759 = vmatpush1.bf16.xpose.msra.mxu0 0
      %1760 = vmatprep.subr.bf16.mxu0 0
      %1761 = vmatpush1.bf16.xpose.msra.mxu0 0
      %1762 = vmatprep.subr.bf16.mxu0 0
      %1763 = vmatpush1.bf16.xpose.msra.mxu0 0
      %1764 = vmatprep.subr.bf16.mxu0 0
      %1765 = vmatpush1.bf16.xpose.msra.mxu0 0
      %1766 = vmatprep.subr.bf16.mxu0 0
      %1767 = vmatpush1.bf16.xpose.msra.mxu0 0
      %1768 = vmatprep.subr.bf16.mxu0 0
      %1769 = vmatpush1.bf16.xpose.msra.mxu0 %v1752
      %1770 = vmatprep.subr.bf16.mxu0 0
      %1771 = vmatpush2.bf16.xpose.msra.mxu0 0
      %1772 = vmatprep.subr.bf16.mxu0 0
      %1773 = vmatpush2.bf16.xpose.msra.mxu0 0
      %1774 = vmatprep.subr.bf16.mxu0 0
      %1775 = vmatpush2.bf16.xpose.msra.mxu0 0
      %1776 = vmatprep.subr.bf16.mxu0 0
      %1777 = vmatpush2.bf16.xpose.msra.mxu0 0
      %1778 = vmatprep.subr.bf16.mxu0 0
      %1779 = vmatpush2.bf16.xpose.msra.mxu0 0
      %1780 = vmatprep.subr.bf16.mxu0 0
      %1781 = vmatpush2.bf16.xpose.msra.mxu0 0
      %1782 = vmatprep.subr.bf16.mxu0 0
      %1783 = vmatpush2.bf16.xpose.msra.mxu0 0
      %1784 = vmatprep.subr.bf16.mxu0 0
      %1785 = vmatpush2.bf16.xpose.msra.mxu0 0
      %1786 = vmatprep.mubr.bf16.mxu0 0
      %1787 = vmatmul.mubr.bf16.gmra.mxu0 %v1740
      %v1788 = vpop.f32.mrf.mxu0
      %v1789 = vadd.f32 0.0, %v1788
      %v1790 = vpop.f32.mrf.mxu0
      %v1791 = vpop.f32.mrf.mxu0
      %v1792 = vadd.f32 0.0, %v1791
      %v1793 = vpop.f32.mrf.mxu0
      %1794 = vmatprep.mubr.bf16.mxu0 0
      %1795 = vmatmul.mubr.bf16.gmra.mxu0 %v1743
      %v1796 = vpop.f32.mrf.mxu0
      %v1797 = vadd.f32 0.0, %v1796
      %v1798 = vpop.f32.mrf.mxu0
      %v1799 = vpop.f32.mrf.mxu0
      %v1800 = vadd.f32 0.0, %v1799
      %v1801 = vpop.f32.mrf.mxu0
      %1802 = vmatprep.mubr.bf16.mxu0 0
      %1803 = vmatmul.mubr.bf16.gmra.mxu0 %v1746
      %v1804 = vpop.f32.mrf.mxu0
      %v1805 = vadd.f32 0.0, %v1804
      %v1806 = vpop.f32.mrf.mxu0
      %v1807 = vpop.f32.mrf.mxu0
      %v1808 = vadd.f32 0.0, %v1807
      %v1809 = vpop.f32.mrf.mxu0
      %1810 = vmatprep.mubr.bf16.mxu0 0
      %1811 = vmatmul.mubr.bf16.gmra.mxu0 %v1749
      %v1812 = vpop.f32.mrf.mxu0
      %v1813 = vadd.f32 0.0, %v1812
      %v1814 = vpop.f32.mrf.mxu0
      %v1815 = vpop.f32.mrf.mxu0
      %v1816 = vadd.f32 0.0, %v1815
      %v1817 = vpop.f32.mrf.mxu0
      %1818 = vdwg.mxu0
      %v1819 = vsel %vm931, %v1789, -inf
      %1820 = vmax.xlane.f32.xlu0 %v1819
      %v1821 = vpop.xlane.xlu0 %1820
      %v1822 = vsel %vm931, %v1792, -inf
      %1823 = vmax.xlane.f32.xlu0 %v1822
      %v1824 = vpop.xlane.xlu0 %1823
      %v1825 = vsel %vm931, %v1797, -inf
      %1826 = vmax.xlane.f32.xlu0 %v1825
      %v1827 = vpop.xlane.xlu0 %1826
      %v1828 = vsel %vm931, %v1800, -inf
      %1829 = vmax.xlane.f32.xlu0 %v1828
      %v1830 = vpop.xlane.xlu0 %1829
      %v1831 = vsel %vm931, %v1805, -inf
      %1832 = vmax.xlane.f32.xlu0 %v1831
      %v1833 = vpop.xlane.xlu0 %1832
      %v1834 = vsel %vm931, %v1808, -inf
      %1835 = vmax.xlane.f32.xlu0 %v1834
      %v1836 = vpop.xlane.xlu0 %1835
      %v1837 = vsel %vm931, %v1813, -inf
      %1838 = vmax.xlane.f32.xlu0 %v1837
      %v1839 = vpop.xlane.xlu0 %1838
      %v1840 = vsel %vm931, %v1816, -inf
      %1841 = vmax.xlane.f32.xlu0 %v1840
      %v1842 = vpop.xlane.xlu0 %1841
      %v1843 = vsub.f32 %v1789, %v1821
      %v1844 = vsub.f32 %v1792, %v1824
      %v1845 = vsub.f32 %v1797, %v1827
      %v1846 = vsub.f32 %v1800, %v1830
      %v1847 = vsub.f32 %v1805, %v1833
      %v1848 = vsub.f32 %v1808, %v1836
      %v1849 = vsub.f32 %v1813, %v1839
      %v1850 = vsub.f32 %v1816, %v1842
      %v1851 = vmul.f32 %v1843, 1.442695
      %v1852 = vpow.pop %v1851
      %v1853 = vmul.f32 %v1844, 1.442695
      %v1854 = vpow.pop %v1853
      %v1855 = vmul.f32 %v1845, 1.442695
      %v1856 = vpow.pop %v1855
      %v1857 = vmul.f32 %v1846, 1.442695
      %v1858 = vpow.pop %v1857
      %v1859 = vmul.f32 %v1847, 1.442695
      %v1860 = vpow.pop %v1859
      %v1861 = vmul.f32 %v1848, 1.442695
      %v1862 = vpow.pop %v1861
      %v1863 = vmul.f32 %v1849, 1.442695
      %v1864 = vpow.pop %v1863
      %v1865 = vmul.f32 %v1850, 1.442695
      %v1866 = vpow.pop %v1865
      %v1867 = vsel %vm931, %v1852, 0.0
      %1868 = vadd.xlane.f32.xlu0 %v1867
      %v1869 = vpop.xlane.xlu0 %1868
      %v1870 = vsel %vm931, %v1854, 0.0
      %1871 = vadd.xlane.f32.xlu0 %v1870
      %v1872 = vpop.xlane.xlu0 %1871
      %v1873 = vsel %vm931, %v1856, 0.0
      %1874 = vadd.xlane.f32.xlu0 %v1873
      %v1875 = vpop.xlane.xlu0 %1874
      %v1876 = vsel %vm931, %v1858, 0.0
      %1877 = vadd.xlane.f32.xlu0 %v1876
      %v1878 = vpop.xlane.xlu0 %1877
      %v1879 = vsel %vm931, %v1860, 0.0
      %1880 = vadd.xlane.f32.xlu0 %v1879
      %v1881 = vpop.xlane.xlu0 %1880
      %v1882 = vsel %vm931, %v1862, 0.0
      %1883 = vadd.xlane.f32.xlu0 %v1882
      %v1884 = vpop.xlane.xlu0 %1883
      %v1885 = vsel %vm931, %v1864, 0.0
      %1886 = vadd.xlane.f32.xlu0 %v1885
      %v1887 = vpop.xlane.xlu0 %1886
      %v1888 = vsel %vm931, %v1866, 0.0
      %1889 = vadd.xlane.f32.xlu0 %v1888
      %v1890 = vpop.xlane.xlu0 %1889
      %v1891 = vrcp.pop %v1869
      %v1892 = vrcp.pop %v1872
      %v1893 = vrcp.pop %v1875
      %v1894 = vrcp.pop %v1878
      %v1895 = vrcp.pop %v1881
      %v1896 = vrcp.pop %v1884
      %v1897 = vrcp.pop %v1887
      %v1898 = vrcp.pop %v1890
      %v1899 = vmul.f32 %v1852, %v1891
      %v1900 = vmul.f32 %v1854, %v1892
      %v1901 = vmul.f32 %v1856, %v1893
      %v1902 = vmul.f32 %v1858, %v1894
      %v1903 = vmul.f32 %v1860, %v1895
      %v1904 = vmul.f32 %v1862, %v1896
      %v1905 = vmul.f32 %v1864, %v1897
      %v1906 = vmul.f32 %v1866, %v1898
      %v1907 = vpack.c.bf16 %v1900, %v1899
      %v1908 = vpack.c.bf16 %v1902, %v1901
      %v1909 = vpack.c.bf16 %v1904, %v1903
      %v1910 = vpack.c.bf16 %v1906, %v1905
      %1911 = vrot.lane.b32.xlu0 %v849, 116
      %v1912 = vpop.permute.xlu0 %1911
      %v1914 = vsel %vm931, %v1907, 0
      %v1917 = vsel %vm931, %v1908, 0
      %v1920 = vsel %vm931, %v1909, 0
      %v1923 = vsel %vm931, %v1910, 0
      %v1926 = vsel %vm1036, %v1912, 0
      %1928 = vmatprep.subr.bf16.mxu0 0
      %1929 = vmatpush1.bf16.msra.mxu0 0
      %1930 = vmatprep.subr.bf16.mxu0 0
      %1931 = vmatpush1.bf16.msra.mxu0 0
      %1932 = vmatprep.subr.bf16.mxu0 0
      %1933 = vmatpush1.bf16.msra.mxu0 0
      %1934 = vmatprep.subr.bf16.mxu0 0
      %1935 = vmatpush1.bf16.msra.mxu0 0
      %1936 = vmatprep.subr.bf16.mxu0 0
      %1937 = vmatpush1.bf16.msra.mxu0 0
      %1938 = vmatprep.subr.bf16.mxu0 0
      %1939 = vmatpush1.bf16.msra.mxu0 0
      %1940 = vmatprep.subr.bf16.mxu0 0
      %1941 = vmatpush1.bf16.msra.mxu0 0
      %1942 = vmatprep.subr.bf16.mxu0 0
      %1943 = vmatpush1.bf16.msra.mxu0 %v1926
      %1944 = vmatprep.subr.bf16.mxu0 0
      %1945 = vmatpush2.bf16.msra.mxu0 0
      %1946 = vmatprep.subr.bf16.mxu0 0
      %1947 = vmatpush2.bf16.msra.mxu0 0
      %1948 = vmatprep.subr.bf16.mxu0 0
      %1949 = vmatpush2.bf16.msra.mxu0 0
      %1950 = vmatprep.subr.bf16.mxu0 0
      %1951 = vmatpush2.bf16.msra.mxu0 0
      %1952 = vmatprep.subr.bf16.mxu0 0
      %1953 = vmatpush2.bf16.msra.mxu0 0
      %1954 = vmatprep.subr.bf16.mxu0 0
      %1955 = vmatpush2.bf16.msra.mxu0 0
      %1956 = vmatprep.subr.bf16.mxu0 0
      %1957 = vmatpush2.bf16.msra.mxu0 0
      %1958 = vmatprep.subr.bf16.mxu0 0
      %1959 = vmatpush2.bf16.msra.mxu0 0
      %1960 = vmatprep.mubr.bf16.mxu0 0
      %1961 = vmatmul.mubr.bf16.gmra.mxu0 %v1914
      %v1962 = vpop.f32.mrf.mxu0
      %v1963 = vadd.f32 0.0, %v1962
      %v1964 = vpop.f32.mrf.mxu0
      %v1965 = vpop.f32.mrf.mxu0
      %v1966 = vadd.f32 0.0, %v1965
      %v1967 = vpop.f32.mrf.mxu0
      %1968 = vmatprep.mubr.bf16.mxu0 0
      %1969 = vmatmul.mubr.bf16.gmra.mxu0 %v1917
      %v1970 = vpop.f32.mrf.mxu0
      %v1971 = vadd.f32 0.0, %v1970
      %v1972 = vpop.f32.mrf.mxu0
      %v1973 = vpop.f32.mrf.mxu0
      %v1974 = vadd.f32 0.0, %v1973
      %v1975 = vpop.f32.mrf.mxu0
      %1976 = vmatprep.mubr.bf16.mxu0 0
      %1977 = vmatmul.mubr.bf16.gmra.mxu0 %v1920
      %v1978 = vpop.f32.mrf.mxu0
      %v1979 = vadd.f32 0.0, %v1978
      %v1980 = vpop.f32.mrf.mxu0
      %v1981 = vpop.f32.mrf.mxu0
      %v1982 = vadd.f32 0.0, %v1981
      %v1983 = vpop.f32.mrf.mxu0
      %1984 = vmatprep.mubr.bf16.mxu0 0
      %1985 = vmatmul.mubr.bf16.gmra.mxu0 %v1923
      %v1986 = vpop.f32.mrf.mxu0
      %v1987 = vadd.f32 0.0, %v1986
      %v1988 = vpop.f32.mrf.mxu0
      %v1989 = vpop.f32.mrf.mxu0
      %v1990 = vadd.f32 0.0, %v1989
      %v1991 = vpop.f32.mrf.mxu0
      %1992 = vdwg.mxu0
      %2001 = vrot.lane.b32.xlu0 %v1963, 12
      %v2002 = vpop.permute.xlu0 %2001
      %2003 = vrot.lane.b32.xlu0 %v1966, 12
      %v2004 = vpop.permute.xlu0 %2003
      %2005 = vrot.lane.b32.xlu0 %v1971, 12
      %v2006 = vpop.permute.xlu0 %2005
      %2007 = vrot.lane.b32.xlu0 %v1974, 12
      %v2008 = vpop.permute.xlu0 %2007
      %2009 = vrot.lane.b32.xlu0 %v1979, 12
      %v2010 = vpop.permute.xlu0 %2009
      %2011 = vrot.lane.b32.xlu0 %v1982, 12
      %v2012 = vpop.permute.xlu0 %2011
      %2013 = vrot.lane.b32.xlu0 %v1987, 12
      %v2014 = vpop.permute.xlu0 %2013
      %2015 = vrot.lane.b32.xlu0 %v1990, 12
      %v2016 = vpop.permute.xlu0 %2015
      %vm2025 = vcmask 130144
      %2026 = vst.msk [vmem:[#allocation2] sm:$0xff] %vm2025, %v2002
      %2027 = vst.msk [vmem:[#allocation2 + $0x8] sm:$0xff] %vm2025, %v2004
      %2028 = vst.msk [vmem:[#allocation2 + $0x10] sm:$0xff] %vm2025, %v2006
      %2029 = vst.msk [vmem:[#allocation2 + $0x18] sm:$0xff] %vm2025, %v2008
      %2030 = vst.msk [vmem:[#allocation2 + $0x20] sm:$0xff] %vm2025, %v2010
      %2031 = vst.msk [vmem:[#allocation2 + $0x28] sm:$0xff] %vm2025, %v2012
      %2032 = vst.msk [vmem:[#allocation2 + $0x30] sm:$0xff] %vm2025, %v2014
      %2033 = vst.msk [vmem:[#allocation2 + $0x38] sm:$0xff] %vm2025, %v2016
      %v2034 = vld [vmem:[#allocation2] sm:$0xff]
      %v2035 = vld [vmem:[#allocation2 + $0x8] sm:$0xff]
      %v2036 = vld [vmem:[#allocation2 + $0x10] sm:$0xff]
      %v2037 = vld [vmem:[#allocation2 + $0x18] sm:$0xff]
      %v2038 = vld [vmem:[#allocation2 + $0x20] sm:$0xff]
      %v2039 = vld [vmem:[#allocation2 + $0x28] sm:$0xff]
      %v2040 = vld [vmem:[#allocation2 + $0x30] sm:$0xff]
      %v2041 = vld [vmem:[#allocation2 + $0x38] sm:$0xff]
      %v2042 = vpack.c.bf16 %v2035, %v2034
      %v2043 = vpack.c.bf16 %v2037, %v2036
      %v2044 = vpack.c.bf16 %v2039, %v2038
      %v2045 = vpack.c.bf16 %v2041, %v2040
      %v2046 = vld [vmem:[%s10] sm:$0xf]
      %v2047 = vld [vmem:[%s10 + $0x4] sm:$0xf]
      %v2048 = vld [vmem:[%s11] sm:$0x1]
      %v2050 = vlaneseq
      %v2051 = vshrl.u32 %v2050, 7
      %v2052 = vsub.s32 0, %v2051
      %v2053 = vrot.slane %v2048, %v2052
      %v2057 = vunpack.c.l.b16 %v2046
      %v2058 = vunpack.c.l.b16 %v2047
      %v2059 = vpack.c.b16 %v2058, %v2057
      %vm2061 = vcmask 130048
      %v2063 = vsel %vm2061, %v2042, 0
      %v2066 = vsel %vm2061, %v2043, 0
      %v2069 = vsel %vm2061, %v2044, 0
      %v2072 = vsel %vm2061, %v2045, 0
      %2074 = vmatprep.subr.bf16.mxu0 0
      %2075 = vmatpush1.bf16.msra.mxu0 0
      %2076 = vmatprep.subr.bf16.mxu0 0
      %2077 = vmatpush1.bf16.msra.mxu0 0
      %2078 = vmatprep.subr.bf16.mxu0 0
      %2079 = vmatpush1.bf16.msra.mxu0 0
      %2080 = vmatprep.subr.bf16.mxu0 0
      %2081 = vmatpush1.bf16.msra.mxu0 0
      %2082 = vmatprep.subr.bf16.mxu0 0
      %2083 = vmatpush1.bf16.msra.mxu0 0
      %2084 = vmatprep.subr.bf16.mxu0 0
      %2085 = vmatpush1.bf16.msra.mxu0 0
      %2086 = vmatprep.subr.bf16.mxu0 0
      %2087 = vmatpush1.bf16.msra.mxu0 0
      %2088 = vmatprep.subr.bf16.mxu0 0
      %2089 = vmatpush1.bf16.msra.mxu0 %v2059
      %2090 = vmatprep.subr.bf16.mxu0 0
      %2091 = vmatpush2.bf16.msra.mxu0 0
      %2092 = vmatprep.subr.bf16.mxu0 0
      %2093 = vmatpush2.bf16.msra.mxu0 0
      %2094 = vmatprep.subr.bf16.mxu0 0
      %2095 = vmatpush2.bf16.msra.mxu0 0
      %2096 = vmatprep.subr.bf16.mxu0 0
      %2097 = vmatpush2.bf16.msra.mxu0 0
      %2098 = vmatprep.subr.bf16.mxu0 0
      %2099 = vmatpush2.bf16.msra.mxu0 0
      %2100 = vmatprep.subr.bf16.mxu0 0
      %2101 = vmatpush2.bf16.msra.mxu0 0
      %2102 = vmatprep.subr.bf16.mxu0 0
      %2103 = vmatpush2.bf16.msra.mxu0 0
      %2104 = vmatprep.subr.bf16.mxu0 0
      %2105 = vmatpush2.bf16.msra.mxu0 0
      %2106 = vmatprep.mubr.bf16.mxu0 0
      %2107 = vmatmul.mubr.bf16.gmra.mxu0 %v2063
      %v2108 = vpop.f32.mrf.mxu0
      %v2109 = vadd.f32 %v2053, %v2108
      %v2110 = vpop.f32.mrf.mxu0
      %v2111 = vpop.f32.mrf.mxu0
      %v2112 = vadd.f32 %v2053, %v2111
      %v2113 = vpop.f32.mrf.mxu0
      %2114 = vmatprep.mubr.bf16.mxu0 0
      %2115 = vmatmul.mubr.bf16.gmra.mxu0 %v2066
      %v2116 = vpop.f32.mrf.mxu0
      %v2117 = vadd.f32 %v2053, %v2116
      %v2118 = vpop.f32.mrf.mxu0
      %v2119 = vpop.f32.mrf.mxu0
      %v2120 = vadd.f32 %v2053, %v2119
      %v2121 = vpop.f32.mrf.mxu0
      %2122 = vmatprep.mubr.bf16.mxu0 0
      %2123 = vmatmul.mubr.bf16.gmra.mxu0 %v2069
      %v2124 = vpop.f32.mrf.mxu0
      %v2125 = vadd.f32 %v2053, %v2124
      %v2126 = vpop.f32.mrf.mxu0
      %v2127 = vpop.f32.mrf.mxu0
      %v2128 = vadd.f32 %v2053, %v2127
      %v2129 = vpop.f32.mrf.mxu0
      %2130 = vmatprep.mubr.bf16.mxu0 0
      %2131 = vmatmul.mubr.bf16.gmra.mxu0 %v2072
      %v2132 = vpop.f32.mrf.mxu0
      %v2133 = vadd.f32 %v2053, %v2132
      %v2134 = vpop.f32.mrf.mxu0
      %v2135 = vpop.f32.mrf.mxu0
      %v2136 = vadd.f32 %v2053, %v2135
      %v2137 = vpop.f32.mrf.mxu0
      %2138 = vdwg.mxu0
      %v2139 = vadd.f32 %v578, %v2109
      %v2140 = vadd.f32 %v579, %v2112
      %v2141 = vadd.f32 %v580, %v2117
      %v2142 = vadd.f32 %v581, %v2120
      %v2143 = vadd.f32 %v582, %v2125
      %v2144 = vadd.f32 %v583, %v2128
      %v2145 = vadd.f32 %v584, %v2133
      %v2146 = vadd.f32 %v585, %v2136
      %v2147 = vld [vmem:[%s12] sm:$0x1]
      %v2148 = vld [vmem:[%s13] sm:$0x1]
      %v2149 = vsel %vm634, %v2139, 0.0
      %2150 = vadd.xlane.f32.xlu0 %v2149
      %v2151 = vpop.xlane.xlu0 %2150
      %v2152 = vsel %vm634, %v2140, 0.0
      %2153 = vadd.xlane.f32.xlu0 %v2152
      %v2154 = vpop.xlane.xlu0 %2153
      %v2155 = vsel %vm634, %v2141, 0.0
      %2156 = vadd.xlane.f32.xlu0 %v2155
      %v2157 = vpop.xlane.xlu0 %2156
      %v2158 = vsel %vm634, %v2142, 0.0
      %2159 = vadd.xlane.f32.xlu0 %v2158
      %v2160 = vpop.xlane.xlu0 %2159
      %v2161 = vsel %vm634, %v2143, 0.0
      %2162 = vadd.xlane.f32.xlu0 %v2161
      %v2163 = vpop.xlane.xlu0 %2162
      %v2164 = vsel %vm634, %v2144, 0.0
      %2165 = vadd.xlane.f32.xlu0 %v2164
      %v2166 = vpop.xlane.xlu0 %2165
      %v2167 = vsel %vm634, %v2145, 0.0
      %2168 = vadd.xlane.f32.xlu0 %v2167
      %v2169 = vpop.xlane.xlu0 %2168
      %v2170 = vsel %vm634, %v2146, 0.0
      %2171 = vadd.xlane.f32.xlu0 %v2170
      %v2172 = vpop.xlane.xlu0 %2171
      %v2173 = vrcp.pop 32.0
      %v2174 = vmul.f32 %v2151, %v2173
      %v2175 = vmul.f32 %v2154, %v2173
      %v2176 = vmul.f32 %v2157, %v2173
      %v2177 = vmul.f32 %v2160, %v2173
      %v2178 = vmul.f32 %v2163, %v2173
      %v2179 = vmul.f32 %v2166, %v2173
      %v2180 = vmul.f32 %v2169, %v2173
      %v2181 = vmul.f32 %v2172, %v2173
      %v2182 = vsub.f32 %v2139, %v2174
      %v2183 = vsub.f32 %v2140, %v2175
      %v2184 = vsub.f32 %v2141, %v2176
      %v2185 = vsub.f32 %v2142, %v2177
      %v2186 = vsub.f32 %v2143, %v2178
      %v2187 = vsub.f32 %v2144, %v2179
      %v2188 = vsub.f32 %v2145, %v2180
      %v2189 = vsub.f32 %v2146, %v2181
      %v2190 = vmul.f32 %v2182, %v2182
      %v2191 = vmul.f32 %v2183, %v2183
      %v2192 = vmul.f32 %v2184, %v2184
      %v2193 = vmul.f32 %v2185, %v2185
      %v2194 = vmul.f32 %v2186, %v2186
      %v2195 = vmul.f32 %v2187, %v2187
      %v2196 = vmul.f32 %v2188, %v2188
      %v2197 = vmul.f32 %v2189, %v2189
      %v2198 = vsel %vm634, %v2190, 0.0
      %2199 = vadd.xlane.f32.xlu0 %v2198
      %v2200 = vpop.xlane.xlu0 %2199
      %v2201 = vsel %vm634, %v2191, 0.0
      %2202 = vadd.xlane.f32.xlu0 %v2201
      %v2203 = vpop.xlane.xlu0 %2202
      %v2204 = vsel %vm634, %v2192, 0.0
      %2205 = vadd.xlane.f32.xlu0 %v2204
      %v2206 = vpop.xlane.xlu0 %2205
      %v2207 = vsel %vm634, %v2193, 0.0
      %2208 = vadd.xlane.f32.xlu0 %v2207
      %v2209 = vpop.xlane.xlu0 %2208
      %v2210 = vsel %vm634, %v2194, 0.0
      %2211 = vadd.xlane.f32.xlu0 %v2210
      %v2212 = vpop.xlane.xlu0 %2211
      %v2213 = vsel %vm634, %v2195, 0.0
      %2214 = vadd.xlane.f32.xlu0 %v2213
      %v2215 = vpop.xlane.xlu0 %2214
      %v2216 = vsel %vm634, %v2196, 0.0
      %2217 = vadd.xlane.f32.xlu0 %v2216
      %v2218 = vpop.xlane.xlu0 %2217
      %v2219 = vsel %vm634, %v2197, 0.0
      %2220 = vadd.xlane.f32.xlu0 %v2219
      %v2221 = vpop.xlane.xlu0 %2220
      %v2222 = vmul.f32 %v2200, %v2173
      %v2223 = vmul.f32 %v2203, %v2173
      %v2224 = vmul.f32 %v2206, %v2173
      %v2225 = vmul.f32 %v2209, %v2173
      %v2226 = vmul.f32 %v2212, %v2173
      %v2227 = vmul.f32 %v2215, %v2173
      %v2228 = vmul.f32 %v2218, %v2173
      %v2229 = vmul.f32 %v2221, %v2173
      %v2230 = vadd.f32 %v2222, 1e-05
      %v2231 = vadd.f32 %v2223, 1e-05
      %v2232 = vadd.f32 %v2224, 1e-05
      %v2233 = vadd.f32 %v2225, 1e-05
      %v2234 = vadd.f32 %v2226, 1e-05
      %v2235 = vadd.f32 %v2227, 1e-05
      %v2236 = vadd.f32 %v2228, 1e-05
      %v2237 = vadd.f32 %v2229, 1e-05
      %v2238 = vrsqrt.pop %v2230
      %v2239 = vrsqrt.pop %v2231
      %v2240 = vrsqrt.pop %v2232
      %v2241 = vrsqrt.pop %v2233
      %v2242 = vrsqrt.pop %v2234
      %v2243 = vrsqrt.pop %v2235
      %v2244 = vrsqrt.pop %v2236
      %v2245 = vrsqrt.pop %v2237
      %v2246 = vmul.f32 %v2182, %v2238
      %v2247 = vmul.f32 %v2183, %v2239
      %v2248 = vmul.f32 %v2184, %v2240
      %v2249 = vmul.f32 %v2185, %v2241
      %v2250 = vmul.f32 %v2186, %v2242
      %v2251 = vmul.f32 %v2187, %v2243
      %v2252 = vmul.f32 %v2188, %v2244
      %v2253 = vmul.f32 %v2189, %v2245
      %v2255 = vlaneseq
      %v2256 = vshrl.u32 %v2255, 7
      %v2257 = vsub.s32 0, %v2256
      %v2258 = vrot.slane %v2147, %v2257
      %v2260 = vmul.f32 %v2246, %v2258
      %v2261 = vmul.f32 %v2247, %v2258
      %v2262 = vmul.f32 %v2248, %v2258
      %v2263 = vmul.f32 %v2249, %v2258
      %v2264 = vmul.f32 %v2250, %v2258
      %v2265 = vmul.f32 %v2251, %v2258
      %v2266 = vmul.f32 %v2252, %v2258
      %v2267 = vmul.f32 %v2253, %v2258
      %v2269 = vlaneseq
      %v2270 = vshrl.u32 %v2269, 7
      %v2271 = vsub.s32 0, %v2270
      %v2272 = vrot.slane %v2148, %v2271
      %v2274 = vadd.f32 %v2260, %v2272
      %v2275 = vadd.f32 %v2261, %v2272
      %v2276 = vadd.f32 %v2262, %v2272
      %v2277 = vadd.f32 %v2263, %v2272
      %v2278 = vadd.f32 %v2264, %v2272
      %v2279 = vadd.f32 %v2265, %v2272
      %v2280 = vadd.f32 %v2266, %v2272
      %v2281 = vadd.f32 %v2267, %v2272
      %2282 = vst.msk [vmem:[%s575] sm:$0xff] %vm634, %v2274
      %2283 = vst.msk [vmem:[%s575 + $0x8] sm:$0xff] %vm634, %v2275
      %2284 = vst.msk [vmem:[%s575 + $0x10] sm:$0xff] %vm634, %v2276
      %2285 = vst.msk [vmem:[%s575 + $0x18] sm:$0xff] %vm634, %v2277
      %2286 = vst.msk [vmem:[%s575 + $0x20] sm:$0xff] %vm634, %v2278
      %2287 = vst.msk [vmem:[%s575 + $0x28] sm:$0xff] %vm634, %v2279
      %2288 = vst.msk [vmem:[%s575 + $0x30] sm:$0xff] %vm634, %v2280
      %2289 = vst.msk [vmem:[%s575 + $0x38] sm:$0xff] %vm634, %v2281
      %s2290 = smul.u32 8, %s30
      %p2291 = scmp.lt.s32.totalorder %s29, 1
      %s2292 = scalar_select %p2291, %s29, 1
      %p2293 = scmp.lt.s32.totalorder %s2290, 7
      %s2294 = scalar_select %p2293, %s2290, 7
      %s2295 = smul.addr %s2292, 8
      %s2296 = sadd.s32 %s2294, %s2295
      %s2297 = smul.addr %s2296, 8
      %s2298 = scalar_lea.vmem %s14, %s2297
      // Predicated region
      $region77: #{two_way_attention_block.7} parent=75 // pred_check
        %p2299 = pneg %p375
      $region78: #{two_way_attention_block.7} parent=75 // pred_check_branch
        %2301 = sbr.rel (%p2299) target = $region80
      $region79: #{two_way_attention_block.7} parent=75 // pred_region
        %s2302 = smul.u32 8, %s30
      $region80: #{two_way_attention_block.7} parent=75 // pred_fallthru
        _
    $region76: #{two_way_attention_block.7} parent=5 // pred_fallthru
      _
    %p2303 = scmp.le.s32.totalorder 2, %s20
    // Predicated region
    $region81: #{two_way_attention_block.7} parent=5 // pred_check
      %p2304 = pneg %p2303
    $region82: #{two_way_attention_block.7} parent=5 // pred_check_branch
      %2306 = sbr.rel (%p2304) target = $region84
    $region83: #{two_way_attention_block.7} parent=5 // pred_region
      %s2307 = ssub.s32 %s20, 2
      // Predicated region
      $region85: #{two_way_attention_block.7} parent=83 // pred_check
        %p2308 = pneg %p381
      $region86: #{two_way_attention_block.7} parent=83 // pred_check_branch
        %2310 = sbr.rel (%p2308) target = $region88
      $region87: #{two_way_attention_block.7} parent=83 // pred_region
        %s2311 = smul.u32 8, %s32
        %p2312 = scmp.lt.s32.totalorder %s31, 1
        %s2313 = scalar_select %p2312, %s31, 1
        %p2314 = scmp.lt.s32.totalorder %s2311, 7
        %s2315 = scalar_select %p2314, %s2311, 7
        %s2316 = smul.addr %s2313, 8
        %s2317 = sadd.s32 %s2315, %s2316
        %s2318 = smul.addr %s2317, 8
        %s2319 = scalar_lea.vmem %s14, %s2318
      $region88: #{two_way_attention_block.7} parent=83 // pred_fallthru
        _
    $region84: #{two_way_attention_block.7} parent=5 // pred_fallthru
      _
  $region6: #{two_way_attention_block.7} parent=0 // loop_footer
    %s24 = sadd.s32 1, %s20
  $region7: #{two_way_attention_block.7} parent=0 // loop_footer_branch
    %19 = sbr.rel target = $region3
  $region8: #{two_way_attention_block.7} parent=0 // loop_exit
    _

</llo_original>
